<compile_context>
chip_gen: v6e
topology: v6e:2x2x1
jax: 0.10.0
libtpu: 0.0.40
codegen_flags: <defaults>
</compile_context>

<pallas_src>
import functools

import jax
import jax.numpy as jnp
from jax import lax
from jax.experimental import pallas as pl
from jax.experimental.pallas import tpu as pltpu

EPS = 1e-3  # BatchNorm eps from the PyTorch module

C_IN = 832
C_B1, C_B2A, C_B2, C_B3A, C_B3, C_B4 = 256, 160, 320, 32, 128, 128
# Fused 1x1 output layout (zero-padded so every slice start is a multiple of 128 lanes).
OFF_B1, OFF_B2A, OFF_B3A, C_FUSED = 0, 256, 512, 640


# ------------------------------ fused kernel -------------------------------

def _inception5a_kernel(x_ref, w1_ref, b1_ref, w2_ref, b2_ref, w3_ref, b3_ref,
                        w4_ref, b4_ref, oa_ref, ob_ref,
                        a2pad_ref, a3pad_ref, xpad_ref, *, H, W):
    # x_ref:  (1, H, W, 832) bf16            oa_ref: (1, H, W, 576) f32  [b1 | b2]
    # w1_ref: (832, 640) bf16 fused 1x1      ob_ref: (1, H, W, 256) f32  [b3 | b4]
    # w2_ref: (9, 160, 320) bf16, w3_ref: (9, 32, 128) bf16, w4_ref: (832, 128) bf16
    # biases: (1, C) f32.  Scratches: zero/-inf padded halo buffers in VMEM.
    M = H * W
    x = x_ref[0]                                          # (H, W, 832) bf16

    # Stage the -inf padded input for the branch-4 max pool while x is live.
    xpad_ref[...] = jnp.full(xpad_ref.shape, -jnp.inf, xpad_ref.dtype)
    xpad_ref[1:H + 1, 1:W + 1, :] = x

    # ---- fused 1x1 convs: branch1 + branch2-reduce + branch3-reduce ----
    x2 = x.reshape(M, C_IN)
    y = jnp.dot(x2, w1_ref[...], preferred_element_type=jnp.float32)
    y = jnp.maximum(y + b1_ref[...], 0.0)                 # (M, 640) f32

    oa_ref[0, :, :, 0:C_B1] = y[:, OFF_B1:OFF_B1 + C_B1].reshape(H, W, C_B1)

    # Stage zero-padded 3x3 inputs (branch2: 160ch, branch3: 32ch) in VMEM.
    a2pad_ref[...] = jnp.zeros(a2pad_ref.shape, a2pad_ref.dtype)
    a2pad_ref[1:H + 1, 1:W + 1, :] = (
        y[:, OFF_B2A:OFF_B2A + C_B2A].astype(jnp.bfloat16).reshape(H, W, C_B2A))
    a3pad_ref[...] = jnp.zeros(a3pad_ref.shape, a3pad_ref.dtype)
    a3pad_ref[1:H + 1, 1:W + 1, :] = (
        y[:, OFF_B3A:OFF_B3A + C_B3A].astype(jnp.bfloat16).reshape(H, W, C_B3A))

    # ---- branch2 / branch3: 3x3 conv (pad 1) as 9 shifted-tap matmuls, M = H*W ----
    acc2 = jnp.zeros((M, C_B2), jnp.float32)
    acc3 = jnp.zeros((M, C_B3), jnp.float32)
    for dy in range(3):
        for dx in range(3):
            k = dy * 3 + dx
            tap2 = a2pad_ref[dy:dy + H, dx:dx + W, :].reshape(M, C_B2A)
            acc2 = acc2 + jnp.dot(tap2, w2_ref[k],
                                  preferred_element_type=jnp.float32)
            tap3 = a3pad_ref[dy:dy + H, dx:dx + W, :].reshape(M, C_B3A)
            acc3 = acc3 + jnp.dot(tap3, w3_ref[k],
                                  preferred_element_type=jnp.float32)

    b2 = jnp.maximum(acc2 + b2_ref[...], 0.0)
    oa_ref[0, :, :, C_B1:C_B1 + C_B2] = b2.reshape(H, W, C_B2)

    b3 = jnp.maximum(acc3 + b3_ref[...], 0.0)
    ob_ref[0, :, :, 0:C_B3] = b3.reshape(H, W, C_B3)

    # ---- branch4: 3x3/s1/p1 max pool (separable) fused with the 1x1 conv ----
    xm = jnp.maximum(jnp.maximum(xpad_ref[:, 0:W, :], xpad_ref[:, 1:W + 1, :]),
                     xpad_ref[:, 2:W + 2, :])             # (H+2, W, 832)
    pooled = jnp.maximum(jnp.maximum(xm[0:H], xm[1:H + 1]), xm[2:H + 2])
    y4 = jnp.dot(pooled.reshape(M, C_IN), w4_ref[...],
                 preferred_element_type=jnp.float32)
    b4 = jnp.maximum(y4 + b4_ref[...], 0.0)
    ob_ref[0, :, :, C_B3:C_B3 + C_B4] = b4.reshape(H, W, C_B4)


# ------------------------- parameters / BN folding -------------------------

def _fold_bn(w, gamma, beta, mean, var, eps=EPS):
    # w has Cout as its last axis; conv(x, w)*scale + shift == conv(x, w*scale) + shift
    scale = gamma / jnp.sqrt(var + eps)
    return w * scale, beta - mean * scale


def _init_bn(key, c):
    k1, k2, k3, k4 = jax.random.split(key, 4)
    gamma = 1.0 + 0.1 * jax.random.normal(k1, (c,), jnp.float32)
    beta = 0.1 * jax.random.normal(k2, (c,), jnp.float32)
    mean = 0.1 * jax.random.normal(k3, (c,), jnp.float32)
    var = 0.5 + jax.random.uniform(k4, (c,), jnp.float32)
    return gamma, beta, mean, var


def init_params(key):
    # TODO(synk): torch.load of the pretrained .pth state_dicts has no in-script
    # equivalent; deterministic random BN-folded weights are used instead.
    keys = jax.random.split(key, 12)

    def conv_bn(kw, kb, kh, kwid, cin, cout):
        w = 0.05 * jax.random.normal(kw, (kh, kwid, cin, cout), jnp.float32)  # HWIO
        return _fold_bn(w, *_init_bn(kb, cout))

    return {
        "b1":   conv_bn(keys[0],  keys[1],  1, 1, C_IN, C_B1),
        "b2_1": conv_bn(keys[2],  keys[3],  1, 1, C_IN, C_B2A),
        "b2_2": conv_bn(keys[4],  keys[5],  3, 3, C_B2A, C_B2),
        "b3_1": conv_bn(keys[6],  keys[7],  1, 1, C_IN, C_B3A),
        "b3_2": conv_bn(keys[8],  keys[9],  3, 3, C_B3A, C_B3),
        "b4":   conv_bn(keys[10], keys[11], 1, 1, C_IN, C_B4),
    }


def pack_params(params):
    """Fuse the three x-fed 1x1 convs, reshape 3x3 weights to (tap, Cin, Cout), cast bf16."""
    w1 = jnp.zeros((C_IN, C_FUSED), jnp.float32)
    b1 = jnp.zeros((1, C_FUSED), jnp.float32)
    w1 = w1.at[:, OFF_B1:OFF_B1 + C_B1].set(params["b1"][0][0, 0])
    b1 = b1.at[0, OFF_B1:OFF_B1 + C_B1].set(params["b1"][1])
    w1 = w1.at[:, OFF_B2A:OFF_B2A + C_B2A].set(params["b2_1"][0][0, 0])
    b1 = b1.at[0, OFF_B2A:OFF_B2A + C_B2A].set(params["b2_1"][1])
    w1 = w1.at[:, OFF_B3A:OFF_B3A + C_B3A].set(params["b3_1"][0][0, 0])
    b1 = b1.at[0, OFF_B3A:OFF_B3A + C_B3A].set(params["b3_1"][1])

    return dict(
        w1=w1.astype(jnp.bfloat16), b1=b1,
        w2=params["b2_2"][0].reshape(9, C_B2A, C_B2).astype(jnp.bfloat16),
        b2=params["b2_2"][1].reshape(1, C_B2),
        w3=params["b3_2"][0].reshape(9, C_B3A, C_B3).astype(jnp.bfloat16),
        b3=params["b3_2"][1].reshape(1, C_B3),
        w4=params["b4"][0][0, 0].astype(jnp.bfloat16),
        b4=params["b4"][1].reshape(1, C_B4),
    )


# ------------------------------- forward pass ------------------------------

def inception5a_forward(x_nchw, packed):
    N, C, H, W = x_nchw.shape
    assert C == C_IN
    x = jnp.transpose(x_nchw, (0, 2, 3, 1)).astype(jnp.bfloat16)   # NCHW -> NHWC bf16

    kernel = functools.partial(_inception5a_kernel, H=H, W=W)
    oa, ob = pl.pallas_call(
        kernel,
        out_shape=(jax.ShapeDtypeStruct((N, H, W, C_B1 + C_B2), jnp.float32),
                   jax.ShapeDtypeStruct((N, H, W, C_B3 + C_B4), jnp.float32)),
        grid_spec=pltpu.PrefetchScalarGridSpec(
            num_scalar_prefetch=0,
            grid=(N,),
            in_specs=[
                pl.BlockSpec((1, H, W, C_IN), lambda n: (n, 0, 0, 0)),
                pl.BlockSpec((C_IN, C_FUSED), lambda n: (0, 0)),
                pl.BlockSpec((1, C_FUSED), lambda n: (0, 0)),
                pl.BlockSpec((9, C_B2A, C_B2), lambda n: (0, 0, 0)),
                pl.BlockSpec((1, C_B2), lambda n: (0, 0)),
                pl.BlockSpec((9, C_B3A, C_B3), lambda n: (0, 0, 0)),
                pl.BlockSpec((1, C_B3), lambda n: (0, 0)),
                pl.BlockSpec((C_IN, C_B4), lambda n: (0, 0)),
                pl.BlockSpec((1, C_B4), lambda n: (0, 0)),
            ],
            out_specs=(
                pl.BlockSpec((1, H, W, C_B1 + C_B2), lambda n: (n, 0, 0, 0)),
                pl.BlockSpec((1, H, W, C_B3 + C_B4), lambda n: (n, 0, 0, 0)),
            ),
            scratch_shapes=[
                pltpu.VMEM((H + 2, W + 2, C_B2A), jnp.bfloat16),
                pltpu.VMEM((H + 2, W + 2, C_B3A), jnp.bfloat16),
                pltpu.VMEM((H + 2, W + 2, C_IN), jnp.bfloat16),
            ],
        ),
        compiler_params=pltpu.CompilerParams(
            dimension_semantics=("parallel",)),
    )(x, packed["w1"], packed["b1"], packed["w2"], packed["b2"],
      packed["w3"], packed["b3"], packed["w4"], packed["b4"])

    out = jnp.concatenate([oa, ob], axis=-1)   # fuses with the transpose below in XLA
    return jnp.transpose(out, (0, 3, 1, 2))    # NHWC -> NCHW


# Pure-JAX reference at matching precision (bf16 inputs, f32 accumulation).
def _ref_forward(x_nchw, params):
    x = jnp.transpose(x_nchw, (0, 2, 3, 1)).astype(jnp.bfloat16)

    def conv(h, w, b):
        y = lax.conv_general_dilated(
            h.astype(jnp.bfloat16), w.astype(jnp.bfloat16), (1, 1), "SAME",
            dimension_numbers=("NHWC", "HWIO", "NHWC"),
            preferred_element_type=jnp.float32)
        return jnp.maximum(y + b, 0.0)

    b1 = conv(x, *params["b1"])
    b2 = conv(conv(x, *params["b2_1"]), *params["b2_2"])
    b3 = conv(conv(x, *params["b3_1"]), *params["b3_2"])
    p4 = lax.reduce_window(x.astype(jnp.float32), -jnp.inf, lax.max,
                           (1, 3, 3, 1), (1, 1, 1, 1),
                           [(0, 0), (1, 1), (1, 1), (0, 0)])
    b4 = conv(p4, *params["b4"])
    out = jnp.concatenate([b1, b2, b3, b4], axis=-1)
    return jnp.transpose(out, (0, 3, 1, 2))


if __name__ == "__main__":
    key = jax.random.PRNGKey(0)
    kx, kp = jax.random.split(key)

    # 832 input channels are required by the module's hard-coded conv shapes.
    N, C, H, W = 2, 832, 8, 8
    x = jax.random.normal(kx, (N, C, H, W), jnp.float32)
    params = init_params(kp)
    packed = pack_params(params)

    fwd = jax.jit(inception5a_forward)
    out = jax.block_until_ready(fwd(x, packed))
    assert out.shape == (N, C_B1 + C_B2 + C_B3 + C_B4, H, W), out.shape

    ref = jax.block_until_ready(jax.jit(_ref_forward)(x, params))
    max_err = float(jnp.max(jnp.abs(out - ref)))
    assert jnp.allclose(out, ref, rtol=2e-2, atol=2e-2), max_err

    print("KERNEL_OK")
</pallas_src>

<mosaic_0001>
module attributes {stable_mosaic.version = 11 : i64} {
  func.func @_inception5a_kernel(%arg0: i32, %arg1: memref<1x8x8x832xbf16, #tpu.memory_space<vmem>>, %arg2: memref<832x640xbf16, #tpu.memory_space<vmem>>, %arg3: memref<1x640xf32, #tpu.memory_space<vmem>>, %arg4: memref<9x160x320xbf16, #tpu.memory_space<vmem>>, %arg5: memref<1x320xf32, #tpu.memory_space<vmem>>, %arg6: memref<9x32x128xbf16, #tpu.memory_space<vmem>>, %arg7: memref<1x128xf32, #tpu.memory_space<vmem>>, %arg8: memref<832x128xbf16, #tpu.memory_space<vmem>>, %arg9: memref<1x128xf32, #tpu.memory_space<vmem>>, %arg10: memref<1x8x8x576xf32, #tpu.memory_space<vmem>>, %arg11: memref<1x8x8x256xf32, #tpu.memory_space<vmem>>, %arg12: memref<10x10x160xbf16, #tpu.memory_space<vmem>>, %arg13: memref<10x10x32xbf16, #tpu.memory_space<vmem>>, %arg14: memref<10x10x832xbf16, #tpu.memory_space<vmem>>) attributes {dimension_semantics = [#tpu.dimension_semantics<parallel>], iteration_bounds = array<i64: 2>, scalar_prefetch = 0 : i64, scratch_operands = 3 : i64, tpu.core_type = #tpu.core_type<tc>, window_params = [{transform_indices = @transform_0, window_bounds = array<i64: 1, 8, 8, 832>}, {pipeline_mode = #tpu.pipeline_mode<synchronous>, transform_indices = @transform_1, window_bounds = array<i64: 832, 640>}, {pipeline_mode = #tpu.pipeline_mode<synchronous>, transform_indices = @transform_2, window_bounds = array<i64: 1, 640>}, {pipeline_mode = #tpu.pipeline_mode<synchronous>, transform_indices = @transform_3, window_bounds = array<i64: 9, 160, 320>}, {pipeline_mode = #tpu.pipeline_mode<synchronous>, transform_indices = @transform_4, window_bounds = array<i64: 1, 320>}, {pipeline_mode = #tpu.pipeline_mode<synchronous>, transform_indices = @transform_5, window_bounds = array<i64: 9, 32, 128>}, {pipeline_mode = #tpu.pipeline_mode<synchronous>, transform_indices = @transform_6, window_bounds = array<i64: 1, 128>}, {pipeline_mode = #tpu.pipeline_mode<synchronous>, transform_indices = @transform_7, window_bounds = array<i64: 832, 128>}, {pipeline_mode = #tpu.pipeline_mode<synchronous>, transform_indices = @transform_8, window_bounds = array<i64: 1, 128>}, {transform_indices = @transform_9, window_bounds = array<i64: 1, 8, 8, 576>}, {transform_indices = @transform_10, window_bounds = array<i64: 1, 8, 8, 256>}]} {
    %c0 = arith.constant 0 : index
    %c0_0 = arith.constant 0 : index
    %c0_1 = arith.constant 0 : index
    %c0_2 = arith.constant 0 : index
    %0 = vector.load %arg1[%c0, %c0_0, %c0_1, %c0_2] : memref<1x8x8x832xbf16, #tpu.memory_space<vmem>>, vector<1x8x8x832xbf16>
    %1 = vector.shape_cast %0 : vector<1x8x8x832xbf16> to vector<8x8x832xbf16>
    %cst = arith.constant 0xFF80 : bf16
    %2 = vector.broadcast %cst : bf16 to vector<10x10x832xbf16>
    %c0_3 = arith.constant 0 : index
    %c0_4 = arith.constant 0 : index
    %c0_5 = arith.constant 0 : index
    %3 = vector.load %arg14[%c0_3, %c0_4, %c0_5] : memref<10x10x832xbf16, #tpu.memory_space<vmem>>, vector<10x10x832xbf16>
    tpu.vector_store %arg14[%c0_3, %c0_4, %c0_5], %2 {strides = array<i32>} : memref<10x10x832xbf16, #tpu.memory_space<vmem>>, vector<10x10x832xbf16>,
    %c1 = arith.constant 1 : index
    %c1_6 = arith.constant 1 : index
    %c0_7 = arith.constant 0 : index
    %4 = vector.load %arg14[%c1, %c1_6, %c0_7] : memref<10x10x832xbf16, #tpu.memory_space<vmem>>, vector<8x8x832xbf16>
    tpu.vector_store %arg14[%c1, %c1_6, %c0_7], %1 {strides = array<i32>} : memref<10x10x832xbf16, #tpu.memory_space<vmem>>, vector<8x8x832xbf16>,
    %5 = vector.shape_cast %1 : vector<8x8x832xbf16> to vector<64x832xbf16>
    %c0_8 = arith.constant 0 : index
    %c0_9 = arith.constant 0 : index
    %6 = vector.load %arg2[%c0_8, %c0_9] : memref<832x640xbf16, #tpu.memory_space<vmem>>, vector<832x640xbf16>
    %cst_10 = arith.constant dense<0.000000e+00> : vector<64x640xf32>
    %7 = tpu.matmul %5, %6, %cst_10 {dimension_numbers = #tpu.dot_dimension_numbers<[1], [0], [0], [1], [0, 0, 1, 1], [], []>} : vector<64x832xbf16>, vector<832x640xbf16>, vector<64x640xf32> -> vector<64x640xf32>
    %c0_11 = arith.constant 0 : index
    %c0_12 = arith.constant 0 : index
    %8 = vector.load %arg3[%c0_11, %c0_12] : memref<1x640xf32, #tpu.memory_space<vmem>>, vector<1x640xf32>
    %9 = vector.broadcast %8 : vector<1x640xf32> to vector<64x640xf32>
    %10 = arith.addf %7, %9 : vector<64x640xf32>
    %cst_13 = arith.constant 0.000000e+00 : f32
    %11 = vector.broadcast %cst_13 : f32 to vector<64x640xf32>
    %12 = arith.maximumf %10, %11 : vector<64x640xf32>
    %13 = vector.extract_strided_slice %12 {offsets = [0, 0], sizes = [64, 256], strides = [1, 1]} : vector<64x640xf32> to vector<64x256xf32>
    %14 = vector.shape_cast %13 : vector<64x256xf32> to vector<8x8x256xf32>
    %c0_14 = arith.constant 0 : index
    %c0_15 = arith.constant 0 : index
    %c0_16 = arith.constant 0 : index
    %c0_17 = arith.constant 0 : index
    %15 = vector.load %arg10[%c0_14, %c0_15, %c0_16, %c0_17] : memref<1x8x8x576xf32, #tpu.memory_space<vmem>>, vector<1x8x8x256xf32>
    %16 = vector.shape_cast %15 : vector<1x8x8x256xf32> to vector<8x8x256xf32>
    %17 = vector.shape_cast %14 : vector<8x8x256xf32> to vector<1x8x8x256xf32>
    tpu.vector_store %arg10[%c0_14, %c0_15, %c0_16, %c0_17], %17 {strides = array<i32>} : memref<1x8x8x576xf32, #tpu.memory_space<vmem>>, vector<1x8x8x256xf32>,
    %cst_18 = arith.constant 0.000000e+00 : bf16
    %18 = vector.broadcast %cst_18 : bf16 to vector<10x10x160xbf16>
    %c0_19 = arith.constant 0 : index
    %c0_20 = arith.constant 0 : index
    %c0_21 = arith.constant 0 : index
    %19 = vector.load %arg12[%c0_19, %c0_20, %c0_21] : memref<10x10x160xbf16, #tpu.memory_space<vmem>>, vector<10x10x160xbf16>
    tpu.vector_store %arg12[%c0_19, %c0_20, %c0_21], %18 {strides = array<i32>} : memref<10x10x160xbf16, #tpu.memory_space<vmem>>, vector<10x10x160xbf16>,
    %20 = vector.extract_strided_slice %12 {offsets = [0, 256], sizes = [64, 160], strides = [1, 1]} : vector<64x640xf32> to vector<64x160xf32>
    %21 = arith.truncf %20 : vector<64x160xf32> to vector<64x160xbf16>
    %22 = vector.shape_cast %21 : vector<64x160xbf16> to vector<8x8x160xbf16>
    %c1_22 = arith.constant 1 : index
    %c1_23 = arith.constant 1 : index
    %c0_24 = arith.constant 0 : index
    %23 = vector.load %arg12[%c1_22, %c1_23, %c0_24] : memref<10x10x160xbf16, #tpu.memory_space<vmem>>, vector<8x8x160xbf16>
    tpu.vector_store %arg12[%c1_22, %c1_23, %c0_24], %22 {strides = array<i32>} : memref<10x10x160xbf16, #tpu.memory_space<vmem>>, vector<8x8x160xbf16>,
    %cst_25 = arith.constant 0.000000e+00 : bf16
    %24 = vector.broadcast %cst_25 : bf16 to vector<10x10x32xbf16>
    %c0_26 = arith.constant 0 : index
    %c0_27 = arith.constant 0 : index
    %c0_28 = arith.constant 0 : index
    %25 = vector.load %arg13[%c0_26, %c0_27, %c0_28] : memref<10x10x32xbf16, #tpu.memory_space<vmem>>, vector<10x10x32xbf16>
    tpu.vector_store %arg13[%c0_26, %c0_27, %c0_28], %24 {strides = array<i32>} : memref<10x10x32xbf16, #tpu.memory_space<vmem>>, vector<10x10x32xbf16>,
    %26 = vector.extract_strided_slice %12 {offsets = [0, 512], sizes = [64, 32], strides = [1, 1]} : vector<64x640xf32> to vector<64x32xf32>
    %27 = arith.truncf %26 : vector<64x32xf32> to vector<64x32xbf16>
    %28 = vector.shape_cast %27 : vector<64x32xbf16> to vector<8x8x32xbf16>
    %c1_29 = arith.constant 1 : index
    %c1_30 = arith.constant 1 : index
    %c0_31 = arith.constant 0 : index
    %29 = vector.load %arg13[%c1_29, %c1_30, %c0_31] : memref<10x10x32xbf16, #tpu.memory_space<vmem>>, vector<8x8x32xbf16>
    tpu.vector_store %arg13[%c1_29, %c1_30, %c0_31], %28 {strides = array<i32>} : memref<10x10x32xbf16, #tpu.memory_space<vmem>>, vector<8x8x32xbf16>,
    %cst_32 = arith.constant 0.000000e+00 : f32
    %30 = vector.broadcast %cst_32 : f32 to vector<64x320xf32>
    %cst_33 = arith.constant 0.000000e+00 : f32
    %31 = vector.broadcast %cst_33 : f32 to vector<64x128xf32>
    %c0_34 = arith.constant 0 : index
    %c0_35 = arith.constant 0 : index
    %c0_36 = arith.constant 0 : index
    %32 = vector.load %arg12[%c0_34, %c0_35, %c0_36] : memref<10x10x160xbf16, #tpu.memory_space<vmem>>, vector<8x8x160xbf16>
    %33 = vector.shape_cast %32 : vector<8x8x160xbf16> to vector<64x160xbf16>
    %c0_37 = arith.constant 0 : index
    %c0_38 = arith.constant 0 : index
    %c0_39 = arith.constant 0 : index
    %34 = vector.load %arg4[%c0_37, %c0_38, %c0_39] : memref<9x160x320xbf16, #tpu.memory_space<vmem>>, vector<1x160x320xbf16>
    %35 = vector.shape_cast %34 : vector<1x160x320xbf16> to vector<160x320xbf16>
    %cst_40 = arith.constant dense<0.000000e+00> : vector<64x320xf32>
    %36 = tpu.matmul %33, %35, %cst_40 {dimension_numbers = #tpu.dot_dimension_numbers<[1], [0], [0], [1], [0, 0, 1, 1], [], []>} : vector<64x160xbf16>, vector<160x320xbf16>, vector<64x320xf32> -> vector<64x320xf32>
    %37 = arith.addf %30, %36 : vector<64x320xf32>
    %c0_41 = arith.constant 0 : index
    %c0_42 = arith.constant 0 : index
    %c0_43 = arith.constant 0 : index
    %38 = vector.load %arg13[%c0_41, %c0_42, %c0_43] : memref<10x10x32xbf16, #tpu.memory_space<vmem>>, vector<8x8x32xbf16>
    %39 = vector.shape_cast %38 : vector<8x8x32xbf16> to vector<64x32xbf16>
    %c0_44 = arith.constant 0 : index
    %c0_45 = arith.constant 0 : index
    %c0_46 = arith.constant 0 : index
    %40 = vector.load %arg6[%c0_44, %c0_45, %c0_46] : memref<9x32x128xbf16, #tpu.memory_space<vmem>>, vector<1x32x128xbf16>
    %41 = vector.shape_cast %40 : vector<1x32x128xbf16> to vector<32x128xbf16>
    %cst_47 = arith.constant dense<0.000000e+00> : vector<64x128xf32>
    %42 = tpu.matmul %39, %41, %cst_47 {dimension_numbers = #tpu.dot_dimension_numbers<[1], [0], [0], [1], [0, 0, 1, 1], [], []>} : vector<64x32xbf16>, vector<32x128xbf16>, vector<64x128xf32> -> vector<64x128xf32>
    %43 = arith.addf %31, %42 : vector<64x128xf32>
    %c0_48 = arith.constant 0 : index
    %c1_49 = arith.constant 1 : index
    %c0_50 = arith.constant 0 : index
    %44 = vector.load %arg12[%c0_48, %c1_49, %c0_50] : memref<10x10x160xbf16, #tpu.memory_space<vmem>>, vector<8x8x160xbf16>
    %45 = vector.shape_cast %44 : vector<8x8x160xbf16> to vector<64x160xbf16>
    %c1_51 = arith.constant 1 : index
    %c0_52 = arith.constant 0 : index
    %c0_53 = arith.constant 0 : index
    %46 = vector.load %arg4[%c1_51, %c0_52, %c0_53] : memref<9x160x320xbf16, #tpu.memory_space<vmem>>, vector<1x160x320xbf16>
    %47 = vector.shape_cast %46 : vector<1x160x320xbf16> to vector<160x320xbf16>
    %cst_54 = arith.constant dense<0.000000e+00> : vector<64x320xf32>
    %48 = tpu.matmul %45, %47, %cst_54 {dimension_numbers = #tpu.dot_dimension_numbers<[1], [0], [0], [1], [0, 0, 1, 1], [], []>} : vector<64x160xbf16>, vector<160x320xbf16>, vector<64x320xf32> -> vector<64x320xf32>
    %49 = arith.addf %37, %48 : vector<64x320xf32>
    %c0_55 = arith.constant 0 : index
    %c1_56 = arith.constant 1 : index
    %c0_57 = arith.constant 0 : index
    %50 = vector.load %arg13[%c0_55, %c1_56, %c0_57] : memref<10x10x32xbf16, #tpu.memory_space<vmem>>, vector<8x8x32xbf16>
    %51 = vector.shape_cast %50 : vector<8x8x32xbf16> to vector<64x32xbf16>
    %c1_58 = arith.constant 1 : index
    %c0_59 = arith.constant 0 : index
    %c0_60 = arith.constant 0 : index
    %52 = vector.load %arg6[%c1_58, %c0_59, %c0_60] : memref<9x32x128xbf16, #tpu.memory_space<vmem>>, vector<1x32x128xbf16>
    %53 = vector.shape_cast %52 : vector<1x32x128xbf16> to vector<32x128xbf16>
    %cst_61 = arith.constant dense<0.000000e+00> : vector<64x128xf32>
    %54 = tpu.matmul %51, %53, %cst_61 {dimension_numbers = #tpu.dot_dimension_numbers<[1], [0], [0], [1], [0, 0, 1, 1], [], []>} : vector<64x32xbf16>, vector<32x128xbf16>, vector<64x128xf32> -> vector<64x128xf32>
    %55 = arith.addf %43, %54 : vector<64x128xf32>
    %c0_62 = arith.constant 0 : index
    %c2 = arith.constant 2 : index
    %c0_63 = arith.constant 0 : index
    %56 = vector.load %arg12[%c0_62, %c2, %c0_63] : memref<10x10x160xbf16, #tpu.memory_space<vmem>>, vector<8x8x160xbf16>
    %57 = vector.shape_cast %56 : vector<8x8x160xbf16> to vector<64x160xbf16>
    %c2_64 = arith.constant 2 : index
    %c0_65 = arith.constant 0 : index
    %c0_66 = arith.constant 0 : index
    %58 = vector.load %arg4[%c2_64, %c0_65, %c0_66] : memref<9x160x320xbf16, #tpu.memory_space<vmem>>, vector<1x160x320xbf16>
    %59 = vector.shape_cast %58 : vector<1x160x320xbf16> to vector<160x320xbf16>
    %cst_67 = arith.constant dense<0.000000e+00> : vector<64x320xf32>
    %60 = tpu.matmul %57, %59, %cst_67 {dimension_numbers = #tpu.dot_dimension_numbers<[1], [0], [0], [1], [0, 0, 1, 1], [], []>} : vector<64x160xbf16>, vector<160x320xbf16>, vector<64x320xf32> -> vector<64x320xf32>
    %61 = arith.addf %49, %60 : vector<64x320xf32>
    %c0_68 = arith.constant 0 : index
    %c2_69 = arith.constant 2 : index
    %c0_70 = arith.constant 0 : index
    %62 = vector.load %arg13[%c0_68, %c2_69, %c0_70] : memref<10x10x32xbf16, #tpu.memory_space<vmem>>, vector<8x8x32xbf16>
    %63 = vector.shape_cast %62 : vector<8x8x32xbf16> to vector<64x32xbf16>
    %c2_71 = arith.constant 2 : index
    %c0_72 = arith.constant 0 : index
    %c0_73 = arith.constant 0 : index
    %64 = vector.load %arg6[%c2_71, %c0_72, %c0_73] : memref<9x32x128xbf16, #tpu.memory_space<vmem>>, vector<1x32x128xbf16>
    %65 = vector.shape_cast %64 : vector<1x32x128xbf16> to vector<32x128xbf16>
    %cst_74 = arith.constant dense<0.000000e+00> : vector<64x128xf32>
    %66 = tpu.matmul %63, %65, %cst_74 {dimension_numbers = #tpu.dot_dimension_numbers<[1], [0], [0], [1], [0, 0, 1, 1], [], []>} : vector<64x32xbf16>, vector<32x128xbf16>, vector<64x128xf32> -> vector<64x128xf32>
    %67 = arith.addf %55, %66 : vector<64x128xf32>
    %c1_75 = arith.constant 1 : index
    %c0_76 = arith.constant 0 : index
    %c0_77 = arith.constant 0 : index
    %68 = vector.load %arg12[%c1_75, %c0_76, %c0_77] : memref<10x10x160xbf16, #tpu.memory_space<vmem>>, vector<8x8x160xbf16>
    %69 = vector.shape_cast %68 : vector<8x8x160xbf16> to vector<64x160xbf16>
    %c3 = arith.constant 3 : index
    %c0_78 = arith.constant 0 : index
    %c0_79 = arith.constant 0 : index
    %70 = vector.load %arg4[%c3, %c0_78, %c0_79] : memref<9x160x320xbf16, #tpu.memory_space<vmem>>, vector<1x160x320xbf16>
    %71 = vector.shape_cast %70 : vector<1x160x320xbf16> to vector<160x320xbf16>
    %cst_80 = arith.constant dense<0.000000e+00> : vector<64x320xf32>
    %72 = tpu.matmul %69, %71, %cst_80 {dimension_numbers = #tpu.dot_dimension_numbers<[1], [0], [0], [1], [0, 0, 1, 1], [], []>} : vector<64x160xbf16>, vector<160x320xbf16>, vector<64x320xf32> -> vector<64x320xf32>
    %73 = arith.addf %61, %72 : vector<64x320xf32>
    %c1_81 = arith.constant 1 : index
    %c0_82 = arith.constant 0 : index
    %c0_83 = arith.constant 0 : index
    %74 = vector.load %arg13[%c1_81, %c0_82, %c0_83] : memref<10x10x32xbf16, #tpu.memory_space<vmem>>, vector<8x8x32xbf16>
    %75 = vector.shape_cast %74 : vector<8x8x32xbf16> to vector<64x32xbf16>
    %c3_84 = arith.constant 3 : index
    %c0_85 = arith.constant 0 : index
    %c0_86 = arith.constant 0 : index
    %76 = vector.load %arg6[%c3_84, %c0_85, %c0_86] : memref<9x32x128xbf16, #tpu.memory_space<vmem>>, vector<1x32x128xbf16>
    %77 = vector.shape_cast %76 : vector<1x32x128xbf16> to vector<32x128xbf16>
    %cst_87 = arith.constant dense<0.000000e+00> : vector<64x128xf32>
    %78 = tpu.matmul %75, %77, %cst_87 {dimension_numbers = #tpu.dot_dimension_numbers<[1], [0], [0], [1], [0, 0, 1, 1], [], []>} : vector<64x32xbf16>, vector<32x128xbf16>, vector<64x128xf32> -> vector<64x128xf32>
    %79 = arith.addf %67, %78 : vector<64x128xf32>
    %c1_88 = arith.constant 1 : index
    %c1_89 = arith.constant 1 : index
    %c0_90 = arith.constant 0 : index
    %80 = vector.load %arg12[%c1_88, %c1_89, %c0_90] : memref<10x10x160xbf16, #tpu.memory_space<vmem>>, vector<8x8x160xbf16>
    %81 = vector.shape_cast %80 : vector<8x8x160xbf16> to vector<64x160xbf16>
    %c4 = arith.constant 4 : index
    %c0_91 = arith.constant 0 : index
    %c0_92 = arith.constant 0 : index
    %82 = vector.load %arg4[%c4, %c0_91, %c0_92] : memref<9x160x320xbf16, #tpu.memory_space<vmem>>, vector<1x160x320xbf16>
    %83 = vector.shape_cast %82 : vector<1x160x320xbf16> to vector<160x320xbf16>
    %cst_93 = arith.constant dense<0.000000e+00> : vector<64x320xf32>
    %84 = tpu.matmul %81, %83, %cst_93 {dimension_numbers = #tpu.dot_dimension_numbers<[1], [0], [0], [1], [0, 0, 1, 1], [], []>} : vector<64x160xbf16>, vector<160x320xbf16>, vector<64x320xf32> -> vector<64x320xf32>
    %85 = arith.addf %73, %84 : vector<64x320xf32>
    %c1_94 = arith.constant 1 : index
    %c1_95 = arith.constant 1 : index
    %c0_96 = arith.constant 0 : index
    %86 = vector.load %arg13[%c1_94, %c1_95, %c0_96] : memref<10x10x32xbf16, #tpu.memory_space<vmem>>, vector<8x8x32xbf16>
    %87 = vector.shape_cast %86 : vector<8x8x32xbf16> to vector<64x32xbf16>
    %c4_97 = arith.constant 4 : index
    %c0_98 = arith.constant 0 : index
    %c0_99 = arith.constant 0 : index
    %88 = vector.load %arg6[%c4_97, %c0_98, %c0_99] : memref<9x32x128xbf16, #tpu.memory_space<vmem>>, vector<1x32x128xbf16>
    %89 = vector.shape_cast %88 : vector<1x32x128xbf16> to vector<32x128xbf16>
    %cst_100 = arith.constant dense<0.000000e+00> : vector<64x128xf32>
    %90 = tpu.matmul %87, %89, %cst_100 {dimension_numbers = #tpu.dot_dimension_numbers<[1], [0], [0], [1], [0, 0, 1, 1], [], []>} : vector<64x32xbf16>, vector<32x128xbf16>, vector<64x128xf32> -> vector<64x128xf32>
    %91 = arith.addf %79, %90 : vector<64x128xf32>
    %c1_101 = arith.constant 1 : index
    %c2_102 = arith.constant 2 : index
    %c0_103 = arith.constant 0 : index
    %92 = vector.load %arg12[%c1_101, %c2_102, %c0_103] : memref<10x10x160xbf16, #tpu.memory_space<vmem>>, vector<8x8x160xbf16>
    %93 = vector.shape_cast %92 : vector<8x8x160xbf16> to vector<64x160xbf16>
    %c5 = arith.constant 5 : index
    %c0_104 = arith.constant 0 : index
    %c0_105 = arith.constant 0 : index
    %94 = vector.load %arg4[%c5, %c0_104, %c0_105] : memref<9x160x320xbf16, #tpu.memory_space<vmem>>, vector<1x160x320xbf16>
    %95 = vector.shape_cast %94 : vector<1x160x320xbf16> to vector<160x320xbf16>
    %cst_106 = arith.constant dense<0.000000e+00> : vector<64x320xf32>
    %96 = tpu.matmul %93, %95, %cst_106 {dimension_numbers = #tpu.dot_dimension_numbers<[1], [0], [0], [1], [0, 0, 1, 1], [], []>} : vector<64x160xbf16>, vector<160x320xbf16>, vector<64x320xf32> -> vector<64x320xf32>
    %97 = arith.addf %85, %96 : vector<64x320xf32>
    %c1_107 = arith.constant 1 : index
    %c2_108 = arith.constant 2 : index
    %c0_109 = arith.constant 0 : index
    %98 = vector.load %arg13[%c1_107, %c2_108, %c0_109] : memref<10x10x32xbf16, #tpu.memory_space<vmem>>, vector<8x8x32xbf16>
    %99 = vector.shape_cast %98 : vector<8x8x32xbf16> to vector<64x32xbf16>
    %c5_110 = arith.constant 5 : index
    %c0_111 = arith.constant 0 : index
    %c0_112 = arith.constant 0 : index
    %100 = vector.load %arg6[%c5_110, %c0_111, %c0_112] : memref<9x32x128xbf16, #tpu.memory_space<vmem>>, vector<1x32x128xbf16>
    %101 = vector.shape_cast %100 : vector<1x32x128xbf16> to vector<32x128xbf16>
    %cst_113 = arith.constant dense<0.000000e+00> : vector<64x128xf32>
    %102 = tpu.matmul %99, %101, %cst_113 {dimension_numbers = #tpu.dot_dimension_numbers<[1], [0], [0], [1], [0, 0, 1, 1], [], []>} : vector<64x32xbf16>, vector<32x128xbf16>, vector<64x128xf32> -> vector<64x128xf32>
    %103 = arith.addf %91, %102 : vector<64x128xf32>
    %c2_114 = arith.constant 2 : index
    %c0_115 = arith.constant 0 : index
    %c0_116 = arith.constant 0 : index
    %104 = vector.load %arg12[%c2_114, %c0_115, %c0_116] : memref<10x10x160xbf16, #tpu.memory_space<vmem>>, vector<8x8x160xbf16>
    %105 = vector.shape_cast %104 : vector<8x8x160xbf16> to vector<64x160xbf16>
    %c6 = arith.constant 6 : index
    %c0_117 = arith.constant 0 : index
    %c0_118 = arith.constant 0 : index
    %106 = vector.load %arg4[%c6, %c0_117, %c0_118] : memref<9x160x320xbf16, #tpu.memory_space<vmem>>, vector<1x160x320xbf16>
    %107 = vector.shape_cast %106 : vector<1x160x320xbf16> to vector<160x320xbf16>
    %cst_119 = arith.constant dense<0.000000e+00> : vector<64x320xf32>
    %108 = tpu.matmul %105, %107, %cst_119 {dimension_numbers = #tpu.dot_dimension_numbers<[1], [0], [0], [1], [0, 0, 1, 1], [], []>} : vector<64x160xbf16>, vector<160x320xbf16>, vector<64x320xf32> -> vector<64x320xf32>
    %109 = arith.addf %97, %108 : vector<64x320xf32>
    %c2_120 = arith.constant 2 : index
    %c0_121 = arith.constant 0 : index
    %c0_122 = arith.constant 0 : index
    %110 = vector.load %arg13[%c2_120, %c0_121, %c0_122] : memref<10x10x32xbf16, #tpu.memory_space<vmem>>, vector<8x8x32xbf16>
    %111 = vector.shape_cast %110 : vector<8x8x32xbf16> to vector<64x32xbf16>
    %c6_123 = arith.constant 6 : index
    %c0_124 = arith.constant 0 : index
    %c0_125 = arith.constant 0 : index
    %112 = vector.load %arg6[%c6_123, %c0_124, %c0_125] : memref<9x32x128xbf16, #tpu.memory_space<vmem>>, vector<1x32x128xbf16>
    %113 = vector.shape_cast %112 : vector<1x32x128xbf16> to vector<32x128xbf16>
    %cst_126 = arith.constant dense<0.000000e+00> : vector<64x128xf32>
    %114 = tpu.matmul %111, %113, %cst_126 {dimension_numbers = #tpu.dot_dimension_numbers<[1], [0], [0], [1], [0, 0, 1, 1], [], []>} : vector<64x32xbf16>, vector<32x128xbf16>, vector<64x128xf32> -> vector<64x128xf32>
    %115 = arith.addf %103, %114 : vector<64x128xf32>
    %c2_127 = arith.constant 2 : index
    %c1_128 = arith.constant 1 : index
    %c0_129 = arith.constant 0 : index
    %116 = vector.load %arg12[%c2_127, %c1_128, %c0_129] : memref<10x10x160xbf16, #tpu.memory_space<vmem>>, vector<8x8x160xbf16>
    %117 = vector.shape_cast %116 : vector<8x8x160xbf16> to vector<64x160xbf16>
    %c7 = arith.constant 7 : index
    %c0_130 = arith.constant 0 : index
    %c0_131 = arith.constant 0 : index
    %118 = vector.load %arg4[%c7, %c0_130, %c0_131] : memref<9x160x320xbf16, #tpu.memory_space<vmem>>, vector<1x160x320xbf16>
    %119 = vector.shape_cast %118 : vector<1x160x320xbf16> to vector<160x320xbf16>
    %cst_132 = arith.constant dense<0.000000e+00> : vector<64x320xf32>
    %120 = tpu.matmul %117, %119, %cst_132 {dimension_numbers = #tpu.dot_dimension_numbers<[1], [0], [0], [1], [0, 0, 1, 1], [], []>} : vector<64x160xbf16>, vector<160x320xbf16>, vector<64x320xf32> -> vector<64x320xf32>
    %121 = arith.addf %109, %120 : vector<64x320xf32>
    %c2_133 = arith.constant 2 : index
    %c1_134 = arith.constant 1 : index
    %c0_135 = arith.constant 0 : index
    %122 = vector.load %arg13[%c2_133, %c1_134, %c0_135] : memref<10x10x32xbf16, #tpu.memory_space<vmem>>, vector<8x8x32xbf16>
    %123 = vector.shape_cast %122 : vector<8x8x32xbf16> to vector<64x32xbf16>
    %c7_136 = arith.constant 7 : index
    %c0_137 = arith.constant 0 : index
    %c0_138 = arith.constant 0 : index
    %124 = vector.load %arg6[%c7_136, %c0_137, %c0_138] : memref<9x32x128xbf16, #tpu.memory_space<vmem>>, vector<1x32x128xbf16>
    %125 = vector.shape_cast %124 : vector<1x32x128xbf16> to vector<32x128xbf16>
    %cst_139 = arith.constant dense<0.000000e+00> : vector<64x128xf32>
    %126 = tpu.matmul %123, %125, %cst_139 {dimension_numbers = #tpu.dot_dimension_numbers<[1], [0], [0], [1], [0, 0, 1, 1], [], []>} : vector<64x32xbf16>, vector<32x128xbf16>, vector<64x128xf32> -> vector<64x128xf32>
    %127 = arith.addf %115, %126 : vector<64x128xf32>
    %c2_140 = arith.constant 2 : index
    %c2_141 = arith.constant 2 : index
    %c0_142 = arith.constant 0 : index
    %128 = vector.load %arg12[%c2_140, %c2_141, %c0_142] : memref<10x10x160xbf16, #tpu.memory_space<vmem>>, vector<8x8x160xbf16>
    %129 = vector.shape_cast %128 : vector<8x8x160xbf16> to vector<64x160xbf16>
    %c8 = arith.constant 8 : index
    %c0_143 = arith.constant 0 : index
    %c0_144 = arith.constant 0 : index
    %130 = vector.load %arg4[%c8, %c0_143, %c0_144] : memref<9x160x320xbf16, #tpu.memory_space<vmem>>, vector<1x160x320xbf16>
    %131 = vector.shape_cast %130 : vector<1x160x320xbf16> to vector<160x320xbf16>
    %cst_145 = arith.constant dense<0.000000e+00> : vector<64x320xf32>
    %132 = tpu.matmul %129, %131, %cst_145 {dimension_numbers = #tpu.dot_dimension_numbers<[1], [0], [0], [1], [0, 0, 1, 1], [], []>} : vector<64x160xbf16>, vector<160x320xbf16>, vector<64x320xf32> -> vector<64x320xf32>
    %133 = arith.addf %121, %132 : vector<64x320xf32>
    %c2_146 = arith.constant 2 : index
    %c2_147 = arith.constant 2 : index
    %c0_148 = arith.constant 0 : index
    %134 = vector.load %arg13[%c2_146, %c2_147, %c0_148] : memref<10x10x32xbf16, #tpu.memory_space<vmem>>, vector<8x8x32xbf16>
    %135 = vector.shape_cast %134 : vector<8x8x32xbf16> to vector<64x32xbf16>
    %c8_149 = arith.constant 8 : index
    %c0_150 = arith.constant 0 : index
    %c0_151 = arith.constant 0 : index
    %136 = vector.load %arg6[%c8_149, %c0_150, %c0_151] : memref<9x32x128xbf16, #tpu.memory_space<vmem>>, vector<1x32x128xbf16>
    %137 = vector.shape_cast %136 : vector<1x32x128xbf16> to vector<32x128xbf16>
    %cst_152 = arith.constant dense<0.000000e+00> : vector<64x128xf32>
    %138 = tpu.matmul %135, %137, %cst_152 {dimension_numbers = #tpu.dot_dimension_numbers<[1], [0], [0], [1], [0, 0, 1, 1], [], []>} : vector<64x32xbf16>, vector<32x128xbf16>, vector<64x128xf32> -> vector<64x128xf32>
    %139 = arith.addf %127, %138 : vector<64x128xf32>
    %c0_153 = arith.constant 0 : index
    %c0_154 = arith.constant 0 : index
    %140 = vector.load %arg5[%c0_153, %c0_154] : memref<1x320xf32, #tpu.memory_space<vmem>>, vector<1x320xf32>
    %141 = vector.broadcast %140 : vector<1x320xf32> to vector<64x320xf32>
    %142 = arith.addf %133, %141 : vector<64x320xf32>
    %cst_155 = arith.constant 0.000000e+00 : f32
    %143 = vector.broadcast %cst_155 : f32 to vector<64x320xf32>
    %144 = arith.maximumf %142, %143 : vector<64x320xf32>
    %145 = vector.shape_cast %144 : vector<64x320xf32> to vector<8x8x320xf32>
    %c0_156 = arith.constant 0 : index
    %c0_157 = arith.constant 0 : index
    %c0_158 = arith.constant 0 : index
    %c256 = arith.constant 256 : index
    %146 = vector.load %arg10[%c0_156, %c0_157, %c0_158, %c256] : memref<1x8x8x576xf32, #tpu.memory_space<vmem>>, vector<1x8x8x320xf32>
    %147 = vector.shape_cast %146 : vector<1x8x8x320xf32> to vector<8x8x320xf32>
    %148 = vector.shape_cast %145 : vector<8x8x320xf32> to vector<1x8x8x320xf32>
    tpu.vector_store %arg10[%c0_156, %c0_157, %c0_158, %c256], %148 {strides = array<i32>} : memref<1x8x8x576xf32, #tpu.memory_space<vmem>>, vector<1x8x8x320xf32>,
    %c0_159 = arith.constant 0 : index
    %c0_160 = arith.constant 0 : index
    %149 = vector.load %arg7[%c0_159, %c0_160] : memref<1x128xf32, #tpu.memory_space<vmem>>, vector<1x128xf32>
    %150 = vector.broadcast %149 : vector<1x128xf32> to vector<64x128xf32>
    %151 = arith.addf %139, %150 : vector<64x128xf32>
    %cst_161 = arith.constant 0.000000e+00 : f32
    %152 = vector.broadcast %cst_161 : f32 to vector<64x128xf32>
    %153 = arith.maximumf %151, %152 : vector<64x128xf32>
    %154 = vector.shape_cast %153 : vector<64x128xf32> to vector<8x8x128xf32>
    %c0_162 = arith.constant 0 : index
    %c0_163 = arith.constant 0 : index
    %c0_164 = arith.constant 0 : index
    %c0_165 = arith.constant 0 : index
    %155 = vector.load %arg11[%c0_162, %c0_163, %c0_164, %c0_165] : memref<1x8x8x256xf32, #tpu.memory_space<vmem>>, vector<1x8x8x128xf32>
    %156 = vector.shape_cast %155 : vector<1x8x8x128xf32> to vector<8x8x128xf32>
    %157 = vector.shape_cast %154 : vector<8x8x128xf32> to vector<1x8x8x128xf32>
    tpu.vector_store %arg11[%c0_162, %c0_163, %c0_164, %c0_165], %157 {strides = array<i32>} : memref<1x8x8x256xf32, #tpu.memory_space<vmem>>, vector<1x8x8x128xf32>,
    %c0_166 = arith.constant 0 : index
    %c0_167 = arith.constant 0 : index
    %c0_168 = arith.constant 0 : index
    %158 = vector.load %arg14[%c0_166, %c0_167, %c0_168] : memref<10x10x832xbf16, #tpu.memory_space<vmem>>, vector<10x8x832xbf16>
    %c0_169 = arith.constant 0 : index
    %c1_170 = arith.constant 1 : index
    %c0_171 = arith.constant 0 : index
    %159 = vector.load %arg14[%c0_169, %c1_170, %c0_171] : memref<10x10x832xbf16, #tpu.memory_space<vmem>>, vector<10x8x832xbf16>
    %160 = arith.maximumf %158, %159 : vector<10x8x832xbf16>
    %c0_172 = arith.constant 0 : index
    %c2_173 = arith.constant 2 : index
    %c0_174 = arith.constant 0 : index
    %161 = vector.load %arg14[%c0_172, %c2_173, %c0_174] : memref<10x10x832xbf16, #tpu.memory_space<vmem>>, vector<10x8x832xbf16>
    %162 = arith.maximumf %160, %161 : vector<10x8x832xbf16>
    %163 = vector.extract_strided_slice %162 {offsets = [0, 0, 0], sizes = [8, 8, 832], strides = [1, 1, 1]} : vector<10x8x832xbf16> to vector<8x8x832xbf16>
    %164 = vector.extract_strided_slice %162 {offsets = [1, 0, 0], sizes = [8, 8, 832], strides = [1, 1, 1]} : vector<10x8x832xbf16> to vector<8x8x832xbf16>
    %165 = arith.maximumf %163, %164 : vector<8x8x832xbf16>
    %166 = vector.extract_strided_slice %162 {offsets = [2, 0, 0], sizes = [8, 8, 832], strides = [1, 1, 1]} : vector<10x8x832xbf16> to vector<8x8x832xbf16>
    %167 = arith.maximumf %165, %166 : vector<8x8x832xbf16>
    %168 = vector.shape_cast %167 : vector<8x8x832xbf16> to vector<64x832xbf16>
    %c0_175 = arith.constant 0 : index
    %c0_176 = arith.constant 0 : index
    %169 = vector.load %arg8[%c0_175, %c0_176] : memref<832x128xbf16, #tpu.memory_space<vmem>>, vector<832x128xbf16>
    %cst_177 = arith.constant dense<0.000000e+00> : vector<64x128xf32>
    %170 = tpu.matmul %168, %169, %cst_177 {dimension_numbers = #tpu.dot_dimension_numbers<[1], [0], [0], [1], [0, 0, 1, 1], [], []>} : vector<64x832xbf16>, vector<832x128xbf16>, vector<64x128xf32> -> vector<64x128xf32>
    %c0_178 = arith.constant 0 : index
    %c0_179 = arith.constant 0 : index
    %171 = vector.load %arg9[%c0_178, %c0_179] : memref<1x128xf32, #tpu.memory_space<vmem>>, vector<1x128xf32>
    %172 = vector.broadcast %171 : vector<1x128xf32> to vector<64x128xf32>
    %173 = arith.addf %170, %172 : vector<64x128xf32>
    %cst_180 = arith.constant 0.000000e+00 : f32
    %174 = vector.broadcast %cst_180 : f32 to vector<64x128xf32>
    %175 = arith.maximumf %173, %174 : vector<64x128xf32>
    %176 = vector.shape_cast %175 : vector<64x128xf32> to vector<8x8x128xf32>
    %c0_181 = arith.constant 0 : index
    %c0_182 = arith.constant 0 : index
    %c0_183 = arith.constant 0 : index
    %c128 = arith.constant 128 : index
    %177 = vector.load %arg11[%c0_181, %c0_182, %c0_183, %c128] : memref<1x8x8x256xf32, #tpu.memory_space<vmem>>, vector<1x8x8x128xf32>
    %178 = vector.shape_cast %177 : vector<1x8x8x128xf32> to vector<8x8x128xf32>
    %179 = vector.shape_cast %176 : vector<8x8x128xf32> to vector<1x8x8x128xf32>
    tpu.vector_store %arg11[%c0_181, %c0_182, %c0_183, %c128], %179 {strides = array<i32>} : memref<1x8x8x256xf32, #tpu.memory_space<vmem>>, vector<1x8x8x128xf32>,
    return
  }
  func.func @transform_0(%arg0: i32) -> (i32, i32, i32, i32) {
    %c0_i32 = arith.constant 0 : i32
    %c0_i32_0 = arith.constant 0 : i32
    %c0_i32_1 = arith.constant 0 : i32
    %c0_i32_2 = arith.constant 0 : i32
    return %arg0, %c0_i32, %c0_i32_0, %c0_i32_1 : i32, i32, i32, i32
  }
  func.func @transform_1(%arg0: i32) -> (i32, i32) {
    %c0_i32 = arith.constant 0 : i32
    %c0_i32_0 = arith.constant 0 : i32
    %c0_i32_1 = arith.constant 0 : i32
    return %c0_i32, %c0_i32_0 : i32, i32
  }
  func.func @transform_2(%arg0: i32) -> (i32, i32) {
    %c0_i32 = arith.constant 0 : i32
    %c0_i32_0 = arith.constant 0 : i32
    %c0_i32_1 = arith.constant 0 : i32
    return %c0_i32, %c0_i32_0 : i32, i32
  }
  func.func @transform_3(%arg0: i32) -> (i32, i32, i32) {
    %c0_i32 = arith.constant 0 : i32
    %c0_i32_0 = arith.constant 0 : i32
    %c0_i32_1 = arith.constant 0 : i32
    %c0_i32_2 = arith.constant 0 : i32
    return %c0_i32, %c0_i32_0, %c0_i32_1 : i32, i32, i32
  }
  func.func @transform_4(%arg0: i32) -> (i32, i32) {
    %c0_i32 = arith.constant 0 : i32
    %c0_i32_0 = arith.constant 0 : i32
    %c0_i32_1 = arith.constant 0 : i32
    return %c0_i32, %c0_i32_0 : i32, i32
  }
  func.func @transform_5(%arg0: i32) -> (i32, i32, i32) {
    %c0_i32 = arith.constant 0 : i32
    %c0_i32_0 = arith.constant 0 : i32
    %c0_i32_1 = arith.constant 0 : i32
    %c0_i32_2 = arith.constant 0 : i32
    return %c0_i32, %c0_i32_0, %c0_i32_1 : i32, i32, i32
  }
  func.func @transform_6(%arg0: i32) -> (i32, i32) {
    %c0_i32 = arith.constant 0 : i32
    %c0_i32_0 = arith.constant 0 : i32
    %c0_i32_1 = arith.constant 0 : i32
    return %c0_i32, %c0_i32_0 : i32, i32
  }
  func.func @transform_7(%arg0: i32) -> (i32, i32) {
    %c0_i32 = arith.constant 0 : i32
    %c0_i32_0 = arith.constant 0 : i32
    %c0_i32_1 = arith.constant 0 : i32
    return %c0_i32, %c0_i32_0 : i32, i32
  }
  func.func @transform_8(%arg0: i32) -> (i32, i32) {
    %c0_i32 = arith.constant 0 : i32
    %c0_i32_0 = arith.constant 0 : i32
    %c0_i32_1 = arith.constant 0 : i32
    return %c0_i32, %c0_i32_0 : i32, i32
  }
  func.func @transform_9(%arg0: i32) -> (i32, i32, i32, i32) {
    %c0_i32 = arith.constant 0 : i32
    %c0_i32_0 = arith.constant 0 : i32
    %c0_i32_1 = arith.constant 0 : i32
    %c0_i32_2 = arith.constant 0 : i32
    return %arg0, %c0_i32, %c0_i32_0, %c0_i32_1 : i32, i32, i32, i32
  }
  func.func @transform_10(%arg0: i32) -> (i32, i32, i32, i32) {
    %c0_i32 = arith.constant 0 : i32
    %c0_i32_0 = arith.constant 0 : i32
    %c0_i32_1 = arith.constant 0 : i32
    %c0_i32_2 = arith.constant 0 : i32
    return %arg0, %c0_i32, %c0_i32_0, %c0_i32_1 : i32, i32, i32, i32
  }
}

</mosaic_0001>

<llo_original>
// kernel: inception5a_forward.1
$region0: #{inception5a_forward.1}
  #allocation0 [shape = 'u32[]', space=smem, size = 0x4, offset = 0x4, fixed_abs, tag = 'smem constant byte address 0x4 - core index']
  #allocation1 [shape = 'u32[144,128]{1,0:T(1,128)}', space=vmem, size = 0x12000, scoped, tag = 'internal scratch']
  #allocation2 [shape = 'bf16[10,10,160]{2,1,0:T(8,128)(2,1)}', space=vmem, size = 0x14000, scoped, tag = 'scratch operand']
  #allocation3 [shape = 'bf16[10,10,32]{2,1,0:T(8,128)(2,1)}', space=vmem, size = 0xa000, scoped, tag = 'scratch operand']
  #allocation4 [shape = 'bf16[10,10,832]{2,1,0:T(8,128)(2,1)}', space=vmem, size = 0x46000, scoped, tag = 'scratch operand']
  %s0 = inlined_call_operand.vmem [shape: bf16[2,8,8,832], index: 0, kind: input, shape index: {}]
  %s1 = inlined_call_operand.hbm [shape: bf16[832,640], index: 1, kind: input, shape index: {}]
  %s2 = inlined_call_operand.hbm [shape: f32[1,640], index: 2, kind: input, shape index: {}]
  %s3 = inlined_call_operand.hbm [shape: bf16[9,160,320], index: 3, kind: input, shape index: {}]
  %s4 = inlined_call_operand.hbm [shape: f32[1,320], index: 4, kind: input, shape index: {}]
  %s5 = inlined_call_operand.hbm [shape: bf16[9,32,128], index: 5, kind: input, shape index: {}]
  %s6 = inlined_call_operand.hbm [shape: f32[1,128], index: 6, kind: input, shape index: {}]
  %s7 = inlined_call_operand.hbm [shape: bf16[832,128], index: 7, kind: input, shape index: {}]
  %s8 = inlined_call_operand.hbm [shape: f32[1,128], index: 8, kind: input, shape index: {}]
  %s9 = inlined_call_operand.vmem [shape: f32[2,8,8,576], index: 9, kind: output, shape index: {0}]
  %s10 = inlined_call_operand.vmem [shape: f32[2,8,8,256], index: 10, kind: output, shape index: {1}]
  %11 = xla_tuple %s9, %s10
  %s12 = sld [smem:[#allocation0]]
  $region109: #{inception5a_forward.1} parent=0
    _
  %s14 = ssub.s32 1, %s12
  %s15 = scalar_select 0, %s14, %s12
  $region1: #{inception5a_forward.1} parent=0
    #allocation5 [shape = 'u8[1064960]{0}', space=vmem, size = 0x104000, scoped, tag = 'input window, operand 1, single buffered']
    #allocation6 [shape = 's32[2]{0}', space=sflag, size = 0x8, scoped, tag = 'scoped memory for inception5a_forward.1']
    #allocation7 [shape = 'u8[2560]{0}', space=vmem, size = 0xc00, scoped, tag = 'input window, operand 2, single buffered']
    #allocation8 [shape = 's32[1]{0}', space=sflag, size = 0x4, scoped, tag = 'scoped memory for inception5a_forward.1']
    #allocation9 [shape = 'u8[1105920]{0}', space=vmem, size = 0x10e000, scoped, tag = 'input window, operand 3, single buffered']
    #allocation10 [shape = 'u8[1536]{0}', space=vmem, size = 0x800, scoped, tag = 'input window, operand 4, single buffered']
    #allocation11 [shape = 's32[1]{0}', space=sflag, size = 0x4, scoped, tag = 'scoped memory for inception5a_forward.1']
    #allocation12 [shape = 'u8[73728]{0}', space=vmem, size = 0x12000, scoped, tag = 'input window, operand 5, single buffered']
    #allocation13 [shape = 'u8[512]{0}', space=vmem, size = 0x400, scoped, tag = 'input window, operand 6, single buffered']
    #allocation14 [shape = 's32[1]{0}', space=sflag, size = 0x4, scoped, tag = 'scoped memory for inception5a_forward.1']
    #allocation15 [shape = 'u8[212992]{0}', space=vmem, size = 0x34000, scoped, tag = 'input window, operand 7, single buffered']
    #allocation16 [shape = 'u8[512]{0}', space=vmem, size = 0x400, scoped, tag = 'input window, operand 8, single buffered']
    #allocation17 [shape = 's32[1]{0}', space=sflag, size = 0x4, scoped, tag = 'scoped memory for inception5a_forward.1']
    %16 = vsyncpa [#allocation6], 0
    %17 = vsyncpa [#allocation8], 0
    %18 = vsyncpa [#allocation11], 0
    %19 = vsyncpa [#allocation14], 0
    %20 = vsyncpa [#allocation17], 0
    loop: start=0, step=1, limit=4
    $region2: #{inception5a_forward.1} parent=1 // loop_pre_header
      _
    $region3: #{inception5a_forward.1} parent=1 // loop_header
      %s22 = sphi 0, %s26
      %p23 = scmp.ge.s32.totalorder %s22, 4
      %s32 = sphi 0, %s34
      %s35 = sphi 0, %s32
      %s36 = sphi 0, %s35
      %s52 = sphi 0, %s36
      %s56 = sphi 0, %s56
      %s58 = sphi 0, %s56
      %s59 = sphi 0, %s58
      %s73 = sphi 0, %s59
      %s77 = sphi 0, %s77
      %s79 = sphi 0, %s77
      %s80 = sphi 0, %s79
      %s94 = sphi 0, %s80
      %s98 = sphi 0, %s98
      %s100 = sphi 0, %s98
      %s101 = sphi 0, %s100
      %s115 = sphi 0, %s101
      %s119 = sphi 0, %s119
      %s121 = sphi 0, %s119
      %s122 = sphi 0, %s121
      %s136 = sphi 0, %s122
      %s140 = sphi 0, %s140
      %s142 = sphi 0, %s140
      %s143 = sphi 0, %s142
      %s157 = sphi 0, %s143
      %s161 = sphi 0, %s161
      %s163 = sphi 0, %s161
      %s164 = sphi 0, %s163
      %s178 = sphi 0, %s164
      %s182 = sphi 0, %s182
      %s184 = sphi 0, %s182
      %s185 = sphi 0, %s184
      %s199 = sphi 0, %s185
      %s203 = sphi 0, %s203
      %s205 = sphi 0, %s203
      %s206 = sphi 0, %s205
      %s220 = sphi 0, %s206
      %s226 = sphi 0, %s228
      %s229 = sphi 0, %s226
      %s230 = sphi 0, %s229
      %s246 = sphi 0, %s230
      %s252 = sphi 0, %s254
      %s255 = sphi 0, %s252
      %s256 = sphi 0, %s255
      %s272 = sphi 0, %s256
    $region4: #{inception5a_forward.1} parent=1 // loop_header_branch
      %25 = sbr.rel (%p23) target = $region8
    $region5: #{inception5a_forward.1} parent=1 // loop_body
      %s27 = ssub.s32 %s22, 1
      %s28 = ssub.s32 %s22, 2
      %s29 = sadd.s32 %s22, 1
      %s30 = ssub.s32 %s22, %s29
      %p31 = scmp.eq.s32.totalorder %s30, 0
      %s33 = sadd.s32 %s32, 1
      %s34 = scalar_select %p31, %s32, %s33
      %p37 = pneg %p31
      %p38 = scmp.eq.s32.totalorder %s22, 1
      %p39 = por %p37, %p38
      %p40 = scmp.ne.s32.totalorder %s32, %s35
      %p41 = scmp.eq.s32.totalorder %s22, 0
      %p42 = por %p40, %p41
      %p43 = scmp.ne.s32.totalorder %s32, %s35
      %p44 = scmp.eq.s32.totalorder %s27, 1
      %p45 = por %p43, %p44
      %p46 = scmp.ne.s32.totalorder %s35, %s36
      %p47 = scmp.eq.s32.totalorder %s27, 0
      %p48 = por %p46, %p47
      %p49 = scmp.ne.s32.totalorder %s35, %s36
      %p50 = scmp.eq.s32.totalorder %s28, 1
      %p51 = por %p49, %p50
      %p53 = scmp.ne.s32.totalorder %s36, %s52
      %p54 = scmp.eq.s32.totalorder %s28, 0
      %p55 = por %p53, %p54
      %s57 = sadd.s32 %s56, 1
      %p60 = scmp.eq.s32.totalorder %s22, 1
      %p61 = scmp.ne.s32.totalorder %s56, %s58
      %p62 = scmp.eq.s32.totalorder %s22, 0
      %p63 = por %p61, %p62
      %p64 = scmp.ne.s32.totalorder %s56, %s58
      %p65 = scmp.eq.s32.totalorder %s27, 1
      %p66 = por %p64, %p65
      %p67 = scmp.ne.s32.totalorder %s58, %s59
      %p68 = scmp.eq.s32.totalorder %s27, 0
      %p69 = por %p67, %p68
      %p70 = scmp.ne.s32.totalorder %s58, %s59
      %p71 = scmp.eq.s32.totalorder %s28, 1
      %p72 = por %p70, %p71
      %p74 = scmp.ne.s32.totalorder %s59, %s73
      %p75 = scmp.eq.s32.totalorder %s28, 0
      %p76 = por %p74, %p75
      %s78 = sadd.s32 %s77, 1
      %p81 = scmp.eq.s32.totalorder %s22, 1
      %p82 = scmp.ne.s32.totalorder %s77, %s79
      %p83 = scmp.eq.s32.totalorder %s22, 0
      %p84 = por %p82, %p83
      %p85 = scmp.ne.s32.totalorder %s77, %s79
      %p86 = scmp.eq.s32.totalorder %s27, 1
      %p87 = por %p85, %p86
      %p88 = scmp.ne.s32.totalorder %s79, %s80
      %p89 = scmp.eq.s32.totalorder %s27, 0
      %p90 = por %p88, %p89
      %p91 = scmp.ne.s32.totalorder %s79, %s80
      %p92 = scmp.eq.s32.totalorder %s28, 1
      %p93 = por %p91, %p92
      %p95 = scmp.ne.s32.totalorder %s80, %s94
      %p96 = scmp.eq.s32.totalorder %s28, 0
      %p97 = por %p95, %p96
      %s99 = sadd.s32 %s98, 1
      %p102 = scmp.eq.s32.totalorder %s22, 1
      %p103 = scmp.ne.s32.totalorder %s98, %s100
      %p104 = scmp.eq.s32.totalorder %s22, 0
      %p105 = por %p103, %p104
      %p106 = scmp.ne.s32.totalorder %s98, %s100
      %p107 = scmp.eq.s32.totalorder %s27, 1
      %p108 = por %p106, %p107
      %p109 = scmp.ne.s32.totalorder %s100, %s101
      %p110 = scmp.eq.s32.totalorder %s27, 0
      %p111 = por %p109, %p110
      %p112 = scmp.ne.s32.totalorder %s100, %s101
      %p113 = scmp.eq.s32.totalorder %s28, 1
      %p114 = por %p112, %p113
      %p116 = scmp.ne.s32.totalorder %s101, %s115
      %p117 = scmp.eq.s32.totalorder %s28, 0
      %p118 = por %p116, %p117
      %s120 = sadd.s32 %s119, 1
      %p123 = scmp.eq.s32.totalorder %s22, 1
      %p124 = scmp.ne.s32.totalorder %s119, %s121
      %p125 = scmp.eq.s32.totalorder %s22, 0
      %p126 = por %p124, %p125
      %p127 = scmp.ne.s32.totalorder %s119, %s121
      %p128 = scmp.eq.s32.totalorder %s27, 1
      %p129 = por %p127, %p128
      %p130 = scmp.ne.s32.totalorder %s121, %s122
      %p131 = scmp.eq.s32.totalorder %s27, 0
      %p132 = por %p130, %p131
      %p133 = scmp.ne.s32.totalorder %s121, %s122
      %p134 = scmp.eq.s32.totalorder %s28, 1
      %p135 = por %p133, %p134
      %p137 = scmp.ne.s32.totalorder %s122, %s136
      %p138 = scmp.eq.s32.totalorder %s28, 0
      %p139 = por %p137, %p138
      %s141 = sadd.s32 %s140, 1
      %p144 = scmp.eq.s32.totalorder %s22, 1
      %p145 = scmp.ne.s32.totalorder %s140, %s142
      %p146 = scmp.eq.s32.totalorder %s22, 0
      %p147 = por %p145, %p146
      %p148 = scmp.ne.s32.totalorder %s140, %s142
      %p149 = scmp.eq.s32.totalorder %s27, 1
      %p150 = por %p148, %p149
      %p151 = scmp.ne.s32.totalorder %s142, %s143
      %p152 = scmp.eq.s32.totalorder %s27, 0
      %p153 = por %p151, %p152
      %p154 = scmp.ne.s32.totalorder %s142, %s143
      %p155 = scmp.eq.s32.totalorder %s28, 1
      %p156 = por %p154, %p155
      %p158 = scmp.ne.s32.totalorder %s143, %s157
      %p159 = scmp.eq.s32.totalorder %s28, 0
      %p160 = por %p158, %p159
      %s162 = sadd.s32 %s161, 1
      %p165 = scmp.eq.s32.totalorder %s22, 1
      %p166 = scmp.ne.s32.totalorder %s161, %s163
      %p167 = scmp.eq.s32.totalorder %s22, 0
      %p168 = por %p166, %p167
      %p169 = scmp.ne.s32.totalorder %s161, %s163
      %p170 = scmp.eq.s32.totalorder %s27, 1
      %p171 = por %p169, %p170
      %p172 = scmp.ne.s32.totalorder %s163, %s164
      %p173 = scmp.eq.s32.totalorder %s27, 0
      %p174 = por %p172, %p173
      %p175 = scmp.ne.s32.totalorder %s163, %s164
      %p176 = scmp.eq.s32.totalorder %s28, 1
      %p177 = por %p175, %p176
      %p179 = scmp.ne.s32.totalorder %s164, %s178
      %p180 = scmp.eq.s32.totalorder %s28, 0
      %p181 = por %p179, %p180
      %s183 = sadd.s32 %s182, 1
      %p186 = scmp.eq.s32.totalorder %s22, 1
      %p187 = scmp.ne.s32.totalorder %s182, %s184
      %p188 = scmp.eq.s32.totalorder %s22, 0
      %p189 = por %p187, %p188
      %p190 = scmp.ne.s32.totalorder %s182, %s184
      %p191 = scmp.eq.s32.totalorder %s27, 1
      %p192 = por %p190, %p191
      %p193 = scmp.ne.s32.totalorder %s184, %s185
      %p194 = scmp.eq.s32.totalorder %s27, 0
      %p195 = por %p193, %p194
      %p196 = scmp.ne.s32.totalorder %s184, %s185
      %p197 = scmp.eq.s32.totalorder %s28, 1
      %p198 = por %p196, %p197
      %p200 = scmp.ne.s32.totalorder %s185, %s199
      %p201 = scmp.eq.s32.totalorder %s28, 0
      %p202 = por %p200, %p201
      %s204 = sadd.s32 %s203, 1
      %p207 = scmp.eq.s32.totalorder %s22, 1
      %p208 = scmp.ne.s32.totalorder %s203, %s205
      %p209 = scmp.eq.s32.totalorder %s22, 0
      %p210 = por %p208, %p209
      %p211 = scmp.ne.s32.totalorder %s203, %s205
      %p212 = scmp.eq.s32.totalorder %s27, 1
      %p213 = por %p211, %p212
      %p214 = scmp.ne.s32.totalorder %s205, %s206
      %p215 = scmp.eq.s32.totalorder %s27, 0
      %p216 = por %p214, %p215
      %p217 = scmp.ne.s32.totalorder %s205, %s206
      %p218 = scmp.eq.s32.totalorder %s28, 1
      %p219 = por %p217, %p218
      %p221 = scmp.ne.s32.totalorder %s206, %s220
      %p222 = scmp.eq.s32.totalorder %s28, 0
      %p223 = por %p221, %p222
      %s224 = ssub.s32 %s22, %s29
      %p225 = scmp.eq.s32.totalorder %s224, 0
      %s227 = sadd.s32 %s226, 1
      %s228 = scalar_select %p225, %s226, %s227
      %p231 = pneg %p225
      %p232 = scmp.eq.s32.totalorder %s22, 1
      %p233 = por %p231, %p232
      %p234 = scmp.ne.s32.totalorder %s226, %s229
      %p235 = scmp.eq.s32.totalorder %s22, 0
      %p236 = por %p234, %p235
      %p237 = scmp.ne.s32.totalorder %s226, %s229
      %p238 = scmp.eq.s32.totalorder %s27, 1
      %p239 = por %p237, %p238
      %p240 = scmp.ne.s32.totalorder %s229, %s230
      %p241 = scmp.eq.s32.totalorder %s27, 0
      %p242 = por %p240, %p241
      %p243 = scmp.ne.s32.totalorder %s229, %s230
      %p244 = scmp.eq.s32.totalorder %s28, 1
      %p245 = por %p243, %p244
      %p247 = scmp.ne.s32.totalorder %s230, %s246
      %p248 = scmp.eq.s32.totalorder %s28, 0
      %p249 = por %p247, %p248
      %s250 = ssub.s32 %s22, %s29
      %p251 = scmp.eq.s32.totalorder %s250, 0
      %s253 = sadd.s32 %s252, 1
      %s254 = scalar_select %p251, %s252, %s253
      %p257 = pneg %p251
      %p258 = scmp.eq.s32.totalorder %s22, 1
      %p259 = por %p257, %p258
      %p260 = scmp.ne.s32.totalorder %s252, %s255
      %p261 = scmp.eq.s32.totalorder %s22, 0
      %p262 = por %p260, %p261
      %p263 = scmp.ne.s32.totalorder %s252, %s255
      %p264 = scmp.eq.s32.totalorder %s27, 1
      %p265 = por %p263, %p264
      %p266 = scmp.ne.s32.totalorder %s255, %s256
      %p267 = scmp.eq.s32.totalorder %s27, 0
      %p268 = por %p266, %p267
      %p269 = scmp.ne.s32.totalorder %s255, %s256
      %p270 = scmp.eq.s32.totalorder %s28, 1
      %p271 = por %p269, %p270
      %p273 = scmp.ne.s32.totalorder %s256, %s272
      %p274 = scmp.eq.s32.totalorder %s28, 0
      %p275 = por %p273, %p274
      %p276 = scmp.le.s32.totalorder 1, %s22
      %p277 = scmp.lt.s32.totalorder %s22, 3
      %p278 = pnand %p276, %p277
      %p279 = pneg %p278
      // Predicated region
      $region9: #{inception5a_forward.1} parent=5 // pred_check
        _
      $region10: #{inception5a_forward.1} parent=5 // pred_check_branch
        %281 = sbr.rel (%p278) target = $region12
      $region11: #{inception5a_forward.1} parent=5 // pred_region
        %s282 = ssub.s32 %s22, 1
        // Predicated region
        $region13: #{inception5a_forward.1} parent=11 // pred_check
          %p283 = pneg %p69
        $region14: #{inception5a_forward.1} parent=11 // pred_check_branch
          %285 = sbr.rel (%p283) target = $region16
        $region15: #{inception5a_forward.1} parent=11 // pred_region
          %s287 = ssub.s32 33280, 33280
          %288 = vsyncadd [#allocation6], %s287
          %s289 = sshll.u32 [#allocation5], 4
          %s290 = int_to_ptr.vmem [resolvable:$true] %s289
          %295 = dma.hbm_to_vmem [thread:$0]  %s1, 33280, %s290, [#allocation6], 320, 320, 20
        $region16: #{inception5a_forward.1} parent=11 // pred_fallthru
          _
        // Predicated region
        $region17: #{inception5a_forward.1} parent=11 // pred_check
          %p296 = pneg %p90
        $region18: #{inception5a_forward.1} parent=11 // pred_check_branch
          %298 = sbr.rel (%p296) target = $region20
        $region19: #{inception5a_forward.1} parent=11 // pred_region
          %s300 = ssub.s32 80, 80
          %301 = vsyncadd [#allocation8], %s300
          %s303 = sshll.u32 [#allocation7], 4
          %s304 = int_to_ptr.vmem [resolvable:$true] %s303
          %306 = dma.hbm_to_vmem [thread:$0]  %s2, 80, %s304, [#allocation8]
        $region20: #{inception5a_forward.1} parent=11 // pred_fallthru
          _
        // Predicated region
        $region21: #{inception5a_forward.1} parent=11 // pred_check
          %p307 = pneg %p111
        $region22: #{inception5a_forward.1} parent=11 // pred_check_branch
          %309 = sbr.rel (%p307) target = $region24
        $region23: #{inception5a_forward.1} parent=11 // pred_region
          %s311 = ssub.s32 34560, 34560
          %312 = vsyncadd [#allocation8], %s311
          %s313 = sshll.u32 [#allocation9], 4
          %s314 = int_to_ptr.vmem [resolvable:$true] %s313
          %319 = dma.hbm_to_vmem [thread:$0]  %s3, 34560, %s314, [#allocation8], 192, 192, 12
        $region24: #{inception5a_forward.1} parent=11 // pred_fallthru
          _
        // Predicated region
        $region25: #{inception5a_forward.1} parent=11 // pred_check
          %p320 = pneg %p132
        $region26: #{inception5a_forward.1} parent=11 // pred_check_branch
          %322 = sbr.rel (%p320) target = $region28
        $region27: #{inception5a_forward.1} parent=11 // pred_region
          %s324 = ssub.s32 48, 48
          %325 = vsyncadd [#allocation11], %s324
          %s327 = sshll.u32 [#allocation10], 4
          %s328 = int_to_ptr.vmem [resolvable:$true] %s327
          %330 = dma.hbm_to_vmem [thread:$0]  %s4, 48, %s328, [#allocation11]
        $region28: #{inception5a_forward.1} parent=11 // pred_fallthru
          _
        // Predicated region
        $region29: #{inception5a_forward.1} parent=11 // pred_check
          %p331 = pneg %p153
        $region30: #{inception5a_forward.1} parent=11 // pred_check_branch
          %333 = sbr.rel (%p331) target = $region32
        $region31: #{inception5a_forward.1} parent=11 // pred_region
          %s335 = ssub.s32 2304, 2304
          %336 = vsyncadd [#allocation11], %s335
          %s337 = sshll.u32 [#allocation12], 4
          %s338 = int_to_ptr.vmem [resolvable:$true] %s337
          %343 = dma.hbm_to_vmem [thread:$0]  %s5, 2304, %s338, [#allocation11], 64, 64, 4
        $region32: #{inception5a_forward.1} parent=11 // pred_fallthru
          _
        // Predicated region
        $region33: #{inception5a_forward.1} parent=11 // pred_check
          %p344 = pneg %p174
        $region34: #{inception5a_forward.1} parent=11 // pred_check_branch
          %346 = sbr.rel (%p344) target = $region36
        $region35: #{inception5a_forward.1} parent=11 // pred_region
          %s348 = ssub.s32 16, 16
          %349 = vsyncadd [#allocation14], %s348
          %s351 = sshll.u32 [#allocation13], 4
          %s352 = int_to_ptr.vmem [resolvable:$true] %s351
          %354 = dma.hbm_to_vmem [thread:$0]  %s6, 16, %s352, [#allocation14]
        $region36: #{inception5a_forward.1} parent=11 // pred_fallthru
          _
        // Predicated region
        $region37: #{inception5a_forward.1} parent=11 // pred_check
          %p355 = pneg %p195
        $region38: #{inception5a_forward.1} parent=11 // pred_check_branch
          %357 = sbr.rel (%p355) target = $region40
        $region39: #{inception5a_forward.1} parent=11 // pred_region
          %s359 = ssub.s32 6656, 6656
          %360 = vsyncadd [#allocation14], %s359
          %s361 = sshll.u32 [#allocation15], 4
          %s362 = int_to_ptr.vmem [resolvable:$true] %s361
          %367 = dma.hbm_to_vmem [thread:$0]  %s7, 6656, %s362, [#allocation14], 64, 64, 4
        $region40: #{inception5a_forward.1} parent=11 // pred_fallthru
          _
        // Predicated region
        $region41: #{inception5a_forward.1} parent=11 // pred_check
          %p368 = pneg %p216
        $region42: #{inception5a_forward.1} parent=11 // pred_check_branch
          %370 = sbr.rel (%p368) target = $region44
        $region43: #{inception5a_forward.1} parent=11 // pred_region
          %s372 = ssub.s32 16, 16
          %373 = vsyncadd [#allocation17], %s372
          %s375 = sshll.u32 [#allocation16], 4
          %s376 = int_to_ptr.vmem [resolvable:$true] %s375
          %378 = dma.hbm_to_vmem [thread:$0]  %s8, 16, %s376, [#allocation17]
        $region44: #{inception5a_forward.1} parent=11 // pred_fallthru
          _
      $region12: #{inception5a_forward.1} parent=5 // pred_fallthru
        _
      %p379 = scmp.lt.s32.totalorder %s22, 2
      // Predicated region
      $region45: #{inception5a_forward.1} parent=5 // pred_check
        %p380 = pneg %p379
      $region46: #{inception5a_forward.1} parent=5 // pred_check_branch
        %382 = sbr.rel (%p380) target = $region48
      $region47: #{inception5a_forward.1} parent=5 // pred_region
        // Predicated region
        $region49: #{inception5a_forward.1} parent=47 // pred_check
          %p383 = pneg %p42
        $region50: #{inception5a_forward.1} parent=47 // pred_check_branch
          %385 = sbr.rel (%p383) target = $region52
        $region51: #{inception5a_forward.1} parent=47 // pred_region
          %p386 = scmp.lt.s32.totalorder %s22, 1
          %s387 = scalar_select %p386, %s22, 1
          %s388 = smul.addr %s387, 56
          %s389 = smul.addr %s388, 4
          %s390 = scalar_lea.vmem %s0, %s389
        $region52: #{inception5a_forward.1} parent=47 // pred_fallthru
          _
      $region48: #{inception5a_forward.1} parent=5 // pred_fallthru
        _
      %p391 = scmp.le.s32.totalorder 1, %s22
      %p392 = scmp.lt.s32.totalorder %s22, 3
      %p393 = pnand %p391, %p392
      %p394 = pneg %p393
      // Predicated region
      $region53: #{inception5a_forward.1} parent=5 // pred_check
        _
      $region54: #{inception5a_forward.1} parent=5 // pred_check_branch
        %396 = sbr.rel (%p393) target = $region56
      $region55: #{inception5a_forward.1} parent=5 // pred_region
        %s397 = ssub.s32 %s22, 1
        // Predicated region
        $region57: #{inception5a_forward.1} parent=55 // pred_check
          %p398 = pneg %p69
        $region58: #{inception5a_forward.1} parent=55 // pred_check_branch
          %400 = sbr.rel (%p398) target = $region60
        $region59: #{inception5a_forward.1} parent=55 // pred_region
          %401 = dma.done [#allocation6], 33280
        $region60: #{inception5a_forward.1} parent=55 // pred_fallthru
          _
        // Predicated region
        $region61: #{inception5a_forward.1} parent=55 // pred_check
          %p402 = pneg %p90
        $region62: #{inception5a_forward.1} parent=55 // pred_check_branch
          %404 = sbr.rel (%p402) target = $region64
        $region63: #{inception5a_forward.1} parent=55 // pred_region
          %405 = dma.done [#allocation8], 80
        $region64: #{inception5a_forward.1} parent=55 // pred_fallthru
          _
        // Predicated region
        $region65: #{inception5a_forward.1} parent=55 // pred_check
          %p406 = pneg %p111
        $region66: #{inception5a_forward.1} parent=55 // pred_check_branch
          %408 = sbr.rel (%p406) target = $region68
        $region67: #{inception5a_forward.1} parent=55 // pred_region
          %409 = dma.done [#allocation8], 34560
        $region68: #{inception5a_forward.1} parent=55 // pred_fallthru
          _
        // Predicated region
        $region69: #{inception5a_forward.1} parent=55 // pred_check
          %p410 = pneg %p132
        $region70: #{inception5a_forward.1} parent=55 // pred_check_branch
          %412 = sbr.rel (%p410) target = $region72
        $region71: #{inception5a_forward.1} parent=55 // pred_region
          %413 = dma.done [#allocation11], 48
        $region72: #{inception5a_forward.1} parent=55 // pred_fallthru
          _
        // Predicated region
        $region73: #{inception5a_forward.1} parent=55 // pred_check
          %p414 = pneg %p153
        $region74: #{inception5a_forward.1} parent=55 // pred_check_branch
          %416 = sbr.rel (%p414) target = $region76
        $region75: #{inception5a_forward.1} parent=55 // pred_region
          %417 = dma.done [#allocation11], 2304
        $region76: #{inception5a_forward.1} parent=55 // pred_fallthru
          _
        // Predicated region
        $region77: #{inception5a_forward.1} parent=55 // pred_check
          %p418 = pneg %p174
        $region78: #{inception5a_forward.1} parent=55 // pred_check_branch
          %420 = sbr.rel (%p418) target = $region80
        $region79: #{inception5a_forward.1} parent=55 // pred_region
          %421 = dma.done [#allocation14], 16
        $region80: #{inception5a_forward.1} parent=55 // pred_fallthru
          _
        // Predicated region
        $region81: #{inception5a_forward.1} parent=55 // pred_check
          %p422 = pneg %p195
        $region82: #{inception5a_forward.1} parent=55 // pred_check_branch
          %424 = sbr.rel (%p422) target = $region84
        $region83: #{inception5a_forward.1} parent=55 // pred_region
          %425 = dma.done [#allocation14], 6656
        $region84: #{inception5a_forward.1} parent=55 // pred_fallthru
          _
        // Predicated region
        $region85: #{inception5a_forward.1} parent=55 // pred_check
          %p426 = pneg %p216
        $region86: #{inception5a_forward.1} parent=55 // pred_check_branch
          %428 = sbr.rel (%p426) target = $region88
        $region87: #{inception5a_forward.1} parent=55 // pred_region
          %429 = dma.done [#allocation17], 16
        $region88: #{inception5a_forward.1} parent=55 // pred_fallthru
          _
        %p430 = scmp.lt.s32.totalorder %s27, 1
        %s431 = scalar_select %p430, %s27, 1
        %s432 = smul.addr %s431, 56
        %s433 = smul.addr %s432, 4
        %s434 = scalar_lea.vmem %s0, %s433
        %p435 = pneg %p48
        %p436 = pneg %p45
        %p437 = pneg %p69
        %p438 = pneg %p66
        %p439 = pneg %p90
        %p440 = pneg %p87
        %p441 = pneg %p111
        %p442 = pneg %p108
        %p443 = pneg %p132
        %p444 = pneg %p129
        %p445 = pneg %p153
        %p446 = pneg %p150
        %p447 = pneg %p174
        %p448 = pneg %p171
        %p449 = pneg %p195
        %p450 = pneg %p192
        %p451 = pneg %p216
        %p452 = pneg %p213
        %p453 = pneg %p242
        %p454 = pneg %p239
        %p455 = scmp.lt.s32.totalorder %s27, 1
        %s456 = scalar_select %p455, %s27, 1
        %s457 = smul.addr %s456, 40
        %s458 = smul.addr %s457, 8
        %s459 = scalar_lea.vmem %s9, %s458
        %p460 = pneg %p268
        %p461 = pneg %p265
        %p462 = scmp.lt.s32.totalorder %s27, 1
        %s463 = scalar_select %p462, %s27, 1
        %s464 = smul.addr %s463, 16
        %s465 = smul.addr %s464, 8
        %s466 = scalar_lea.vmem %s10, %s465
        %p467 = scmp.lt.s32.totalorder %s27, 1
        %s468 = scalar_select %p467, %s27, 1
        %s469 = smul.addr %s468, 56
        %s470 = smul.addr %s469, 4
        %s471 = scalar_lea.vmem %s0, %s470
        %p472 = scmp.lt.s32.totalorder %s27, 1
        %s473 = scalar_select %p472, %s27, 1
        %s474 = smul.addr %s473, 40
        %s475 = smul.addr %s474, 8
        %s476 = scalar_lea.vmem %s9, %s475
        %p477 = scmp.lt.s32.totalorder %s27, 1
        %s478 = scalar_select %p477, %s27, 1
        %s479 = smul.addr %s478, 16
        %s480 = smul.addr %s479, 8
        %s481 = scalar_lea.vmem %s10, %s480
        %v484 = vld [vmem:[%s471] sm:$0xff]
        %v485 = vld [vmem:[%s471 + $0x8] sm:$0xff]
        %v486 = vld [vmem:[%s471 + $0x10] sm:$0xff]
        %v487 = vld [vmem:[%s471 + $0x18] sm:$0xf]
        %v488 = vld [vmem:[%s471 + $0x1c] sm:$0xff]
        %v489 = vld [vmem:[%s471 + $0x24] sm:$0xff]
        %v490 = vld [vmem:[%s471 + $0x2c] sm:$0xff]
        %v491 = vld [vmem:[%s471 + $0x34] sm:$0xf]
        %v492 = vld [vmem:[%s471 + $0x38] sm:$0xff]
        %v493 = vld [vmem:[%s471 + $0x40] sm:$0xff]
        %v494 = vld [vmem:[%s471 + $0x48] sm:$0xff]
        %v495 = vld [vmem:[%s471 + $0x50] sm:$0xf]
        %v496 = vld [vmem:[%s471 + $0x54] sm:$0xff]
        %v497 = vld [vmem:[%s471 + $0x5c] sm:$0xff]
        %v498 = vld [vmem:[%s471 + $0x64] sm:$0xff]
        %v499 = vld [vmem:[%s471 + $0x6c] sm:$0xf]
        %v500 = vld [vmem:[%s471 + $0x70] sm:$0xff]
        %v501 = vld [vmem:[%s471 + $0x78] sm:$0xff]
        %v502 = vld [vmem:[%s471 + $0x80] sm:$0xff]
        %v503 = vld [vmem:[%s471 + $0x88] sm:$0xf]
        %v504 = vld [vmem:[%s471 + $0x8c] sm:$0xff]
        %v505 = vld [vmem:[%s471 + $0x94] sm:$0xff]
        %v506 = vld [vmem:[%s471 + $0x9c] sm:$0xff]
        %v507 = vld [vmem:[%s471 + $0xa4] sm:$0xf]
        %v508 = vld [vmem:[%s471 + $0xa8] sm:$0xff]
        %v509 = vld [vmem:[%s471 + $0xb0] sm:$0xff]
        %v510 = vld [vmem:[%s471 + $0xb8] sm:$0xff]
        %v511 = vld [vmem:[%s471 + $0xc0] sm:$0xf]
        %v512 = vld [vmem:[%s471 + $0xc4] sm:$0xff]
        %v513 = vld [vmem:[%s471 + $0xcc] sm:$0xff]
        %v514 = vld [vmem:[%s471 + $0xd4] sm:$0xff]
        %v515 = vld [vmem:[%s471 + $0xdc] sm:$0xf]
        %516 = vst [vmem:[#allocation4] sm:$0xff] 4286644096
        %517 = vst [vmem:[#allocation4 + $0x8] sm:$0xff] 4286644096
        %518 = vst [vmem:[#allocation4 + $0x10] sm:$0xff] 4286644096
        %vm519 = vcmask 519168
        %520 = vst.msk [vmem:[#allocation4 + $0x18] sm:$0xf] %vm519, 4286644096
        %521 = vst [vmem:[#allocation4 + $0x1c] sm:$0x11] 4286644096
        %522 = vst [vmem:[#allocation4 + $0x24] sm:$0x11] 4286644096
        %523 = vst [vmem:[#allocation4 + $0x2c] sm:$0x11] 4286644096
        %vm524 = vcmask 516096
        %525 = vst.msk [vmem:[#allocation4 + $0x34] sm:$0x1] %vm524, 4286644096
        %526 = vst [vmem:[#allocation4 + $0x38] sm:$0xff] 4286644096
        %527 = vst [vmem:[#allocation4 + $0x40] sm:$0xff] 4286644096
        %528 = vst [vmem:[#allocation4 + $0x48] sm:$0xff] 4286644096
        %529 = vst.msk [vmem:[#allocation4 + $0x50] sm:$0xf] %vm519, 4286644096
        %530 = vst [vmem:[#allocation4 + $0x54] sm:$0x11] 4286644096
        %531 = vst [vmem:[#allocation4 + $0x5c] sm:$0x11] 4286644096
        %532 = vst [vmem:[#allocation4 + $0x64] sm:$0x11] 4286644096
        %533 = vst.msk [vmem:[#allocation4 + $0x6c] sm:$0x1] %vm524, 4286644096
        %534 = vst [vmem:[#allocation4 + $0x70] sm:$0xff] 4286644096
        %535 = vst [vmem:[#allocation4 + $0x78] sm:$0xff] 4286644096
        %536 = vst [vmem:[#allocation4 + $0x80] sm:$0xff] 4286644096
        %537 = vst.msk [vmem:[#allocation4 + $0x88] sm:$0xf] %vm519, 4286644096
        %538 = vst [vmem:[#allocation4 + $0x8c] sm:$0x11] 4286644096
        %539 = vst [vmem:[#allocation4 + $0x94] sm:$0x11] 4286644096
        %540 = vst [vmem:[#allocation4 + $0x9c] sm:$0x11] 4286644096
        %541 = vst.msk [vmem:[#allocation4 + $0xa4] sm:$0x1] %vm524, 4286644096
        %542 = vst [vmem:[#allocation4 + $0xa8] sm:$0xff] 4286644096
        %543 = vst [vmem:[#allocation4 + $0xb0] sm:$0xff] 4286644096
        %544 = vst [vmem:[#allocation4 + $0xb8] sm:$0xff] 4286644096
        %545 = vst.msk [vmem:[#allocation4 + $0xc0] sm:$0xf] %vm519, 4286644096
        %546 = vst [vmem:[#allocation4 + $0xc4] sm:$0x11] 4286644096
        %547 = vst [vmem:[#allocation4 + $0xcc] sm:$0x11] 4286644096
        %548 = vst [vmem:[#allocation4 + $0xd4] sm:$0x11] 4286644096
        %549 = vst.msk [vmem:[#allocation4 + $0xdc] sm:$0x1] %vm524, 4286644096
        %550 = vst [vmem:[#allocation4 + $0xe0] sm:$0xff] 4286644096
        %551 = vst [vmem:[#allocation4 + $0xe8] sm:$0xff] 4286644096
        %552 = vst [vmem:[#allocation4 + $0xf0] sm:$0xff] 4286644096
        %553 = vst.msk [vmem:[#allocation4 + $0xf8] sm:$0xf] %vm519, 4286644096
        %554 = vst [vmem:[#allocation4 + $0xfc] sm:$0x11] 4286644096
        %555 = vst [vmem:[#allocation4 + $0x104] sm:$0x11] 4286644096
        %556 = vst [vmem:[#allocation4 + $0x10c] sm:$0x11] 4286644096
        %557 = vst.msk [vmem:[#allocation4 + $0x114] sm:$0x1] %vm524, 4286644096
        %558 = vst [vmem:[#allocation4 + $0x118] sm:$0xff] 4286644096
        %559 = vst [vmem:[#allocation4 + $0x120] sm:$0xff] 4286644096
        %560 = vst [vmem:[#allocation4 + $0x128] sm:$0xff] 4286644096
        %561 = vst.msk [vmem:[#allocation4 + $0x130] sm:$0xf] %vm519, 4286644096
        %562 = vst [vmem:[#allocation4 + $0x134] sm:$0x11] 4286644096
        %563 = vst [vmem:[#allocation4 + $0x13c] sm:$0x11] 4286644096
        %564 = vst [vmem:[#allocation4 + $0x144] sm:$0x11] 4286644096
        %565 = vst.msk [vmem:[#allocation4 + $0x14c] sm:$0x1] %vm524, 4286644096
        %566 = vst [vmem:[#allocation4 + $0x150] sm:$0xff] 4286644096
        %567 = vst [vmem:[#allocation4 + $0x158] sm:$0xff] 4286644096
        %568 = vst [vmem:[#allocation4 + $0x160] sm:$0xff] 4286644096
        %569 = vst.msk [vmem:[#allocation4 + $0x168] sm:$0xf] %vm519, 4286644096
        %570 = vst [vmem:[#allocation4 + $0x16c] sm:$0x11] 4286644096
        %571 = vst [vmem:[#allocation4 + $0x174] sm:$0x11] 4286644096
        %572 = vst [vmem:[#allocation4 + $0x17c] sm:$0x11] 4286644096
        %573 = vst.msk [vmem:[#allocation4 + $0x184] sm:$0x1] %vm524, 4286644096
        %574 = vst [vmem:[#allocation4 + $0x188] sm:$0xff] 4286644096
        %575 = vst [vmem:[#allocation4 + $0x190] sm:$0xff] 4286644096
        %576 = vst [vmem:[#allocation4 + $0x198] sm:$0xff] 4286644096
        %577 = vst.msk [vmem:[#allocation4 + $0x1a0] sm:$0xf] %vm519, 4286644096
        %578 = vst [vmem:[#allocation4 + $0x1a4] sm:$0x11] 4286644096
        %579 = vst [vmem:[#allocation4 + $0x1ac] sm:$0x11] 4286644096
        %580 = vst [vmem:[#allocation4 + $0x1b4] sm:$0x11] 4286644096
        %581 = vst.msk [vmem:[#allocation4 + $0x1bc] sm:$0x1] %vm524, 4286644096
        %582 = vst [vmem:[#allocation4 + $0x1c0] sm:$0xff] 4286644096
        %583 = vst [vmem:[#allocation4 + $0x1c8] sm:$0xff] 4286644096
        %584 = vst [vmem:[#allocation4 + $0x1d0] sm:$0xff] 4286644096
        %585 = vst.msk [vmem:[#allocation4 + $0x1d8] sm:$0xf] %vm519, 4286644096
        %586 = vst [vmem:[#allocation4 + $0x1dc] sm:$0x11] 4286644096
        %587 = vst [vmem:[#allocation4 + $0x1e4] sm:$0x11] 4286644096
        %588 = vst [vmem:[#allocation4 + $0x1ec] sm:$0x11] 4286644096
        %589 = vst.msk [vmem:[#allocation4 + $0x1f4] sm:$0x1] %vm524, 4286644096
        %590 = vst [vmem:[#allocation4 + $0x1f8] sm:$0xff] 4286644096
        %591 = vst [vmem:[#allocation4 + $0x200] sm:$0xff] 4286644096
        %592 = vst [vmem:[#allocation4 + $0x208] sm:$0xff] 4286644096
        %593 = vst.msk [vmem:[#allocation4 + $0x210] sm:$0xf] %vm519, 4286644096
        %594 = vst [vmem:[#allocation4 + $0x214] sm:$0x11] 4286644096
        %595 = vst [vmem:[#allocation4 + $0x21c] sm:$0x11] 4286644096
        %596 = vst [vmem:[#allocation4 + $0x224] sm:$0x11] 4286644096
        %597 = vst.msk [vmem:[#allocation4 + $0x22c] sm:$0x1] %vm524, 4286644096
        %v599 = vshrl.u32 %v484, 16
        %v601 = vrot.slane %v599, 7
        %v602 = vshll.u32 %v484, 16
        %v604 = vor.u32 %v601, %v602
        %v606 = vshrl.u32 %v485, 16
        %v608 = vrot.slane %v606, 7
        %v609 = vshll.u32 %v485, 16
        %v611 = vor.u32 %v608, %v609
        %v613 = vshrl.u32 %v486, 16
        %v615 = vrot.slane %v613, 7
        %v616 = vshll.u32 %v486, 16
        %v618 = vor.u32 %v615, %v616
        %v620 = vshrl.u32 %v487, 16
        %v622 = vrot.slane %v620, 7
        %v623 = vshll.u32 %v487, 16
        %v625 = vor.u32 %v622, %v623
        %v626 = vrot.slane %v601, 4
        %v627 = vrot.slane %v608, 4
        %v628 = vrot.slane %v615, 4
        %v629 = vrot.slane %v622, 4
        %v631 = vshrl.u32 %v488, 16
        %v633 = vrot.slane %v631, 7
        %v634 = vshll.u32 %v488, 16
        %v636 = vor.u32 %v633, %v634
        %v638 = vshrl.u32 %v489, 16
        %v640 = vrot.slane %v638, 7
        %v641 = vshll.u32 %v489, 16
        %v643 = vor.u32 %v640, %v641
        %v645 = vshrl.u32 %v490, 16
        %v647 = vrot.slane %v645, 7
        %v648 = vshll.u32 %v490, 16
        %v650 = vor.u32 %v647, %v648
        %v652 = vshrl.u32 %v491, 16
        %v654 = vrot.slane %v652, 7
        %v655 = vshll.u32 %v491, 16
        %v657 = vor.u32 %v654, %v655
        %v658 = vrot.slane %v633, 4
        %v659 = vrot.slane %v640, 4
        %v660 = vrot.slane %v647, 4
        %v661 = vrot.slane %v654, 4
        %v663 = vshrl.u32 %v492, 16
        %v665 = vrot.slane %v663, 7
        %v666 = vshll.u32 %v492, 16
        %v668 = vor.u32 %v665, %v666
        %v670 = vshrl.u32 %v493, 16
        %v672 = vrot.slane %v670, 7
        %v673 = vshll.u32 %v493, 16
        %v675 = vor.u32 %v672, %v673
        %v677 = vshrl.u32 %v494, 16
        %v679 = vrot.slane %v677, 7
        %v680 = vshll.u32 %v494, 16
        %v682 = vor.u32 %v679, %v680
        %v684 = vshrl.u32 %v495, 16
        %v686 = vrot.slane %v684, 7
        %v687 = vshll.u32 %v495, 16
        %v689 = vor.u32 %v686, %v687
        %v690 = vrot.slane %v665, 4
        %v691 = vrot.slane %v672, 4
        %v692 = vrot.slane %v679, 4
        %v693 = vrot.slane %v686, 4
        %v695 = vshrl.u32 %v496, 16
        %v697 = vrot.slane %v695, 7
        %v698 = vshll.u32 %v496, 16
        %v700 = vor.u32 %v697, %v698
        %v702 = vshrl.u32 %v497, 16
        %v704 = vrot.slane %v702, 7
        %v705 = vshll.u32 %v497, 16
        %v707 = vor.u32 %v704, %v705
        %v709 = vshrl.u32 %v498, 16
        %v711 = vrot.slane %v709, 7
        %v712 = vshll.u32 %v498, 16
        %v714 = vor.u32 %v711, %v712
        %v716 = vshrl.u32 %v499, 16
        %v718 = vrot.slane %v716, 7
        %v719 = vshll.u32 %v499, 16
        %v721 = vor.u32 %v718, %v719
        %v722 = vrot.slane %v697, 4
        %v723 = vrot.slane %v704, 4
        %v724 = vrot.slane %v711, 4
        %v725 = vrot.slane %v718, 4
        %v727 = vshrl.u32 %v500, 16
        %v729 = vrot.slane %v727, 7
        %v730 = vshll.u32 %v500, 16
        %v732 = vor.u32 %v729, %v730
        %v734 = vshrl.u32 %v501, 16
        %v736 = vrot.slane %v734, 7
        %v737 = vshll.u32 %v501, 16
        %v739 = vor.u32 %v736, %v737
        %v741 = vshrl.u32 %v502, 16
        %v743 = vrot.slane %v741, 7
        %v744 = vshll.u32 %v502, 16
        %v746 = vor.u32 %v743, %v744
        %v748 = vshrl.u32 %v503, 16
        %v750 = vrot.slane %v748, 7
        %v751 = vshll.u32 %v503, 16
        %v753 = vor.u32 %v750, %v751
        %v754 = vrot.slane %v729, 4
        %v755 = vrot.slane %v736, 4
        %v756 = vrot.slane %v743, 4
        %v757 = vrot.slane %v750, 4
        %v759 = vshrl.u32 %v504, 16
        %v761 = vrot.slane %v759, 7
        %v762 = vshll.u32 %v504, 16
        %v764 = vor.u32 %v761, %v762
        %v766 = vshrl.u32 %v505, 16
        %v768 = vrot.slane %v766, 7
        %v769 = vshll.u32 %v505, 16
        %v771 = vor.u32 %v768, %v769
        %v773 = vshrl.u32 %v506, 16
        %v775 = vrot.slane %v773, 7
        %v776 = vshll.u32 %v506, 16
        %v778 = vor.u32 %v775, %v776
        %v780 = vshrl.u32 %v507, 16
        %v782 = vrot.slane %v780, 7
        %v783 = vshll.u32 %v507, 16
        %v785 = vor.u32 %v782, %v783
        %v786 = vrot.slane %v761, 4
        %v787 = vrot.slane %v768, 4
        %v788 = vrot.slane %v775, 4
        %v789 = vrot.slane %v782, 4
        %v791 = vshrl.u32 %v508, 16
        %v793 = vrot.slane %v791, 7
        %v794 = vshll.u32 %v508, 16
        %v796 = vor.u32 %v793, %v794
        %v798 = vshrl.u32 %v509, 16
        %v800 = vrot.slane %v798, 7
        %v801 = vshll.u32 %v509, 16
        %v803 = vor.u32 %v800, %v801
        %v805 = vshrl.u32 %v510, 16
        %v807 = vrot.slane %v805, 7
        %v808 = vshll.u32 %v510, 16
        %v810 = vor.u32 %v807, %v808
        %v812 = vshrl.u32 %v511, 16
        %v814 = vrot.slane %v812, 7
        %v815 = vshll.u32 %v511, 16
        %v817 = vor.u32 %v814, %v815
        %v818 = vrot.slane %v793, 4
        %v819 = vrot.slane %v800, 4
        %v820 = vrot.slane %v807, 4
        %v821 = vrot.slane %v814, 4
        %v823 = vshrl.u32 %v512, 16
        %v825 = vrot.slane %v823, 7
        %v826 = vshll.u32 %v512, 16
        %v828 = vor.u32 %v825, %v826
        %v830 = vshrl.u32 %v513, 16
        %v832 = vrot.slane %v830, 7
        %v833 = vshll.u32 %v513, 16
        %v835 = vor.u32 %v832, %v833
        %v837 = vshrl.u32 %v514, 16
        %v839 = vrot.slane %v837, 7
        %v840 = vshll.u32 %v514, 16
        %v842 = vor.u32 %v839, %v840
        %v844 = vshrl.u32 %v515, 16
        %v846 = vrot.slane %v844, 7
        %v847 = vshll.u32 %v515, 16
        %v849 = vor.u32 %v846, %v847
        %v850 = vrot.slane %v825, 4
        %v851 = vrot.slane %v832, 4
        %v852 = vrot.slane %v839, 4
        %v853 = vrot.slane %v846, 4
        %s918 = scalar_lea.vmem [#allocation4], 56
        %vm919 = vcmask 1043456
        %vm920 = vsmask.f32 7938
        %vm921 = vmand %vm919, %vm920
        %vm922 = vcmask 1047556
        %vm923 = vsmask.f32 7954
        %vm924 = vmand %vm922, %vm923
        %vm925 = vmor %vm924, %vm921
        %v926 = vld [vmem:[%s918] sm:$0xff]
        %v927 = vsel %vm925, %v604, %v926
        %928 = vst [vmem:[%s918] sm:$0xff] %v927
        %v929 = vld [vmem:[%s918 + $0x8] sm:$0xff]
        %v930 = vsel %vm925, %v611, %v929
        %931 = vst [vmem:[%s918 + $0x8] sm:$0xff] %v930
        %v932 = vld [vmem:[%s918 + $0x10] sm:$0xff]
        %v933 = vsel %vm925, %v618, %v932
        %934 = vst [vmem:[%s918 + $0x10] sm:$0xff] %v933
        %vm935 = vcmask 519168
        %vm936 = vmand %vm935, %vm920
        %v937 = vld [vmem:[%s918 + $0x18] sm:$0xf]
        %v938 = vsel %vm936, %v625, %v937
        %939 = vst [vmem:[%s918 + $0x18] sm:$0xf] %v938
        %vm940 = vcmask 1040384
        %vm941 = vsmask.f32 256
        %vm942 = vmand %vm940, %vm941
        %vm943 = vcmask 1044484
        %vm944 = vsmask.f32 4352
        %vm945 = vmand %vm943, %vm944
        %vm946 = vmor %vm945, %vm942
        %v947 = vld [vmem:[%s918 + $0x1c] sm:$0x11]
        %v948 = vsel %vm946, %v626, %v947
        %949 = vst [vmem:[%s918 + $0x1c] sm:$0x11] %v948
        %v950 = vld [vmem:[%s918 + $0x24] sm:$0x11]
        %v951 = vsel %vm946, %v627, %v950
        %952 = vst [vmem:[%s918 + $0x24] sm:$0x11] %v951
        %v953 = vld [vmem:[%s918 + $0x2c] sm:$0x11]
        %v954 = vsel %vm946, %v628, %v953
        %955 = vst [vmem:[%s918 + $0x2c] sm:$0x11] %v954
        %vm956 = vcmask 516096
        %vm957 = vmand %vm956, %vm941
        %v958 = vld [vmem:[%s918 + $0x34] sm:$0x1]
        %v959 = vsel %vm957, %v629, %v958
        %960 = vst [vmem:[%s918 + $0x34] sm:$0x1] %v959
        %v961 = vld [vmem:[%s918 + $0x38] sm:$0xff]
        %v962 = vsel %vm925, %v636, %v961
        %963 = vst [vmem:[%s918 + $0x38] sm:$0xff] %v962
        %v964 = vld [vmem:[%s918 + $0x40] sm:$0xff]
        %v965 = vsel %vm925, %v643, %v964
        %966 = vst [vmem:[%s918 + $0x40] sm:$0xff] %v965
        %v967 = vld [vmem:[%s918 + $0x48] sm:$0xff]
        %v968 = vsel %vm925, %v650, %v967
        %969 = vst [vmem:[%s918 + $0x48] sm:$0xff] %v968
        %v970 = vld [vmem:[%s918 + $0x50] sm:$0xf]
        %v971 = vsel %vm936, %v657, %v970
        %972 = vst [vmem:[%s918 + $0x50] sm:$0xf] %v971
        %v973 = vld [vmem:[%s918 + $0x54] sm:$0x11]
        %v974 = vsel %vm946, %v658, %v973
        %975 = vst [vmem:[%s918 + $0x54] sm:$0x11] %v974
        %v976 = vld [vmem:[%s918 + $0x5c] sm:$0x11]
        %v977 = vsel %vm946, %v659, %v976
        %978 = vst [vmem:[%s918 + $0x5c] sm:$0x11] %v977
        %v979 = vld [vmem:[%s918 + $0x64] sm:$0x11]
        %v980 = vsel %vm946, %v660, %v979
        %981 = vst [vmem:[%s918 + $0x64] sm:$0x11] %v980
        %v982 = vld [vmem:[%s918 + $0x6c] sm:$0x1]
        %v983 = vsel %vm957, %v661, %v982
        %984 = vst [vmem:[%s918 + $0x6c] sm:$0x1] %v983
        %v985 = vld [vmem:[%s918 + $0x70] sm:$0xff]
        %v986 = vsel %vm925, %v668, %v985
        %987 = vst [vmem:[%s918 + $0x70] sm:$0xff] %v986
        %v988 = vld [vmem:[%s918 + $0x78] sm:$0xff]
        %v989 = vsel %vm925, %v675, %v988
        %990 = vst [vmem:[%s918 + $0x78] sm:$0xff] %v989
        %v991 = vld [vmem:[%s918 + $0x80] sm:$0xff]
        %v992 = vsel %vm925, %v682, %v991
        %993 = vst [vmem:[%s918 + $0x80] sm:$0xff] %v992
        %v994 = vld [vmem:[%s918 + $0x88] sm:$0xf]
        %v995 = vsel %vm936, %v689, %v994
        %996 = vst [vmem:[%s918 + $0x88] sm:$0xf] %v995
        %v997 = vld [vmem:[%s918 + $0x8c] sm:$0x11]
        %v998 = vsel %vm946, %v690, %v997
        %999 = vst [vmem:[%s918 + $0x8c] sm:$0x11] %v998
        %v1000 = vld [vmem:[%s918 + $0x94] sm:$0x11]
        %v1001 = vsel %vm946, %v691, %v1000
        %1002 = vst [vmem:[%s918 + $0x94] sm:$0x11] %v1001
        %v1003 = vld [vmem:[%s918 + $0x9c] sm:$0x11]
        %v1004 = vsel %vm946, %v692, %v1003
        %1005 = vst [vmem:[%s918 + $0x9c] sm:$0x11] %v1004
        %v1006 = vld [vmem:[%s918 + $0xa4] sm:$0x1]
        %v1007 = vsel %vm957, %v693, %v1006
        %1008 = vst [vmem:[%s918 + $0xa4] sm:$0x1] %v1007
        %v1009 = vld [vmem:[%s918 + $0xa8] sm:$0xff]
        %v1010 = vsel %vm925, %v700, %v1009
        %1011 = vst [vmem:[%s918 + $0xa8] sm:$0xff] %v1010
        %v1012 = vld [vmem:[%s918 + $0xb0] sm:$0xff]
        %v1013 = vsel %vm925, %v707, %v1012
        %1014 = vst [vmem:[%s918 + $0xb0] sm:$0xff] %v1013
        %v1015 = vld [vmem:[%s918 + $0xb8] sm:$0xff]
        %v1016 = vsel %vm925, %v714, %v1015
        %1017 = vst [vmem:[%s918 + $0xb8] sm:$0xff] %v1016
        %v1018 = vld [vmem:[%s918 + $0xc0] sm:$0xf]
        %v1019 = vsel %vm936, %v721, %v1018
        %1020 = vst [vmem:[%s918 + $0xc0] sm:$0xf] %v1019
        %v1021 = vld [vmem:[%s918 + $0xc4] sm:$0x11]
        %v1022 = vsel %vm946, %v722, %v1021
        %1023 = vst [vmem:[%s918 + $0xc4] sm:$0x11] %v1022
        %v1024 = vld [vmem:[%s918 + $0xcc] sm:$0x11]
        %v1025 = vsel %vm946, %v723, %v1024
        %1026 = vst [vmem:[%s918 + $0xcc] sm:$0x11] %v1025
        %v1027 = vld [vmem:[%s918 + $0xd4] sm:$0x11]
        %v1028 = vsel %vm946, %v724, %v1027
        %1029 = vst [vmem:[%s918 + $0xd4] sm:$0x11] %v1028
        %v1030 = vld [vmem:[%s918 + $0xdc] sm:$0x1]
        %v1031 = vsel %vm957, %v725, %v1030
        %1032 = vst [vmem:[%s918 + $0xdc] sm:$0x1] %v1031
        %v1033 = vld [vmem:[%s918 + $0xe0] sm:$0xff]
        %v1034 = vsel %vm925, %v732, %v1033
        %1035 = vst [vmem:[%s918 + $0xe0] sm:$0xff] %v1034
        %v1036 = vld [vmem:[%s918 + $0xe8] sm:$0xff]
        %v1037 = vsel %vm925, %v739, %v1036
        %1038 = vst [vmem:[%s918 + $0xe8] sm:$0xff] %v1037
        %v1039 = vld [vmem:[%s918 + $0xf0] sm:$0xff]
        %v1040 = vsel %vm925, %v746, %v1039
        %1041 = vst [vmem:[%s918 + $0xf0] sm:$0xff] %v1040
        %v1042 = vld [vmem:[%s918 + $0xf8] sm:$0xf]
        %v1043 = vsel %vm936, %v753, %v1042
        %1044 = vst [vmem:[%s918 + $0xf8] sm:$0xf] %v1043
        %v1045 = vld [vmem:[%s918 + $0xfc] sm:$0x11]
        %v1046 = vsel %vm946, %v754, %v1045
        %1047 = vst [vmem:[%s918 + $0xfc] sm:$0x11] %v1046
        %v1048 = vld [vmem:[%s918 + $0x104] sm:$0x11]
        %v1049 = vsel %vm946, %v755, %v1048
        %1050 = vst [vmem:[%s918 + $0x104] sm:$0x11] %v1049
        %v1051 = vld [vmem:[%s918 + $0x10c] sm:$0x11]
        %v1052 = vsel %vm946, %v756, %v1051
        %1053 = vst [vmem:[%s918 + $0x10c] sm:$0x11] %v1052
        %v1054 = vld [vmem:[%s918 + $0x114] sm:$0x1]
        %v1055 = vsel %vm957, %v757, %v1054
        %1056 = vst [vmem:[%s918 + $0x114] sm:$0x1] %v1055
        %v1057 = vld [vmem:[%s918 + $0x118] sm:$0xff]
        %v1058 = vsel %vm925, %v764, %v1057
        %1059 = vst [vmem:[%s918 + $0x118] sm:$0xff] %v1058
        %v1060 = vld [vmem:[%s918 + $0x120] sm:$0xff]
        %v1061 = vsel %vm925, %v771, %v1060
        %1062 = vst [vmem:[%s918 + $0x120] sm:$0xff] %v1061
        %v1063 = vld [vmem:[%s918 + $0x128] sm:$0xff]
        %v1064 = vsel %vm925, %v778, %v1063
        %1065 = vst [vmem:[%s918 + $0x128] sm:$0xff] %v1064
        %v1066 = vld [vmem:[%s918 + $0x130] sm:$0xf]
        %v1067 = vsel %vm936, %v785, %v1066
        %1068 = vst [vmem:[%s918 + $0x130] sm:$0xf] %v1067
        %v1069 = vld [vmem:[%s918 + $0x134] sm:$0x11]
        %v1070 = vsel %vm946, %v786, %v1069
        %1071 = vst [vmem:[%s918 + $0x134] sm:$0x11] %v1070
        %v1072 = vld [vmem:[%s918 + $0x13c] sm:$0x11]
        %v1073 = vsel %vm946, %v787, %v1072
        %1074 = vst [vmem:[%s918 + $0x13c] sm:$0x11] %v1073
        %v1075 = vld [vmem:[%s918 + $0x144] sm:$0x11]
        %v1076 = vsel %vm946, %v788, %v1075
        %1077 = vst [vmem:[%s918 + $0x144] sm:$0x11] %v1076
        %v1078 = vld [vmem:[%s918 + $0x14c] sm:$0x1]
        %v1079 = vsel %vm957, %v789, %v1078
        %1080 = vst [vmem:[%s918 + $0x14c] sm:$0x1] %v1079
        %v1081 = vld [vmem:[%s918 + $0x150] sm:$0xff]
        %v1082 = vsel %vm925, %v796, %v1081
        %1083 = vst [vmem:[%s918 + $0x150] sm:$0xff] %v1082
        %v1084 = vld [vmem:[%s918 + $0x158] sm:$0xff]
        %v1085 = vsel %vm925, %v803, %v1084
        %1086 = vst [vmem:[%s918 + $0x158] sm:$0xff] %v1085
        %v1087 = vld [vmem:[%s918 + $0x160] sm:$0xff]
        %v1088 = vsel %vm925, %v810, %v1087
        %1089 = vst [vmem:[%s918 + $0x160] sm:$0xff] %v1088
        %v1090 = vld [vmem:[%s918 + $0x168] sm:$0xf]
        %v1091 = vsel %vm936, %v817, %v1090
        %1092 = vst [vmem:[%s918 + $0x168] sm:$0xf] %v1091
        %v1093 = vld [vmem:[%s918 + $0x16c] sm:$0x11]
        %v1094 = vsel %vm946, %v818, %v1093
        %1095 = vst [vmem:[%s918 + $0x16c] sm:$0x11] %v1094
        %v1096 = vld [vmem:[%s918 + $0x174] sm:$0x11]
        %v1097 = vsel %vm946, %v819, %v1096
        %1098 = vst [vmem:[%s918 + $0x174] sm:$0x11] %v1097
        %v1099 = vld [vmem:[%s918 + $0x17c] sm:$0x11]
        %v1100 = vsel %vm946, %v820, %v1099
        %1101 = vst [vmem:[%s918 + $0x17c] sm:$0x11] %v1100
        %v1102 = vld [vmem:[%s918 + $0x184] sm:$0x1]
        %v1103 = vsel %vm957, %v821, %v1102
        %1104 = vst [vmem:[%s918 + $0x184] sm:$0x1] %v1103
        %v1105 = vld [vmem:[%s918 + $0x188] sm:$0xff]
        %v1106 = vsel %vm925, %v828, %v1105
        %1107 = vst [vmem:[%s918 + $0x188] sm:$0xff] %v1106
        %v1108 = vld [vmem:[%s918 + $0x190] sm:$0xff]
        %v1109 = vsel %vm925, %v835, %v1108
        %1110 = vst [vmem:[%s918 + $0x190] sm:$0xff] %v1109
        %v1111 = vld [vmem:[%s918 + $0x198] sm:$0xff]
        %v1112 = vsel %vm925, %v842, %v1111
        %1113 = vst [vmem:[%s918 + $0x198] sm:$0xff] %v1112
        %v1114 = vld [vmem:[%s918 + $0x1a0] sm:$0xf]
        %v1115 = vsel %vm936, %v849, %v1114
        %1116 = vst [vmem:[%s918 + $0x1a0] sm:$0xf] %v1115
        %v1117 = vld [vmem:[%s918 + $0x1a4] sm:$0x11]
        %v1118 = vsel %vm946, %v850, %v1117
        %1119 = vst [vmem:[%s918 + $0x1a4] sm:$0x11] %v1118
        %v1120 = vld [vmem:[%s918 + $0x1ac] sm:$0x11]
        %v1121 = vsel %vm946, %v851, %v1120
        %1122 = vst [vmem:[%s918 + $0x1ac] sm:$0x11] %v1121
        %v1123 = vld [vmem:[%s918 + $0x1b4] sm:$0x11]
        %v1124 = vsel %vm946, %v852, %v1123
        %1125 = vst [vmem:[%s918 + $0x1b4] sm:$0x11] %v1124
        %v1126 = vld [vmem:[%s918 + $0x1bc] sm:$0x1]
        %v1127 = vsel %vm957, %v853, %v1126
        %1128 = vst [vmem:[%s918 + $0x1bc] sm:$0x1] %v1127
        %v1129 = vld [vmem:[#allocation5] sm:$0xff]
        %v1130 = vld [vmem:[#allocation5 + $0x8] sm:$0xff]
        %v1131 = vld [vmem:[#allocation5 + $0x10] sm:$0xf]
        %v1132 = vld [vmem:[#allocation5 + $0x14] sm:$0xff]
        %v1133 = vld [vmem:[#allocation5 + $0x1c] sm:$0xff]
        %v1134 = vld [vmem:[#allocation5 + $0x24] sm:$0xf]
        %v1135 = vld [vmem:[#allocation5 + $0x28] sm:$0xff]
        %v1136 = vld [vmem:[#allocation5 + $0x30] sm:$0xff]
        %v1137 = vld [vmem:[#allocation5 + $0x38] sm:$0xf]
        %v1138 = vld [vmem:[#allocation5 + $0x3c] sm:$0xff]
        %v1139 = vld [vmem:[#allocation5 + $0x44] sm:$0xff]
        %v1140 = vld [vmem:[#allocation5 + $0x4c] sm:$0xf]
        %v1141 = vld [vmem:[#allocation5 + $0x50] sm:$0xff]
        %v1142 = vld [vmem:[#allocation5 + $0x58] sm:$0xff]
        %v1143 = vld [vmem:[#allocation5 + $0x60] sm:$0xf]
        %v1144 = vld [vmem:[#allocation5 + $0x64] sm:$0xff]
        %v1145 = vld [vmem:[#allocation5 + $0x6c] sm:$0xff]
        %v1146 = vld [vmem:[#allocation5 + $0x74] sm:$0xf]
        %v1147 = vld [vmem:[#allocation5 + $0x78] sm:$0xff]
        %v1148 = vld [vmem:[#allocation5 + $0x80] sm:$0xff]
        %v1149 = vld [vmem:[#allocation5 + $0x88] sm:$0xf]
        %v1150 = vld [vmem:[#allocation5 + $0x8c] sm:$0xff]
        %v1151 = vld [vmem:[#allocation5 + $0x94] sm:$0xff]
        %v1152 = vld [vmem:[#allocation5 + $0x9c] sm:$0xf]
        %v1153 = vld [vmem:[#allocation5 + $0xa0] sm:$0xff]
        %v1154 = vld [vmem:[#allocation5 + $0xa8] sm:$0xff]
        %v1155 = vld [vmem:[#allocation5 + $0xb0] sm:$0xf]
        %v1156 = vld [vmem:[#allocation5 + $0xb4] sm:$0xff]
        %v1157 = vld [vmem:[#allocation5 + $0xbc] sm:$0xff]
        %v1158 = vld [vmem:[#allocation5 + $0xc4] sm:$0xf]
        %v1159 = vld [vmem:[#allocation5 + $0xc8] sm:$0xff]
        %v1160 = vld [vmem:[#allocation5 + $0xd0] sm:$0xff]
        %v1161 = vld [vmem:[#allocation5 + $0xd8] sm:$0xf]
        %v1162 = vld [vmem:[#allocation5 + $0xdc] sm:$0xff]
        %v1163 = vld [vmem:[#allocation5 + $0xe4] sm:$0xff]
        %v1164 = vld [vmem:[#allocation5 + $0xec] sm:$0xf]
        %v1165 = vld [vmem:[#allocation5 + $0xf0] sm:$0xff]
        %v1166 = vld [vmem:[#allocation5 + $0xf8] sm:$0xff]
        %v1167 = vld [vmem:[#allocation5 + $0x100] sm:$0xf]
        %v1168 = vld [vmem:[#allocation5 + $0x104] sm:$0xff]
        %v1169 = vld [vmem:[#allocation5 + $0x10c] sm:$0xff]
        %v1170 = vld [vmem:[#allocation5 + $0x114] sm:$0xf]
        %v1171 = vld [vmem:[#allocation5 + $0x118] sm:$0xff]
        %v1172 = vld [vmem:[#allocation5 + $0x120] sm:$0xff]
        %v1173 = vld [vmem:[#allocation5 + $0x128] sm:$0xf]
        %v1174 = vld [vmem:[#allocation5 + $0x12c] sm:$0xff]
        %v1175 = vld [vmem:[#allocation5 + $0x134] sm:$0xff]
        %v1176 = vld [vmem:[#allocation5 + $0x13c] sm:$0xf]
        %v1177 = vld [vmem:[#allocation5 + $0x140] sm:$0xff]
        %v1178 = vld [vmem:[#allocation5 + $0x148] sm:$0xff]
        %v1179 = vld [vmem:[#allocation5 + $0x150] sm:$0xf]
        %v1180 = vld [vmem:[#allocation5 + $0x154] sm:$0xff]
        %v1181 = vld [vmem:[#allocation5 + $0x15c] sm:$0xff]
        %v1182 = vld [vmem:[#allocation5 + $0x164] sm:$0xf]
        %v1183 = vld [vmem:[#allocation5 + $0x168] sm:$0xff]
        %v1184 = vld [vmem:[#allocation5 + $0x170] sm:$0xff]
        %v1185 = vld [vmem:[#allocation5 + $0x178] sm:$0xf]
        %v1186 = vld [vmem:[#allocation5 + $0x17c] sm:$0xff]
        %v1187 = vld [vmem:[#allocation5 + $0x184] sm:$0xff]
        %v1188 = vld [vmem:[#allocation5 + $0x18c] sm:$0xf]
        %v1189 = vld [vmem:[#allocation5 + $0x190] sm:$0xff]
        %v1190 = vld [vmem:[#allocation5 + $0x198] sm:$0xff]
        %v1191 = vld [vmem:[#allocation5 + $0x1a0] sm:$0xf]
        %v1192 = vld [vmem:[#allocation5 + $0x1a4] sm:$0xff]
        %v1193 = vld [vmem:[#allocation5 + $0x1ac] sm:$0xff]
        %v1194 = vld [vmem:[#allocation5 + $0x1b4] sm:$0xf]
        %v1195 = vld [vmem:[#allocation5 + $0x1b8] sm:$0xff]
        %v1196 = vld [vmem:[#allocation5 + $0x1c0] sm:$0xff]
        %v1197 = vld [vmem:[#allocation5 + $0x1c8] sm:$0xf]
        %v1198 = vld [vmem:[#allocation5 + $0x1cc] sm:$0xff]
        %v1199 = vld [vmem:[#allocation5 + $0x1d4] sm:$0xff]
        %v1200 = vld [vmem:[#allocation5 + $0x1dc] sm:$0xf]
        %v1201 = vld [vmem:[#allocation5 + $0x1e0] sm:$0xff]
        %v1202 = vld [vmem:[#allocation5 + $0x1e8] sm:$0xff]
        %v1203 = vld [vmem:[#allocation5 + $0x1f0] sm:$0xf]
        %v1204 = vld [vmem:[#allocation5 + $0x1f4] sm:$0xff]
        %v1205 = vld [vmem:[#allocation5 + $0x1fc] sm:$0xff]
        %v1206 = vld [vmem:[#allocation5 + $0x204] sm:$0xf]
        %v1207 = vld [vmem:[#allocation5 + $0x208] sm:$0xff]
        %v1208 = vld [vmem:[#allocation5 + $0x210] sm:$0xff]
        %v1209 = vld [vmem:[#allocation5 + $0x218] sm:$0xf]
        %v1210 = vld [vmem:[#allocation5 + $0x21c] sm:$0xff]
        %v1211 = vld [vmem:[#allocation5 + $0x224] sm:$0xff]
        %v1212 = vld [vmem:[#allocation5 + $0x22c] sm:$0xf]
        %v1213 = vld [vmem:[#allocation5 + $0x230] sm:$0xff]
        %v1214 = vld [vmem:[#allocation5 + $0x238] sm:$0xff]
        %v1215 = vld [vmem:[#allocation5 + $0x240] sm:$0xf]
        %v1216 = vld [vmem:[#allocation5 + $0x244] sm:$0xff]
        %v1217 = vld [vmem:[#allocation5 + $0x24c] sm:$0xff]
        %v1218 = vld [vmem:[#allocation5 + $0x254] sm:$0xf]
        %v1219 = vld [vmem:[#allocation5 + $0x258] sm:$0xff]
        %v1220 = vld [vmem:[#allocation5 + $0x260] sm:$0xff]
        %v1221 = vld [vmem:[#allocation5 + $0x268] sm:$0xf]
        %v1222 = vld [vmem:[#allocation5 + $0x26c] sm:$0xff]
        %v1223 = vld [vmem:[#allocation5 + $0x274] sm:$0xff]
        %v1224 = vld [vmem:[#allocation5 + $0x27c] sm:$0xf]
        %v1225 = vld [vmem:[#allocation5 + $0x280] sm:$0xff]
        %v1226 = vld [vmem:[#allocation5 + $0x288] sm:$0xff]
        %v1227 = vld [vmem:[#allocation5 + $0x290] sm:$0xf]
        %v1228 = vld [vmem:[#allocation5 + $0x294] sm:$0xff]
        %v1229 = vld [vmem:[#allocation5 + $0x29c] sm:$0xff]
        %v1230 = vld [vmem:[#allocation5 + $0x2a4] sm:$0xf]
        %v1231 = vld [vmem:[#allocation5 + $0x2a8] sm:$0xff]
        %v1232 = vld [vmem:[#allocation5 + $0x2b0] sm:$0xff]
        %v1233 = vld [vmem:[#allocation5 + $0x2b8] sm:$0xf]
        %v1234 = vld [vmem:[#allocation5 + $0x2bc] sm:$0xff]
        %v1235 = vld [vmem:[#allocation5 + $0x2c4] sm:$0xff]
        %v1236 = vld [vmem:[#allocation5 + $0x2cc] sm:$0xf]
        %v1237 = vld [vmem:[#allocation5 + $0x2d0] sm:$0xff]
        %v1238 = vld [vmem:[#allocation5 + $0x2d8] sm:$0xff]
        %v1239 = vld [vmem:[#allocation5 + $0x2e0] sm:$0xf]
        %v1240 = vld [vmem:[#allocation5 + $0x2e4] sm:$0xff]
        %v1241 = vld [vmem:[#allocation5 + $0x2ec] sm:$0xff]
        %v1242 = vld [vmem:[#allocation5 + $0x2f4] sm:$0xf]
        %v1243 = vld [vmem:[#allocation5 + $0x2f8] sm:$0xff]
        %v1244 = vld [vmem:[#allocation5 + $0x300] sm:$0xff]
        %v1245 = vld [vmem:[#allocation5 + $0x308] sm:$0xf]
        %v1246 = vld [vmem:[#allocation5 + $0x30c] sm:$0xff]
        %v1247 = vld [vmem:[#allocation5 + $0x314] sm:$0xff]
        %v1248 = vld [vmem:[#allocation5 + $0x31c] sm:$0xf]
        %v1249 = vld [vmem:[#allocation5 + $0x320] sm:$0xff]
        %v1250 = vld [vmem:[#allocation5 + $0x328] sm:$0xff]
        %v1251 = vld [vmem:[#allocation5 + $0x330] sm:$0xf]
        %v1252 = vld [vmem:[#allocation5 + $0x334] sm:$0xff]
        %v1253 = vld [vmem:[#allocation5 + $0x33c] sm:$0xff]
        %v1254 = vld [vmem:[#allocation5 + $0x344] sm:$0xf]
        %v1255 = vld [vmem:[#allocation5 + $0x348] sm:$0xff]
        %v1256 = vld [vmem:[#allocation5 + $0x350] sm:$0xff]
        %v1257 = vld [vmem:[#allocation5 + $0x358] sm:$0xf]
        %v1258 = vld [vmem:[#allocation5 + $0x35c] sm:$0xff]
        %v1259 = vld [vmem:[#allocation5 + $0x364] sm:$0xff]
        %v1260 = vld [vmem:[#allocation5 + $0x36c] sm:$0xf]
        %v1261 = vld [vmem:[#allocation5 + $0x370] sm:$0xff]
        %v1262 = vld [vmem:[#allocation5 + $0x378] sm:$0xff]
        %v1263 = vld [vmem:[#allocation5 + $0x380] sm:$0xf]
        %v1264 = vld [vmem:[#allocation5 + $0x384] sm:$0xff]
        %v1265 = vld [vmem:[#allocation5 + $0x38c] sm:$0xff]
        %v1266 = vld [vmem:[#allocation5 + $0x394] sm:$0xf]
        %v1267 = vld [vmem:[#allocation5 + $0x398] sm:$0xff]
        %v1268 = vld [vmem:[#allocation5 + $0x3a0] sm:$0xff]
        %v1269 = vld [vmem:[#allocation5 + $0x3a8] sm:$0xf]
        %v1270 = vld [vmem:[#allocation5 + $0x3ac] sm:$0xff]
        %v1271 = vld [vmem:[#allocation5 + $0x3b4] sm:$0xff]
        %v1272 = vld [vmem:[#allocation5 + $0x3bc] sm:$0xf]
        %v1273 = vld [vmem:[#allocation5 + $0x3c0] sm:$0xff]
        %v1274 = vld [vmem:[#allocation5 + $0x3c8] sm:$0xff]
        %v1275 = vld [vmem:[#allocation5 + $0x3d0] sm:$0xf]
        %v1276 = vld [vmem:[#allocation5 + $0x3d4] sm:$0xff]
        %v1277 = vld [vmem:[#allocation5 + $0x3dc] sm:$0xff]
        %v1278 = vld [vmem:[#allocation5 + $0x3e4] sm:$0xf]
        %v1279 = vld [vmem:[#allocation5 + $0x3e8] sm:$0xff]
        %v1280 = vld [vmem:[#allocation5 + $0x3f0] sm:$0xff]
        %v1281 = vld [vmem:[#allocation5 + $0x3f8] sm:$0xf]
        %v1282 = vld [vmem:[#allocation5 + $0x3fc] sm:$0xff]
        %v1283 = vld [vmem:[#allocation5 + $0x404] sm:$0xff]
        %v1284 = vld [vmem:[#allocation5 + $0x40c] sm:$0xf]
        %v1285 = vld [vmem:[#allocation5 + $0x410] sm:$0xff]
        %v1286 = vld [vmem:[#allocation5 + $0x418] sm:$0xff]
        %v1287 = vld [vmem:[#allocation5 + $0x420] sm:$0xf]
        %v1288 = vld [vmem:[#allocation5 + $0x424] sm:$0xff]
        %v1289 = vld [vmem:[#allocation5 + $0x42c] sm:$0xff]
        %v1290 = vld [vmem:[#allocation5 + $0x434] sm:$0xf]
        %v1291 = vld [vmem:[#allocation5 + $0x438] sm:$0xff]
        %v1292 = vld [vmem:[#allocation5 + $0x440] sm:$0xff]
        %v1293 = vld [vmem:[#allocation5 + $0x448] sm:$0xf]
        %v1294 = vld [vmem:[#allocation5 + $0x44c] sm:$0xff]
        %v1295 = vld [vmem:[#allocation5 + $0x454] sm:$0xff]
        %v1296 = vld [vmem:[#allocation5 + $0x45c] sm:$0xf]
        %v1297 = vld [vmem:[#allocation5 + $0x460] sm:$0xff]
        %v1298 = vld [vmem:[#allocation5 + $0x468] sm:$0xff]
        %v1299 = vld [vmem:[#allocation5 + $0x470] sm:$0xf]
        %v1300 = vld [vmem:[#allocation5 + $0x474] sm:$0xff]
        %v1301 = vld [vmem:[#allocation5 + $0x47c] sm:$0xff]
        %v1302 = vld [vmem:[#allocation5 + $0x484] sm:$0xf]
        %v1303 = vld [vmem:[#allocation5 + $0x488] sm:$0xff]
        %v1304 = vld [vmem:[#allocation5 + $0x490] sm:$0xff]
        %v1305 = vld [vmem:[#allocation5 + $0x498] sm:$0xf]
        %v1306 = vld [vmem:[#allocation5 + $0x49c] sm:$0xff]
        %v1307 = vld [vmem:[#allocation5 + $0x4a4] sm:$0xff]
        %v1308 = vld [vmem:[#allocation5 + $0x4ac] sm:$0xf]
        %v1309 = vld [vmem:[#allocation5 + $0x4b0] sm:$0xff]
        %v1310 = vld [vmem:[#allocation5 + $0x4b8] sm:$0xff]
        %v1311 = vld [vmem:[#allocation5 + $0x4c0] sm:$0xf]
        %v1312 = vld [vmem:[#allocation5 + $0x4c4] sm:$0xff]
        %v1313 = vld [vmem:[#allocation5 + $0x4cc] sm:$0xff]
        %v1314 = vld [vmem:[#allocation5 + $0x4d4] sm:$0xf]
        %v1315 = vld [vmem:[#allocation5 + $0x4d8] sm:$0xff]
        %v1316 = vld [vmem:[#allocation5 + $0x4e0] sm:$0xff]
        %v1317 = vld [vmem:[#allocation5 + $0x4e8] sm:$0xf]
        %v1318 = vld [vmem:[#allocation5 + $0x4ec] sm:$0xff]
        %v1319 = vld [vmem:[#allocation5 + $0x4f4] sm:$0xff]
        %v1320 = vld [vmem:[#allocation5 + $0x4fc] sm:$0xf]
        %v1321 = vld [vmem:[#allocation5 + $0x500] sm:$0xff]
        %v1322 = vld [vmem:[#allocation5 + $0x508] sm:$0xff]
        %v1323 = vld [vmem:[#allocation5 + $0x510] sm:$0xf]
        %v1324 = vld [vmem:[#allocation5 + $0x514] sm:$0xff]
        %v1325 = vld [vmem:[#allocation5 + $0x51c] sm:$0xff]
        %v1326 = vld [vmem:[#allocation5 + $0x524] sm:$0xf]
        %v1327 = vld [vmem:[#allocation5 + $0x528] sm:$0xff]
        %v1328 = vld [vmem:[#allocation5 + $0x530] sm:$0xff]
        %v1329 = vld [vmem:[#allocation5 + $0x538] sm:$0xf]
        %v1330 = vld [vmem:[#allocation5 + $0x53c] sm:$0xff]
        %v1331 = vld [vmem:[#allocation5 + $0x544] sm:$0xff]
        %v1332 = vld [vmem:[#allocation5 + $0x54c] sm:$0xf]
        %v1333 = vld [vmem:[#allocation5 + $0x550] sm:$0xff]
        %v1334 = vld [vmem:[#allocation5 + $0x558] sm:$0xff]
        %v1335 = vld [vmem:[#allocation5 + $0x560] sm:$0xf]
        %v1336 = vld [vmem:[#allocation5 + $0x564] sm:$0xff]
        %v1337 = vld [vmem:[#allocation5 + $0x56c] sm:$0xff]
        %v1338 = vld [vmem:[#allocation5 + $0x574] sm:$0xf]
        %v1339 = vld [vmem:[#allocation5 + $0x578] sm:$0xff]
        %v1340 = vld [vmem:[#allocation5 + $0x580] sm:$0xff]
        %v1341 = vld [vmem:[#allocation5 + $0x588] sm:$0xf]
        %v1342 = vld [vmem:[#allocation5 + $0x58c] sm:$0xff]
        %v1343 = vld [vmem:[#allocation5 + $0x594] sm:$0xff]
        %v1344 = vld [vmem:[#allocation5 + $0x59c] sm:$0xf]
        %v1345 = vld [vmem:[#allocation5 + $0x5a0] sm:$0xff]
        %v1346 = vld [vmem:[#allocation5 + $0x5a8] sm:$0xff]
        %v1347 = vld [vmem:[#allocation5 + $0x5b0] sm:$0xf]
        %v1348 = vld [vmem:[#allocation5 + $0x5b4] sm:$0xff]
        %v1349 = vld [vmem:[#allocation5 + $0x5bc] sm:$0xff]
        %v1350 = vld [vmem:[#allocation5 + $0x5c4] sm:$0xf]
        %v1351 = vld [vmem:[#allocation5 + $0x5c8] sm:$0xff]
        %v1352 = vld [vmem:[#allocation5 + $0x5d0] sm:$0xff]
        %v1353 = vld [vmem:[#allocation5 + $0x5d8] sm:$0xf]
        %v1354 = vld [vmem:[#allocation5 + $0x5dc] sm:$0xff]
        %v1355 = vld [vmem:[#allocation5 + $0x5e4] sm:$0xff]
        %v1356 = vld [vmem:[#allocation5 + $0x5ec] sm:$0xf]
        %v1357 = vld [vmem:[#allocation5 + $0x5f0] sm:$0xff]
        %v1358 = vld [vmem:[#allocation5 + $0x5f8] sm:$0xff]
        %v1359 = vld [vmem:[#allocation5 + $0x600] sm:$0xf]
        %v1360 = vld [vmem:[#allocation5 + $0x604] sm:$0xff]
        %v1361 = vld [vmem:[#allocation5 + $0x60c] sm:$0xff]
        %v1362 = vld [vmem:[#allocation5 + $0x614] sm:$0xf]
        %v1363 = vld [vmem:[#allocation5 + $0x618] sm:$0xff]
        %v1364 = vld [vmem:[#allocation5 + $0x620] sm:$0xff]
        %v1365 = vld [vmem:[#allocation5 + $0x628] sm:$0xf]
        %v1366 = vld [vmem:[#allocation5 + $0x62c] sm:$0xff]
        %v1367 = vld [vmem:[#allocation5 + $0x634] sm:$0xff]
        %v1368 = vld [vmem:[#allocation5 + $0x63c] sm:$0xf]
        %v1369 = vld [vmem:[#allocation5 + $0x640] sm:$0xff]
        %v1370 = vld [vmem:[#allocation5 + $0x648] sm:$0xff]
        %v1371 = vld [vmem:[#allocation5 + $0x650] sm:$0xf]
        %v1372 = vld [vmem:[#allocation5 + $0x654] sm:$0xff]
        %v1373 = vld [vmem:[#allocation5 + $0x65c] sm:$0xff]
        %v1374 = vld [vmem:[#allocation5 + $0x664] sm:$0xf]
        %v1375 = vld [vmem:[#allocation5 + $0x668] sm:$0xff]
        %v1376 = vld [vmem:[#allocation5 + $0x670] sm:$0xff]
        %v1377 = vld [vmem:[#allocation5 + $0x678] sm:$0xf]
        %v1378 = vld [vmem:[#allocation5 + $0x67c] sm:$0xff]
        %v1379 = vld [vmem:[#allocation5 + $0x684] sm:$0xff]
        %v1380 = vld [vmem:[#allocation5 + $0x68c] sm:$0xf]
        %v1381 = vld [vmem:[#allocation5 + $0x690] sm:$0xff]
        %v1382 = vld [vmem:[#allocation5 + $0x698] sm:$0xff]
        %v1383 = vld [vmem:[#allocation5 + $0x6a0] sm:$0xf]
        %v1384 = vld [vmem:[#allocation5 + $0x6a4] sm:$0xff]
        %v1385 = vld [vmem:[#allocation5 + $0x6ac] sm:$0xff]
        %v1386 = vld [vmem:[#allocation5 + $0x6b4] sm:$0xf]
        %v1387 = vld [vmem:[#allocation5 + $0x6b8] sm:$0xff]
        %v1388 = vld [vmem:[#allocation5 + $0x6c0] sm:$0xff]
        %v1389 = vld [vmem:[#allocation5 + $0x6c8] sm:$0xf]
        %v1390 = vld [vmem:[#allocation5 + $0x6cc] sm:$0xff]
        %v1391 = vld [vmem:[#allocation5 + $0x6d4] sm:$0xff]
        %v1392 = vld [vmem:[#allocation5 + $0x6dc] sm:$0xf]
        %v1393 = vld [vmem:[#allocation5 + $0x6e0] sm:$0xff]
        %v1394 = vld [vmem:[#allocation5 + $0x6e8] sm:$0xff]
        %v1395 = vld [vmem:[#allocation5 + $0x6f0] sm:$0xf]
        %v1396 = vld [vmem:[#allocation5 + $0x6f4] sm:$0xff]
        %v1397 = vld [vmem:[#allocation5 + $0x6fc] sm:$0xff]
        %v1398 = vld [vmem:[#allocation5 + $0x704] sm:$0xf]
        %v1399 = vld [vmem:[#allocation5 + $0x708] sm:$0xff]
        %v1400 = vld [vmem:[#allocation5 + $0x710] sm:$0xff]
        %v1401 = vld [vmem:[#allocation5 + $0x718] sm:$0xf]
        %v1402 = vld [vmem:[#allocation5 + $0x71c] sm:$0xff]
        %v1403 = vld [vmem:[#allocation5 + $0x724] sm:$0xff]
        %v1404 = vld [vmem:[#allocation5 + $0x72c] sm:$0xf]
        %v1405 = vld [vmem:[#allocation5 + $0x730] sm:$0xff]
        %v1406 = vld [vmem:[#allocation5 + $0x738] sm:$0xff]
        %v1407 = vld [vmem:[#allocation5 + $0x740] sm:$0xf]
        %v1408 = vld [vmem:[#allocation5 + $0x744] sm:$0xff]
        %v1409 = vld [vmem:[#allocation5 + $0x74c] sm:$0xff]
        %v1410 = vld [vmem:[#allocation5 + $0x754] sm:$0xf]
        %v1411 = vld [vmem:[#allocation5 + $0x758] sm:$0xff]
        %v1412 = vld [vmem:[#allocation5 + $0x760] sm:$0xff]
        %v1413 = vld [vmem:[#allocation5 + $0x768] sm:$0xf]
        %v1414 = vld [vmem:[#allocation5 + $0x76c] sm:$0xff]
        %v1415 = vld [vmem:[#allocation5 + $0x774] sm:$0xff]
        %v1416 = vld [vmem:[#allocation5 + $0x77c] sm:$0xf]
        %v1417 = vld [vmem:[#allocation5 + $0x780] sm:$0xff]
        %v1418 = vld [vmem:[#allocation5 + $0x788] sm:$0xff]
        %v1419 = vld [vmem:[#allocation5 + $0x790] sm:$0xf]
        %v1420 = vld [vmem:[#allocation5 + $0x794] sm:$0xff]
        %v1421 = vld [vmem:[#allocation5 + $0x79c] sm:$0xff]
        %v1422 = vld [vmem:[#allocation5 + $0x7a4] sm:$0xf]
        %v1423 = vld [vmem:[#allocation5 + $0x7a8] sm:$0xff]
        %v1424 = vld [vmem:[#allocation5 + $0x7b0] sm:$0xff]
        %v1425 = vld [vmem:[#allocation5 + $0x7b8] sm:$0xf]
        %v1426 = vld [vmem:[#allocation5 + $0x7bc] sm:$0xff]
        %v1427 = vld [vmem:[#allocation5 + $0x7c4] sm:$0xff]
        %v1428 = vld [vmem:[#allocation5 + $0x7cc] sm:$0xf]
        %v1429 = vld [vmem:[#allocation5 + $0x7d0] sm:$0xff]
        %v1430 = vld [vmem:[#allocation5 + $0x7d8] sm:$0xff]
        %v1431 = vld [vmem:[#allocation5 + $0x7e0] sm:$0xf]
        %v1432 = vld [vmem:[#allocation5 + $0x7e4] sm:$0xff]
        %v1433 = vld [vmem:[#allocation5 + $0x7ec] sm:$0xff]
        %v1434 = vld [vmem:[#allocation5 + $0x7f4] sm:$0xf]
        %v1435 = vld [vmem:[#allocation5 + $0x7f8] sm:$0xff]
        %v1436 = vld [vmem:[#allocation5 + $0x800] sm:$0xff]
        %v1437 = vld [vmem:[#allocation5 + $0x808] sm:$0xf]
        %v1438 = vld [vmem:[#allocation5 + $0x80c] sm:$0xff]
        %v1439 = vld [vmem:[#allocation5 + $0x814] sm:$0xff]
        %v1440 = vld [vmem:[#allocation5 + $0x81c] sm:$0xf]
        %v1441 = vld [vmem:[#allocation7] sm:$0x1f]
        %v1443 = vlaneseq
        %v1444 = vshrl.u32 %v1443, 7
        %v1445 = vsub.s32 0, %v1444
        %v1446 = vrot.slane %v1441, %v1445
        %v1447 = vlaneseq
        %v1448 = vshrl.u32 %v1447, 7
        %v1449 = vsub.s32 1, %v1448
        %v1450 = vrot.slane %v1441, %v1449
        %v1451 = vlaneseq
        %v1452 = vshrl.u32 %v1451, 7
        %v1453 = vsub.s32 2, %v1452
        %v1454 = vrot.slane %v1441, %v1453
        %v1455 = vlaneseq
        %v1456 = vshrl.u32 %v1455, 7
        %v1457 = vsub.s32 3, %v1456
        %v1458 = vrot.slane %v1441, %v1457
        %v1459 = vlaneseq
        %v1460 = vshrl.u32 %v1459, 7
        %v1461 = vsub.s32 4, %v1460
        %v1462 = vrot.slane %v1441, %v1461
        %v1500 = vunpack.c.l.b16 %v484
        %v1501 = vunpack.c.h.b16 %v484
        %v1502 = vunpack.c.l.b16 %v485
        %v1503 = vunpack.c.h.b16 %v485
        %v1504 = vunpack.c.l.b16 %v486
        %v1505 = vunpack.c.h.b16 %v486
        %v1506 = vunpack.c.l.b16 %v487
        %v1507 = vunpack.c.l.b16 %v488
        %v1508 = vunpack.c.h.b16 %v488
        %v1509 = vunpack.c.l.b16 %v489
        %v1510 = vunpack.c.h.b16 %v489
        %v1511 = vunpack.c.l.b16 %v490
        %v1512 = vunpack.c.h.b16 %v490
        %v1513 = vunpack.c.l.b16 %v491
        %v1514 = vunpack.c.l.b16 %v492
        %v1515 = vunpack.c.h.b16 %v492
        %v1516 = vunpack.c.l.b16 %v493
        %v1517 = vunpack.c.h.b16 %v493
        %v1518 = vunpack.c.l.b16 %v494
        %v1519 = vunpack.c.h.b16 %v494
        %v1520 = vunpack.c.l.b16 %v495
        %v1521 = vunpack.c.l.b16 %v496
        %v1522 = vunpack.c.h.b16 %v496
        %v1523 = vunpack.c.l.b16 %v497
        %v1524 = vunpack.c.h.b16 %v497
        %v1525 = vunpack.c.l.b16 %v498
        %v1526 = vunpack.c.h.b16 %v498
        %v1527 = vunpack.c.l.b16 %v499
        %v1528 = vunpack.c.l.b16 %v500
        %v1529 = vunpack.c.h.b16 %v500
        %v1530 = vunpack.c.l.b16 %v501
        %v1531 = vunpack.c.h.b16 %v501
        %v1532 = vunpack.c.l.b16 %v502
        %v1533 = vunpack.c.h.b16 %v502
        %v1534 = vunpack.c.l.b16 %v503
        %v1535 = vunpack.c.l.b16 %v504
        %v1536 = vunpack.c.h.b16 %v504
        %v1537 = vunpack.c.l.b16 %v505
        %v1538 = vunpack.c.h.b16 %v505
        %v1539 = vunpack.c.l.b16 %v506
        %v1540 = vunpack.c.h.b16 %v506
        %v1541 = vunpack.c.l.b16 %v507
        %v1542 = vunpack.c.l.b16 %v508
        %v1543 = vunpack.c.h.b16 %v508
        %v1544 = vunpack.c.l.b16 %v509
        %v1545 = vunpack.c.h.b16 %v509
        %v1546 = vunpack.c.l.b16 %v510
        %v1547 = vunpack.c.h.b16 %v510
        %v1548 = vunpack.c.l.b16 %v511
        %v1549 = vunpack.c.l.b16 %v512
        %v1550 = vunpack.c.h.b16 %v512
        %v1551 = vunpack.c.l.b16 %v513
        %v1552 = vunpack.c.h.b16 %v513
        %v1553 = vunpack.c.l.b16 %v514
        %v1554 = vunpack.c.h.b16 %v514
        %v1555 = vunpack.c.l.b16 %v515
        %v1556 = vpack.c.b16 %v1507, %v1500
        %v1557 = vpack.c.b16 %v1508, %v1501
        %v1558 = vpack.c.b16 %v1509, %v1502
        %v1559 = vpack.c.b16 %v1510, %v1503
        %v1560 = vpack.c.b16 %v1511, %v1504
        %v1561 = vpack.c.b16 %v1512, %v1505
        %v1562 = vpack.c.b16 %v1513, %v1506
        %v1563 = vpack.c.b16 %v1521, %v1514
        %v1564 = vpack.c.b16 %v1522, %v1515
        %v1565 = vpack.c.b16 %v1523, %v1516
        %v1566 = vpack.c.b16 %v1524, %v1517
        %v1567 = vpack.c.b16 %v1525, %v1518
        %v1568 = vpack.c.b16 %v1526, %v1519
        %v1569 = vpack.c.b16 %v1527, %v1520
        %v1570 = vpack.c.b16 %v1535, %v1528
        %v1571 = vpack.c.b16 %v1536, %v1529
        %v1572 = vpack.c.b16 %v1537, %v1530
        %v1573 = vpack.c.b16 %v1538, %v1531
        %v1574 = vpack.c.b16 %v1539, %v1532
        %v1575 = vpack.c.b16 %v1540, %v1533
        %v1576 = vpack.c.b16 %v1541, %v1534
        %v1577 = vpack.c.b16 %v1549, %v1542
        %v1578 = vpack.c.b16 %v1550, %v1543
        %v1579 = vpack.c.b16 %v1551, %v1544
        %v1580 = vpack.c.b16 %v1552, %v1545
        %v1581 = vpack.c.b16 %v1553, %v1546
        %v1582 = vpack.c.b16 %v1554, %v1547
        %v1583 = vpack.c.b16 %v1555, %v1548
        %v1920 = vunpack.c.l.b16 %v1129
        %v1921 = vunpack.c.h.b16 %v1129
        %v1922 = vunpack.c.l.b16 %v1130
        %v1923 = vunpack.c.h.b16 %v1130
        %v1924 = vunpack.c.l.b16 %v1131
        %v1925 = vunpack.c.l.b16 %v1132
        %v1926 = vunpack.c.h.b16 %v1132
        %v1927 = vunpack.c.l.b16 %v1133
        %v1928 = vunpack.c.h.b16 %v1133
        %v1929 = vunpack.c.l.b16 %v1134
        %v1930 = vunpack.c.l.b16 %v1135
        %v1931 = vunpack.c.h.b16 %v1135
        %v1932 = vunpack.c.l.b16 %v1136
        %v1933 = vunpack.c.h.b16 %v1136
        %v1934 = vunpack.c.l.b16 %v1137
        %v1935 = vunpack.c.l.b16 %v1138
        %v1936 = vunpack.c.h.b16 %v1138
        %v1937 = vunpack.c.l.b16 %v1139
        %v1938 = vunpack.c.h.b16 %v1139
        %v1939 = vunpack.c.l.b16 %v1140
        %v1940 = vunpack.c.l.b16 %v1141
        %v1941 = vunpack.c.h.b16 %v1141
        %v1942 = vunpack.c.l.b16 %v1142
        %v1943 = vunpack.c.h.b16 %v1142
        %v1944 = vunpack.c.l.b16 %v1143
        %v1945 = vunpack.c.l.b16 %v1144
        %v1946 = vunpack.c.h.b16 %v1144
        %v1947 = vunpack.c.l.b16 %v1145
        %v1948 = vunpack.c.h.b16 %v1145
        %v1949 = vunpack.c.l.b16 %v1146
        %v1950 = vunpack.c.l.b16 %v1147
        %v1951 = vunpack.c.h.b16 %v1147
        %v1952 = vunpack.c.l.b16 %v1148
        %v1953 = vunpack.c.h.b16 %v1148
        %v1954 = vunpack.c.l.b16 %v1149
        %v1955 = vunpack.c.l.b16 %v1150
        %v1956 = vunpack.c.h.b16 %v1150
        %v1957 = vunpack.c.l.b16 %v1151
        %v1958 = vunpack.c.h.b16 %v1151
        %v1959 = vunpack.c.l.b16 %v1152
        %v1960 = vunpack.c.l.b16 %v1153
        %v1961 = vunpack.c.h.b16 %v1153
        %v1962 = vunpack.c.l.b16 %v1154
        %v1963 = vunpack.c.h.b16 %v1154
        %v1964 = vunpack.c.l.b16 %v1155
        %v1965 = vunpack.c.l.b16 %v1156
        %v1966 = vunpack.c.h.b16 %v1156
        %v1967 = vunpack.c.l.b16 %v1157
        %v1968 = vunpack.c.h.b16 %v1157
        %v1969 = vunpack.c.l.b16 %v1158
        %v1970 = vunpack.c.l.b16 %v1159
        %v1971 = vunpack.c.h.b16 %v1159
        %v1972 = vunpack.c.l.b16 %v1160
        %v1973 = vunpack.c.h.b16 %v1160
        %v1974 = vunpack.c.l.b16 %v1161
        %v1975 = vunpack.c.l.b16 %v1162
        %v1976 = vunpack.c.h.b16 %v1162
        %v1977 = vunpack.c.l.b16 %v1163
        %v1978 = vunpack.c.h.b16 %v1163
        %v1979 = vunpack.c.l.b16 %v1164
        %v1980 = vunpack.c.l.b16 %v1165
        %v1981 = vunpack.c.h.b16 %v1165
        %v1982 = vunpack.c.l.b16 %v1166
        %v1983 = vunpack.c.h.b16 %v1166
        %v1984 = vunpack.c.l.b16 %v1167
        %v1985 = vunpack.c.l.b16 %v1168
        %v1986 = vunpack.c.h.b16 %v1168
        %v1987 = vunpack.c.l.b16 %v1169
        %v1988 = vunpack.c.h.b16 %v1169
        %v1989 = vunpack.c.l.b16 %v1170
        %v1990 = vunpack.c.l.b16 %v1171
        %v1991 = vunpack.c.h.b16 %v1171
        %v1992 = vunpack.c.l.b16 %v1172
        %v1993 = vunpack.c.h.b16 %v1172
        %v1994 = vunpack.c.l.b16 %v1173
        %v1995 = vunpack.c.l.b16 %v1174
        %v1996 = vunpack.c.h.b16 %v1174
        %v1997 = vunpack.c.l.b16 %v1175
        %v1998 = vunpack.c.h.b16 %v1175
        %v1999 = vunpack.c.l.b16 %v1176
        %v2000 = vunpack.c.l.b16 %v1177
        %v2001 = vunpack.c.h.b16 %v1177
        %v2002 = vunpack.c.l.b16 %v1178
        %v2003 = vunpack.c.h.b16 %v1178
        %v2004 = vunpack.c.l.b16 %v1179
        %v2005 = vunpack.c.l.b16 %v1180
        %v2006 = vunpack.c.h.b16 %v1180
        %v2007 = vunpack.c.l.b16 %v1181
        %v2008 = vunpack.c.h.b16 %v1181
        %v2009 = vunpack.c.l.b16 %v1182
        %v2010 = vunpack.c.l.b16 %v1183
        %v2011 = vunpack.c.h.b16 %v1183
        %v2012 = vunpack.c.l.b16 %v1184
        %v2013 = vunpack.c.h.b16 %v1184
        %v2014 = vunpack.c.l.b16 %v1185
        %v2015 = vunpack.c.l.b16 %v1186
        %v2016 = vunpack.c.h.b16 %v1186
        %v2017 = vunpack.c.l.b16 %v1187
        %v2018 = vunpack.c.h.b16 %v1187
        %v2019 = vunpack.c.l.b16 %v1188
        %v2020 = vunpack.c.l.b16 %v1189
        %v2021 = vunpack.c.h.b16 %v1189
        %v2022 = vunpack.c.l.b16 %v1190
        %v2023 = vunpack.c.h.b16 %v1190
        %v2024 = vunpack.c.l.b16 %v1191
        %v2025 = vunpack.c.l.b16 %v1192
        %v2026 = vunpack.c.h.b16 %v1192
        %v2027 = vunpack.c.l.b16 %v1193
        %v2028 = vunpack.c.h.b16 %v1193
        %v2029 = vunpack.c.l.b16 %v1194
        %v2030 = vunpack.c.l.b16 %v1195
        %v2031 = vunpack.c.h.b16 %v1195
        %v2032 = vunpack.c.l.b16 %v1196
        %v2033 = vunpack.c.h.b16 %v1196
        %v2034 = vunpack.c.l.b16 %v1197
        %v2035 = vunpack.c.l.b16 %v1198
        %v2036 = vunpack.c.h.b16 %v1198
        %v2037 = vunpack.c.l.b16 %v1199
        %v2038 = vunpack.c.h.b16 %v1199
        %v2039 = vunpack.c.l.b16 %v1200
        %v2040 = vunpack.c.l.b16 %v1201
        %v2041 = vunpack.c.h.b16 %v1201
        %v2042 = vunpack.c.l.b16 %v1202
        %v2043 = vunpack.c.h.b16 %v1202
        %v2044 = vunpack.c.l.b16 %v1203
        %v2045 = vunpack.c.l.b16 %v1204
        %v2046 = vunpack.c.h.b16 %v1204
        %v2047 = vunpack.c.l.b16 %v1205
        %v2048 = vunpack.c.h.b16 %v1205
        %v2049 = vunpack.c.l.b16 %v1206
        %v2050 = vunpack.c.l.b16 %v1207
        %v2051 = vunpack.c.h.b16 %v1207
        %v2052 = vunpack.c.l.b16 %v1208
        %v2053 = vunpack.c.h.b16 %v1208
        %v2054 = vunpack.c.l.b16 %v1209
        %v2055 = vunpack.c.l.b16 %v1210
        %v2056 = vunpack.c.h.b16 %v1210
        %v2057 = vunpack.c.l.b16 %v1211
        %v2058 = vunpack.c.h.b16 %v1211
        %v2059 = vunpack.c.l.b16 %v1212
        %v2060 = vunpack.c.l.b16 %v1213
        %v2061 = vunpack.c.h.b16 %v1213
        %v2062 = vunpack.c.l.b16 %v1214
        %v2063 = vunpack.c.h.b16 %v1214
        %v2064 = vunpack.c.l.b16 %v1215
        %v2065 = vunpack.c.l.b16 %v1216
        %v2066 = vunpack.c.h.b16 %v1216
        %v2067 = vunpack.c.l.b16 %v1217
        %v2068 = vunpack.c.h.b16 %v1217
        %v2069 = vunpack.c.l.b16 %v1218
        %v2070 = vunpack.c.l.b16 %v1219
        %v2071 = vunpack.c.h.b16 %v1219
        %v2072 = vunpack.c.l.b16 %v1220
        %v2073 = vunpack.c.h.b16 %v1220
        %v2074 = vunpack.c.l.b16 %v1221
        %v2075 = vunpack.c.l.b16 %v1222
        %v2076 = vunpack.c.h.b16 %v1222
        %v2077 = vunpack.c.l.b16 %v1223
        %v2078 = vunpack.c.h.b16 %v1223
        %v2079 = vunpack.c.l.b16 %v1224
        %v2080 = vunpack.c.l.b16 %v1225
        %v2081 = vunpack.c.h.b16 %v1225
        %v2082 = vunpack.c.l.b16 %v1226
        %v2083 = vunpack.c.h.b16 %v1226
        %v2084 = vunpack.c.l.b16 %v1227
        %v2085 = vunpack.c.l.b16 %v1228
        %v2086 = vunpack.c.h.b16 %v1228
        %v2087 = vunpack.c.l.b16 %v1229
        %v2088 = vunpack.c.h.b16 %v1229
        %v2089 = vunpack.c.l.b16 %v1230
        %v2090 = vunpack.c.l.b16 %v1231
        %v2091 = vunpack.c.h.b16 %v1231
        %v2092 = vunpack.c.l.b16 %v1232
        %v2093 = vunpack.c.h.b16 %v1232
        %v2094 = vunpack.c.l.b16 %v1233
        %v2095 = vunpack.c.l.b16 %v1234
        %v2096 = vunpack.c.h.b16 %v1234
        %v2097 = vunpack.c.l.b16 %v1235
        %v2098 = vunpack.c.h.b16 %v1235
        %v2099 = vunpack.c.l.b16 %v1236
        %v2100 = vunpack.c.l.b16 %v1237
        %v2101 = vunpack.c.h.b16 %v1237
        %v2102 = vunpack.c.l.b16 %v1238
        %v2103 = vunpack.c.h.b16 %v1238
        %v2104 = vunpack.c.l.b16 %v1239
        %v2105 = vunpack.c.l.b16 %v1240
        %v2106 = vunpack.c.h.b16 %v1240
        %v2107 = vunpack.c.l.b16 %v1241
        %v2108 = vunpack.c.h.b16 %v1241
        %v2109 = vunpack.c.l.b16 %v1242
        %v2110 = vunpack.c.l.b16 %v1243
        %v2111 = vunpack.c.h.b16 %v1243
        %v2112 = vunpack.c.l.b16 %v1244
        %v2113 = vunpack.c.h.b16 %v1244
        %v2114 = vunpack.c.l.b16 %v1245
        %v2115 = vunpack.c.l.b16 %v1246
        %v2116 = vunpack.c.h.b16 %v1246
        %v2117 = vunpack.c.l.b16 %v1247
        %v2118 = vunpack.c.h.b16 %v1247
        %v2119 = vunpack.c.l.b16 %v1248
        %v2120 = vunpack.c.l.b16 %v1249
        %v2121 = vunpack.c.h.b16 %v1249
        %v2122 = vunpack.c.l.b16 %v1250
        %v2123 = vunpack.c.h.b16 %v1250
        %v2124 = vunpack.c.l.b16 %v1251
        %v2125 = vunpack.c.l.b16 %v1252
        %v2126 = vunpack.c.h.b16 %v1252
        %v2127 = vunpack.c.l.b16 %v1253
        %v2128 = vunpack.c.h.b16 %v1253
        %v2129 = vunpack.c.l.b16 %v1254
        %v2130 = vunpack.c.l.b16 %v1255
        %v2131 = vunpack.c.h.b16 %v1255
        %v2132 = vunpack.c.l.b16 %v1256
        %v2133 = vunpack.c.h.b16 %v1256
        %v2134 = vunpack.c.l.b16 %v1257
        %v2135 = vunpack.c.l.b16 %v1258
        %v2136 = vunpack.c.h.b16 %v1258
        %v2137 = vunpack.c.l.b16 %v1259
        %v2138 = vunpack.c.h.b16 %v1259
        %v2139 = vunpack.c.l.b16 %v1260
        %v2140 = vunpack.c.l.b16 %v1261
        %v2141 = vunpack.c.h.b16 %v1261
        %v2142 = vunpack.c.l.b16 %v1262
        %v2143 = vunpack.c.h.b16 %v1262
        %v2144 = vunpack.c.l.b16 %v1263
        %v2145 = vunpack.c.l.b16 %v1264
        %v2146 = vunpack.c.h.b16 %v1264
        %v2147 = vunpack.c.l.b16 %v1265
        %v2148 = vunpack.c.h.b16 %v1265
        %v2149 = vunpack.c.l.b16 %v1266
        %v2150 = vunpack.c.l.b16 %v1267
        %v2151 = vunpack.c.h.b16 %v1267
        %v2152 = vunpack.c.l.b16 %v1268
        %v2153 = vunpack.c.h.b16 %v1268
        %v2154 = vunpack.c.l.b16 %v1269
        %v2155 = vunpack.c.l.b16 %v1270
        %v2156 = vunpack.c.h.b16 %v1270
        %v2157 = vunpack.c.l.b16 %v1271
        %v2158 = vunpack.c.h.b16 %v1271
        %v2159 = vunpack.c.l.b16 %v1272
        %v2160 = vunpack.c.l.b16 %v1273
        %v2161 = vunpack.c.h.b16 %v1273
        %v2162 = vunpack.c.l.b16 %v1274
        %v2163 = vunpack.c.h.b16 %v1274
        %v2164 = vunpack.c.l.b16 %v1275
        %v2165 = vunpack.c.l.b16 %v1276
        %v2166 = vunpack.c.h.b16 %v1276
        %v2167 = vunpack.c.l.b16 %v1277
        %v2168 = vunpack.c.h.b16 %v1277
        %v2169 = vunpack.c.l.b16 %v1278
        %v2170 = vunpack.c.l.b16 %v1279
        %v2171 = vunpack.c.h.b16 %v1279
        %v2172 = vunpack.c.l.b16 %v1280
        %v2173 = vunpack.c.h.b16 %v1280
        %v2174 = vunpack.c.l.b16 %v1281
        %v2175 = vunpack.c.l.b16 %v1282
        %v2176 = vunpack.c.h.b16 %v1282
        %v2177 = vunpack.c.l.b16 %v1283
        %v2178 = vunpack.c.h.b16 %v1283
        %v2179 = vunpack.c.l.b16 %v1284
        %v2180 = vunpack.c.l.b16 %v1285
        %v2181 = vunpack.c.h.b16 %v1285
        %v2182 = vunpack.c.l.b16 %v1286
        %v2183 = vunpack.c.h.b16 %v1286
        %v2184 = vunpack.c.l.b16 %v1287
        %v2185 = vunpack.c.l.b16 %v1288
        %v2186 = vunpack.c.h.b16 %v1288
        %v2187 = vunpack.c.l.b16 %v1289
        %v2188 = vunpack.c.h.b16 %v1289
        %v2189 = vunpack.c.l.b16 %v1290
        %v2190 = vunpack.c.l.b16 %v1291
        %v2191 = vunpack.c.h.b16 %v1291
        %v2192 = vunpack.c.l.b16 %v1292
        %v2193 = vunpack.c.h.b16 %v1292
        %v2194 = vunpack.c.l.b16 %v1293
        %v2195 = vunpack.c.l.b16 %v1294
        %v2196 = vunpack.c.h.b16 %v1294
        %v2197 = vunpack.c.l.b16 %v1295
        %v2198 = vunpack.c.h.b16 %v1295
        %v2199 = vunpack.c.l.b16 %v1296
        %v2200 = vunpack.c.l.b16 %v1297
        %v2201 = vunpack.c.h.b16 %v1297
        %v2202 = vunpack.c.l.b16 %v1298
        %v2203 = vunpack.c.h.b16 %v1298
        %v2204 = vunpack.c.l.b16 %v1299
        %v2205 = vunpack.c.l.b16 %v1300
        %v2206 = vunpack.c.h.b16 %v1300
        %v2207 = vunpack.c.l.b16 %v1301
        %v2208 = vunpack.c.h.b16 %v1301
        %v2209 = vunpack.c.l.b16 %v1302
        %v2210 = vunpack.c.l.b16 %v1303
        %v2211 = vunpack.c.h.b16 %v1303
        %v2212 = vunpack.c.l.b16 %v1304
        %v2213 = vunpack.c.h.b16 %v1304
        %v2214 = vunpack.c.l.b16 %v1305
        %v2215 = vunpack.c.l.b16 %v1306
        %v2216 = vunpack.c.h.b16 %v1306
        %v2217 = vunpack.c.l.b16 %v1307
        %v2218 = vunpack.c.h.b16 %v1307
        %v2219 = vunpack.c.l.b16 %v1308
        %v2220 = vunpack.c.l.b16 %v1309
        %v2221 = vunpack.c.h.b16 %v1309
        %v2222 = vunpack.c.l.b16 %v1310
        %v2223 = vunpack.c.h.b16 %v1310
        %v2224 = vunpack.c.l.b16 %v1311
        %v2225 = vunpack.c.l.b16 %v1312
        %v2226 = vunpack.c.h.b16 %v1312
        %v2227 = vunpack.c.l.b16 %v1313
        %v2228 = vunpack.c.h.b16 %v1313
        %v2229 = vunpack.c.l.b16 %v1314
        %v2230 = vunpack.c.l.b16 %v1315
        %v2231 = vunpack.c.h.b16 %v1315
        %v2232 = vunpack.c.l.b16 %v1316
        %v2233 = vunpack.c.h.b16 %v1316
        %v2234 = vunpack.c.l.b16 %v1317
        %v2235 = vunpack.c.l.b16 %v1318
        %v2236 = vunpack.c.h.b16 %v1318
        %v2237 = vunpack.c.l.b16 %v1319
        %v2238 = vunpack.c.h.b16 %v1319
        %v2239 = vunpack.c.l.b16 %v1320
        %v2240 = vunpack.c.l.b16 %v1321
        %v2241 = vunpack.c.h.b16 %v1321
        %v2242 = vunpack.c.l.b16 %v1322
        %v2243 = vunpack.c.h.b16 %v1322
        %v2244 = vunpack.c.l.b16 %v1323
        %v2245 = vunpack.c.l.b16 %v1324
        %v2246 = vunpack.c.h.b16 %v1324
        %v2247 = vunpack.c.l.b16 %v1325
        %v2248 = vunpack.c.h.b16 %v1325
        %v2249 = vunpack.c.l.b16 %v1326
        %v2250 = vunpack.c.l.b16 %v1327
        %v2251 = vunpack.c.h.b16 %v1327
        %v2252 = vunpack.c.l.b16 %v1328
        %v2253 = vunpack.c.h.b16 %v1328
        %v2254 = vunpack.c.l.b16 %v1329
        %v2255 = vunpack.c.l.b16 %v1330
        %v2256 = vunpack.c.h.b16 %v1330
        %v2257 = vunpack.c.l.b16 %v1331
        %v2258 = vunpack.c.h.b16 %v1331
        %v2259 = vunpack.c.l.b16 %v1332
        %v2260 = vunpack.c.l.b16 %v1333
        %v2261 = vunpack.c.h.b16 %v1333
        %v2262 = vunpack.c.l.b16 %v1334
        %v2263 = vunpack.c.h.b16 %v1334
        %v2264 = vunpack.c.l.b16 %v1335
        %v2265 = vunpack.c.l.b16 %v1336
        %v2266 = vunpack.c.h.b16 %v1336
        %v2267 = vunpack.c.l.b16 %v1337
        %v2268 = vunpack.c.h.b16 %v1337
        %v2269 = vunpack.c.l.b16 %v1338
        %v2270 = vunpack.c.l.b16 %v1339
        %v2271 = vunpack.c.h.b16 %v1339
        %v2272 = vunpack.c.l.b16 %v1340
        %v2273 = vunpack.c.h.b16 %v1340
        %v2274 = vunpack.c.l.b16 %v1341
        %v2275 = vunpack.c.l.b16 %v1342
        %v2276 = vunpack.c.h.b16 %v1342
        %v2277 = vunpack.c.l.b16 %v1343
        %v2278 = vunpack.c.h.b16 %v1343
        %v2279 = vunpack.c.l.b16 %v1344
        %v2280 = vunpack.c.l.b16 %v1345
        %v2281 = vunpack.c.h.b16 %v1345
        %v2282 = vunpack.c.l.b16 %v1346
        %v2283 = vunpack.c.h.b16 %v1346
        %v2284 = vunpack.c.l.b16 %v1347
        %v2285 = vunpack.c.l.b16 %v1348
        %v2286 = vunpack.c.h.b16 %v1348
        %v2287 = vunpack.c.l.b16 %v1349
        %v2288 = vunpack.c.h.b16 %v1349
        %v2289 = vunpack.c.l.b16 %v1350
        %v2290 = vunpack.c.l.b16 %v1351
        %v2291 = vunpack.c.h.b16 %v1351
        %v2292 = vunpack.c.l.b16 %v1352
        %v2293 = vunpack.c.h.b16 %v1352
        %v2294 = vunpack.c.l.b16 %v1353
        %v2295 = vunpack.c.l.b16 %v1354
        %v2296 = vunpack.c.h.b16 %v1354
        %v2297 = vunpack.c.l.b16 %v1355
        %v2298 = vunpack.c.h.b16 %v1355
        %v2299 = vunpack.c.l.b16 %v1356
        %v2300 = vunpack.c.l.b16 %v1357
        %v2301 = vunpack.c.h.b16 %v1357
        %v2302 = vunpack.c.l.b16 %v1358
        %v2303 = vunpack.c.h.b16 %v1358
        %v2304 = vunpack.c.l.b16 %v1359
        %v2305 = vunpack.c.l.b16 %v1360
        %v2306 = vunpack.c.h.b16 %v1360
        %v2307 = vunpack.c.l.b16 %v1361
        %v2308 = vunpack.c.h.b16 %v1361
        %v2309 = vunpack.c.l.b16 %v1362
        %v2310 = vunpack.c.l.b16 %v1363
        %v2311 = vunpack.c.h.b16 %v1363
        %v2312 = vunpack.c.l.b16 %v1364
        %v2313 = vunpack.c.h.b16 %v1364
        %v2314 = vunpack.c.l.b16 %v1365
        %v2315 = vunpack.c.l.b16 %v1366
        %v2316 = vunpack.c.h.b16 %v1366
        %v2317 = vunpack.c.l.b16 %v1367
        %v2318 = vunpack.c.h.b16 %v1367
        %v2319 = vunpack.c.l.b16 %v1368
        %v2320 = vunpack.c.l.b16 %v1369
        %v2321 = vunpack.c.h.b16 %v1369
        %v2322 = vunpack.c.l.b16 %v1370
        %v2323 = vunpack.c.h.b16 %v1370
        %v2324 = vunpack.c.l.b16 %v1371
        %v2325 = vunpack.c.l.b16 %v1372
        %v2326 = vunpack.c.h.b16 %v1372
        %v2327 = vunpack.c.l.b16 %v1373
        %v2328 = vunpack.c.h.b16 %v1373
        %v2329 = vunpack.c.l.b16 %v1374
        %v2330 = vunpack.c.l.b16 %v1375
        %v2331 = vunpack.c.h.b16 %v1375
        %v2332 = vunpack.c.l.b16 %v1376
        %v2333 = vunpack.c.h.b16 %v1376
        %v2334 = vunpack.c.l.b16 %v1377
        %v2335 = vunpack.c.l.b16 %v1378
        %v2336 = vunpack.c.h.b16 %v1378
        %v2337 = vunpack.c.l.b16 %v1379
        %v2338 = vunpack.c.h.b16 %v1379
        %v2339 = vunpack.c.l.b16 %v1380
        %v2340 = vunpack.c.l.b16 %v1381
        %v2341 = vunpack.c.h.b16 %v1381
        %v2342 = vunpack.c.l.b16 %v1382
        %v2343 = vunpack.c.h.b16 %v1382
        %v2344 = vunpack.c.l.b16 %v1383
        %v2345 = vunpack.c.l.b16 %v1384
        %v2346 = vunpack.c.h.b16 %v1384
        %v2347 = vunpack.c.l.b16 %v1385
        %v2348 = vunpack.c.h.b16 %v1385
        %v2349 = vunpack.c.l.b16 %v1386
        %v2350 = vunpack.c.l.b16 %v1387
        %v2351 = vunpack.c.h.b16 %v1387
        %v2352 = vunpack.c.l.b16 %v1388
        %v2353 = vunpack.c.h.b16 %v1388
        %v2354 = vunpack.c.l.b16 %v1389
        %v2355 = vunpack.c.l.b16 %v1390
        %v2356 = vunpack.c.h.b16 %v1390
        %v2357 = vunpack.c.l.b16 %v1391
        %v2358 = vunpack.c.h.b16 %v1391
        %v2359 = vunpack.c.l.b16 %v1392
        %v2360 = vunpack.c.l.b16 %v1393
        %v2361 = vunpack.c.h.b16 %v1393
        %v2362 = vunpack.c.l.b16 %v1394
        %v2363 = vunpack.c.h.b16 %v1394
        %v2364 = vunpack.c.l.b16 %v1395
        %v2365 = vunpack.c.l.b16 %v1396
        %v2366 = vunpack.c.h.b16 %v1396
        %v2367 = vunpack.c.l.b16 %v1397
        %v2368 = vunpack.c.h.b16 %v1397
        %v2369 = vunpack.c.l.b16 %v1398
        %v2370 = vunpack.c.l.b16 %v1399
        %v2371 = vunpack.c.h.b16 %v1399
        %v2372 = vunpack.c.l.b16 %v1400
        %v2373 = vunpack.c.h.b16 %v1400
        %v2374 = vunpack.c.l.b16 %v1401
        %v2375 = vunpack.c.l.b16 %v1402
        %v2376 = vunpack.c.h.b16 %v1402
        %v2377 = vunpack.c.l.b16 %v1403
        %v2378 = vunpack.c.h.b16 %v1403
        %v2379 = vunpack.c.l.b16 %v1404
        %v2380 = vunpack.c.l.b16 %v1405
        %v2381 = vunpack.c.h.b16 %v1405
        %v2382 = vunpack.c.l.b16 %v1406
        %v2383 = vunpack.c.h.b16 %v1406
        %v2384 = vunpack.c.l.b16 %v1407
        %v2385 = vunpack.c.l.b16 %v1408
        %v2386 = vunpack.c.h.b16 %v1408
        %v2387 = vunpack.c.l.b16 %v1409
        %v2388 = vunpack.c.h.b16 %v1409
        %v2389 = vunpack.c.l.b16 %v1410
        %v2390 = vunpack.c.l.b16 %v1411
        %v2391 = vunpack.c.h.b16 %v1411
        %v2392 = vunpack.c.l.b16 %v1412
        %v2393 = vunpack.c.h.b16 %v1412
        %v2394 = vunpack.c.l.b16 %v1413
        %v2395 = vunpack.c.l.b16 %v1414
        %v2396 = vunpack.c.h.b16 %v1414
        %v2397 = vunpack.c.l.b16 %v1415
        %v2398 = vunpack.c.h.b16 %v1415
        %v2399 = vunpack.c.l.b16 %v1416
        %v2400 = vunpack.c.l.b16 %v1417
        %v2401 = vunpack.c.h.b16 %v1417
        %v2402 = vunpack.c.l.b16 %v1418
        %v2403 = vunpack.c.h.b16 %v1418
        %v2404 = vunpack.c.l.b16 %v1419
        %v2405 = vunpack.c.l.b16 %v1420
        %v2406 = vunpack.c.h.b16 %v1420
        %v2407 = vunpack.c.l.b16 %v1421
        %v2408 = vunpack.c.h.b16 %v1421
        %v2409 = vunpack.c.l.b16 %v1422
        %v2410 = vunpack.c.l.b16 %v1423
        %v2411 = vunpack.c.h.b16 %v1423
        %v2412 = vunpack.c.l.b16 %v1424
        %v2413 = vunpack.c.h.b16 %v1424
        %v2414 = vunpack.c.l.b16 %v1425
        %v2415 = vunpack.c.l.b16 %v1426
        %v2416 = vunpack.c.h.b16 %v1426
        %v2417 = vunpack.c.l.b16 %v1427
        %v2418 = vunpack.c.h.b16 %v1427
        %v2419 = vunpack.c.l.b16 %v1428
        %v2420 = vunpack.c.l.b16 %v1429
        %v2421 = vunpack.c.h.b16 %v1429
        %v2422 = vunpack.c.l.b16 %v1430
        %v2423 = vunpack.c.h.b16 %v1430
        %v2424 = vunpack.c.l.b16 %v1431
        %v2425 = vunpack.c.l.b16 %v1432
        %v2426 = vunpack.c.h.b16 %v1432
        %v2427 = vunpack.c.l.b16 %v1433
        %v2428 = vunpack.c.h.b16 %v1433
        %v2429 = vunpack.c.l.b16 %v1434
        %v2430 = vunpack.c.l.b16 %v1435
        %v2431 = vunpack.c.h.b16 %v1435
        %v2432 = vunpack.c.l.b16 %v1436
        %v2433 = vunpack.c.h.b16 %v1436
        %v2434 = vunpack.c.l.b16 %v1437
        %v2435 = vunpack.c.l.b16 %v1438
        %v2436 = vunpack.c.h.b16 %v1438
        %v2437 = vunpack.c.l.b16 %v1439
        %v2438 = vunpack.c.h.b16 %v1439
        %v2439 = vunpack.c.l.b16 %v1440
        %v2440 = vpack.c.b16 %v1925, %v1920
        %v2441 = vpack.c.b16 %v1926, %v1921
        %v2442 = vpack.c.b16 %v1927, %v1922
        %v2443 = vpack.c.b16 %v1928, %v1923
        %v2444 = vpack.c.b16 %v1929, %v1924
        %v2445 = vpack.c.b16 %v1935, %v1930
        %v2446 = vpack.c.b16 %v1936, %v1931
        %v2447 = vpack.c.b16 %v1937, %v1932
        %v2448 = vpack.c.b16 %v1938, %v1933
        %v2449 = vpack.c.b16 %v1939, %v1934
        %v2450 = vpack.c.b16 %v1945, %v1940
        %v2451 = vpack.c.b16 %v1946, %v1941
        %v2452 = vpack.c.b16 %v1947, %v1942
        %v2453 = vpack.c.b16 %v1948, %v1943
        %v2454 = vpack.c.b16 %v1949, %v1944
        %v2455 = vpack.c.b16 %v1955, %v1950
        %v2456 = vpack.c.b16 %v1956, %v1951
        %v2457 = vpack.c.b16 %v1957, %v1952
        %v2458 = vpack.c.b16 %v1958, %v1953
        %v2459 = vpack.c.b16 %v1959, %v1954
        %v2460 = vpack.c.b16 %v1965, %v1960
        %v2461 = vpack.c.b16 %v1966, %v1961
        %v2462 = vpack.c.b16 %v1967, %v1962
        %v2463 = vpack.c.b16 %v1968, %v1963
        %v2464 = vpack.c.b16 %v1969, %v1964
        %v2465 = vpack.c.b16 %v1975, %v1970
        %v2466 = vpack.c.b16 %v1976, %v1971
        %v2467 = vpack.c.b16 %v1977, %v1972
        %v2468 = vpack.c.b16 %v1978, %v1973
        %v2469 = vpack.c.b16 %v1979, %v1974
        %v2470 = vpack.c.b16 %v1985, %v1980
        %v2471 = vpack.c.b16 %v1986, %v1981
        %v2472 = vpack.c.b16 %v1987, %v1982
        %v2473 = vpack.c.b16 %v1988, %v1983
        %v2474 = vpack.c.b16 %v1989, %v1984
        %v2475 = vpack.c.b16 %v1995, %v1990
        %v2476 = vpack.c.b16 %v1996, %v1991
        %v2477 = vpack.c.b16 %v1997, %v1992
        %v2478 = vpack.c.b16 %v1998, %v1993
        %v2479 = vpack.c.b16 %v1999, %v1994
        %v2480 = vpack.c.b16 %v2005, %v2000
        %v2481 = vpack.c.b16 %v2006, %v2001
        %v2482 = vpack.c.b16 %v2007, %v2002
        %v2483 = vpack.c.b16 %v2008, %v2003
        %v2484 = vpack.c.b16 %v2009, %v2004
        %v2485 = vpack.c.b16 %v2015, %v2010
        %v2486 = vpack.c.b16 %v2016, %v2011
        %v2487 = vpack.c.b16 %v2017, %v2012
        %v2488 = vpack.c.b16 %v2018, %v2013
        %v2489 = vpack.c.b16 %v2019, %v2014
        %v2490 = vpack.c.b16 %v2025, %v2020
        %v2491 = vpack.c.b16 %v2026, %v2021
        %v2492 = vpack.c.b16 %v2027, %v2022
        %v2493 = vpack.c.b16 %v2028, %v2023
        %v2494 = vpack.c.b16 %v2029, %v2024
        %v2495 = vpack.c.b16 %v2035, %v2030
        %v2496 = vpack.c.b16 %v2036, %v2031
        %v2497 = vpack.c.b16 %v2037, %v2032
        %v2498 = vpack.c.b16 %v2038, %v2033
        %v2499 = vpack.c.b16 %v2039, %v2034
        %v2500 = vpack.c.b16 %v2045, %v2040
        %v2501 = vpack.c.b16 %v2046, %v2041
        %v2502 = vpack.c.b16 %v2047, %v2042
        %v2503 = vpack.c.b16 %v2048, %v2043
        %v2504 = vpack.c.b16 %v2049, %v2044
        %v2505 = vpack.c.b16 %v2055, %v2050
        %v2506 = vpack.c.b16 %v2056, %v2051
        %v2507 = vpack.c.b16 %v2057, %v2052
        %v2508 = vpack.c.b16 %v2058, %v2053
        %v2509 = vpack.c.b16 %v2059, %v2054
        %v2510 = vpack.c.b16 %v2065, %v2060
        %v2511 = vpack.c.b16 %v2066, %v2061
        %v2512 = vpack.c.b16 %v2067, %v2062
        %v2513 = vpack.c.b16 %v2068, %v2063
        %v2514 = vpack.c.b16 %v2069, %v2064
        %v2515 = vpack.c.b16 %v2075, %v2070
        %v2516 = vpack.c.b16 %v2076, %v2071
        %v2517 = vpack.c.b16 %v2077, %v2072
        %v2518 = vpack.c.b16 %v2078, %v2073
        %v2519 = vpack.c.b16 %v2079, %v2074
        %v2520 = vpack.c.b16 %v2085, %v2080
        %v2521 = vpack.c.b16 %v2086, %v2081
        %v2522 = vpack.c.b16 %v2087, %v2082
        %v2523 = vpack.c.b16 %v2088, %v2083
        %v2524 = vpack.c.b16 %v2089, %v2084
        %v2525 = vpack.c.b16 %v2095, %v2090
        %v2526 = vpack.c.b16 %v2096, %v2091
        %v2527 = vpack.c.b16 %v2097, %v2092
        %v2528 = vpack.c.b16 %v2098, %v2093
        %v2529 = vpack.c.b16 %v2099, %v2094
        %v2530 = vpack.c.b16 %v2105, %v2100
        %v2531 = vpack.c.b16 %v2106, %v2101
        %v2532 = vpack.c.b16 %v2107, %v2102
        %v2533 = vpack.c.b16 %v2108, %v2103
        %v2534 = vpack.c.b16 %v2109, %v2104
        %v2535 = vpack.c.b16 %v2115, %v2110
        %v2536 = vpack.c.b16 %v2116, %v2111
        %v2537 = vpack.c.b16 %v2117, %v2112
        %v2538 = vpack.c.b16 %v2118, %v2113
        %v2539 = vpack.c.b16 %v2119, %v2114
        %v2540 = vpack.c.b16 %v2125, %v2120
        %v2541 = vpack.c.b16 %v2126, %v2121
        %v2542 = vpack.c.b16 %v2127, %v2122
        %v2543 = vpack.c.b16 %v2128, %v2123
        %v2544 = vpack.c.b16 %v2129, %v2124
        %v2545 = vpack.c.b16 %v2135, %v2130
        %v2546 = vpack.c.b16 %v2136, %v2131
        %v2547 = vpack.c.b16 %v2137, %v2132
        %v2548 = vpack.c.b16 %v2138, %v2133
        %v2549 = vpack.c.b16 %v2139, %v2134
        %v2550 = vpack.c.b16 %v2145, %v2140
        %v2551 = vpack.c.b16 %v2146, %v2141
        %v2552 = vpack.c.b16 %v2147, %v2142
        %v2553 = vpack.c.b16 %v2148, %v2143
        %v2554 = vpack.c.b16 %v2149, %v2144
        %v2555 = vpack.c.b16 %v2155, %v2150
        %v2556 = vpack.c.b16 %v2156, %v2151
        %v2557 = vpack.c.b16 %v2157, %v2152
        %v2558 = vpack.c.b16 %v2158, %v2153
        %v2559 = vpack.c.b16 %v2159, %v2154
        %v2560 = vpack.c.b16 %v2165, %v2160
        %v2561 = vpack.c.b16 %v2166, %v2161
        %v2562 = vpack.c.b16 %v2167, %v2162
        %v2563 = vpack.c.b16 %v2168, %v2163
        %v2564 = vpack.c.b16 %v2169, %v2164
        %v2565 = vpack.c.b16 %v2175, %v2170
        %v2566 = vpack.c.b16 %v2176, %v2171
        %v2567 = vpack.c.b16 %v2177, %v2172
        %v2568 = vpack.c.b16 %v2178, %v2173
        %v2569 = vpack.c.b16 %v2179, %v2174
        %v2570 = vpack.c.b16 %v2185, %v2180
        %v2571 = vpack.c.b16 %v2186, %v2181
        %v2572 = vpack.c.b16 %v2187, %v2182
        %v2573 = vpack.c.b16 %v2188, %v2183
        %v2574 = vpack.c.b16 %v2189, %v2184
        %v2575 = vpack.c.b16 %v2195, %v2190
        %v2576 = vpack.c.b16 %v2196, %v2191
        %v2577 = vpack.c.b16 %v2197, %v2192
        %v2578 = vpack.c.b16 %v2198, %v2193
        %v2579 = vpack.c.b16 %v2199, %v2194
        %v2580 = vpack.c.b16 %v2205, %v2200
        %v2581 = vpack.c.b16 %v2206, %v2201
        %v2582 = vpack.c.b16 %v2207, %v2202
        %v2583 = vpack.c.b16 %v2208, %v2203
        %v2584 = vpack.c.b16 %v2209, %v2204
        %v2585 = vpack.c.b16 %v2215, %v2210
        %v2586 = vpack.c.b16 %v2216, %v2211
        %v2587 = vpack.c.b16 %v2217, %v2212
        %v2588 = vpack.c.b16 %v2218, %v2213
        %v2589 = vpack.c.b16 %v2219, %v2214
        %v2590 = vpack.c.b16 %v2225, %v2220
        %v2591 = vpack.c.b16 %v2226, %v2221
        %v2592 = vpack.c.b16 %v2227, %v2222
        %v2593 = vpack.c.b16 %v2228, %v2223
        %v2594 = vpack.c.b16 %v2229, %v2224
        %v2595 = vpack.c.b16 %v2235, %v2230
        %v2596 = vpack.c.b16 %v2236, %v2231
        %v2597 = vpack.c.b16 %v2237, %v2232
        %v2598 = vpack.c.b16 %v2238, %v2233
        %v2599 = vpack.c.b16 %v2239, %v2234
        %v2600 = vpack.c.b16 %v2245, %v2240
        %v2601 = vpack.c.b16 %v2246, %v2241
        %v2602 = vpack.c.b16 %v2247, %v2242
        %v2603 = vpack.c.b16 %v2248, %v2243
        %v2604 = vpack.c.b16 %v2249, %v2244
        %v2605 = vpack.c.b16 %v2255, %v2250
        %v2606 = vpack.c.b16 %v2256, %v2251
        %v2607 = vpack.c.b16 %v2257, %v2252
        %v2608 = vpack.c.b16 %v2258, %v2253
        %v2609 = vpack.c.b16 %v2259, %v2254
        %v2610 = vpack.c.b16 %v2265, %v2260
        %v2611 = vpack.c.b16 %v2266, %v2261
        %v2612 = vpack.c.b16 %v2267, %v2262
        %v2613 = vpack.c.b16 %v2268, %v2263
        %v2614 = vpack.c.b16 %v2269, %v2264
        %v2615 = vpack.c.b16 %v2275, %v2270
        %v2616 = vpack.c.b16 %v2276, %v2271
        %v2617 = vpack.c.b16 %v2277, %v2272
        %v2618 = vpack.c.b16 %v2278, %v2273
        %v2619 = vpack.c.b16 %v2279, %v2274
        %v2620 = vpack.c.b16 %v2285, %v2280
        %v2621 = vpack.c.b16 %v2286, %v2281
        %v2622 = vpack.c.b16 %v2287, %v2282
        %v2623 = vpack.c.b16 %v2288, %v2283
        %v2624 = vpack.c.b16 %v2289, %v2284
        %v2625 = vpack.c.b16 %v2295, %v2290
        %v2626 = vpack.c.b16 %v2296, %v2291
        %v2627 = vpack.c.b16 %v2297, %v2292
        %v2628 = vpack.c.b16 %v2298, %v2293
        %v2629 = vpack.c.b16 %v2299, %v2294
        %v2630 = vpack.c.b16 %v2305, %v2300
        %v2631 = vpack.c.b16 %v2306, %v2301
        %v2632 = vpack.c.b16 %v2307, %v2302
        %v2633 = vpack.c.b16 %v2308, %v2303
        %v2634 = vpack.c.b16 %v2309, %v2304
        %v2635 = vpack.c.b16 %v2315, %v2310
        %v2636 = vpack.c.b16 %v2316, %v2311
        %v2637 = vpack.c.b16 %v2317, %v2312
        %v2638 = vpack.c.b16 %v2318, %v2313
        %v2639 = vpack.c.b16 %v2319, %v2314
        %v2640 = vpack.c.b16 %v2325, %v2320
        %v2641 = vpack.c.b16 %v2326, %v2321
        %v2642 = vpack.c.b16 %v2327, %v2322
        %v2643 = vpack.c.b16 %v2328, %v2323
        %v2644 = vpack.c.b16 %v2329, %v2324
        %v2645 = vpack.c.b16 %v2335, %v2330
        %v2646 = vpack.c.b16 %v2336, %v2331
        %v2647 = vpack.c.b16 %v2337, %v2332
        %v2648 = vpack.c.b16 %v2338, %v2333
        %v2649 = vpack.c.b16 %v2339, %v2334
        %v2650 = vpack.c.b16 %v2345, %v2340
        %v2651 = vpack.c.b16 %v2346, %v2341
        %v2652 = vpack.c.b16 %v2347, %v2342
        %v2653 = vpack.c.b16 %v2348, %v2343
        %v2654 = vpack.c.b16 %v2349, %v2344
        %v2655 = vpack.c.b16 %v2355, %v2350
        %v2656 = vpack.c.b16 %v2356, %v2351
        %v2657 = vpack.c.b16 %v2357, %v2352
        %v2658 = vpack.c.b16 %v2358, %v2353
        %v2659 = vpack.c.b16 %v2359, %v2354
        %v2660 = vpack.c.b16 %v2365, %v2360
        %v2661 = vpack.c.b16 %v2366, %v2361
        %v2662 = vpack.c.b16 %v2367, %v2362
        %v2663 = vpack.c.b16 %v2368, %v2363
        %v2664 = vpack.c.b16 %v2369, %v2364
        %v2665 = vpack.c.b16 %v2375, %v2370
        %v2666 = vpack.c.b16 %v2376, %v2371
        %v2667 = vpack.c.b16 %v2377, %v2372
        %v2668 = vpack.c.b16 %v2378, %v2373
        %v2669 = vpack.c.b16 %v2379, %v2374
        %v2670 = vpack.c.b16 %v2385, %v2380
        %v2671 = vpack.c.b16 %v2386, %v2381
        %v2672 = vpack.c.b16 %v2387, %v2382
        %v2673 = vpack.c.b16 %v2388, %v2383
        %v2674 = vpack.c.b16 %v2389, %v2384
        %v2675 = vpack.c.b16 %v2395, %v2390
        %v2676 = vpack.c.b16 %v2396, %v2391
        %v2677 = vpack.c.b16 %v2397, %v2392
        %v2678 = vpack.c.b16 %v2398, %v2393
        %v2679 = vpack.c.b16 %v2399, %v2394
        %v2680 = vpack.c.b16 %v2405, %v2400
        %v2681 = vpack.c.b16 %v2406, %v2401
        %v2682 = vpack.c.b16 %v2407, %v2402
        %v2683 = vpack.c.b16 %v2408, %v2403
        %v2684 = vpack.c.b16 %v2409, %v2404
        %v2685 = vpack.c.b16 %v2415, %v2410
        %v2686 = vpack.c.b16 %v2416, %v2411
        %v2687 = vpack.c.b16 %v2417, %v2412
        %v2688 = vpack.c.b16 %v2418, %v2413
        %v2689 = vpack.c.b16 %v2419, %v2414
        %v2690 = vpack.c.b16 %v2425, %v2420
        %v2691 = vpack.c.b16 %v2426, %v2421
        %v2692 = vpack.c.b16 %v2427, %v2422
        %v2693 = vpack.c.b16 %v2428, %v2423
        %v2694 = vpack.c.b16 %v2429, %v2424
        %v2695 = vpack.c.b16 %v2435, %v2430
        %v2696 = vpack.c.b16 %v2436, %v2431
        %v2697 = vpack.c.b16 %v2437, %v2432
        %v2698 = vpack.c.b16 %v2438, %v2433
        %v2699 = vpack.c.b16 %v2439, %v2434
        %vm2960 = vcmask 523264
        %v2962 = vsel %vm2960, %v1562, 0
        %v2965 = vsel %vm2960, %v1569, 0
        %v2968 = vsel %vm2960, %v1576, 0
        %v2971 = vsel %vm2960, %v1583, 0
        %2973 = vmatprep.subr.bf16.mxu0 %v2476
        %2974 = vmatpush1.bf16.msra.mxu0 %v2475
        %2975 = vmatprep.subr.bf16.mxu0 %v2471
        %2976 = vmatpush1.bf16.msra.mxu0 %v2470
        %2977 = vmatprep.subr.bf16.mxu0 %v2466
        %2978 = vmatpush1.bf16.msra.mxu0 %v2465
        %2979 = vmatprep.subr.bf16.mxu0 %v2461
        %2980 = vmatpush1.bf16.msra.mxu0 %v2460
        %2981 = vmatprep.subr.bf16.mxu0 %v2456
        %2982 = vmatpush1.bf16.msra.mxu0 %v2455
        %2983 = vmatprep.subr.bf16.mxu0 %v2451
        %2984 = vmatpush1.bf16.msra.mxu0 %v2450
        %2985 = vmatprep.subr.bf16.mxu0 %v2446
        %2986 = vmatpush1.bf16.msra.mxu0 %v2445
        %2987 = vmatprep.subr.bf16.mxu0 %v2441
        %2988 = vmatpush1.bf16.msra.mxu0 %v2440
        %2989 = vmatprep.subr.bf16.mxu0 %v2516
        %2990 = vmatpush2.bf16.msra.mxu0 %v2515
        %2991 = vmatprep.subr.bf16.mxu0 %v2511
        %2992 = vmatpush2.bf16.msra.mxu0 %v2510
        %2993 = vmatprep.subr.bf16.mxu0 %v2506
        %2994 = vmatpush2.bf16.msra.mxu0 %v2505
        %2995 = vmatprep.subr.bf16.mxu0 %v2501
        %2996 = vmatpush2.bf16.msra.mxu0 %v2500
        %2997 = vmatprep.subr.bf16.mxu0 %v2496
        %2998 = vmatpush2.bf16.msra.mxu0 %v2495
        %2999 = vmatprep.subr.bf16.mxu0 %v2491
        %3000 = vmatpush2.bf16.msra.mxu0 %v2490
        %3001 = vmatprep.subr.bf16.mxu0 %v2486
        %3002 = vmatpush2.bf16.msra.mxu0 %v2485
        %3003 = vmatprep.subr.bf16.mxu0 %v2481
        %3004 = vmatpush2.bf16.msra.mxu0 %v2480
        %3005 = vmatprep.mubr.bf16.mxu0 %v1557
        %3006 = vmatmul.mubr.bf16.gmra.mxu0 %v1556
        %v3007 = vpop.f32.mrf.mxu0
        %v3008 = vadd.f32 %v1446, %v3007
        %v3009 = vpop.f32.mrf.mxu0
        %v3010 = vadd.f32 %v1450, %v3009
        %v3011 = vpop.f32.mrf.mxu0
        %v3012 = vadd.f32 %v1446, %v3011
        %v3013 = vpop.f32.mrf.mxu0
        %v3014 = vadd.f32 %v1450, %v3013
        %3015 = vmatprep.mubr.bf16.mxu0 %v1564
        %3016 = vmatmul.mubr.bf16.gmra.mxu0 %v1563
        %v3017 = vpop.f32.mrf.mxu0
        %v3018 = vadd.f32 %v1446, %v3017
        %v3019 = vpop.f32.mrf.mxu0
        %v3020 = vadd.f32 %v1450, %v3019
        %v3021 = vpop.f32.mrf.mxu0
        %v3022 = vadd.f32 %v1446, %v3021
        %v3023 = vpop.f32.mrf.mxu0
        %v3024 = vadd.f32 %v1450, %v3023
        %3025 = vmatprep.mubr.bf16.mxu0 %v1571
        %3026 = vmatmul.mubr.bf16.gmra.mxu0 %v1570
        %v3027 = vpop.f32.mrf.mxu0
        %v3028 = vadd.f32 %v1446, %v3027
        %v3029 = vpop.f32.mrf.mxu0
        %v3030 = vadd.f32 %v1450, %v3029
        %v3031 = vpop.f32.mrf.mxu0
        %v3032 = vadd.f32 %v1446, %v3031
        %v3033 = vpop.f32.mrf.mxu0
        %v3034 = vadd.f32 %v1450, %v3033
        %3035 = vmatprep.mubr.bf16.mxu0 %v1578
        %3036 = vmatmul.mubr.bf16.gmra.mxu0 %v1577
        %v3037 = vpop.f32.mrf.mxu0
        %v3038 = vadd.f32 %v1446, %v3037
        %v3039 = vpop.f32.mrf.mxu0
        %v3040 = vadd.f32 %v1450, %v3039
        %v3041 = vpop.f32.mrf.mxu0
        %v3042 = vadd.f32 %v1446, %v3041
        %v3043 = vpop.f32.mrf.mxu0
        %v3044 = vadd.f32 %v1450, %v3043
        %3045 = vdwg.mxu0
        %3046 = vmatprep.subr.bf16.mxu0 %v2556
        %3047 = vmatpush1.bf16.msra.mxu0 %v2555
        %3048 = vmatprep.subr.bf16.mxu0 %v2551
        %3049 = vmatpush1.bf16.msra.mxu0 %v2550
        %3050 = vmatprep.subr.bf16.mxu0 %v2546
        %3051 = vmatpush1.bf16.msra.mxu0 %v2545
        %3052 = vmatprep.subr.bf16.mxu0 %v2541
        %3053 = vmatpush1.bf16.msra.mxu0 %v2540
        %3054 = vmatprep.subr.bf16.mxu0 %v2536
        %3055 = vmatpush1.bf16.msra.mxu0 %v2535
        %3056 = vmatprep.subr.bf16.mxu0 %v2531
        %3057 = vmatpush1.bf16.msra.mxu0 %v2530
        %3058 = vmatprep.subr.bf16.mxu0 %v2526
        %3059 = vmatpush1.bf16.msra.mxu0 %v2525
        %3060 = vmatprep.subr.bf16.mxu0 %v2521
        %3061 = vmatpush1.bf16.msra.mxu0 %v2520
        %3062 = vmatprep.subr.bf16.mxu0 %v2596
        %3063 = vmatpush2.bf16.msra.mxu0 %v2595
        %3064 = vmatprep.subr.bf16.mxu0 %v2591
        %3065 = vmatpush2.bf16.msra.mxu0 %v2590
        %3066 = vmatprep.subr.bf16.mxu0 %v2586
        %3067 = vmatpush2.bf16.msra.mxu0 %v2585
        %3068 = vmatprep.subr.bf16.mxu0 %v2581
        %3069 = vmatpush2.bf16.msra.mxu0 %v2580
        %3070 = vmatprep.subr.bf16.mxu0 %v2576
        %3071 = vmatpush2.bf16.msra.mxu0 %v2575
        %3072 = vmatprep.subr.bf16.mxu0 %v2571
        %3073 = vmatpush2.bf16.msra.mxu0 %v2570
        %3074 = vmatprep.subr.bf16.mxu0 %v2566
        %3075 = vmatpush2.bf16.msra.mxu0 %v2565
        %3076 = vmatprep.subr.bf16.mxu0 %v2561
        %3077 = vmatpush2.bf16.msra.mxu0 %v2560
        %3078 = vmatprep.mubr.bf16.mxu0 %v1559
        %3079 = vmatmul.mubr.bf16.gmra.mxu0 %v1558
        %v3080 = vpop.f32.mrf.mxu0
        %v3081 = vadd.f32 %v3008, %v3080
        %v3082 = vpop.f32.mrf.mxu0
        %v3083 = vadd.f32 %v3010, %v3082
        %v3084 = vpop.f32.mrf.mxu0
        %v3085 = vadd.f32 %v3012, %v3084
        %v3086 = vpop.f32.mrf.mxu0
        %v3087 = vadd.f32 %v3014, %v3086
        %3088 = vmatprep.mubr.bf16.mxu0 %v1566
        %3089 = vmatmul.mubr.bf16.gmra.mxu0 %v1565
        %v3090 = vpop.f32.mrf.mxu0
        %v3091 = vadd.f32 %v3018, %v3090
        %v3092 = vpop.f32.mrf.mxu0
        %v3093 = vadd.f32 %v3020, %v3092
        %v3094 = vpop.f32.mrf.mxu0
        %v3095 = vadd.f32 %v3022, %v3094
        %v3096 = vpop.f32.mrf.mxu0
        %v3097 = vadd.f32 %v3024, %v3096
        %3098 = vmatprep.mubr.bf16.mxu0 %v1573
        %3099 = vmatmul.mubr.bf16.gmra.mxu0 %v1572
        %v3100 = vpop.f32.mrf.mxu0
        %v3101 = vadd.f32 %v3028, %v3100
        %v3102 = vpop.f32.mrf.mxu0
        %v3103 = vadd.f32 %v3030, %v3102
        %v3104 = vpop.f32.mrf.mxu0
        %v3105 = vadd.f32 %v3032, %v3104
        %v3106 = vpop.f32.mrf.mxu0
        %v3107 = vadd.f32 %v3034, %v3106
        %3108 = vmatprep.mubr.bf16.mxu0 %v1580
        %3109 = vmatmul.mubr.bf16.gmra.mxu0 %v1579
        %v3110 = vpop.f32.mrf.mxu0
        %v3111 = vadd.f32 %v3038, %v3110
        %v3112 = vpop.f32.mrf.mxu0
        %v3113 = vadd.f32 %v3040, %v3112
        %v3114 = vpop.f32.mrf.mxu0
        %v3115 = vadd.f32 %v3042, %v3114
        %v3116 = vpop.f32.mrf.mxu0
        %v3117 = vadd.f32 %v3044, %v3116
        %3118 = vdwg.mxu0
        %3119 = vmatprep.subr.bf16.mxu0 %v2636
        %3120 = vmatpush1.bf16.msra.mxu0 %v2635
        %3121 = vmatprep.subr.bf16.mxu0 %v2631
        %3122 = vmatpush1.bf16.msra.mxu0 %v2630
        %3123 = vmatprep.subr.bf16.mxu0 %v2626
        %3124 = vmatpush1.bf16.msra.mxu0 %v2625
        %3125 = vmatprep.subr.bf16.mxu0 %v2621
        %3126 = vmatpush1.bf16.msra.mxu0 %v2620
        %3127 = vmatprep.subr.bf16.mxu0 %v2616
        %3128 = vmatpush1.bf16.msra.mxu0 %v2615
        %3129 = vmatprep.subr.bf16.mxu0 %v2611
        %3130 = vmatpush1.bf16.msra.mxu0 %v2610
        %3131 = vmatprep.subr.bf16.mxu0 %v2606
        %3132 = vmatpush1.bf16.msra.mxu0 %v2605
        %3133 = vmatprep.subr.bf16.mxu0 %v2601
        %3134 = vmatpush1.bf16.msra.mxu0 %v2600
        %3135 = vmatprep.subr.bf16.mxu0 %v2676
        %3136 = vmatpush2.bf16.msra.mxu0 %v2675
        %3137 = vmatprep.subr.bf16.mxu0 %v2671
        %3138 = vmatpush2.bf16.msra.mxu0 %v2670
        %3139 = vmatprep.subr.bf16.mxu0 %v2666
        %3140 = vmatpush2.bf16.msra.mxu0 %v2665
        %3141 = vmatprep.subr.bf16.mxu0 %v2661
        %3142 = vmatpush2.bf16.msra.mxu0 %v2660
        %3143 = vmatprep.subr.bf16.mxu0 %v2656
        %3144 = vmatpush2.bf16.msra.mxu0 %v2655
        %3145 = vmatprep.subr.bf16.mxu0 %v2651
        %3146 = vmatpush2.bf16.msra.mxu0 %v2650
        %3147 = vmatprep.subr.bf16.mxu0 %v2646
        %3148 = vmatpush2.bf16.msra.mxu0 %v2645
        %3149 = vmatprep.subr.bf16.mxu0 %v2641
        %3150 = vmatpush2.bf16.msra.mxu0 %v2640
        %3151 = vmatprep.mubr.bf16.mxu0 %v1561
        %3152 = vmatmul.mubr.bf16.gmra.mxu0 %v1560
        %v3153 = vpop.f32.mrf.mxu0
        %v3154 = vadd.f32 %v3081, %v3153
        %v3155 = vpop.f32.mrf.mxu0
        %v3156 = vadd.f32 %v3083, %v3155
        %v3157 = vpop.f32.mrf.mxu0
        %v3158 = vadd.f32 %v3085, %v3157
        %v3159 = vpop.f32.mrf.mxu0
        %v3160 = vadd.f32 %v3087, %v3159
        %3161 = vmatprep.mubr.bf16.mxu0 %v1568
        %3162 = vmatmul.mubr.bf16.gmra.mxu0 %v1567
        %v3163 = vpop.f32.mrf.mxu0
        %v3164 = vadd.f32 %v3091, %v3163
        %v3165 = vpop.f32.mrf.mxu0
        %v3166 = vadd.f32 %v3093, %v3165
        %v3167 = vpop.f32.mrf.mxu0
        %v3168 = vadd.f32 %v3095, %v3167
        %v3169 = vpop.f32.mrf.mxu0
        %v3170 = vadd.f32 %v3097, %v3169
        %3171 = vmatprep.mubr.bf16.mxu0 %v1575
        %3172 = vmatmul.mubr.bf16.gmra.mxu0 %v1574
        %v3173 = vpop.f32.mrf.mxu0
        %v3174 = vadd.f32 %v3101, %v3173
        %v3175 = vpop.f32.mrf.mxu0
        %v3176 = vadd.f32 %v3103, %v3175
        %v3177 = vpop.f32.mrf.mxu0
        %v3178 = vadd.f32 %v3105, %v3177
        %v3179 = vpop.f32.mrf.mxu0
        %v3180 = vadd.f32 %v3107, %v3179
        %3181 = vmatprep.mubr.bf16.mxu0 %v1582
        %3182 = vmatmul.mubr.bf16.gmra.mxu0 %v1581
        %v3183 = vpop.f32.mrf.mxu0
        %v3184 = vadd.f32 %v3111, %v3183
        %v3185 = vpop.f32.mrf.mxu0
        %v3186 = vadd.f32 %v3113, %v3185
        %v3187 = vpop.f32.mrf.mxu0
        %v3188 = vadd.f32 %v3115, %v3187
        %v3189 = vpop.f32.mrf.mxu0
        %v3190 = vadd.f32 %v3117, %v3189
        %3191 = vdwg.mxu0
        %3192 = vmatprep.subr.bf16.mxu0 0
        %3193 = vmatpush1.bf16.msra.mxu0 0
        %3194 = vmatprep.subr.bf16.mxu0 0
        %3195 = vmatpush1.bf16.msra.mxu0 0
        %3196 = vmatprep.subr.bf16.mxu0 0
        %3197 = vmatpush1.bf16.msra.mxu0 0
        %3198 = vmatprep.subr.bf16.mxu0 0
        %3199 = vmatpush1.bf16.msra.mxu0 0
        %3200 = vmatprep.subr.bf16.mxu0 %v2696
        %3201 = vmatpush1.bf16.msra.mxu0 %v2695
        %3202 = vmatprep.subr.bf16.mxu0 %v2691
        %3203 = vmatpush1.bf16.msra.mxu0 %v2690
        %3204 = vmatprep.subr.bf16.mxu0 %v2686
        %3205 = vmatpush1.bf16.msra.mxu0 %v2685
        %3206 = vmatprep.subr.bf16.mxu0 %v2681
        %3207 = vmatpush1.bf16.msra.mxu0 %v2680
        %3208 = vmatprep.subr.bf16.mxu0 0
        %3209 = vmatpush2.bf16.msra.mxu0 0
        %3210 = vmatprep.subr.bf16.mxu0 0
        %3211 = vmatpush2.bf16.msra.mxu0 0
        %3212 = vmatprep.subr.bf16.mxu0 0
        %3213 = vmatpush2.bf16.msra.mxu0 0
        %3214 = vmatprep.subr.bf16.mxu0 0
        %3215 = vmatpush2.bf16.msra.mxu0 0
        %3216 = vmatprep.subr.bf16.mxu0 0
        %3217 = vmatpush2.bf16.msra.mxu0 0
        %3218 = vmatprep.subr.bf16.mxu0 0
        %3219 = vmatpush2.bf16.msra.mxu0 0
        %3220 = vmatprep.subr.bf16.mxu0 0
        %3221 = vmatpush2.bf16.msra.mxu0 0
        %3222 = vmatprep.subr.bf16.mxu0 0
        %3223 = vmatpush2.bf16.msra.mxu0 0
        %3224 = vmatprep.mubr.bf16.mxu0 0
        %3225 = vmatmul.mubr.bf16.gmra.mxu0 %v2962
        %v3226 = vpop.f32.mrf.mxu0
        %v3227 = vadd.f32 %v3154, %v3226
        %v3228 = vpop.f32.mrf.mxu0
        %v3229 = vadd.f32 %v3156, %v3228
        %v3230 = vpop.f32.mrf.mxu0
        %v3231 = vadd.f32 %v3158, %v3230
        %v3232 = vpop.f32.mrf.mxu0
        %v3233 = vadd.f32 %v3160, %v3232
        %3234 = vmatprep.mubr.bf16.mxu0 0
        %3235 = vmatmul.mubr.bf16.gmra.mxu0 %v2965
        %v3236 = vpop.f32.mrf.mxu0
        %v3237 = vadd.f32 %v3164, %v3236
        %v3238 = vpop.f32.mrf.mxu0
        %v3239 = vadd.f32 %v3166, %v3238
        %v3240 = vpop.f32.mrf.mxu0
        %v3241 = vadd.f32 %v3168, %v3240
        %v3242 = vpop.f32.mrf.mxu0
        %v3243 = vadd.f32 %v3170, %v3242
        %3244 = vmatprep.mubr.bf16.mxu0 0
        %3245 = vmatmul.mubr.bf16.gmra.mxu0 %v2968
        %v3246 = vpop.f32.mrf.mxu0
        %v3247 = vadd.f32 %v3174, %v3246
        %v3248 = vpop.f32.mrf.mxu0
        %v3249 = vadd.f32 %v3176, %v3248
        %v3250 = vpop.f32.mrf.mxu0
        %v3251 = vadd.f32 %v3178, %v3250
        %v3252 = vpop.f32.mrf.mxu0
        %v3253 = vadd.f32 %v3180, %v3252
        %3254 = vmatprep.mubr.bf16.mxu0 0
        %3255 = vmatmul.mubr.bf16.gmra.mxu0 %v2971
        %v3256 = vpop.f32.mrf.mxu0
        %v3257 = vadd.f32 %v3184, %v3256
        %v3258 = vpop.f32.mrf.mxu0
        %v3259 = vadd.f32 %v3186, %v3258
        %v3260 = vpop.f32.mrf.mxu0
        %v3261 = vadd.f32 %v3188, %v3260
        %v3262 = vpop.f32.mrf.mxu0
        %v3263 = vadd.f32 %v3190, %v3262
        %3264 = vdwg.mxu0
        %3265 = vmatprep.subr.bf16.mxu0 %v2478
        %3266 = vmatpush1.bf16.msra.mxu0 %v2477
        %3267 = vmatprep.subr.bf16.mxu0 %v2473
        %3268 = vmatpush1.bf16.msra.mxu0 %v2472
        %3269 = vmatprep.subr.bf16.mxu0 %v2468
        %3270 = vmatpush1.bf16.msra.mxu0 %v2467
        %3271 = vmatprep.subr.bf16.mxu0 %v2463
        %3272 = vmatpush1.bf16.msra.mxu0 %v2462
        %3273 = vmatprep.subr.bf16.mxu0 %v2458
        %3274 = vmatpush1.bf16.msra.mxu0 %v2457
        %3275 = vmatprep.subr.bf16.mxu0 %v2453
        %3276 = vmatpush1.bf16.msra.mxu0 %v2452
        %3277 = vmatprep.subr.bf16.mxu0 %v2448
        %3278 = vmatpush1.bf16.msra.mxu0 %v2447
        %3279 = vmatprep.subr.bf16.mxu0 %v2443
        %3280 = vmatpush1.bf16.msra.mxu0 %v2442
        %3281 = vmatprep.subr.bf16.mxu0 %v2518
        %3282 = vmatpush2.bf16.msra.mxu0 %v2517
        %3283 = vmatprep.subr.bf16.mxu0 %v2513
        %3284 = vmatpush2.bf16.msra.mxu0 %v2512
        %3285 = vmatprep.subr.bf16.mxu0 %v2508
        %3286 = vmatpush2.bf16.msra.mxu0 %v2507
        %3287 = vmatprep.subr.bf16.mxu0 %v2503
        %3288 = vmatpush2.bf16.msra.mxu0 %v2502
        %3289 = vmatprep.subr.bf16.mxu0 %v2498
        %3290 = vmatpush2.bf16.msra.mxu0 %v2497
        %3291 = vmatprep.subr.bf16.mxu0 %v2493
        %3292 = vmatpush2.bf16.msra.mxu0 %v2492
        %3293 = vmatprep.subr.bf16.mxu0 %v2488
        %3294 = vmatpush2.bf16.msra.mxu0 %v2487
        %3295 = vmatprep.subr.bf16.mxu0 %v2483
        %3296 = vmatpush2.bf16.msra.mxu0 %v2482
        %3297 = vmatprep.mubr.bf16.mxu0 %v1557
        %3298 = vmatmul.mubr.bf16.gmra.mxu0 %v1556
        %v3299 = vpop.f32.mrf.mxu0
        %v3300 = vadd.f32 %v1454, %v3299
        %v3301 = vpop.f32.mrf.mxu0
        %v3302 = vadd.f32 %v1458, %v3301
        %v3303 = vpop.f32.mrf.mxu0
        %v3304 = vadd.f32 %v1454, %v3303
        %v3305 = vpop.f32.mrf.mxu0
        %v3306 = vadd.f32 %v1458, %v3305
        %3307 = vmatprep.mubr.bf16.mxu0 %v1564
        %3308 = vmatmul.mubr.bf16.gmra.mxu0 %v1563
        %v3309 = vpop.f32.mrf.mxu0
        %v3310 = vadd.f32 %v1454, %v3309
        %v3311 = vpop.f32.mrf.mxu0
        %v3312 = vadd.f32 %v1458, %v3311
        %v3313 = vpop.f32.mrf.mxu0
        %v3314 = vadd.f32 %v1454, %v3313
        %v3315 = vpop.f32.mrf.mxu0
        %v3316 = vadd.f32 %v1458, %v3315
        %3317 = vmatprep.mubr.bf16.mxu0 %v1571
        %3318 = vmatmul.mubr.bf16.gmra.mxu0 %v1570
        %v3319 = vpop.f32.mrf.mxu0
        %v3320 = vadd.f32 %v1454, %v3319
        %v3321 = vpop.f32.mrf.mxu0
        %v3322 = vadd.f32 %v1458, %v3321
        %v3323 = vpop.f32.mrf.mxu0
        %v3324 = vadd.f32 %v1454, %v3323
        %v3325 = vpop.f32.mrf.mxu0
        %v3326 = vadd.f32 %v1458, %v3325
        %3327 = vmatprep.mubr.bf16.mxu0 %v1578
        %3328 = vmatmul.mubr.bf16.gmra.mxu0 %v1577
        %v3329 = vpop.f32.mrf.mxu0
        %v3330 = vadd.f32 %v1454, %v3329
        %v3331 = vpop.f32.mrf.mxu0
        %v3332 = vadd.f32 %v1458, %v3331
        %v3333 = vpop.f32.mrf.mxu0
        %v3334 = vadd.f32 %v1454, %v3333
        %v3335 = vpop.f32.mrf.mxu0
        %v3336 = vadd.f32 %v1458, %v3335
        %3337 = vdwg.mxu0
        %3338 = vmatprep.subr.bf16.mxu0 %v2558
        %3339 = vmatpush1.bf16.msra.mxu0 %v2557
        %3340 = vmatprep.subr.bf16.mxu0 %v2553
        %3341 = vmatpush1.bf16.msra.mxu0 %v2552
        %3342 = vmatprep.subr.bf16.mxu0 %v2548
        %3343 = vmatpush1.bf16.msra.mxu0 %v2547
        %3344 = vmatprep.subr.bf16.mxu0 %v2543
        %3345 = vmatpush1.bf16.msra.mxu0 %v2542
        %3346 = vmatprep.subr.bf16.mxu0 %v2538
        %3347 = vmatpush1.bf16.msra.mxu0 %v2537
        %3348 = vmatprep.subr.bf16.mxu0 %v2533
        %3349 = vmatpush1.bf16.msra.mxu0 %v2532
        %3350 = vmatprep.subr.bf16.mxu0 %v2528
        %3351 = vmatpush1.bf16.msra.mxu0 %v2527
        %3352 = vmatprep.subr.bf16.mxu0 %v2523
        %3353 = vmatpush1.bf16.msra.mxu0 %v2522
        %3354 = vmatprep.subr.bf16.mxu0 %v2598
        %3355 = vmatpush2.bf16.msra.mxu0 %v2597
        %3356 = vmatprep.subr.bf16.mxu0 %v2593
        %3357 = vmatpush2.bf16.msra.mxu0 %v2592
        %3358 = vmatprep.subr.bf16.mxu0 %v2588
        %3359 = vmatpush2.bf16.msra.mxu0 %v2587
        %3360 = vmatprep.subr.bf16.mxu0 %v2583
        %3361 = vmatpush2.bf16.msra.mxu0 %v2582
        %3362 = vmatprep.subr.bf16.mxu0 %v2578
        %3363 = vmatpush2.bf16.msra.mxu0 %v2577
        %3364 = vmatprep.subr.bf16.mxu0 %v2573
        %3365 = vmatpush2.bf16.msra.mxu0 %v2572
        %3366 = vmatprep.subr.bf16.mxu0 %v2568
        %3367 = vmatpush2.bf16.msra.mxu0 %v2567
        %3368 = vmatprep.subr.bf16.mxu0 %v2563
        %3369 = vmatpush2.bf16.msra.mxu0 %v2562
        %3370 = vmatprep.mubr.bf16.mxu0 %v1559
        %3371 = vmatmul.mubr.bf16.gmra.mxu0 %v1558
        %v3372 = vpop.f32.mrf.mxu0
        %v3373 = vadd.f32 %v3300, %v3372
        %v3374 = vpop.f32.mrf.mxu0
        %v3375 = vadd.f32 %v3302, %v3374
        %v3376 = vpop.f32.mrf.mxu0
        %v3377 = vadd.f32 %v3304, %v3376
        %v3378 = vpop.f32.mrf.mxu0
        %v3379 = vadd.f32 %v3306, %v3378
        %3380 = vmatprep.mubr.bf16.mxu0 %v1566
        %3381 = vmatmul.mubr.bf16.gmra.mxu0 %v1565
        %v3382 = vpop.f32.mrf.mxu0
        %v3383 = vadd.f32 %v3310, %v3382
        %v3384 = vpop.f32.mrf.mxu0
        %v3385 = vadd.f32 %v3312, %v3384
        %v3386 = vpop.f32.mrf.mxu0
        %v3387 = vadd.f32 %v3314, %v3386
        %v3388 = vpop.f32.mrf.mxu0
        %v3389 = vadd.f32 %v3316, %v3388
        %3390 = vmatprep.mubr.bf16.mxu0 %v1573
        %3391 = vmatmul.mubr.bf16.gmra.mxu0 %v1572
        %v3392 = vpop.f32.mrf.mxu0
        %v3393 = vadd.f32 %v3320, %v3392
        %v3394 = vpop.f32.mrf.mxu0
        %v3395 = vadd.f32 %v3322, %v3394
        %v3396 = vpop.f32.mrf.mxu0
        %v3397 = vadd.f32 %v3324, %v3396
        %v3398 = vpop.f32.mrf.mxu0
        %v3399 = vadd.f32 %v3326, %v3398
        %3400 = vmatprep.mubr.bf16.mxu0 %v1580
        %3401 = vmatmul.mubr.bf16.gmra.mxu0 %v1579
        %v3402 = vpop.f32.mrf.mxu0
        %v3403 = vadd.f32 %v3330, %v3402
        %v3404 = vpop.f32.mrf.mxu0
        %v3405 = vadd.f32 %v3332, %v3404
        %v3406 = vpop.f32.mrf.mxu0
        %v3407 = vadd.f32 %v3334, %v3406
        %v3408 = vpop.f32.mrf.mxu0
        %v3409 = vadd.f32 %v3336, %v3408
        %3410 = vdwg.mxu0
        %3411 = vmatprep.subr.bf16.mxu0 %v2638
        %3412 = vmatpush1.bf16.msra.mxu0 %v2637
        %3413 = vmatprep.subr.bf16.mxu0 %v2633
        %3414 = vmatpush1.bf16.msra.mxu0 %v2632
        %3415 = vmatprep.subr.bf16.mxu0 %v2628
        %3416 = vmatpush1.bf16.msra.mxu0 %v2627
        %3417 = vmatprep.subr.bf16.mxu0 %v2623
        %3418 = vmatpush1.bf16.msra.mxu0 %v2622
        %3419 = vmatprep.subr.bf16.mxu0 %v2618
        %3420 = vmatpush1.bf16.msra.mxu0 %v2617
        %3421 = vmatprep.subr.bf16.mxu0 %v2613
        %3422 = vmatpush1.bf16.msra.mxu0 %v2612
        %3423 = vmatprep.subr.bf16.mxu0 %v2608
        %3424 = vmatpush1.bf16.msra.mxu0 %v2607
        %3425 = vmatprep.subr.bf16.mxu0 %v2603
        %3426 = vmatpush1.bf16.msra.mxu0 %v2602
        %3427 = vmatprep.subr.bf16.mxu0 %v2678
        %3428 = vmatpush2.bf16.msra.mxu0 %v2677
        %3429 = vmatprep.subr.bf16.mxu0 %v2673
        %3430 = vmatpush2.bf16.msra.mxu0 %v2672
        %3431 = vmatprep.subr.bf16.mxu0 %v2668
        %3432 = vmatpush2.bf16.msra.mxu0 %v2667
        %3433 = vmatprep.subr.bf16.mxu0 %v2663
        %3434 = vmatpush2.bf16.msra.mxu0 %v2662
        %3435 = vmatprep.subr.bf16.mxu0 %v2658
        %3436 = vmatpush2.bf16.msra.mxu0 %v2657
        %3437 = vmatprep.subr.bf16.mxu0 %v2653
        %3438 = vmatpush2.bf16.msra.mxu0 %v2652
        %3439 = vmatprep.subr.bf16.mxu0 %v2648
        %3440 = vmatpush2.bf16.msra.mxu0 %v2647
        %3441 = vmatprep.subr.bf16.mxu0 %v2643
        %3442 = vmatpush2.bf16.msra.mxu0 %v2642
        %3443 = vmatprep.mubr.bf16.mxu0 %v1561
        %3444 = vmatmul.mubr.bf16.gmra.mxu0 %v1560
        %v3445 = vpop.f32.mrf.mxu0
        %v3446 = vadd.f32 %v3373, %v3445
        %v3447 = vpop.f32.mrf.mxu0
        %v3448 = vadd.f32 %v3375, %v3447
        %v3449 = vpop.f32.mrf.mxu0
        %v3450 = vadd.f32 %v3377, %v3449
        %v3451 = vpop.f32.mrf.mxu0
        %v3452 = vadd.f32 %v3379, %v3451
        %3453 = vmatprep.mubr.bf16.mxu0 %v1568
        %3454 = vmatmul.mubr.bf16.gmra.mxu0 %v1567
        %v3455 = vpop.f32.mrf.mxu0
        %v3456 = vadd.f32 %v3383, %v3455
        %v3457 = vpop.f32.mrf.mxu0
        %v3458 = vadd.f32 %v3385, %v3457
        %v3459 = vpop.f32.mrf.mxu0
        %v3460 = vadd.f32 %v3387, %v3459
        %v3461 = vpop.f32.mrf.mxu0
        %v3462 = vadd.f32 %v3389, %v3461
        %3463 = vmatprep.mubr.bf16.mxu0 %v1575
        %3464 = vmatmul.mubr.bf16.gmra.mxu0 %v1574
        %v3465 = vpop.f32.mrf.mxu0
        %v3466 = vadd.f32 %v3393, %v3465
        %v3467 = vpop.f32.mrf.mxu0
        %v3468 = vadd.f32 %v3395, %v3467
        %v3469 = vpop.f32.mrf.mxu0
        %v3470 = vadd.f32 %v3397, %v3469
        %v3471 = vpop.f32.mrf.mxu0
        %v3472 = vadd.f32 %v3399, %v3471
        %3473 = vmatprep.mubr.bf16.mxu0 %v1582
        %3474 = vmatmul.mubr.bf16.gmra.mxu0 %v1581
        %v3475 = vpop.f32.mrf.mxu0
        %v3476 = vadd.f32 %v3403, %v3475
        %v3477 = vpop.f32.mrf.mxu0
        %v3478 = vadd.f32 %v3405, %v3477
        %v3479 = vpop.f32.mrf.mxu0
        %v3480 = vadd.f32 %v3407, %v3479
        %v3481 = vpop.f32.mrf.mxu0
        %v3482 = vadd.f32 %v3409, %v3481
        %3483 = vdwg.mxu0
        %3484 = vmatprep.subr.bf16.mxu0 0
        %3485 = vmatpush1.bf16.msra.mxu0 0
        %3486 = vmatprep.subr.bf16.mxu0 0
        %3487 = vmatpush1.bf16.msra.mxu0 0
        %3488 = vmatprep.subr.bf16.mxu0 0
        %3489 = vmatpush1.bf16.msra.mxu0 0
        %3490 = vmatprep.subr.bf16.mxu0 0
        %3491 = vmatpush1.bf16.msra.mxu0 0
        %3492 = vmatprep.subr.bf16.mxu0 %v2698
        %3493 = vmatpush1.bf16.msra.mxu0 %v2697
        %3494 = vmatprep.subr.bf16.mxu0 %v2693
        %3495 = vmatpush1.bf16.msra.mxu0 %v2692
        %3496 = vmatprep.subr.bf16.mxu0 %v2688
        %3497 = vmatpush1.bf16.msra.mxu0 %v2687
        %3498 = vmatprep.subr.bf16.mxu0 %v2683
        %3499 = vmatpush1.bf16.msra.mxu0 %v2682
        %3500 = vmatprep.subr.bf16.mxu0 0
        %3501 = vmatpush2.bf16.msra.mxu0 0
        %3502 = vmatprep.subr.bf16.mxu0 0
        %3503 = vmatpush2.bf16.msra.mxu0 0
        %3504 = vmatprep.subr.bf16.mxu0 0
        %3505 = vmatpush2.bf16.msra.mxu0 0
        %3506 = vmatprep.subr.bf16.mxu0 0
        %3507 = vmatpush2.bf16.msra.mxu0 0
        %3508 = vmatprep.subr.bf16.mxu0 0
        %3509 = vmatpush2.bf16.msra.mxu0 0
        %3510 = vmatprep.subr.bf16.mxu0 0
        %3511 = vmatpush2.bf16.msra.mxu0 0
        %3512 = vmatprep.subr.bf16.mxu0 0
        %3513 = vmatpush2.bf16.msra.mxu0 0
        %3514 = vmatprep.subr.bf16.mxu0 0
        %3515 = vmatpush2.bf16.msra.mxu0 0
        %3516 = vmatprep.mubr.bf16.mxu0 0
        %3517 = vmatmul.mubr.bf16.gmra.mxu0 %v2962
        %v3518 = vpop.f32.mrf.mxu0
        %v3519 = vadd.f32 %v3446, %v3518
        %v3520 = vpop.f32.mrf.mxu0
        %v3521 = vadd.f32 %v3448, %v3520
        %v3522 = vpop.f32.mrf.mxu0
        %v3523 = vadd.f32 %v3450, %v3522
        %v3524 = vpop.f32.mrf.mxu0
        %v3525 = vadd.f32 %v3452, %v3524
        %3526 = vmatprep.mubr.bf16.mxu0 0
        %3527 = vmatmul.mubr.bf16.gmra.mxu0 %v2965
        %v3528 = vpop.f32.mrf.mxu0
        %v3529 = vadd.f32 %v3456, %v3528
        %v3530 = vpop.f32.mrf.mxu0
        %v3531 = vadd.f32 %v3458, %v3530
        %v3532 = vpop.f32.mrf.mxu0
        %v3533 = vadd.f32 %v3460, %v3532
        %v3534 = vpop.f32.mrf.mxu0
        %v3535 = vadd.f32 %v3462, %v3534
        %3536 = vmatprep.mubr.bf16.mxu0 0
        %3537 = vmatmul.mubr.bf16.gmra.mxu0 %v2968
        %v3538 = vpop.f32.mrf.mxu0
        %v3539 = vadd.f32 %v3466, %v3538
        %v3540 = vpop.f32.mrf.mxu0
        %v3541 = vadd.f32 %v3468, %v3540
        %v3542 = vpop.f32.mrf.mxu0
        %v3543 = vadd.f32 %v3470, %v3542
        %v3544 = vpop.f32.mrf.mxu0
        %v3545 = vadd.f32 %v3472, %v3544
        %3546 = vmatprep.mubr.bf16.mxu0 0
        %3547 = vmatmul.mubr.bf16.gmra.mxu0 %v2971
        %v3548 = vpop.f32.mrf.mxu0
        %v3549 = vadd.f32 %v3476, %v3548
        %v3550 = vpop.f32.mrf.mxu0
        %v3551 = vadd.f32 %v3478, %v3550
        %v3552 = vpop.f32.mrf.mxu0
        %v3553 = vadd.f32 %v3480, %v3552
        %v3554 = vpop.f32.mrf.mxu0
        %v3555 = vadd.f32 %v3482, %v3554
        %3556 = vdwg.mxu0
        %3557 = vmatprep.subr.bf16.mxu0 0
        %3558 = vmatpush1.bf16.msra.mxu0 %v2479
        %3559 = vmatprep.subr.bf16.mxu0 0
        %3560 = vmatpush1.bf16.msra.mxu0 %v2474
        %3561 = vmatprep.subr.bf16.mxu0 0
        %3562 = vmatpush1.bf16.msra.mxu0 %v2469
        %3563 = vmatprep.subr.bf16.mxu0 0
        %3564 = vmatpush1.bf16.msra.mxu0 %v2464
        %3565 = vmatprep.subr.bf16.mxu0 0
        %3566 = vmatpush1.bf16.msra.mxu0 %v2459
        %3567 = vmatprep.subr.bf16.mxu0 0
        %3568 = vmatpush1.bf16.msra.mxu0 %v2454
        %3569 = vmatprep.subr.bf16.mxu0 0
        %3570 = vmatpush1.bf16.msra.mxu0 %v2449
        %3571 = vmatprep.subr.bf16.mxu0 0
        %3572 = vmatpush1.bf16.msra.mxu0 %v2444
        %3573 = vmatprep.subr.bf16.mxu0 0
        %3574 = vmatpush2.bf16.msra.mxu0 %v2519
        %3575 = vmatprep.subr.bf16.mxu0 0
        %3576 = vmatpush2.bf16.msra.mxu0 %v2514
        %3577 = vmatprep.subr.bf16.mxu0 0
        %3578 = vmatpush2.bf16.msra.mxu0 %v2509
        %3579 = vmatprep.subr.bf16.mxu0 0
        %3580 = vmatpush2.bf16.msra.mxu0 %v2504
        %3581 = vmatprep.subr.bf16.mxu0 0
        %3582 = vmatpush2.bf16.msra.mxu0 %v2499
        %3583 = vmatprep.subr.bf16.mxu0 0
        %3584 = vmatpush2.bf16.msra.mxu0 %v2494
        %3585 = vmatprep.subr.bf16.mxu0 0
        %3586 = vmatpush2.bf16.msra.mxu0 %v2489
        %3587 = vmatprep.subr.bf16.mxu0 0
        %3588 = vmatpush2.bf16.msra.mxu0 %v2484
        %3589 = vmatprep.mubr.bf16.mxu0 %v1557
        %3590 = vmatmul.mubr.bf16.gmra.mxu0 %v1556
        %v3591 = vpop.f32.mrf.mxu0
        %v3592 = vadd.f32 %v1462, %v3591
        %v3593 = vpop.f32.mrf.mxu0
        %v3594 = vpop.f32.mrf.mxu0
        %v3595 = vadd.f32 %v1462, %v3594
        %v3596 = vpop.f32.mrf.mxu0
        %3597 = vmatprep.mubr.bf16.mxu0 %v1564
        %3598 = vmatmul.mubr.bf16.gmra.mxu0 %v1563
        %v3599 = vpop.f32.mrf.mxu0
        %v3600 = vadd.f32 %v1462, %v3599
        %v3601 = vpop.f32.mrf.mxu0
        %v3602 = vpop.f32.mrf.mxu0
        %v3603 = vadd.f32 %v1462, %v3602
        %v3604 = vpop.f32.mrf.mxu0
        %3605 = vmatprep.mubr.bf16.mxu0 %v1571
        %3606 = vmatmul.mubr.bf16.gmra.mxu0 %v1570
        %v3607 = vpop.f32.mrf.mxu0
        %v3608 = vadd.f32 %v1462, %v3607
        %v3609 = vpop.f32.mrf.mxu0
        %v3610 = vpop.f32.mrf.mxu0
        %v3611 = vadd.f32 %v1462, %v3610
        %v3612 = vpop.f32.mrf.mxu0
        %3613 = vmatprep.mubr.bf16.mxu0 %v1578
        %3614 = vmatmul.mubr.bf16.gmra.mxu0 %v1577
        %v3615 = vpop.f32.mrf.mxu0
        %v3616 = vadd.f32 %v1462, %v3615
        %v3617 = vpop.f32.mrf.mxu0
        %v3618 = vpop.f32.mrf.mxu0
        %v3619 = vadd.f32 %v1462, %v3618
        %v3620 = vpop.f32.mrf.mxu0
        %3621 = vdwg.mxu0
        %3622 = vmatprep.subr.bf16.mxu0 0
        %3623 = vmatpush1.bf16.msra.mxu0 %v2559
        %3624 = vmatprep.subr.bf16.mxu0 0
        %3625 = vmatpush1.bf16.msra.mxu0 %v2554
        %3626 = vmatprep.subr.bf16.mxu0 0
        %3627 = vmatpush1.bf16.msra.mxu0 %v2549
        %3628 = vmatprep.subr.bf16.mxu0 0
        %3629 = vmatpush1.bf16.msra.mxu0 %v2544
        %3630 = vmatprep.subr.bf16.mxu0 0
        %3631 = vmatpush1.bf16.msra.mxu0 %v2539
        %3632 = vmatprep.subr.bf16.mxu0 0
        %3633 = vmatpush1.bf16.msra.mxu0 %v2534
        %3634 = vmatprep.subr.bf16.mxu0 0
        %3635 = vmatpush1.bf16.msra.mxu0 %v2529
        %3636 = vmatprep.subr.bf16.mxu0 0
        %3637 = vmatpush1.bf16.msra.mxu0 %v2524
        %3638 = vmatprep.subr.bf16.mxu0 0
        %3639 = vmatpush2.bf16.msra.mxu0 %v2599
        %3640 = vmatprep.subr.bf16.mxu0 0
        %3641 = vmatpush2.bf16.msra.mxu0 %v2594
        %3642 = vmatprep.subr.bf16.mxu0 0
        %3643 = vmatpush2.bf16.msra.mxu0 %v2589
        %3644 = vmatprep.subr.bf16.mxu0 0
        %3645 = vmatpush2.bf16.msra.mxu0 %v2584
        %3646 = vmatprep.subr.bf16.mxu0 0
        %3647 = vmatpush2.bf16.msra.mxu0 %v2579
        %3648 = vmatprep.subr.bf16.mxu0 0
        %3649 = vmatpush2.bf16.msra.mxu0 %v2574
        %3650 = vmatprep.subr.bf16.mxu0 0
        %3651 = vmatpush2.bf16.msra.mxu0 %v2569
        %3652 = vmatprep.subr.bf16.mxu0 0
        %3653 = vmatpush2.bf16.msra.mxu0 %v2564
        %3654 = vmatprep.mubr.bf16.mxu0 %v1559
        %3655 = vmatmul.mubr.bf16.gmra.mxu0 %v1558
        %v3656 = vpop.f32.mrf.mxu0
        %v3657 = vadd.f32 %v3592, %v3656
        %v3658 = vpop.f32.mrf.mxu0
        %v3659 = vpop.f32.mrf.mxu0
        %v3660 = vadd.f32 %v3595, %v3659
        %v3661 = vpop.f32.mrf.mxu0
        %3662 = vmatprep.mubr.bf16.mxu0 %v1566
        %3663 = vmatmul.mubr.bf16.gmra.mxu0 %v1565
        %v3664 = vpop.f32.mrf.mxu0
        %v3665 = vadd.f32 %v3600, %v3664
        %v3666 = vpop.f32.mrf.mxu0
        %v3667 = vpop.f32.mrf.mxu0
        %v3668 = vadd.f32 %v3603, %v3667
        %v3669 = vpop.f32.mrf.mxu0
        %3670 = vmatprep.mubr.bf16.mxu0 %v1573
        %3671 = vmatmul.mubr.bf16.gmra.mxu0 %v1572
        %v3672 = vpop.f32.mrf.mxu0
        %v3673 = vadd.f32 %v3608, %v3672
        %v3674 = vpop.f32.mrf.mxu0
        %v3675 = vpop.f32.mrf.mxu0
        %v3676 = vadd.f32 %v3611, %v3675
        %v3677 = vpop.f32.mrf.mxu0
        %3678 = vmatprep.mubr.bf16.mxu0 %v1580
        %3679 = vmatmul.mubr.bf16.gmra.mxu0 %v1579
        %v3680 = vpop.f32.mrf.mxu0
        %v3681 = vadd.f32 %v3616, %v3680
        %v3682 = vpop.f32.mrf.mxu0
        %v3683 = vpop.f32.mrf.mxu0
        %v3684 = vadd.f32 %v3619, %v3683
        %v3685 = vpop.f32.mrf.mxu0
        %3686 = vdwg.mxu0
        %3687 = vmatprep.subr.bf16.mxu0 0
        %3688 = vmatpush1.bf16.msra.mxu0 %v2639
        %3689 = vmatprep.subr.bf16.mxu0 0
        %3690 = vmatpush1.bf16.msra.mxu0 %v2634
        %3691 = vmatprep.subr.bf16.mxu0 0
        %3692 = vmatpush1.bf16.msra.mxu0 %v2629
        %3693 = vmatprep.subr.bf16.mxu0 0
        %3694 = vmatpush1.bf16.msra.mxu0 %v2624
        %3695 = vmatprep.subr.bf16.mxu0 0
        %3696 = vmatpush1.bf16.msra.mxu0 %v2619
        %3697 = vmatprep.subr.bf16.mxu0 0
        %3698 = vmatpush1.bf16.msra.mxu0 %v2614
        %3699 = vmatprep.subr.bf16.mxu0 0
        %3700 = vmatpush1.bf16.msra.mxu0 %v2609
        %3701 = vmatprep.subr.bf16.mxu0 0
        %3702 = vmatpush1.bf16.msra.mxu0 %v2604
        %3703 = vmatprep.subr.bf16.mxu0 0
        %3704 = vmatpush2.bf16.msra.mxu0 %v2679
        %3705 = vmatprep.subr.bf16.mxu0 0
        %3706 = vmatpush2.bf16.msra.mxu0 %v2674
        %3707 = vmatprep.subr.bf16.mxu0 0
        %3708 = vmatpush2.bf16.msra.mxu0 %v2669
        %3709 = vmatprep.subr.bf16.mxu0 0
        %3710 = vmatpush2.bf16.msra.mxu0 %v2664
        %3711 = vmatprep.subr.bf16.mxu0 0
        %3712 = vmatpush2.bf16.msra.mxu0 %v2659
        %3713 = vmatprep.subr.bf16.mxu0 0
        %3714 = vmatpush2.bf16.msra.mxu0 %v2654
        %3715 = vmatprep.subr.bf16.mxu0 0
        %3716 = vmatpush2.bf16.msra.mxu0 %v2649
        %3717 = vmatprep.subr.bf16.mxu0 0
        %3718 = vmatpush2.bf16.msra.mxu0 %v2644
        %3719 = vmatprep.mubr.bf16.mxu0 %v1561
        %3720 = vmatmul.mubr.bf16.gmra.mxu0 %v1560
        %v3721 = vpop.f32.mrf.mxu0
        %v3722 = vadd.f32 %v3657, %v3721
        %v3723 = vpop.f32.mrf.mxu0
        %v3724 = vpop.f32.mrf.mxu0
        %v3725 = vadd.f32 %v3660, %v3724
        %v3726 = vpop.f32.mrf.mxu0
        %3727 = vmatprep.mubr.bf16.mxu0 %v1568
        %3728 = vmatmul.mubr.bf16.gmra.mxu0 %v1567
        %v3729 = vpop.f32.mrf.mxu0
        %v3730 = vadd.f32 %v3665, %v3729
        %v3731 = vpop.f32.mrf.mxu0
        %v3732 = vpop.f32.mrf.mxu0
        %v3733 = vadd.f32 %v3668, %v3732
        %v3734 = vpop.f32.mrf.mxu0
        %3735 = vmatprep.mubr.bf16.mxu0 %v1575
        %3736 = vmatmul.mubr.bf16.gmra.mxu0 %v1574
        %v3737 = vpop.f32.mrf.mxu0
        %v3738 = vadd.f32 %v3673, %v3737
        %v3739 = vpop.f32.mrf.mxu0
        %v3740 = vpop.f32.mrf.mxu0
        %v3741 = vadd.f32 %v3676, %v3740
        %v3742 = vpop.f32.mrf.mxu0
        %3743 = vmatprep.mubr.bf16.mxu0 %v1582
        %3744 = vmatmul.mubr.bf16.gmra.mxu0 %v1581
        %v3745 = vpop.f32.mrf.mxu0
        %v3746 = vadd.f32 %v3681, %v3745
        %v3747 = vpop.f32.mrf.mxu0
        %v3748 = vpop.f32.mrf.mxu0
        %v3749 = vadd.f32 %v3684, %v3748
        %v3750 = vpop.f32.mrf.mxu0
        %3751 = vdwg.mxu0
        %3752 = vmatprep.subr.bf16.mxu0 0
        %3753 = vmatpush1.bf16.msra.mxu0 0
        %3754 = vmatprep.subr.bf16.mxu0 0
        %3755 = vmatpush1.bf16.msra.mxu0 0
        %3756 = vmatprep.subr.bf16.mxu0 0
        %3757 = vmatpush1.bf16.msra.mxu0 0
        %3758 = vmatprep.subr.bf16.mxu0 0
        %3759 = vmatpush1.bf16.msra.mxu0 0
        %3760 = vmatprep.subr.bf16.mxu0 0
        %3761 = vmatpush1.bf16.msra.mxu0 %v2699
        %3762 = vmatprep.subr.bf16.mxu0 0
        %3763 = vmatpush1.bf16.msra.mxu0 %v2694
        %3764 = vmatprep.subr.bf16.mxu0 0
        %3765 = vmatpush1.bf16.msra.mxu0 %v2689
        %3766 = vmatprep.subr.bf16.mxu0 0
        %3767 = vmatpush1.bf16.msra.mxu0 %v2684
        %3768 = vmatprep.subr.bf16.mxu0 0
        %3769 = vmatpush2.bf16.msra.mxu0 0
        %3770 = vmatprep.subr.bf16.mxu0 0
        %3771 = vmatpush2.bf16.msra.mxu0 0
        %3772 = vmatprep.subr.bf16.mxu0 0
        %3773 = vmatpush2.bf16.msra.mxu0 0
        %3774 = vmatprep.subr.bf16.mxu0 0
        %3775 = vmatpush2.bf16.msra.mxu0 0
        %3776 = vmatprep.subr.bf16.mxu0 0
        %3777 = vmatpush2.bf16.msra.mxu0 0
        %3778 = vmatprep.subr.bf16.mxu0 0
        %3779 = vmatpush2.bf16.msra.mxu0 0
        %3780 = vmatprep.subr.bf16.mxu0 0
        %3781 = vmatpush2.bf16.msra.mxu0 0
        %3782 = vmatprep.subr.bf16.mxu0 0
        %3783 = vmatpush2.bf16.msra.mxu0 0
        %3784 = vmatprep.mubr.bf16.mxu0 0
        %3785 = vmatmul.mubr.bf16.gmra.mxu0 %v2962
        %v3786 = vpop.f32.mrf.mxu0
        %v3787 = vadd.f32 %v3722, %v3786
        %v3788 = vpop.f32.mrf.mxu0
        %v3789 = vpop.f32.mrf.mxu0
        %v3790 = vadd.f32 %v3725, %v3789
        %v3791 = vpop.f32.mrf.mxu0
        %3792 = vmatprep.mubr.bf16.mxu0 0
        %3793 = vmatmul.mubr.bf16.gmra.mxu0 %v2965
        %v3794 = vpop.f32.mrf.mxu0
        %v3795 = vadd.f32 %v3730, %v3794
        %v3796 = vpop.f32.mrf.mxu0
        %v3797 = vpop.f32.mrf.mxu0
        %v3798 = vadd.f32 %v3733, %v3797
        %v3799 = vpop.f32.mrf.mxu0
        %3800 = vmatprep.mubr.bf16.mxu0 0
        %3801 = vmatmul.mubr.bf16.gmra.mxu0 %v2968
        %v3802 = vpop.f32.mrf.mxu0
        %v3803 = vadd.f32 %v3738, %v3802
        %v3804 = vpop.f32.mrf.mxu0
        %v3805 = vpop.f32.mrf.mxu0
        %v3806 = vadd.f32 %v3741, %v3805
        %v3807 = vpop.f32.mrf.mxu0
        %3808 = vmatprep.mubr.bf16.mxu0 0
        %3809 = vmatmul.mubr.bf16.gmra.mxu0 %v2971
        %v3810 = vpop.f32.mrf.mxu0
        %v3811 = vadd.f32 %v3746, %v3810
        %v3812 = vpop.f32.mrf.mxu0
        %v3813 = vpop.f32.mrf.mxu0
        %v3814 = vadd.f32 %v3749, %v3813
        %v3815 = vpop.f32.mrf.mxu0
        %3816 = vdwg.mxu0
        %v3817 = vmax.f32 %v3227, 0.0
        %v3818 = vmax.f32 %v3229, 0.0
        %v3819 = vmax.f32 %v3519, 0.0
        %v3820 = vmax.f32 %v3521, 0.0
        %v3821 = vmax.f32 %v3787, 0.0
        %v3822 = vmax.f32 %v3231, 0.0
        %v3823 = vmax.f32 %v3233, 0.0
        %v3824 = vmax.f32 %v3523, 0.0
        %v3825 = vmax.f32 %v3525, 0.0
        %v3826 = vmax.f32 %v3790, 0.0
        %v3827 = vmax.f32 %v3237, 0.0
        %v3828 = vmax.f32 %v3239, 0.0
        %v3829 = vmax.f32 %v3529, 0.0
        %v3830 = vmax.f32 %v3531, 0.0
        %v3831 = vmax.f32 %v3795, 0.0
        %v3832 = vmax.f32 %v3241, 0.0
        %v3833 = vmax.f32 %v3243, 0.0
        %v3834 = vmax.f32 %v3533, 0.0
        %v3835 = vmax.f32 %v3535, 0.0
        %v3836 = vmax.f32 %v3798, 0.0
        %v3837 = vmax.f32 %v3247, 0.0
        %v3838 = vmax.f32 %v3249, 0.0
        %v3839 = vmax.f32 %v3539, 0.0
        %v3840 = vmax.f32 %v3541, 0.0
        %v3841 = vmax.f32 %v3803, 0.0
        %v3842 = vmax.f32 %v3251, 0.0
        %v3843 = vmax.f32 %v3253, 0.0
        %v3844 = vmax.f32 %v3543, 0.0
        %v3845 = vmax.f32 %v3545, 0.0
        %v3846 = vmax.f32 %v3806, 0.0
        %v3847 = vmax.f32 %v3257, 0.0
        %v3848 = vmax.f32 %v3259, 0.0
        %v3849 = vmax.f32 %v3549, 0.0
        %v3850 = vmax.f32 %v3551, 0.0
        %v3851 = vmax.f32 %v3811, 0.0
        %v3852 = vmax.f32 %v3261, 0.0
        %v3853 = vmax.f32 %v3263, 0.0
        %v3854 = vmax.f32 %v3553, 0.0
        %v3855 = vmax.f32 %v3555, 0.0
        %v3856 = vmax.f32 %v3814, 0.0
        %3857 = vst [vmem:[%s476] sm:$0xff] %v3817
        %3858 = vst [vmem:[%s476 + $0x8] sm:$0xff] %v3818
        %3859 = vst [vmem:[%s476 + $0x28] sm:$0xff] %v3822
        %3860 = vst [vmem:[%s476 + $0x30] sm:$0xff] %v3823
        %3861 = vst [vmem:[%s476 + $0x50] sm:$0xff] %v3827
        %3862 = vst [vmem:[%s476 + $0x58] sm:$0xff] %v3828
        %3863 = vst [vmem:[%s476 + $0x78] sm:$0xff] %v3832
        %3864 = vst [vmem:[%s476 + $0x80] sm:$0xff] %v3833
        %3865 = vst [vmem:[%s476 + $0xa0] sm:$0xff] %v3837
        %3866 = vst [vmem:[%s476 + $0xa8] sm:$0xff] %v3838
        %3867 = vst [vmem:[%s476 + $0xc8] sm:$0xff] %v3842
        %3868 = vst [vmem:[%s476 + $0xd0] sm:$0xff] %v3843
        %3869 = vst [vmem:[%s476 + $0xf0] sm:$0xff] %v3847
        %3870 = vst [vmem:[%s476 + $0xf8] sm:$0xff] %v3848
        %3871 = vst [vmem:[%s476 + $0x118] sm:$0xff] %v3852
        %3872 = vst [vmem:[%s476 + $0x120] sm:$0xff] %v3853
        %vm3873 = vcmask 1043456
        %vm3874 = vcmask 261124
        %vm3875 = vmor %vm3874, %vm3873
        %3876 = vst.msk [vmem:[#allocation2] sm:$0xff] %vm3875, 0
        %vm3877 = vcmask 1040384
        %vm3878 = vcmask 258052
        %vm3879 = vmor %vm3878, %vm3877
        %3880 = vst.msk [vmem:[#allocation2 + $0x8] sm:$0x11] %vm3879, 0
        %3881 = vst.msk [vmem:[#allocation2 + $0x10] sm:$0xff] %vm3875, 0
        %3882 = vst.msk [vmem:[#allocation2 + $0x18] sm:$0x11] %vm3879, 0
        %3883 = vst.msk [vmem:[#allocation2 + $0x20] sm:$0xff] %vm3875, 0
        %3884 = vst.msk [vmem:[#allocation2 + $0x28] sm:$0x11] %vm3879, 0
        %3885 = vst.msk [vmem:[#allocation2 + $0x30] sm:$0xff] %vm3875, 0
        %3886 = vst.msk [vmem:[#allocation2 + $0x38] sm:$0x11] %vm3879, 0
        %3887 = vst.msk [vmem:[#allocation2 + $0x40] sm:$0xff] %vm3875, 0
        %3888 = vst.msk [vmem:[#allocation2 + $0x48] sm:$0x11] %vm3879, 0
        %3889 = vst.msk [vmem:[#allocation2 + $0x50] sm:$0xff] %vm3875, 0
        %3890 = vst.msk [vmem:[#allocation2 + $0x58] sm:$0x11] %vm3879, 0
        %3891 = vst.msk [vmem:[#allocation2 + $0x60] sm:$0xff] %vm3875, 0
        %3892 = vst.msk [vmem:[#allocation2 + $0x68] sm:$0x11] %vm3879, 0
        %3893 = vst.msk [vmem:[#allocation2 + $0x70] sm:$0xff] %vm3875, 0
        %3894 = vst.msk [vmem:[#allocation2 + $0x78] sm:$0x11] %vm3879, 0
        %3895 = vst.msk [vmem:[#allocation2 + $0x80] sm:$0xff] %vm3875, 0
        %3896 = vst.msk [vmem:[#allocation2 + $0x88] sm:$0x11] %vm3879, 0
        %3897 = vst.msk [vmem:[#allocation2 + $0x90] sm:$0xff] %vm3875, 0
        %3898 = vst.msk [vmem:[#allocation2 + $0x98] sm:$0x11] %vm3879, 0
        %v3899 = vpack.c.bf16 %v3824, %v3819
        %v3900 = vpack.c.bf16 %v3825, %v3820
        %v3901 = vpack.c.bf16 %v3834, %v3829
        %v3902 = vpack.c.bf16 %v3835, %v3830
        %v3903 = vpack.c.bf16 %v3844, %v3839
        %v3904 = vpack.c.bf16 %v3845, %v3840
        %v3905 = vpack.c.bf16 %v3854, %v3849
        %v3906 = vpack.c.bf16 %v3855, %v3850
        %v3915 = vunpack.c.l.b16 %v3899
        %v3916 = vunpack.c.l.b16 %v3900
        %v3917 = vunpack.c.h.b16 %v3899
        %v3918 = vunpack.c.h.b16 %v3900
        %v3919 = vunpack.c.l.b16 %v3901
        %v3920 = vunpack.c.l.b16 %v3902
        %v3921 = vunpack.c.h.b16 %v3901
        %v3922 = vunpack.c.h.b16 %v3902
        %v3923 = vunpack.c.l.b16 %v3903
        %v3924 = vunpack.c.l.b16 %v3904
        %v3925 = vunpack.c.h.b16 %v3903
        %v3926 = vunpack.c.h.b16 %v3904
        %v3927 = vunpack.c.l.b16 %v3905
        %v3928 = vunpack.c.l.b16 %v3906
        %v3929 = vunpack.c.h.b16 %v3905
        %v3930 = vunpack.c.h.b16 %v3906
        %v3931 = vpack.c.b16 %v3916, %v3915
        %v3932 = vpack.c.b16 %v3918, %v3917
        %v3933 = vpack.c.b16 %v3920, %v3919
        %v3934 = vpack.c.b16 %v3922, %v3921
        %v3935 = vpack.c.b16 %v3924, %v3923
        %v3936 = vpack.c.b16 %v3926, %v3925
        %v3937 = vpack.c.b16 %v3928, %v3927
        %v3938 = vpack.c.b16 %v3930, %v3929
        %v3940 = vshrl.u32 %v3931, 16
        %v3942 = vrot.slane %v3940, 7
        %v3943 = vshll.u32 %v3931, 16
        %v3945 = vor.u32 %v3942, %v3943
        %v3946 = vrot.slane %v3942, 4
        %v3948 = vshrl.u32 %v3932, 16
        %v3950 = vrot.slane %v3948, 7
        %v3951 = vshll.u32 %v3932, 16
        %v3953 = vor.u32 %v3950, %v3951
        %v3954 = vrot.slane %v3950, 4
        %v3956 = vshrl.u32 %v3933, 16
        %v3958 = vrot.slane %v3956, 7
        %v3959 = vshll.u32 %v3933, 16
        %v3961 = vor.u32 %v3958, %v3959
        %v3962 = vrot.slane %v3958, 4
        %v3964 = vshrl.u32 %v3934, 16
        %v3966 = vrot.slane %v3964, 7
        %v3967 = vshll.u32 %v3934, 16
        %v3969 = vor.u32 %v3966, %v3967
        %v3970 = vrot.slane %v3966, 4
        %v3972 = vshrl.u32 %v3935, 16
        %v3974 = vrot.slane %v3972, 7
        %v3975 = vshll.u32 %v3935, 16
        %v3977 = vor.u32 %v3974, %v3975
        %v3978 = vrot.slane %v3974, 4
        %v3980 = vshrl.u32 %v3936, 16
        %v3982 = vrot.slane %v3980, 7
        %v3983 = vshll.u32 %v3936, 16
        %v3985 = vor.u32 %v3982, %v3983
        %v3986 = vrot.slane %v3982, 4
        %v3988 = vshrl.u32 %v3937, 16
        %v3990 = vrot.slane %v3988, 7
        %v3991 = vshll.u32 %v3937, 16
        %v3993 = vor.u32 %v3990, %v3991
        %v3994 = vrot.slane %v3990, 4
        %v3996 = vshrl.u32 %v3938, 16
        %v3998 = vrot.slane %v3996, 7
        %v3999 = vshll.u32 %v3938, 16
        %v4001 = vor.u32 %v3998, %v3999
        %v4002 = vrot.slane %v3998, 4
        %s4019 = scalar_lea.vmem [#allocation2], 16
        %vm4020 = vcmask 261124
        %vm4021 = vmand %vm4020, %vm923
        %vm4022 = vmor %vm4021, %vm921
        %v4023 = vld [vmem:[%s4019] sm:$0xff]
        %v4024 = vsel %vm4022, %v3945, %v4023
        %4025 = vst [vmem:[%s4019] sm:$0xff] %v4024
        %vm4026 = vcmask 258052
        %vm4027 = vmand %vm4026, %vm944
        %vm4028 = vmor %vm4027, %vm942
        %v4029 = vld [vmem:[%s4019 + $0x8] sm:$0x11]
        %v4030 = vsel %vm4028, %v3946, %v4029
        %4031 = vst [vmem:[%s4019 + $0x8] sm:$0x11] %v4030
        %v4032 = vld [vmem:[%s4019 + $0x10] sm:$0xff]
        %v4033 = vsel %vm4022, %v3953, %v4032
        %4034 = vst [vmem:[%s4019 + $0x10] sm:$0xff] %v4033
        %v4035 = vld [vmem:[%s4019 + $0x18] sm:$0x11]
        %v4036 = vsel %vm4028, %v3954, %v4035
        %4037 = vst [vmem:[%s4019 + $0x18] sm:$0x11] %v4036
        %v4038 = vld [vmem:[%s4019 + $0x20] sm:$0xff]
        %v4039 = vsel %vm4022, %v3961, %v4038
        %4040 = vst [vmem:[%s4019 + $0x20] sm:$0xff] %v4039
        %v4041 = vld [vmem:[%s4019 + $0x28] sm:$0x11]
        %v4042 = vsel %vm4028, %v3962, %v4041
        %4043 = vst [vmem:[%s4019 + $0x28] sm:$0x11] %v4042
        %v4044 = vld [vmem:[%s4019 + $0x30] sm:$0xff]
        %v4045 = vsel %vm4022, %v3969, %v4044
        %4046 = vst [vmem:[%s4019 + $0x30] sm:$0xff] %v4045
        %v4047 = vld [vmem:[%s4019 + $0x38] sm:$0x11]
        %v4048 = vsel %vm4028, %v3970, %v4047
        %4049 = vst [vmem:[%s4019 + $0x38] sm:$0x11] %v4048
        %v4050 = vld [vmem:[%s4019 + $0x40] sm:$0xff]
        %v4051 = vsel %vm4022, %v3977, %v4050
        %4052 = vst [vmem:[%s4019 + $0x40] sm:$0xff] %v4051
        %v4053 = vld [vmem:[%s4019 + $0x48] sm:$0x11]
        %v4054 = vsel %vm4028, %v3978, %v4053
        %4055 = vst [vmem:[%s4019 + $0x48] sm:$0x11] %v4054
        %v4056 = vld [vmem:[%s4019 + $0x50] sm:$0xff]
        %v4057 = vsel %vm4022, %v3985, %v4056
        %4058 = vst [vmem:[%s4019 + $0x50] sm:$0xff] %v4057
        %v4059 = vld [vmem:[%s4019 + $0x58] sm:$0x11]
        %v4060 = vsel %vm4028, %v3986, %v4059
        %4061 = vst [vmem:[%s4019 + $0x58] sm:$0x11] %v4060
        %v4062 = vld [vmem:[%s4019 + $0x60] sm:$0xff]
        %v4063 = vsel %vm4022, %v3993, %v4062
        %4064 = vst [vmem:[%s4019 + $0x60] sm:$0xff] %v4063
        %v4065 = vld [vmem:[%s4019 + $0x68] sm:$0x11]
        %v4066 = vsel %vm4028, %v3994, %v4065
        %4067 = vst [vmem:[%s4019 + $0x68] sm:$0x11] %v4066
        %v4068 = vld [vmem:[%s4019 + $0x70] sm:$0xff]
        %v4069 = vsel %vm4022, %v4001, %v4068
        %4070 = vst [vmem:[%s4019 + $0x70] sm:$0xff] %v4069
        %v4071 = vld [vmem:[%s4019 + $0x78] sm:$0x11]
        %v4072 = vsel %vm4028, %v4002, %v4071
        %4073 = vst [vmem:[%s4019 + $0x78] sm:$0x11] %v4072
        %vm4074 = vcmask 257024
        %4075 = vst.msk [vmem:[#allocation3] sm:$0xf] %vm4074, 0
        %vm4076 = vcmask 253952
        %4077 = vst.msk [vmem:[#allocation3 + $0x4] sm:$0x1] %vm4076, 0
        %4078 = vst.msk [vmem:[#allocation3 + $0x8] sm:$0xf] %vm4074, 0
        %4079 = vst.msk [vmem:[#allocation3 + $0xc] sm:$0x1] %vm4076, 0
        %4080 = vst.msk [vmem:[#allocation3 + $0x10] sm:$0xf] %vm4074, 0
        %4081 = vst.msk [vmem:[#allocation3 + $0x14] sm:$0x1] %vm4076, 0
        %4082 = vst.msk [vmem:[#allocation3 + $0x18] sm:$0xf] %vm4074, 0
        %4083 = vst.msk [vmem:[#allocation3 + $0x1c] sm:$0x1] %vm4076, 0
        %4084 = vst.msk [vmem:[#allocation3 + $0x20] sm:$0xf] %vm4074, 0
        %4085 = vst.msk [vmem:[#allocation3 + $0x24] sm:$0x1] %vm4076, 0
        %4086 = vst.msk [vmem:[#allocation3 + $0x28] sm:$0xf] %vm4074, 0
        %4087 = vst.msk [vmem:[#allocation3 + $0x2c] sm:$0x1] %vm4076, 0
        %4088 = vst.msk [vmem:[#allocation3 + $0x30] sm:$0xf] %vm4074, 0
        %4089 = vst.msk [vmem:[#allocation3 + $0x34] sm:$0x1] %vm4076, 0
        %4090 = vst.msk [vmem:[#allocation3 + $0x38] sm:$0xf] %vm4074, 0
        %4091 = vst.msk [vmem:[#allocation3 + $0x3c] sm:$0x1] %vm4076, 0
        %4092 = vst.msk [vmem:[#allocation3 + $0x40] sm:$0xf] %vm4074, 0
        %4093 = vst.msk [vmem:[#allocation3 + $0x44] sm:$0x1] %vm4076, 0
        %4094 = vst.msk [vmem:[#allocation3 + $0x48] sm:$0xf] %vm4074, 0
        %4095 = vst.msk [vmem:[#allocation3 + $0x4c] sm:$0x1] %vm4076, 0
        %v4096 = vpack.c.bf16 %v3826, %v3821
        %v4097 = vpack.c.bf16 %v3836, %v3831
        %v4098 = vpack.c.bf16 %v3846, %v3841
        %v4099 = vpack.c.bf16 %v3856, %v3851
        %v4104 = vunpack.c.l.b16 %v4096
        %v4105 = vunpack.c.h.b16 %v4096
        %v4106 = vunpack.c.l.b16 %v4097
        %v4107 = vunpack.c.h.b16 %v4097
        %v4108 = vunpack.c.l.b16 %v4098
        %v4109 = vunpack.c.h.b16 %v4098
        %v4110 = vunpack.c.l.b16 %v4099
        %v4111 = vunpack.c.h.b16 %v4099
        %v4112 = vpack.c.b16 %v4104, %v4104
        %v4113 = vpack.c.b16 %v4105, %v4105
        %v4114 = vpack.c.b16 %v4106, %v4106
        %v4115 = vpack.c.b16 %v4107, %v4107
        %v4116 = vpack.c.b16 %v4108, %v4108
        %v4117 = vpack.c.b16 %v4109, %v4109
        %v4118 = vpack.c.b16 %v4110, %v4110
        %v4119 = vpack.c.b16 %v4111, %v4111
        %v4121 = vshrl.u32 %v4112, 16
        %v4123 = vrot.slane %v4121, 7
        %v4124 = vshll.u32 %v4112, 16
        %v4126 = vor.u32 %v4123, %v4124
        %v4127 = vrot.slane %v4123, 4
        %v4129 = vshrl.u32 %v4113, 16
        %v4131 = vrot.slane %v4129, 7
        %v4132 = vshll.u32 %v4113, 16
        %v4134 = vor.u32 %v4131, %v4132
        %v4135 = vrot.slane %v4131, 4
        %v4137 = vshrl.u32 %v4114, 16
        %v4139 = vrot.slane %v4137, 7
        %v4140 = vshll.u32 %v4114, 16
        %v4142 = vor.u32 %v4139, %v4140
        %v4143 = vrot.slane %v4139, 4
        %v4145 = vshrl.u32 %v4115, 16
        %v4147 = vrot.slane %v4145, 7
        %v4148 = vshll.u32 %v4115, 16
        %v4150 = vor.u32 %v4147, %v4148
        %v4151 = vrot.slane %v4147, 4
        %v4153 = vshrl.u32 %v4116, 16
        %v4155 = vrot.slane %v4153, 7
        %v4156 = vshll.u32 %v4116, 16
        %v4158 = vor.u32 %v4155, %v4156
        %v4159 = vrot.slane %v4155, 4
        %v4161 = vshrl.u32 %v4117, 16
        %v4163 = vrot.slane %v4161, 7
        %v4164 = vshll.u32 %v4117, 16
        %v4166 = vor.u32 %v4163, %v4164
        %v4167 = vrot.slane %v4163, 4
        %v4169 = vshrl.u32 %v4118, 16
        %v4171 = vrot.slane %v4169, 7
        %v4172 = vshll.u32 %v4118, 16
        %v4174 = vor.u32 %v4171, %v4172
        %v4175 = vrot.slane %v4171, 4
        %v4177 = vshrl.u32 %v4119, 16
        %v4179 = vrot.slane %v4177, 7
        %v4180 = vshll.u32 %v4119, 16
        %v4182 = vor.u32 %v4179, %v4180
        %v4183 = vrot.slane %v4179, 4
        %s4200 = scalar_lea.vmem [#allocation3], 8
        %vm4201 = vcmask 257024
        %vm4202 = vmand %vm4201, %vm920
        %v4203 = vld [vmem:[%s4200] sm:$0xf]
        %v4204 = vsel %vm4202, %v4126, %v4203
        %4205 = vst [vmem:[%s4200] sm:$0xf] %v4204
        %vm4206 = vcmask 253952
        %vm4207 = vmand %vm4206, %vm941
        %v4208 = vld [vmem:[%s4200 + $0x4] sm:$0x1]
        %v4209 = vsel %vm4207, %v4127, %v4208
        %4210 = vst [vmem:[%s4200 + $0x4] sm:$0x1] %v4209
        %v4211 = vld [vmem:[%s4200 + $0x8] sm:$0xf]
        %v4212 = vsel %vm4202, %v4134, %v4211
        %4213 = vst [vmem:[%s4200 + $0x8] sm:$0xf] %v4212
        %v4214 = vld [vmem:[%s4200 + $0xc] sm:$0x1]
        %v4215 = vsel %vm4207, %v4135, %v4214
        %4216 = vst [vmem:[%s4200 + $0xc] sm:$0x1] %v4215
        %v4217 = vld [vmem:[%s4200 + $0x10] sm:$0xf]
        %v4218 = vsel %vm4202, %v4142, %v4217
        %4219 = vst [vmem:[%s4200 + $0x10] sm:$0xf] %v4218
        %v4220 = vld [vmem:[%s4200 + $0x14] sm:$0x1]
        %v4221 = vsel %vm4207, %v4143, %v4220
        %4222 = vst [vmem:[%s4200 + $0x14] sm:$0x1] %v4221
        %v4223 = vld [vmem:[%s4200 + $0x18] sm:$0xf]
        %v4224 = vsel %vm4202, %v4150, %v4223
        %4225 = vst [vmem:[%s4200 + $0x18] sm:$0xf] %v4224
        %v4226 = vld [vmem:[%s4200 + $0x1c] sm:$0x1]
        %v4227 = vsel %vm4207, %v4151, %v4226
        %4228 = vst [vmem:[%s4200 + $0x1c] sm:$0x1] %v4227
        %v4229 = vld [vmem:[%s4200 + $0x20] sm:$0xf]
        %v4230 = vsel %vm4202, %v4158, %v4229
        %4231 = vst [vmem:[%s4200 + $0x20] sm:$0xf] %v4230
        %v4232 = vld [vmem:[%s4200 + $0x24] sm:$0x1]
        %v4233 = vsel %vm4207, %v4159, %v4232
        %4234 = vst [vmem:[%s4200 + $0x24] sm:$0x1] %v4233
        %v4235 = vld [vmem:[%s4200 + $0x28] sm:$0xf]
        %v4236 = vsel %vm4202, %v4166, %v4235
        %4237 = vst [vmem:[%s4200 + $0x28] sm:$0xf] %v4236
        %v4238 = vld [vmem:[%s4200 + $0x2c] sm:$0x1]
        %v4239 = vsel %vm4207, %v4167, %v4238
        %4240 = vst [vmem:[%s4200 + $0x2c] sm:$0x1] %v4239
        %v4241 = vld [vmem:[%s4200 + $0x30] sm:$0xf]
        %v4242 = vsel %vm4202, %v4174, %v4241
        %4243 = vst [vmem:[%s4200 + $0x30] sm:$0xf] %v4242
        %v4244 = vld [vmem:[%s4200 + $0x34] sm:$0x1]
        %v4245 = vsel %vm4207, %v4175, %v4244
        %4246 = vst [vmem:[%s4200 + $0x34] sm:$0x1] %v4245
        %v4247 = vld [vmem:[%s4200 + $0x38] sm:$0xf]
        %v4248 = vsel %vm4202, %v4182, %v4247
        %4249 = vst [vmem:[%s4200 + $0x38] sm:$0xf] %v4248
        %v4250 = vld [vmem:[%s4200 + $0x3c] sm:$0x1]
        %v4251 = vsel %vm4207, %v4183, %v4250
        %4252 = vst [vmem:[%s4200 + $0x3c] sm:$0x1] %v4251
        %v4253 = vld [vmem:[#allocation2] sm:$0xff]
        %v4254 = vld [vmem:[#allocation2 + $0x10] sm:$0xff]
        %v4255 = vld [vmem:[#allocation2 + $0x20] sm:$0xff]
        %v4256 = vld [vmem:[#allocation2 + $0x30] sm:$0xff]
        %v4257 = vld [vmem:[#allocation2 + $0x40] sm:$0xff]
        %v4258 = vld [vmem:[#allocation2 + $0x50] sm:$0xff]
        %v4259 = vld [vmem:[#allocation2 + $0x60] sm:$0xff]
        %v4260 = vld [vmem:[#allocation2 + $0x70] sm:$0xff]
        %v4261 = vld [vmem:[#allocation9] sm:$0xff]
        %v4262 = vld [vmem:[#allocation9 + $0x8] sm:$0xf]
        %v4263 = vld [vmem:[#allocation9 + $0xc] sm:$0xff]
        %v4264 = vld [vmem:[#allocation9 + $0x14] sm:$0xf]
        %v4265 = vld [vmem:[#allocation9 + $0x18] sm:$0xff]
        %v4266 = vld [vmem:[#allocation9 + $0x20] sm:$0xf]
        %v4267 = vld [vmem:[#allocation9 + $0x24] sm:$0xff]
        %v4268 = vld [vmem:[#allocation9 + $0x2c] sm:$0xf]
        %v4269 = vld [vmem:[#allocation9 + $0x30] sm:$0xff]
        %v4270 = vld [vmem:[#allocation9 + $0x38] sm:$0xf]
        %v4271 = vld [vmem:[#allocation9 + $0x3c] sm:$0xff]
        %v4272 = vld [vmem:[#allocation9 + $0x44] sm:$0xf]
        %v4273 = vld [vmem:[#allocation9 + $0x48] sm:$0xff]
        %v4274 = vld [vmem:[#allocation9 + $0x50] sm:$0xf]
        %v4275 = vld [vmem:[#allocation9 + $0x54] sm:$0xff]
        %v4276 = vld [vmem:[#allocation9 + $0x5c] sm:$0xf]
        %v4277 = vld [vmem:[#allocation9 + $0x60] sm:$0xff]
        %v4278 = vld [vmem:[#allocation9 + $0x68] sm:$0xf]
        %v4279 = vld [vmem:[#allocation9 + $0x6c] sm:$0xff]
        %v4280 = vld [vmem:[#allocation9 + $0x74] sm:$0xf]
        %v4281 = vld [vmem:[#allocation9 + $0x78] sm:$0xff]
        %v4282 = vld [vmem:[#allocation9 + $0x80] sm:$0xf]
        %v4283 = vld [vmem:[#allocation9 + $0x84] sm:$0xff]
        %v4284 = vld [vmem:[#allocation9 + $0x8c] sm:$0xf]
        %v4285 = vld [vmem:[#allocation9 + $0x90] sm:$0xff]
        %v4286 = vld [vmem:[#allocation9 + $0x98] sm:$0xf]
        %v4287 = vld [vmem:[#allocation9 + $0x9c] sm:$0xff]
        %v4288 = vld [vmem:[#allocation9 + $0xa4] sm:$0xf]
        %v4289 = vld [vmem:[#allocation9 + $0xa8] sm:$0xff]
        %v4290 = vld [vmem:[#allocation9 + $0xb0] sm:$0xf]
        %v4291 = vld [vmem:[#allocation9 + $0xb4] sm:$0xff]
        %v4292 = vld [vmem:[#allocation9 + $0xbc] sm:$0xf]
        %v4293 = vld [vmem:[#allocation9 + $0xc0] sm:$0xff]
        %v4294 = vld [vmem:[#allocation9 + $0xc8] sm:$0xf]
        %v4295 = vld [vmem:[#allocation9 + $0xcc] sm:$0xff]
        %v4296 = vld [vmem:[#allocation9 + $0xd4] sm:$0xf]
        %v4297 = vld [vmem:[#allocation9 + $0xd8] sm:$0xff]
        %v4298 = vld [vmem:[#allocation9 + $0xe0] sm:$0xf]
        %v4299 = vld [vmem:[#allocation9 + $0xe4] sm:$0xff]
        %v4300 = vld [vmem:[#allocation9 + $0xec] sm:$0xf]
        %v4301 = vld [vmem:[#allocation3] sm:$0xf]
        %v4302 = vld [vmem:[#allocation3 + $0x8] sm:$0xf]
        %v4303 = vld [vmem:[#allocation3 + $0x10] sm:$0xf]
        %v4304 = vld [vmem:[#allocation3 + $0x18] sm:$0xf]
        %v4305 = vld [vmem:[#allocation3 + $0x20] sm:$0xf]
        %v4306 = vld [vmem:[#allocation3 + $0x28] sm:$0xf]
        %v4307 = vld [vmem:[#allocation3 + $0x30] sm:$0xf]
        %v4308 = vld [vmem:[#allocation3 + $0x38] sm:$0xf]
        %v4309 = vld [vmem:[#allocation12] sm:$0xf]
        %v4310 = vld [vmem:[#allocation12 + $0x4] sm:$0xf]
        %v4311 = vld [vmem:[#allocation12 + $0x8] sm:$0xf]
        %v4312 = vld [vmem:[#allocation12 + $0xc] sm:$0xf]
        %v4313 = vld [vmem:[#allocation2 + $0x8] sm:$0x11]
        %v4314 = vld [vmem:[#allocation2 + $0x18] sm:$0x11]
        %v4315 = vld [vmem:[#allocation2 + $0x28] sm:$0x11]
        %v4316 = vld [vmem:[#allocation2 + $0x38] sm:$0x11]
        %v4317 = vld [vmem:[#allocation2 + $0x48] sm:$0x11]
        %v4318 = vld [vmem:[#allocation2 + $0x58] sm:$0x11]
        %v4319 = vld [vmem:[#allocation2 + $0x68] sm:$0x11]
        %v4320 = vld [vmem:[#allocation2 + $0x78] sm:$0x11]
        %vm4321 = vsmask.f32 3328
        %vm4322 = vsmask.f32 7440
        %vm4323 = vmor %vm4321, %vm4322
        %v4325 = vshrl.u32 %v4253, 16
        %v4327 = vrot.slane %v4325, 4
        %v4328 = vshll.u32 %v4253, 16
        %v4330 = vrot.slane %v4328, 5
        %v4331 = vor.u32 %v4327, %v4330
        %v4332 = vrot.slane %v4331, 4
        %v4334 = vshll.u32 %v4313, 16
        %v4336 = vrot.slane %v4334, 5
        %v4337 = vsel %vm4323, %v4332, %v4336
        %v4339 = vshrl.u32 %v4254, 16
        %v4341 = vrot.slane %v4339, 4
        %v4342 = vshll.u32 %v4254, 16
        %v4344 = vrot.slane %v4342, 5
        %v4345 = vor.u32 %v4341, %v4344
        %v4346 = vrot.slane %v4345, 4
        %v4348 = vshll.u32 %v4314, 16
        %v4350 = vrot.slane %v4348, 5
        %v4351 = vsel %vm4323, %v4346, %v4350
        %v4353 = vshrl.u32 %v4255, 16
        %v4355 = vrot.slane %v4353, 4
        %v4356 = vshll.u32 %v4255, 16
        %v4358 = vrot.slane %v4356, 5
        %v4359 = vor.u32 %v4355, %v4358
        %v4360 = vrot.slane %v4359, 4
        %v4362 = vshll.u32 %v4315, 16
        %v4364 = vrot.slane %v4362, 5
        %v4365 = vsel %vm4323, %v4360, %v4364
        %v4367 = vshrl.u32 %v4256, 16
        %v4369 = vrot.slane %v4367, 4
        %v4370 = vshll.u32 %v4256, 16
        %v4372 = vrot.slane %v4370, 5
        %v4373 = vor.u32 %v4369, %v4372
        %v4374 = vrot.slane %v4373, 4
        %v4376 = vshll.u32 %v4316, 16
        %v4378 = vrot.slane %v4376, 5
        %v4379 = vsel %vm4323, %v4374, %v4378
        %v4381 = vshrl.u32 %v4257, 16
        %v4383 = vrot.slane %v4381, 4
        %v4384 = vshll.u32 %v4257, 16
        %v4386 = vrot.slane %v4384, 5
        %v4387 = vor.u32 %v4383, %v4386
        %v4388 = vrot.slane %v4387, 4
        %v4390 = vshll.u32 %v4317, 16
        %v4392 = vrot.slane %v4390, 5
        %v4393 = vsel %vm4323, %v4388, %v4392
        %v4395 = vshrl.u32 %v4258, 16
        %v4397 = vrot.slane %v4395, 4
        %v4398 = vshll.u32 %v4258, 16
        %v4400 = vrot.slane %v4398, 5
        %v4401 = vor.u32 %v4397, %v4400
        %v4402 = vrot.slane %v4401, 4
        %v4404 = vshll.u32 %v4318, 16
        %v4406 = vrot.slane %v4404, 5
        %v4407 = vsel %vm4323, %v4402, %v4406
        %v4409 = vshrl.u32 %v4259, 16
        %v4411 = vrot.slane %v4409, 4
        %v4412 = vshll.u32 %v4259, 16
        %v4414 = vrot.slane %v4412, 5
        %v4415 = vor.u32 %v4411, %v4414
        %v4416 = vrot.slane %v4415, 4
        %v4418 = vshll.u32 %v4319, 16
        %v4420 = vrot.slane %v4418, 5
        %v4421 = vsel %vm4323, %v4416, %v4420
        %v4423 = vshrl.u32 %v4260, 16
        %v4425 = vrot.slane %v4423, 4
        %v4426 = vshll.u32 %v4260, 16
        %v4428 = vrot.slane %v4426, 5
        %v4429 = vor.u32 %v4425, %v4428
        %v4430 = vrot.slane %v4429, 4
        %v4432 = vshll.u32 %v4320, 16
        %v4434 = vrot.slane %v4432, 5
        %v4435 = vsel %vm4323, %v4430, %v4434
        %s4436 = scalar_lea.vmem [#allocation9], 240
        %v4437 = vld [vmem:[%s4436] sm:$0xff]
        %v4438 = vld [vmem:[%s4436 + $0x8] sm:$0xf]
        %v4439 = vld [vmem:[%s4436 + $0xc] sm:$0xff]
        %v4440 = vld [vmem:[%s4436 + $0x14] sm:$0xf]
        %v4441 = vld [vmem:[%s4436 + $0x18] sm:$0xff]
        %v4442 = vld [vmem:[%s4436 + $0x20] sm:$0xf]
        %v4443 = vld [vmem:[%s4436 + $0x24] sm:$0xff]
        %v4444 = vld [vmem:[%s4436 + $0x2c] sm:$0xf]
        %v4445 = vld [vmem:[%s4436 + $0x30] sm:$0xff]
        %v4446 = vld [vmem:[%s4436 + $0x38] sm:$0xf]
        %v4447 = vld [vmem:[%s4436 + $0x3c] sm:$0xff]
        %v4448 = vld [vmem:[%s4436 + $0x44] sm:$0xf]
        %v4449 = vld [vmem:[%s4436 + $0x48] sm:$0xff]
        %v4450 = vld [vmem:[%s4436 + $0x50] sm:$0xf]
        %v4451 = vld [vmem:[%s4436 + $0x54] sm:$0xff]
        %v4452 = vld [vmem:[%s4436 + $0x5c] sm:$0xf]
        %v4453 = vld [vmem:[%s4436 + $0x60] sm:$0xff]
        %v4454 = vld [vmem:[%s4436 + $0x68] sm:$0xf]
        %v4455 = vld [vmem:[%s4436 + $0x6c] sm:$0xff]
        %v4456 = vld [vmem:[%s4436 + $0x74] sm:$0xf]
        %v4457 = vld [vmem:[%s4436 + $0x78] sm:$0xff]
        %v4458 = vld [vmem:[%s4436 + $0x80] sm:$0xf]
        %v4459 = vld [vmem:[%s4436 + $0x84] sm:$0xff]
        %v4460 = vld [vmem:[%s4436 + $0x8c] sm:$0xf]
        %v4461 = vld [vmem:[%s4436 + $0x90] sm:$0xff]
        %v4462 = vld [vmem:[%s4436 + $0x98] sm:$0xf]
        %v4463 = vld [vmem:[%s4436 + $0x9c] sm:$0xff]
        %v4464 = vld [vmem:[%s4436 + $0xa4] sm:$0xf]
        %v4465 = vld [vmem:[%s4436 + $0xa8] sm:$0xff]
        %v4466 = vld [vmem:[%s4436 + $0xb0] sm:$0xf]
        %v4467 = vld [vmem:[%s4436 + $0xb4] sm:$0xff]
        %v4468 = vld [vmem:[%s4436 + $0xbc] sm:$0xf]
        %v4469 = vld [vmem:[%s4436 + $0xc0] sm:$0xff]
        %v4470 = vld [vmem:[%s4436 + $0xc8] sm:$0xf]
        %v4471 = vld [vmem:[%s4436 + $0xcc] sm:$0xff]
        %v4472 = vld [vmem:[%s4436 + $0xd4] sm:$0xf]
        %v4473 = vld [vmem:[%s4436 + $0xd8] sm:$0xff]
        %v4474 = vld [vmem:[%s4436 + $0xe0] sm:$0xf]
        %v4475 = vld [vmem:[%s4436 + $0xe4] sm:$0xff]
        %v4476 = vld [vmem:[%s4436 + $0xec] sm:$0xf]
        %v4477 = vunpack.c.l.b16 %v4337
        %v4478 = vunpack.c.h.b16 %v4337
        %v4479 = vunpack.c.l.b16 %v4351
        %v4480 = vunpack.c.h.b16 %v4351
        %v4481 = vunpack.c.l.b16 %v4365
        %v4482 = vunpack.c.h.b16 %v4365
        %v4483 = vunpack.c.l.b16 %v4379
        %v4484 = vunpack.c.h.b16 %v4379
        %v4485 = vunpack.c.l.b16 %v4393
        %v4486 = vunpack.c.h.b16 %v4393
        %v4487 = vunpack.c.l.b16 %v4407
        %v4488 = vunpack.c.h.b16 %v4407
        %v4489 = vunpack.c.l.b16 %v4421
        %v4490 = vunpack.c.h.b16 %v4421
        %v4491 = vunpack.c.l.b16 %v4435
        %v4492 = vunpack.c.h.b16 %v4435
        %v4493 = vpack.c.b16 %v4479, %v4477
        %v4494 = vpack.c.b16 %v4480, %v4478
        %v4495 = vpack.c.b16 %v4483, %v4481
        %v4496 = vpack.c.b16 %v4484, %v4482
        %v4497 = vpack.c.b16 %v4487, %v4485
        %v4498 = vpack.c.b16 %v4488, %v4486
        %v4499 = vpack.c.b16 %v4491, %v4489
        %v4500 = vpack.c.b16 %v4492, %v4490
        %v4545 = vunpack.c.l.b16 %v4437
        %v4546 = vunpack.c.h.b16 %v4437
        %v4547 = vunpack.c.l.b16 %v4438
        %v4548 = vunpack.c.l.b16 %v4439
        %v4549 = vunpack.c.h.b16 %v4439
        %v4550 = vunpack.c.l.b16 %v4440
        %v4551 = vunpack.c.l.b16 %v4441
        %v4552 = vunpack.c.h.b16 %v4441
        %v4553 = vunpack.c.l.b16 %v4442
        %v4554 = vunpack.c.l.b16 %v4443
        %v4555 = vunpack.c.h.b16 %v4443
        %v4556 = vunpack.c.l.b16 %v4444
        %v4557 = vunpack.c.l.b16 %v4445
        %v4558 = vunpack.c.h.b16 %v4445
        %v4559 = vunpack.c.l.b16 %v4446
        %v4560 = vunpack.c.l.b16 %v4447
        %v4561 = vunpack.c.h.b16 %v4447
        %v4562 = vunpack.c.l.b16 %v4448
        %v4563 = vunpack.c.l.b16 %v4449
        %v4564 = vunpack.c.h.b16 %v4449
        %v4565 = vunpack.c.l.b16 %v4450
        %v4566 = vunpack.c.l.b16 %v4451
        %v4567 = vunpack.c.h.b16 %v4451
        %v4568 = vunpack.c.l.b16 %v4452
        %v4569 = vunpack.c.l.b16 %v4453
        %v4570 = vunpack.c.h.b16 %v4453
        %v4571 = vunpack.c.l.b16 %v4454
        %v4572 = vunpack.c.l.b16 %v4455
        %v4573 = vunpack.c.h.b16 %v4455
        %v4574 = vunpack.c.l.b16 %v4456
        %v4575 = vunpack.c.l.b16 %v4457
        %v4576 = vunpack.c.h.b16 %v4457
        %v4577 = vunpack.c.l.b16 %v4458
        %v4578 = vunpack.c.l.b16 %v4459
        %v4579 = vunpack.c.h.b16 %v4459
        %v4580 = vunpack.c.l.b16 %v4460
        %v4581 = vunpack.c.l.b16 %v4461
        %v4582 = vunpack.c.h.b16 %v4461
        %v4583 = vunpack.c.l.b16 %v4462
        %v4584 = vunpack.c.l.b16 %v4463
        %v4585 = vunpack.c.h.b16 %v4463
        %v4586 = vunpack.c.l.b16 %v4464
        %v4587 = vunpack.c.l.b16 %v4465
        %v4588 = vunpack.c.h.b16 %v4465
        %v4589 = vunpack.c.l.b16 %v4466
        %v4590 = vunpack.c.l.b16 %v4467
        %v4591 = vunpack.c.h.b16 %v4467
        %v4592 = vunpack.c.l.b16 %v4468
        %v4593 = vunpack.c.l.b16 %v4469
        %v4594 = vunpack.c.h.b16 %v4469
        %v4595 = vunpack.c.l.b16 %v4470
        %v4596 = vunpack.c.l.b16 %v4471
        %v4597 = vunpack.c.h.b16 %v4471
        %v4598 = vunpack.c.l.b16 %v4472
        %v4599 = vunpack.c.l.b16 %v4473
        %v4600 = vunpack.c.h.b16 %v4473
        %v4601 = vunpack.c.l.b16 %v4474
        %v4602 = vunpack.c.l.b16 %v4475
        %v4603 = vunpack.c.h.b16 %v4475
        %v4604 = vunpack.c.l.b16 %v4476
        %v4605 = vpack.c.b16 %v4548, %v4545
        %v4606 = vpack.c.b16 %v4549, %v4546
        %v4607 = vpack.c.b16 %v4550, %v4547
        %v4608 = vpack.c.b16 %v4554, %v4551
        %v4609 = vpack.c.b16 %v4555, %v4552
        %v4610 = vpack.c.b16 %v4556, %v4553
        %v4611 = vpack.c.b16 %v4560, %v4557
        %v4612 = vpack.c.b16 %v4561, %v4558
        %v4613 = vpack.c.b16 %v4562, %v4559
        %v4614 = vpack.c.b16 %v4566, %v4563
        %v4615 = vpack.c.b16 %v4567, %v4564
        %v4616 = vpack.c.b16 %v4568, %v4565
        %v4617 = vpack.c.b16 %v4572, %v4569
        %v4618 = vpack.c.b16 %v4573, %v4570
        %v4619 = vpack.c.b16 %v4574, %v4571
        %v4620 = vpack.c.b16 %v4578, %v4575
        %v4621 = vpack.c.b16 %v4579, %v4576
        %v4622 = vpack.c.b16 %v4580, %v4577
        %v4623 = vpack.c.b16 %v4584, %v4581
        %v4624 = vpack.c.b16 %v4585, %v4582
        %v4625 = vpack.c.b16 %v4586, %v4583
        %v4626 = vpack.c.b16 %v4590, %v4587
        %v4627 = vpack.c.b16 %v4591, %v4588
        %v4628 = vpack.c.b16 %v4592, %v4589
        %v4629 = vpack.c.b16 %v4596, %v4593
        %v4630 = vpack.c.b16 %v4597, %v4594
        %v4631 = vpack.c.b16 %v4598, %v4595
        %v4632 = vpack.c.b16 %v4602, %v4599
        %v4633 = vpack.c.b16 %v4603, %v4600
        %v4634 = vpack.c.b16 %v4604, %v4601
        %vm4665 = vcmask 261120
        %v4667 = vsel %vm4665, %v4494, 0
        %v4670 = vsel %vm4665, %v4496, 0
        %v4673 = vsel %vm4665, %v4498, 0
        %v4676 = vsel %vm4665, %v4500, 0
        %4678 = vmatprep.subr.bf16.mxu0 %v4627
        %4679 = vmatpush1.bf16.msra.mxu0 %v4626
        %4680 = vmatprep.subr.bf16.mxu0 %v4624
        %4681 = vmatpush1.bf16.msra.mxu0 %v4623
        %4682 = vmatprep.subr.bf16.mxu0 %v4621
        %4683 = vmatpush1.bf16.msra.mxu0 %v4620
        %4684 = vmatprep.subr.bf16.mxu0 %v4618
        %4685 = vmatpush1.bf16.msra.mxu0 %v4617
        %4686 = vmatprep.subr.bf16.mxu0 %v4615
        %4687 = vmatpush1.bf16.msra.mxu0 %v4614
        %4688 = vmatprep.subr.bf16.mxu0 %v4612
        %4689 = vmatpush1.bf16.msra.mxu0 %v4611
        %4690 = vmatprep.subr.bf16.mxu0 %v4609
        %4691 = vmatpush1.bf16.msra.mxu0 %v4608
        %4692 = vmatprep.subr.bf16.mxu0 %v4606
        %4693 = vmatpush1.bf16.msra.mxu0 %v4605
        %4694 = vmatprep.subr.bf16.mxu0 0
        %4695 = vmatpush2.bf16.msra.mxu0 0
        %4696 = vmatprep.subr.bf16.mxu0 0
        %4697 = vmatpush2.bf16.msra.mxu0 0
        %4698 = vmatprep.subr.bf16.mxu0 0
        %4699 = vmatpush2.bf16.msra.mxu0 0
        %4700 = vmatprep.subr.bf16.mxu0 0
        %4701 = vmatpush2.bf16.msra.mxu0 0
        %4702 = vmatprep.subr.bf16.mxu0 0
        %4703 = vmatpush2.bf16.msra.mxu0 0
        %4704 = vmatprep.subr.bf16.mxu0 0
        %4705 = vmatpush2.bf16.msra.mxu0 0
        %4706 = vmatprep.subr.bf16.mxu0 %v4633
        %4707 = vmatpush2.bf16.msra.mxu0 %v4632
        %4708 = vmatprep.subr.bf16.mxu0 %v4630
        %4709 = vmatpush2.bf16.msra.mxu0 %v4629
        %4710 = vmatprep.mubr.bf16.mxu0 %v4667
        %4711 = vmatmul.mubr.bf16.gmra.mxu0 %v4493
        %v4712 = vpop.f32.mrf.mxu0
        %v4713 = vadd.f32 0.0, %v4712
        %v4714 = vpop.f32.mrf.mxu0
        %v4715 = vadd.f32 0.0, %v4714
        %v4716 = vpop.f32.mrf.mxu0
        %v4717 = vadd.f32 0.0, %v4716
        %v4718 = vpop.f32.mrf.mxu0
        %v4719 = vadd.f32 0.0, %v4718
        %4720 = vmatprep.mubr.bf16.mxu0 %v4670
        %4721 = vmatmul.mubr.bf16.gmra.mxu0 %v4495
        %v4722 = vpop.f32.mrf.mxu0
        %v4723 = vadd.f32 0.0, %v4722
        %v4724 = vpop.f32.mrf.mxu0
        %v4725 = vadd.f32 0.0, %v4724
        %v4726 = vpop.f32.mrf.mxu0
        %v4727 = vadd.f32 0.0, %v4726
        %v4728 = vpop.f32.mrf.mxu0
        %v4729 = vadd.f32 0.0, %v4728
        %4730 = vmatprep.mubr.bf16.mxu0 %v4673
        %4731 = vmatmul.mubr.bf16.gmra.mxu0 %v4497
        %v4732 = vpop.f32.mrf.mxu0
        %v4733 = vadd.f32 0.0, %v4732
        %v4734 = vpop.f32.mrf.mxu0
        %v4735 = vadd.f32 0.0, %v4734
        %v4736 = vpop.f32.mrf.mxu0
        %v4737 = vadd.f32 0.0, %v4736
        %v4738 = vpop.f32.mrf.mxu0
        %v4739 = vadd.f32 0.0, %v4738
        %4740 = vmatprep.mubr.bf16.mxu0 %v4676
        %4741 = vmatmul.mubr.bf16.gmra.mxu0 %v4499
        %v4742 = vpop.f32.mrf.mxu0
        %v4743 = vadd.f32 0.0, %v4742
        %v4744 = vpop.f32.mrf.mxu0
        %v4745 = vadd.f32 0.0, %v4744
        %v4746 = vpop.f32.mrf.mxu0
        %v4747 = vadd.f32 0.0, %v4746
        %v4748 = vpop.f32.mrf.mxu0
        %v4749 = vadd.f32 0.0, %v4748
        %4750 = vdwg.mxu0
        %4751 = vmatprep.subr.bf16.mxu0 0
        %4752 = vmatpush1.bf16.msra.mxu0 %v4628
        %4753 = vmatprep.subr.bf16.mxu0 0
        %4754 = vmatpush1.bf16.msra.mxu0 %v4625
        %4755 = vmatprep.subr.bf16.mxu0 0
        %4756 = vmatpush1.bf16.msra.mxu0 %v4622
        %4757 = vmatprep.subr.bf16.mxu0 0
        %4758 = vmatpush1.bf16.msra.mxu0 %v4619
        %4759 = vmatprep.subr.bf16.mxu0 0
        %4760 = vmatpush1.bf16.msra.mxu0 %v4616
        %4761 = vmatprep.subr.bf16.mxu0 0
        %4762 = vmatpush1.bf16.msra.mxu0 %v4613
        %4763 = vmatprep.subr.bf16.mxu0 0
        %4764 = vmatpush1.bf16.msra.mxu0 %v4610
        %4765 = vmatprep.subr.bf16.mxu0 0
        %4766 = vmatpush1.bf16.msra.mxu0 %v4607
        %4767 = vmatprep.subr.bf16.mxu0 0
        %4768 = vmatpush2.bf16.msra.mxu0 0
        %4769 = vmatprep.subr.bf16.mxu0 0
        %4770 = vmatpush2.bf16.msra.mxu0 0
        %4771 = vmatprep.subr.bf16.mxu0 0
        %4772 = vmatpush2.bf16.msra.mxu0 0
        %4773 = vmatprep.subr.bf16.mxu0 0
        %4774 = vmatpush2.bf16.msra.mxu0 0
        %4775 = vmatprep.subr.bf16.mxu0 0
        %4776 = vmatpush2.bf16.msra.mxu0 0
        %4777 = vmatprep.subr.bf16.mxu0 0
        %4778 = vmatpush2.bf16.msra.mxu0 0
        %4779 = vmatprep.subr.bf16.mxu0 0
        %4780 = vmatpush2.bf16.msra.mxu0 %v4634
        %4781 = vmatprep.subr.bf16.mxu0 0
        %4782 = vmatpush2.bf16.msra.mxu0 %v4631
        %4783 = vmatprep.mubr.bf16.mxu0 %v4667
        %4784 = vmatmul.mubr.bf16.gmra.mxu0 %v4493
        %v4785 = vpop.f32.mrf.mxu0
        %v4786 = vadd.f32 0.0, %v4785
        %v4787 = vpop.f32.mrf.mxu0
        %v4788 = vpop.f32.mrf.mxu0
        %v4789 = vadd.f32 0.0, %v4788
        %v4790 = vpop.f32.mrf.mxu0
        %4791 = vmatprep.mubr.bf16.mxu0 %v4670
        %4792 = vmatmul.mubr.bf16.gmra.mxu0 %v4495
        %v4793 = vpop.f32.mrf.mxu0
        %v4794 = vadd.f32 0.0, %v4793
        %v4795 = vpop.f32.mrf.mxu0
        %v4796 = vpop.f32.mrf.mxu0
        %v4797 = vadd.f32 0.0, %v4796
        %v4798 = vpop.f32.mrf.mxu0
        %4799 = vmatprep.mubr.bf16.mxu0 %v4673
        %4800 = vmatmul.mubr.bf16.gmra.mxu0 %v4497
        %v4801 = vpop.f32.mrf.mxu0
        %v4802 = vadd.f32 0.0, %v4801
        %v4803 = vpop.f32.mrf.mxu0
        %v4804 = vpop.f32.mrf.mxu0
        %v4805 = vadd.f32 0.0, %v4804
        %v4806 = vpop.f32.mrf.mxu0
        %4807 = vmatprep.mubr.bf16.mxu0 %v4676
        %4808 = vmatmul.mubr.bf16.gmra.mxu0 %v4499
        %v4809 = vpop.f32.mrf.mxu0
        %v4810 = vadd.f32 0.0, %v4809
        %v4811 = vpop.f32.mrf.mxu0
        %v4812 = vpop.f32.mrf.mxu0
        %v4813 = vadd.f32 0.0, %v4812
        %v4814 = vpop.f32.mrf.mxu0
        %4815 = vdwg.mxu0
        %v4824 = vunpack.c.l.b16 %v4253
        %v4825 = vunpack.c.h.b16 %v4253
        %v4826 = vunpack.c.l.b16 %v4254
        %v4827 = vunpack.c.h.b16 %v4254
        %v4828 = vunpack.c.l.b16 %v4255
        %v4829 = vunpack.c.h.b16 %v4255
        %v4830 = vunpack.c.l.b16 %v4256
        %v4831 = vunpack.c.h.b16 %v4256
        %v4832 = vunpack.c.l.b16 %v4257
        %v4833 = vunpack.c.h.b16 %v4257
        %v4834 = vunpack.c.l.b16 %v4258
        %v4835 = vunpack.c.h.b16 %v4258
        %v4836 = vunpack.c.l.b16 %v4259
        %v4837 = vunpack.c.h.b16 %v4259
        %v4838 = vunpack.c.l.b16 %v4260
        %v4839 = vunpack.c.h.b16 %v4260
        %v4840 = vpack.c.b16 %v4826, %v4824
        %v4841 = vpack.c.b16 %v4827, %v4825
        %v4842 = vpack.c.b16 %v4830, %v4828
        %v4843 = vpack.c.b16 %v4831, %v4829
        %v4844 = vpack.c.b16 %v4834, %v4832
        %v4845 = vpack.c.b16 %v4835, %v4833
        %v4846 = vpack.c.b16 %v4838, %v4836
        %v4847 = vpack.c.b16 %v4839, %v4837
        %v4892 = vunpack.c.l.b16 %v4261
        %v4893 = vunpack.c.h.b16 %v4261
        %v4894 = vunpack.c.l.b16 %v4262
        %v4895 = vunpack.c.l.b16 %v4263
        %v4896 = vunpack.c.h.b16 %v4263
        %v4897 = vunpack.c.l.b16 %v4264
        %v4898 = vunpack.c.l.b16 %v4265
        %v4899 = vunpack.c.h.b16 %v4265
        %v4900 = vunpack.c.l.b16 %v4266
        %v4901 = vunpack.c.l.b16 %v4267
        %v4902 = vunpack.c.h.b16 %v4267
        %v4903 = vunpack.c.l.b16 %v4268
        %v4904 = vunpack.c.l.b16 %v4269
        %v4905 = vunpack.c.h.b16 %v4269
        %v4906 = vunpack.c.l.b16 %v4270
        %v4907 = vunpack.c.l.b16 %v4271
        %v4908 = vunpack.c.h.b16 %v4271
        %v4909 = vunpack.c.l.b16 %v4272
        %v4910 = vunpack.c.l.b16 %v4273
        %v4911 = vunpack.c.h.b16 %v4273
        %v4912 = vunpack.c.l.b16 %v4274
        %v4913 = vunpack.c.l.b16 %v4275
        %v4914 = vunpack.c.h.b16 %v4275
        %v4915 = vunpack.c.l.b16 %v4276
        %v4916 = vunpack.c.l.b16 %v4277
        %v4917 = vunpack.c.h.b16 %v4277
        %v4918 = vunpack.c.l.b16 %v4278
        %v4919 = vunpack.c.l.b16 %v4279
        %v4920 = vunpack.c.h.b16 %v4279
        %v4921 = vunpack.c.l.b16 %v4280
        %v4922 = vunpack.c.l.b16 %v4281
        %v4923 = vunpack.c.h.b16 %v4281
        %v4924 = vunpack.c.l.b16 %v4282
        %v4925 = vunpack.c.l.b16 %v4283
        %v4926 = vunpack.c.h.b16 %v4283
        %v4927 = vunpack.c.l.b16 %v4284
        %v4928 = vunpack.c.l.b16 %v4285
        %v4929 = vunpack.c.h.b16 %v4285
        %v4930 = vunpack.c.l.b16 %v4286
        %v4931 = vunpack.c.l.b16 %v4287
        %v4932 = vunpack.c.h.b16 %v4287
        %v4933 = vunpack.c.l.b16 %v4288
        %v4934 = vunpack.c.l.b16 %v4289
        %v4935 = vunpack.c.h.b16 %v4289
        %v4936 = vunpack.c.l.b16 %v4290
        %v4937 = vunpack.c.l.b16 %v4291
        %v4938 = vunpack.c.h.b16 %v4291
        %v4939 = vunpack.c.l.b16 %v4292
        %v4940 = vunpack.c.l.b16 %v4293
        %v4941 = vunpack.c.h.b16 %v4293
        %v4942 = vunpack.c.l.b16 %v4294
        %v4943 = vunpack.c.l.b16 %v4295
        %v4944 = vunpack.c.h.b16 %v4295
        %v4945 = vunpack.c.l.b16 %v4296
        %v4946 = vunpack.c.l.b16 %v4297
        %v4947 = vunpack.c.h.b16 %v4297
        %v4948 = vunpack.c.l.b16 %v4298
        %v4949 = vunpack.c.l.b16 %v4299
        %v4950 = vunpack.c.h.b16 %v4299
        %v4951 = vunpack.c.l.b16 %v4300
        %v4952 = vpack.c.b16 %v4895, %v4892
        %v4953 = vpack.c.b16 %v4896, %v4893
        %v4954 = vpack.c.b16 %v4897, %v4894
        %v4955 = vpack.c.b16 %v4901, %v4898
        %v4956 = vpack.c.b16 %v4902, %v4899
        %v4957 = vpack.c.b16 %v4903, %v4900
        %v4958 = vpack.c.b16 %v4907, %v4904
        %v4959 = vpack.c.b16 %v4908, %v4905
        %v4960 = vpack.c.b16 %v4909, %v4906
        %v4961 = vpack.c.b16 %v4913, %v4910
        %v4962 = vpack.c.b16 %v4914, %v4911
        %v4963 = vpack.c.b16 %v4915, %v4912
        %v4964 = vpack.c.b16 %v4919, %v4916
        %v4965 = vpack.c.b16 %v4920, %v4917
        %v4966 = vpack.c.b16 %v4921, %v4918
        %v4967 = vpack.c.b16 %v4925, %v4922
        %v4968 = vpack.c.b16 %v4926, %v4923
        %v4969 = vpack.c.b16 %v4927, %v4924
        %v4970 = vpack.c.b16 %v4931, %v4928
        %v4971 = vpack.c.b16 %v4932, %v4929
        %v4972 = vpack.c.b16 %v4933, %v4930
        %v4973 = vpack.c.b16 %v4937, %v4934
        %v4974 = vpack.c.b16 %v4938, %v4935
        %v4975 = vpack.c.b16 %v4939, %v4936
        %v4976 = vpack.c.b16 %v4943, %v4940
        %v4977 = vpack.c.b16 %v4944, %v4941
        %v4978 = vpack.c.b16 %v4945, %v4942
        %v4979 = vpack.c.b16 %v4949, %v4946
        %v4980 = vpack.c.b16 %v4950, %v4947
        %v4981 = vpack.c.b16 %v4951, %v4948
        %v5013 = vsel %vm4665, %v4841, 0
        %v5016 = vsel %vm4665, %v4843, 0
        %v5019 = vsel %vm4665, %v4845, 0
        %v5022 = vsel %vm4665, %v4847, 0
        %5024 = vmatprep.subr.bf16.mxu0 %v4974
        %5025 = vmatpush1.bf16.msra.mxu0 %v4973
        %5026 = vmatprep.subr.bf16.mxu0 %v4971
        %5027 = vmatpush1.bf16.msra.mxu0 %v4970
        %5028 = vmatprep.subr.bf16.mxu0 %v4968
        %5029 = vmatpush1.bf16.msra.mxu0 %v4967
        %5030 = vmatprep.subr.bf16.mxu0 %v4965
        %5031 = vmatpush1.bf16.msra.mxu0 %v4964
        %5032 = vmatprep.subr.bf16.mxu0 %v4962
        %5033 = vmatpush1.bf16.msra.mxu0 %v4961
        %5034 = vmatprep.subr.bf16.mxu0 %v4959
        %5035 = vmatpush1.bf16.msra.mxu0 %v4958
        %5036 = vmatprep.subr.bf16.mxu0 %v4956
        %5037 = vmatpush1.bf16.msra.mxu0 %v4955
        %5038 = vmatprep.subr.bf16.mxu0 %v4953
        %5039 = vmatpush1.bf16.msra.mxu0 %v4952
        %5040 = vmatprep.subr.bf16.mxu0 0
        %5041 = vmatpush2.bf16.msra.mxu0 0
        %5042 = vmatprep.subr.bf16.mxu0 0
        %5043 = vmatpush2.bf16.msra.mxu0 0
        %5044 = vmatprep.subr.bf16.mxu0 0
        %5045 = vmatpush2.bf16.msra.mxu0 0
        %5046 = vmatprep.subr.bf16.mxu0 0
        %5047 = vmatpush2.bf16.msra.mxu0 0
        %5048 = vmatprep.subr.bf16.mxu0 0
        %5049 = vmatpush2.bf16.msra.mxu0 0
        %5050 = vmatprep.subr.bf16.mxu0 0
        %5051 = vmatpush2.bf16.msra.mxu0 0
        %5052 = vmatprep.subr.bf16.mxu0 %v4980
        %5053 = vmatpush2.bf16.msra.mxu0 %v4979
        %5054 = vmatprep.subr.bf16.mxu0 %v4977
        %5055 = vmatpush2.bf16.msra.mxu0 %v4976
        %5056 = vmatprep.mubr.bf16.mxu0 %v5013
        %5057 = vmatmul.mubr.bf16.gmra.mxu0 %v4840
        %v5058 = vpop.f32.mrf.mxu0
        %v5059 = vadd.f32 %v4713, %v5058
        %v5060 = vpop.f32.mrf.mxu0
        %v5061 = vadd.f32 %v4715, %v5060
        %v5062 = vpop.f32.mrf.mxu0
        %v5063 = vadd.f32 %v4717, %v5062
        %v5064 = vpop.f32.mrf.mxu0
        %v5065 = vadd.f32 %v4719, %v5064
        %5066 = vmatprep.mubr.bf16.mxu0 %v5016
        %5067 = vmatmul.mubr.bf16.gmra.mxu0 %v4842
        %v5068 = vpop.f32.mrf.mxu0
        %v5069 = vadd.f32 %v4723, %v5068
        %v5070 = vpop.f32.mrf.mxu0
        %v5071 = vadd.f32 %v4725, %v5070
        %v5072 = vpop.f32.mrf.mxu0
        %v5073 = vadd.f32 %v4727, %v5072
        %v5074 = vpop.f32.mrf.mxu0
        %v5075 = vadd.f32 %v4729, %v5074
        %5076 = vmatprep.mubr.bf16.mxu0 %v5019
        %5077 = vmatmul.mubr.bf16.gmra.mxu0 %v4844
        %v5078 = vpop.f32.mrf.mxu0
        %v5079 = vadd.f32 %v4733, %v5078
        %v5080 = vpop.f32.mrf.mxu0
        %v5081 = vadd.f32 %v4735, %v5080
        %v5082 = vpop.f32.mrf.mxu0
        %v5083 = vadd.f32 %v4737, %v5082
        %v5084 = vpop.f32.mrf.mxu0
        %v5085 = vadd.f32 %v4739, %v5084
        %5086 = vmatprep.mubr.bf16.mxu0 %v5022
        %5087 = vmatmul.mubr.bf16.gmra.mxu0 %v4846
        %v5088 = vpop.f32.mrf.mxu0
        %v5089 = vadd.f32 %v4743, %v5088
        %v5090 = vpop.f32.mrf.mxu0
        %v5091 = vadd.f32 %v4745, %v5090
        %v5092 = vpop.f32.mrf.mxu0
        %v5093 = vadd.f32 %v4747, %v5092
        %v5094 = vpop.f32.mrf.mxu0
        %v5095 = vadd.f32 %v4749, %v5094
        %5096 = vdwg.mxu0
        %5097 = vmatprep.subr.bf16.mxu0 0
        %5098 = vmatpush1.bf16.msra.mxu0 %v4975
        %5099 = vmatprep.subr.bf16.mxu0 0
        %5100 = vmatpush1.bf16.msra.mxu0 %v4972
        %5101 = vmatprep.subr.bf16.mxu0 0
        %5102 = vmatpush1.bf16.msra.mxu0 %v4969
        %5103 = vmatprep.subr.bf16.mxu0 0
        %5104 = vmatpush1.bf16.msra.mxu0 %v4966
        %5105 = vmatprep.subr.bf16.mxu0 0
        %5106 = vmatpush1.bf16.msra.mxu0 %v4963
        %5107 = vmatprep.subr.bf16.mxu0 0
        %5108 = vmatpush1.bf16.msra.mxu0 %v4960
        %5109 = vmatprep.subr.bf16.mxu0 0
        %5110 = vmatpush1.bf16.msra.mxu0 %v4957
        %5111 = vmatprep.subr.bf16.mxu0 0
        %5112 = vmatpush1.bf16.msra.mxu0 %v4954
        %5113 = vmatprep.subr.bf16.mxu0 0
        %5114 = vmatpush2.bf16.msra.mxu0 0
        %5115 = vmatprep.subr.bf16.mxu0 0
        %5116 = vmatpush2.bf16.msra.mxu0 0
        %5117 = vmatprep.subr.bf16.mxu0 0
        %5118 = vmatpush2.bf16.msra.mxu0 0
        %5119 = vmatprep.subr.bf16.mxu0 0
        %5120 = vmatpush2.bf16.msra.mxu0 0
        %5121 = vmatprep.subr.bf16.mxu0 0
        %5122 = vmatpush2.bf16.msra.mxu0 0
        %5123 = vmatprep.subr.bf16.mxu0 0
        %5124 = vmatpush2.bf16.msra.mxu0 0
        %5125 = vmatprep.subr.bf16.mxu0 0
        %5126 = vmatpush2.bf16.msra.mxu0 %v4981
        %5127 = vmatprep.subr.bf16.mxu0 0
        %5128 = vmatpush2.bf16.msra.mxu0 %v4978
        %5129 = vmatprep.mubr.bf16.mxu0 %v5013
        %5130 = vmatmul.mubr.bf16.gmra.mxu0 %v4840
        %v5131 = vpop.f32.mrf.mxu0
        %v5132 = vadd.f32 %v4786, %v5131
        %v5133 = vpop.f32.mrf.mxu0
        %v5134 = vpop.f32.mrf.mxu0
        %v5135 = vadd.f32 %v4789, %v5134
        %v5136 = vpop.f32.mrf.mxu0
        %5137 = vmatprep.mubr.bf16.mxu0 %v5016
        %5138 = vmatmul.mubr.bf16.gmra.mxu0 %v4842
        %v5139 = vpop.f32.mrf.mxu0
        %v5140 = vadd.f32 %v4794, %v5139
        %v5141 = vpop.f32.mrf.mxu0
        %v5142 = vpop.f32.mrf.mxu0
        %v5143 = vadd.f32 %v4797, %v5142
        %v5144 = vpop.f32.mrf.mxu0
        %5145 = vmatprep.mubr.bf16.mxu0 %v5019
        %5146 = vmatmul.mubr.bf16.gmra.mxu0 %v4844
        %v5147 = vpop.f32.mrf.mxu0
        %v5148 = vadd.f32 %v4802, %v5147
        %v5149 = vpop.f32.mrf.mxu0
        %v5150 = vpop.f32.mrf.mxu0
        %v5151 = vadd.f32 %v4805, %v5150
        %v5152 = vpop.f32.mrf.mxu0
        %5153 = vmatprep.mubr.bf16.mxu0 %v5022
        %5154 = vmatmul.mubr.bf16.gmra.mxu0 %v4846
        %v5155 = vpop.f32.mrf.mxu0
        %v5156 = vadd.f32 %v4810, %v5155
        %v5157 = vpop.f32.mrf.mxu0
        %v5158 = vpop.f32.mrf.mxu0
        %v5159 = vadd.f32 %v4813, %v5158
        %v5160 = vpop.f32.mrf.mxu0
        %5161 = vdwg.mxu0
        %v5162 = vld [vmem:[#allocation3] sm:$0xf]
        %v5163 = vld [vmem:[#allocation3 + $0x4] sm:$0x1]
        %v5164 = vld [vmem:[#allocation3 + $0x8] sm:$0xf]
        %v5165 = vld [vmem:[#allocation3 + $0xc] sm:$0x1]
        %v5166 = vld [vmem:[#allocation3 + $0x10] sm:$0xf]
        %v5167 = vld [vmem:[#allocation3 + $0x14] sm:$0x1]
        %v5168 = vld [vmem:[#allocation3 + $0x18] sm:$0xf]
        %v5169 = vld [vmem:[#allocation3 + $0x1c] sm:$0x1]
        %v5170 = vld [vmem:[#allocation3 + $0x20] sm:$0xf]
        %v5171 = vld [vmem:[#allocation3 + $0x24] sm:$0x1]
        %v5172 = vld [vmem:[#allocation3 + $0x28] sm:$0xf]
        %v5173 = vld [vmem:[#allocation3 + $0x2c] sm:$0x1]
        %v5174 = vld [vmem:[#allocation3 + $0x30] sm:$0xf]
        %v5175 = vld [vmem:[#allocation3 + $0x34] sm:$0x1]
        %v5176 = vld [vmem:[#allocation3 + $0x38] sm:$0xf]
        %v5177 = vld [vmem:[#allocation3 + $0x3c] sm:$0x1]
        %v5179 = vshrl.u32 %v5162, 16
        %v5181 = vrot.slane %v5179, 4
        %v5182 = vshll.u32 %v5162, 16
        %v5184 = vrot.slane %v5182, 5
        %v5185 = vor.u32 %v5181, %v5184
        %v5186 = vrot.slane %v5185, 4
        %v5188 = vshll.u32 %v5163, 16
        %v5190 = vrot.slane %v5188, 5
        %v5191 = vsel %vm4323, %v5186, %v5190
        %v5193 = vshrl.u32 %v5164, 16
        %v5195 = vrot.slane %v5193, 4
        %v5196 = vshll.u32 %v5164, 16
        %v5198 = vrot.slane %v5196, 5
        %v5199 = vor.u32 %v5195, %v5198
        %v5200 = vrot.slane %v5199, 4
        %v5202 = vshll.u32 %v5165, 16
        %v5204 = vrot.slane %v5202, 5
        %v5205 = vsel %vm4323, %v5200, %v5204
        %v5207 = vshrl.u32 %v5166, 16
        %v5209 = vrot.slane %v5207, 4
        %v5210 = vshll.u32 %v5166, 16
        %v5212 = vrot.slane %v5210, 5
        %v5213 = vor.u32 %v5209, %v5212
        %v5214 = vrot.slane %v5213, 4
        %v5216 = vshll.u32 %v5167, 16
        %v5218 = vrot.slane %v5216, 5
        %v5219 = vsel %vm4323, %v5214, %v5218
        %v5221 = vshrl.u32 %v5168, 16
        %v5223 = vrot.slane %v5221, 4
        %v5224 = vshll.u32 %v5168, 16
        %v5226 = vrot.slane %v5224, 5
        %v5227 = vor.u32 %v5223, %v5226
        %v5228 = vrot.slane %v5227, 4
        %v5230 = vshll.u32 %v5169, 16
        %v5232 = vrot.slane %v5230, 5
        %v5233 = vsel %vm4323, %v5228, %v5232
        %v5235 = vshrl.u32 %v5170, 16
        %v5237 = vrot.slane %v5235, 4
        %v5238 = vshll.u32 %v5170, 16
        %v5240 = vrot.slane %v5238, 5
        %v5241 = vor.u32 %v5237, %v5240
        %v5242 = vrot.slane %v5241, 4
        %v5244 = vshll.u32 %v5171, 16
        %v5246 = vrot.slane %v5244, 5
        %v5247 = vsel %vm4323, %v5242, %v5246
        %v5249 = vshrl.u32 %v5172, 16
        %v5251 = vrot.slane %v5249, 4
        %v5252 = vshll.u32 %v5172, 16
        %v5254 = vrot.slane %v5252, 5
        %v5255 = vor.u32 %v5251, %v5254
        %v5256 = vrot.slane %v5255, 4
        %v5258 = vshll.u32 %v5173, 16
        %v5260 = vrot.slane %v5258, 5
        %v5261 = vsel %vm4323, %v5256, %v5260
        %v5263 = vshrl.u32 %v5174, 16
        %v5265 = vrot.slane %v5263, 4
        %v5266 = vshll.u32 %v5174, 16
        %v5268 = vrot.slane %v5266, 5
        %v5269 = vor.u32 %v5265, %v5268
        %v5270 = vrot.slane %v5269, 4
        %v5272 = vshll.u32 %v5175, 16
        %v5274 = vrot.slane %v5272, 5
        %v5275 = vsel %vm4323, %v5270, %v5274
        %v5277 = vshrl.u32 %v5176, 16
        %v5279 = vrot.slane %v5277, 4
        %v5280 = vshll.u32 %v5176, 16
        %v5282 = vrot.slane %v5280, 5
        %v5283 = vor.u32 %v5279, %v5282
        %v5284 = vrot.slane %v5283, 4
        %v5286 = vshll.u32 %v5177, 16
        %v5288 = vrot.slane %v5286, 5
        %v5289 = vsel %vm4323, %v5284, %v5288
        %s5290 = scalar_lea.vmem [#allocation12], 16
        %v5291 = vld [vmem:[%s5290] sm:$0xf]
        %v5292 = vld [vmem:[%s5290 + $0x4] sm:$0xf]
        %v5293 = vld [vmem:[%s5290 + $0x8] sm:$0xf]
        %v5294 = vld [vmem:[%s5290 + $0xc] sm:$0xf]
        %v5295 = vunpack.c.l.b16 %v5191
        %v5296 = vunpack.c.l.b16 %v5205
        %v5297 = vunpack.c.l.b16 %v5219
        %v5298 = vunpack.c.l.b16 %v5233
        %v5299 = vunpack.c.l.b16 %v5247
        %v5300 = vunpack.c.l.b16 %v5261
        %v5301 = vunpack.c.l.b16 %v5275
        %v5302 = vunpack.c.l.b16 %v5289
        %v5303 = vpack.c.b16 %v5296, %v5295
        %v5304 = vpack.c.b16 %v5298, %v5297
        %v5305 = vpack.c.b16 %v5300, %v5299
        %v5306 = vpack.c.b16 %v5302, %v5301
        %v5311 = vunpack.c.l.b16 %v5291
        %v5312 = vunpack.c.l.b16 %v5292
        %v5313 = vunpack.c.l.b16 %v5293
        %v5314 = vunpack.c.l.b16 %v5294
        %v5315 = vpack.c.b16 %v5312, %v5311
        %v5316 = vpack.c.b16 %v5314, %v5313
        %v5320 = vsel %vm4665, %v5303, 0
        %v5323 = vsel %vm4665, %v5304, 0
        %v5326 = vsel %vm4665, %v5305, 0
        %v5329 = vsel %vm4665, %v5306, 0
        %5331 = vmatprep.subr.bf16.mxu0 0
        %5332 = vmatpush1.bf16.msra.mxu0 0
        %5333 = vmatprep.subr.bf16.mxu0 0
        %5334 = vmatpush1.bf16.msra.mxu0 0
        %5335 = vmatprep.subr.bf16.mxu0 0
        %5336 = vmatpush1.bf16.msra.mxu0 0
        %5337 = vmatprep.subr.bf16.mxu0 0
        %5338 = vmatpush1.bf16.msra.mxu0 0
        %5339 = vmatprep.subr.bf16.mxu0 0
        %5340 = vmatpush1.bf16.msra.mxu0 0
        %5341 = vmatprep.subr.bf16.mxu0 0
        %5342 = vmatpush1.bf16.msra.mxu0 0
        %5343 = vmatprep.subr.bf16.mxu0 0
        %5344 = vmatpush1.bf16.msra.mxu0 %v5316
        %5345 = vmatprep.subr.bf16.mxu0 0
        %5346 = vmatpush1.bf16.msra.mxu0 %v5315
        %5347 = vmatprep.subr.bf16.mxu0 0
        %5348 = vmatpush2.bf16.msra.mxu0 0
        %5349 = vmatprep.subr.bf16.mxu0 0
        %5350 = vmatpush2.bf16.msra.mxu0 0
        %5351 = vmatprep.subr.bf16.mxu0 0
        %5352 = vmatpush2.bf16.msra.mxu0 0
        %5353 = vmatprep.subr.bf16.mxu0 0
        %5354 = vmatpush2.bf16.msra.mxu0 0
        %5355 = vmatprep.subr.bf16.mxu0 0
        %5356 = vmatpush2.bf16.msra.mxu0 0
        %5357 = vmatprep.subr.bf16.mxu0 0
        %5358 = vmatpush2.bf16.msra.mxu0 0
        %5359 = vmatprep.subr.bf16.mxu0 0
        %5360 = vmatpush2.bf16.msra.mxu0 0
        %5361 = vmatprep.subr.bf16.mxu0 0
        %5362 = vmatpush2.bf16.msra.mxu0 0
        %5363 = vmatprep.mubr.bf16.mxu0 0
        %5364 = vmatmul.mubr.bf16.gmra.mxu0 %v5320
        %v5365 = vpop.f32.mrf.mxu0
        %v5366 = vadd.f32 0.0, %v5365
        %v5367 = vpop.f32.mrf.mxu0
        %v5368 = vpop.f32.mrf.mxu0
        %v5369 = vadd.f32 0.0, %v5368
        %v5370 = vpop.f32.mrf.mxu0
        %5371 = vmatprep.mubr.bf16.mxu0 0
        %5372 = vmatmul.mubr.bf16.gmra.mxu0 %v5323
        %v5373 = vpop.f32.mrf.mxu0
        %v5374 = vadd.f32 0.0, %v5373
        %v5375 = vpop.f32.mrf.mxu0
        %v5376 = vpop.f32.mrf.mxu0
        %v5377 = vadd.f32 0.0, %v5376
        %v5378 = vpop.f32.mrf.mxu0
        %5379 = vmatprep.mubr.bf16.mxu0 0
        %5380 = vmatmul.mubr.bf16.gmra.mxu0 %v5326
        %v5381 = vpop.f32.mrf.mxu0
        %v5382 = vadd.f32 0.0, %v5381
        %v5383 = vpop.f32.mrf.mxu0
        %v5384 = vpop.f32.mrf.mxu0
        %v5385 = vadd.f32 0.0, %v5384
        %v5386 = vpop.f32.mrf.mxu0
        %5387 = vmatprep.mubr.bf16.mxu0 0
        %5388 = vmatmul.mubr.bf16.gmra.mxu0 %v5329
        %v5389 = vpop.f32.mrf.mxu0
        %v5390 = vadd.f32 0.0, %v5389
        %v5391 = vpop.f32.mrf.mxu0
        %v5392 = vpop.f32.mrf.mxu0
        %v5393 = vadd.f32 0.0, %v5392
        %v5394 = vpop.f32.mrf.mxu0
        %5395 = vdwg.mxu0
        %v5404 = vunpack.c.l.b16 %v4301
        %v5405 = vunpack.c.l.b16 %v4302
        %v5406 = vunpack.c.l.b16 %v4303
        %v5407 = vunpack.c.l.b16 %v4304
        %v5408 = vunpack.c.l.b16 %v4305
        %v5409 = vunpack.c.l.b16 %v4306
        %v5410 = vunpack.c.l.b16 %v4307
        %v5411 = vunpack.c.l.b16 %v4308
        %v5412 = vpack.c.b16 %v5405, %v5404
        %v5413 = vpack.c.b16 %v5407, %v5406
        %v5414 = vpack.c.b16 %v5409, %v5408
        %v5415 = vpack.c.b16 %v5411, %v5410
        %v5420 = vunpack.c.l.b16 %v4309
        %v5421 = vunpack.c.l.b16 %v4310
        %v5422 = vunpack.c.l.b16 %v4311
        %v5423 = vunpack.c.l.b16 %v4312
        %v5424 = vpack.c.b16 %v5421, %v5420
        %v5425 = vpack.c.b16 %v5423, %v5422
        %v5429 = vsel %vm4665, %v5412, 0
        %v5432 = vsel %vm4665, %v5413, 0
        %v5435 = vsel %vm4665, %v5414, 0
        %v5438 = vsel %vm4665, %v5415, 0
        %5440 = vmatprep.subr.bf16.mxu0 0
        %5441 = vmatpush1.bf16.msra.mxu0 0
        %5442 = vmatprep.subr.bf16.mxu0 0
        %5443 = vmatpush1.bf16.msra.mxu0 0
        %5444 = vmatprep.subr.bf16.mxu0 0
        %5445 = vmatpush1.bf16.msra.mxu0 0
        %5446 = vmatprep.subr.bf16.mxu0 0
        %5447 = vmatpush1.bf16.msra.mxu0 0
        %5448 = vmatprep.subr.bf16.mxu0 0
        %5449 = vmatpush1.bf16.msra.mxu0 0
        %5450 = vmatprep.subr.bf16.mxu0 0
        %5451 = vmatpush1.bf16.msra.mxu0 0
        %5452 = vmatprep.subr.bf16.mxu0 0
        %5453 = vmatpush1.bf16.msra.mxu0 %v5425
        %5454 = vmatprep.subr.bf16.mxu0 0
        %5455 = vmatpush1.bf16.msra.mxu0 %v5424
        %5456 = vmatprep.subr.bf16.mxu0 0
        %5457 = vmatpush2.bf16.msra.mxu0 0
        %5458 = vmatprep.subr.bf16.mxu0 0
        %5459 = vmatpush2.bf16.msra.mxu0 0
        %5460 = vmatprep.subr.bf16.mxu0 0
        %5461 = vmatpush2.bf16.msra.mxu0 0
        %5462 = vmatprep.subr.bf16.mxu0 0
        %5463 = vmatpush2.bf16.msra.mxu0 0
        %5464 = vmatprep.subr.bf16.mxu0 0
        %5465 = vmatpush2.bf16.msra.mxu0 0
        %5466 = vmatprep.subr.bf16.mxu0 0
        %5467 = vmatpush2.bf16.msra.mxu0 0
        %5468 = vmatprep.subr.bf16.mxu0 0
        %5469 = vmatpush2.bf16.msra.mxu0 0
        %5470 = vmatprep.subr.bf16.mxu0 0
        %5471 = vmatpush2.bf16.msra.mxu0 0
        %5472 = vmatprep.mubr.bf16.mxu0 0
        %5473 = vmatmul.mubr.bf16.gmra.mxu0 %v5429
        %v5474 = vpop.f32.mrf.mxu0
        %v5475 = vadd.f32 %v5366, %v5474
        %v5476 = vpop.f32.mrf.mxu0
        %v5477 = vpop.f32.mrf.mxu0
        %v5478 = vadd.f32 %v5369, %v5477
        %v5479 = vpop.f32.mrf.mxu0
        %5480 = vmatprep.mubr.bf16.mxu0 0
        %5481 = vmatmul.mubr.bf16.gmra.mxu0 %v5432
        %v5482 = vpop.f32.mrf.mxu0
        %v5483 = vadd.f32 %v5374, %v5482
        %v5484 = vpop.f32.mrf.mxu0
        %v5485 = vpop.f32.mrf.mxu0
        %v5486 = vadd.f32 %v5377, %v5485
        %v5487 = vpop.f32.mrf.mxu0
        %5488 = vmatprep.mubr.bf16.mxu0 0
        %5489 = vmatmul.mubr.bf16.gmra.mxu0 %v5435
        %v5490 = vpop.f32.mrf.mxu0
        %v5491 = vadd.f32 %v5382, %v5490
        %v5492 = vpop.f32.mrf.mxu0
        %v5493 = vpop.f32.mrf.mxu0
        %v5494 = vadd.f32 %v5385, %v5493
        %v5495 = vpop.f32.mrf.mxu0
        %5496 = vmatprep.mubr.bf16.mxu0 0
        %5497 = vmatmul.mubr.bf16.gmra.mxu0 %v5438
        %v5498 = vpop.f32.mrf.mxu0
        %v5499 = vadd.f32 %v5390, %v5498
        %v5500 = vpop.f32.mrf.mxu0
        %v5501 = vpop.f32.mrf.mxu0
        %v5502 = vadd.f32 %v5393, %v5501
        %v5503 = vpop.f32.mrf.mxu0
        %5504 = vdwg.mxu0
        %v5505 = vld [vmem:[#allocation2] sm:$0xee]
        %v5506 = vld [vmem:[#allocation2 + $0x10] sm:$0xee]
        %v5507 = vld [vmem:[#allocation2 + $0x20] sm:$0xee]
        %v5508 = vld [vmem:[#allocation2 + $0x30] sm:$0xee]
        %v5509 = vld [vmem:[#allocation2 + $0x40] sm:$0xee]
        %v5510 = vld [vmem:[#allocation2 + $0x50] sm:$0xee]
        %v5511 = vld [vmem:[#allocation2 + $0x60] sm:$0xee]
        %v5512 = vld [vmem:[#allocation2 + $0x70] sm:$0xee]
        %vm5529 = vcmask 1042432
        %vm5530 = vcmask 1046532
        %vm5531 = vmor %vm5529, %vm5530
        %v5532 = vrot.slane %v5505, 5
        %v5533 = vrot.slane %v5532, 4
        %v5534 = vrot.slane %v4313, 5
        %v5535 = vsel %vm5531, %v5533, %v5534
        %v5536 = vrot.slane %v5506, 5
        %v5537 = vrot.slane %v5536, 4
        %v5538 = vrot.slane %v4314, 5
        %v5539 = vsel %vm5531, %v5537, %v5538
        %v5540 = vrot.slane %v5507, 5
        %v5541 = vrot.slane %v5540, 4
        %v5542 = vrot.slane %v4315, 5
        %v5543 = vsel %vm5531, %v5541, %v5542
        %v5544 = vrot.slane %v5508, 5
        %v5545 = vrot.slane %v5544, 4
        %v5546 = vrot.slane %v4316, 5
        %v5547 = vsel %vm5531, %v5545, %v5546
        %v5548 = vrot.slane %v5509, 5
        %v5549 = vrot.slane %v5548, 4
        %v5550 = vrot.slane %v4317, 5
        %v5551 = vsel %vm5531, %v5549, %v5550
        %v5552 = vrot.slane %v5510, 5
        %v5553 = vrot.slane %v5552, 4
        %v5554 = vrot.slane %v4318, 5
        %v5555 = vsel %vm5531, %v5553, %v5554
        %v5556 = vrot.slane %v5511, 5
        %v5557 = vrot.slane %v5556, 4
        %v5558 = vrot.slane %v4319, 5
        %v5559 = vsel %vm5531, %v5557, %v5558
        %v5560 = vrot.slane %v5512, 5
        %v5561 = vrot.slane %v5560, 4
        %v5562 = vrot.slane %v4320, 5
        %v5563 = vsel %vm5531, %v5561, %v5562
        %s5564 = scalar_lea.vmem [#allocation9], 480
        %v5565 = vld [vmem:[%s5564] sm:$0xff]
        %v5566 = vld [vmem:[%s5564 + $0x8] sm:$0xf]
        %v5567 = vld [vmem:[%s5564 + $0xc] sm:$0xff]
        %v5568 = vld [vmem:[%s5564 + $0x14] sm:$0xf]
        %v5569 = vld [vmem:[%s5564 + $0x18] sm:$0xff]
        %v5570 = vld [vmem:[%s5564 + $0x20] sm:$0xf]
        %v5571 = vld [vmem:[%s5564 + $0x24] sm:$0xff]
        %v5572 = vld [vmem:[%s5564 + $0x2c] sm:$0xf]
        %v5573 = vld [vmem:[%s5564 + $0x30] sm:$0xff]
        %v5574 = vld [vmem:[%s5564 + $0x38] sm:$0xf]
        %v5575 = vld [vmem:[%s5564 + $0x3c] sm:$0xff]
        %v5576 = vld [vmem:[%s5564 + $0x44] sm:$0xf]
        %v5577 = vld [vmem:[%s5564 + $0x48] sm:$0xff]
        %v5578 = vld [vmem:[%s5564 + $0x50] sm:$0xf]
        %v5579 = vld [vmem:[%s5564 + $0x54] sm:$0xff]
        %v5580 = vld [vmem:[%s5564 + $0x5c] sm:$0xf]
        %v5581 = vld [vmem:[%s5564 + $0x60] sm:$0xff]
        %v5582 = vld [vmem:[%s5564 + $0x68] sm:$0xf]
        %v5583 = vld [vmem:[%s5564 + $0x6c] sm:$0xff]
        %v5584 = vld [vmem:[%s5564 + $0x74] sm:$0xf]
        %v5585 = vld [vmem:[%s5564 + $0x78] sm:$0xff]
        %v5586 = vld [vmem:[%s5564 + $0x80] sm:$0xf]
        %v5587 = vld [vmem:[%s5564 + $0x84] sm:$0xff]
        %v5588 = vld [vmem:[%s5564 + $0x8c] sm:$0xf]
        %v5589 = vld [vmem:[%s5564 + $0x90] sm:$0xff]
        %v5590 = vld [vmem:[%s5564 + $0x98] sm:$0xf]
        %v5591 = vld [vmem:[%s5564 + $0x9c] sm:$0xff]
        %v5592 = vld [vmem:[%s5564 + $0xa4] sm:$0xf]
        %v5593 = vld [vmem:[%s5564 + $0xa8] sm:$0xff]
        %v5594 = vld [vmem:[%s5564 + $0xb0] sm:$0xf]
        %v5595 = vld [vmem:[%s5564 + $0xb4] sm:$0xff]
        %v5596 = vld [vmem:[%s5564 + $0xbc] sm:$0xf]
        %v5597 = vld [vmem:[%s5564 + $0xc0] sm:$0xff]
        %v5598 = vld [vmem:[%s5564 + $0xc8] sm:$0xf]
        %v5599 = vld [vmem:[%s5564 + $0xcc] sm:$0xff]
        %v5600 = vld [vmem:[%s5564 + $0xd4] sm:$0xf]
        %v5601 = vld [vmem:[%s5564 + $0xd8] sm:$0xff]
        %v5602 = vld [vmem:[%s5564 + $0xe0] sm:$0xf]
        %v5603 = vld [vmem:[%s5564 + $0xe4] sm:$0xff]
        %v5604 = vld [vmem:[%s5564 + $0xec] sm:$0xf]
        %v5605 = vunpack.c.l.b16 %v5535
        %v5606 = vunpack.c.h.b16 %v5535
        %v5607 = vunpack.c.l.b16 %v5539
        %v5608 = vunpack.c.h.b16 %v5539
        %v5609 = vunpack.c.l.b16 %v5543
        %v5610 = vunpack.c.h.b16 %v5543
        %v5611 = vunpack.c.l.b16 %v5547
        %v5612 = vunpack.c.h.b16 %v5547
        %v5613 = vunpack.c.l.b16 %v5551
        %v5614 = vunpack.c.h.b16 %v5551
        %v5615 = vunpack.c.l.b16 %v5555
        %v5616 = vunpack.c.h.b16 %v5555
        %v5617 = vunpack.c.l.b16 %v5559
        %v5618 = vunpack.c.h.b16 %v5559
        %v5619 = vunpack.c.l.b16 %v5563
        %v5620 = vunpack.c.h.b16 %v5563
        %v5621 = vpack.c.b16 %v5607, %v5605
        %v5622 = vpack.c.b16 %v5608, %v5606
        %v5623 = vpack.c.b16 %v5611, %v5609
        %v5624 = vpack.c.b16 %v5612, %v5610
        %v5625 = vpack.c.b16 %v5615, %v5613
        %v5626 = vpack.c.b16 %v5616, %v5614
        %v5627 = vpack.c.b16 %v5619, %v5617
        %v5628 = vpack.c.b16 %v5620, %v5618
        %v5673 = vunpack.c.l.b16 %v5565
        %v5674 = vunpack.c.h.b16 %v5565
        %v5675 = vunpack.c.l.b16 %v5566
        %v5676 = vunpack.c.l.b16 %v5567
        %v5677 = vunpack.c.h.b16 %v5567
        %v5678 = vunpack.c.l.b16 %v5568
        %v5679 = vunpack.c.l.b16 %v5569
        %v5680 = vunpack.c.h.b16 %v5569
        %v5681 = vunpack.c.l.b16 %v5570
        %v5682 = vunpack.c.l.b16 %v5571
        %v5683 = vunpack.c.h.b16 %v5571
        %v5684 = vunpack.c.l.b16 %v5572
        %v5685 = vunpack.c.l.b16 %v5573
        %v5686 = vunpack.c.h.b16 %v5573
        %v5687 = vunpack.c.l.b16 %v5574
        %v5688 = vunpack.c.l.b16 %v5575
        %v5689 = vunpack.c.h.b16 %v5575
        %v5690 = vunpack.c.l.b16 %v5576
        %v5691 = vunpack.c.l.b16 %v5577
        %v5692 = vunpack.c.h.b16 %v5577
        %v5693 = vunpack.c.l.b16 %v5578
        %v5694 = vunpack.c.l.b16 %v5579
        %v5695 = vunpack.c.h.b16 %v5579
        %v5696 = vunpack.c.l.b16 %v5580
        %v5697 = vunpack.c.l.b16 %v5581
        %v5698 = vunpack.c.h.b16 %v5581
        %v5699 = vunpack.c.l.b16 %v5582
        %v5700 = vunpack.c.l.b16 %v5583
        %v5701 = vunpack.c.h.b16 %v5583
        %v5702 = vunpack.c.l.b16 %v5584
        %v5703 = vunpack.c.l.b16 %v5585
        %v5704 = vunpack.c.h.b16 %v5585
        %v5705 = vunpack.c.l.b16 %v5586
        %v5706 = vunpack.c.l.b16 %v5587
        %v5707 = vunpack.c.h.b16 %v5587
        %v5708 = vunpack.c.l.b16 %v5588
        %v5709 = vunpack.c.l.b16 %v5589
        %v5710 = vunpack.c.h.b16 %v5589
        %v5711 = vunpack.c.l.b16 %v5590
        %v5712 = vunpack.c.l.b16 %v5591
        %v5713 = vunpack.c.h.b16 %v5591
        %v5714 = vunpack.c.l.b16 %v5592
        %v5715 = vunpack.c.l.b16 %v5593
        %v5716 = vunpack.c.h.b16 %v5593
        %v5717 = vunpack.c.l.b16 %v5594
        %v5718 = vunpack.c.l.b16 %v5595
        %v5719 = vunpack.c.h.b16 %v5595
        %v5720 = vunpack.c.l.b16 %v5596
        %v5721 = vunpack.c.l.b16 %v5597
        %v5722 = vunpack.c.h.b16 %v5597
        %v5723 = vunpack.c.l.b16 %v5598
        %v5724 = vunpack.c.l.b16 %v5599
        %v5725 = vunpack.c.h.b16 %v5599
        %v5726 = vunpack.c.l.b16 %v5600
        %v5727 = vunpack.c.l.b16 %v5601
        %v5728 = vunpack.c.h.b16 %v5601
        %v5729 = vunpack.c.l.b16 %v5602
        %v5730 = vunpack.c.l.b16 %v5603
        %v5731 = vunpack.c.h.b16 %v5603
        %v5732 = vunpack.c.l.b16 %v5604
        %v5733 = vpack.c.b16 %v5676, %v5673
        %v5734 = vpack.c.b16 %v5677, %v5674
        %v5735 = vpack.c.b16 %v5678, %v5675
        %v5736 = vpack.c.b16 %v5682, %v5679
        %v5737 = vpack.c.b16 %v5683, %v5680
        %v5738 = vpack.c.b16 %v5684, %v5681
        %v5739 = vpack.c.b16 %v5688, %v5685
        %v5740 = vpack.c.b16 %v5689, %v5686
        %v5741 = vpack.c.b16 %v5690, %v5687
        %v5742 = vpack.c.b16 %v5694, %v5691
        %v5743 = vpack.c.b16 %v5695, %v5692
        %v5744 = vpack.c.b16 %v5696, %v5693
        %v5745 = vpack.c.b16 %v5700, %v5697
        %v5746 = vpack.c.b16 %v5701, %v5698
        %v5747 = vpack.c.b16 %v5702, %v5699
        %v5748 = vpack.c.b16 %v5706, %v5703
        %v5749 = vpack.c.b16 %v5707, %v5704
        %v5750 = vpack.c.b16 %v5708, %v5705
        %v5751 = vpack.c.b16 %v5712, %v5709
        %v5752 = vpack.c.b16 %v5713, %v5710
        %v5753 = vpack.c.b16 %v5714, %v5711
        %v5754 = vpack.c.b16 %v5718, %v5715
        %v5755 = vpack.c.b16 %v5719, %v5716
        %v5756 = vpack.c.b16 %v5720, %v5717
        %v5757 = vpack.c.b16 %v5724, %v5721
        %v5758 = vpack.c.b16 %v5725, %v5722
        %v5759 = vpack.c.b16 %v5726, %v5723
        %v5760 = vpack.c.b16 %v5730, %v5727
        %v5761 = vpack.c.b16 %v5731, %v5728
        %v5762 = vpack.c.b16 %v5732, %v5729
        %v5794 = vsel %vm4665, %v5622, 0
        %v5797 = vsel %vm4665, %v5624, 0
        %v5800 = vsel %vm4665, %v5626, 0
        %v5803 = vsel %vm4665, %v5628, 0
        %5805 = vmatprep.subr.bf16.mxu0 %v5755
        %5806 = vmatpush1.bf16.msra.mxu0 %v5754
        %5807 = vmatprep.subr.bf16.mxu0 %v5752
        %5808 = vmatpush1.bf16.msra.mxu0 %v5751
        %5809 = vmatprep.subr.bf16.mxu0 %v5749
        %5810 = vmatpush1.bf16.msra.mxu0 %v5748
        %5811 = vmatprep.subr.bf16.mxu0 %v5746
        %5812 = vmatpush1.bf16.msra.mxu0 %v5745
        %5813 = vmatprep.subr.bf16.mxu0 %v5743
        %5814 = vmatpush1.bf16.msra.mxu0 %v5742
        %5815 = vmatprep.subr.bf16.mxu0 %v5740
        %5816 = vmatpush1.bf16.msra.mxu0 %v5739
        %5817 = vmatprep.subr.bf16.mxu0 %v5737
        %5818 = vmatpush1.bf16.msra.mxu0 %v5736
        %5819 = vmatprep.subr.bf16.mxu0 %v5734
        %5820 = vmatpush1.bf16.msra.mxu0 %v5733
        %5821 = vmatprep.subr.bf16.mxu0 0
        %5822 = vmatpush2.bf16.msra.mxu0 0
        %5823 = vmatprep.subr.bf16.mxu0 0
        %5824 = vmatpush2.bf16.msra.mxu0 0
        %5825 = vmatprep.subr.bf16.mxu0 0
        %5826 = vmatpush2.bf16.msra.mxu0 0
        %5827 = vmatprep.subr.bf16.mxu0 0
        %5828 = vmatpush2.bf16.msra.mxu0 0
        %5829 = vmatprep.subr.bf16.mxu0 0
        %5830 = vmatpush2.bf16.msra.mxu0 0
        %5831 = vmatprep.subr.bf16.mxu0 0
        %5832 = vmatpush2.bf16.msra.mxu0 0
        %5833 = vmatprep.subr.bf16.mxu0 %v5761
        %5834 = vmatpush2.bf16.msra.mxu0 %v5760
        %5835 = vmatprep.subr.bf16.mxu0 %v5758
        %5836 = vmatpush2.bf16.msra.mxu0 %v5757
        %5837 = vmatprep.mubr.bf16.mxu0 %v5794
        %5838 = vmatmul.mubr.bf16.gmra.mxu0 %v5621
        %v5839 = vpop.f32.mrf.mxu0
        %v5840 = vadd.f32 0.0, %v5839
        %v5841 = vpop.f32.mrf.mxu0
        %v5842 = vadd.f32 0.0, %v5841
        %v5843 = vpop.f32.mrf.mxu0
        %v5844 = vadd.f32 0.0, %v5843
        %v5845 = vpop.f32.mrf.mxu0
        %v5846 = vadd.f32 0.0, %v5845
        %5847 = vmatprep.mubr.bf16.mxu0 %v5797
        %5848 = vmatmul.mubr.bf16.gmra.mxu0 %v5623
        %v5849 = vpop.f32.mrf.mxu0
        %v5850 = vadd.f32 0.0, %v5849
        %v5851 = vpop.f32.mrf.mxu0
        %v5852 = vadd.f32 0.0, %v5851
        %v5853 = vpop.f32.mrf.mxu0
        %v5854 = vadd.f32 0.0, %v5853
        %v5855 = vpop.f32.mrf.mxu0
        %v5856 = vadd.f32 0.0, %v5855
        %5857 = vmatprep.mubr.bf16.mxu0 %v5800
        %5858 = vmatmul.mubr.bf16.gmra.mxu0 %v5625
        %v5859 = vpop.f32.mrf.mxu0
        %v5860 = vadd.f32 0.0, %v5859
        %v5861 = vpop.f32.mrf.mxu0
        %v5862 = vadd.f32 0.0, %v5861
        %v5863 = vpop.f32.mrf.mxu0
        %v5864 = vadd.f32 0.0, %v5863
        %v5865 = vpop.f32.mrf.mxu0
        %v5866 = vadd.f32 0.0, %v5865
        %5867 = vmatprep.mubr.bf16.mxu0 %v5803
        %5868 = vmatmul.mubr.bf16.gmra.mxu0 %v5627
        %v5869 = vpop.f32.mrf.mxu0
        %v5870 = vadd.f32 0.0, %v5869
        %v5871 = vpop.f32.mrf.mxu0
        %v5872 = vadd.f32 0.0, %v5871
        %v5873 = vpop.f32.mrf.mxu0
        %v5874 = vadd.f32 0.0, %v5873
        %v5875 = vpop.f32.mrf.mxu0
        %v5876 = vadd.f32 0.0, %v5875
        %5877 = vdwg.mxu0
        %5878 = vmatprep.subr.bf16.mxu0 0
        %5879 = vmatpush1.bf16.msra.mxu0 %v5756
        %5880 = vmatprep.subr.bf16.mxu0 0
        %5881 = vmatpush1.bf16.msra.mxu0 %v5753
        %5882 = vmatprep.subr.bf16.mxu0 0
        %5883 = vmatpush1.bf16.msra.mxu0 %v5750
        %5884 = vmatprep.subr.bf16.mxu0 0
        %5885 = vmatpush1.bf16.msra.mxu0 %v5747
        %5886 = vmatprep.subr.bf16.mxu0 0
        %5887 = vmatpush1.bf16.msra.mxu0 %v5744
        %5888 = vmatprep.subr.bf16.mxu0 0
        %5889 = vmatpush1.bf16.msra.mxu0 %v5741
        %5890 = vmatprep.subr.bf16.mxu0 0
        %5891 = vmatpush1.bf16.msra.mxu0 %v5738
        %5892 = vmatprep.subr.bf16.mxu0 0
        %5893 = vmatpush1.bf16.msra.mxu0 %v5735
        %5894 = vmatprep.subr.bf16.mxu0 0
        %5895 = vmatpush2.bf16.msra.mxu0 0
        %5896 = vmatprep.subr.bf16.mxu0 0
        %5897 = vmatpush2.bf16.msra.mxu0 0
        %5898 = vmatprep.subr.bf16.mxu0 0
        %5899 = vmatpush2.bf16.msra.mxu0 0
        %5900 = vmatprep.subr.bf16.mxu0 0
        %5901 = vmatpush2.bf16.msra.mxu0 0
        %5902 = vmatprep.subr.bf16.mxu0 0
        %5903 = vmatpush2.bf16.msra.mxu0 0
        %5904 = vmatprep.subr.bf16.mxu0 0
        %5905 = vmatpush2.bf16.msra.mxu0 0
        %5906 = vmatprep.subr.bf16.mxu0 0
        %5907 = vmatpush2.bf16.msra.mxu0 %v5762
        %5908 = vmatprep.subr.bf16.mxu0 0
        %5909 = vmatpush2.bf16.msra.mxu0 %v5759
        %5910 = vmatprep.mubr.bf16.mxu0 %v5794
        %5911 = vmatmul.mubr.bf16.gmra.mxu0 %v5621
        %v5912 = vpop.f32.mrf.mxu0
        %v5913 = vadd.f32 0.0, %v5912
        %v5914 = vpop.f32.mrf.mxu0
        %v5915 = vpop.f32.mrf.mxu0
        %v5916 = vadd.f32 0.0, %v5915
        %v5917 = vpop.f32.mrf.mxu0
        %5918 = vmatprep.mubr.bf16.mxu0 %v5797
        %5919 = vmatmul.mubr.bf16.gmra.mxu0 %v5623
        %v5920 = vpop.f32.mrf.mxu0
        %v5921 = vadd.f32 0.0, %v5920
        %v5922 = vpop.f32.mrf.mxu0
        %v5923 = vpop.f32.mrf.mxu0
        %v5924 = vadd.f32 0.0, %v5923
        %v5925 = vpop.f32.mrf.mxu0
        %5926 = vmatprep.mubr.bf16.mxu0 %v5800
        %5927 = vmatmul.mubr.bf16.gmra.mxu0 %v5625
        %v5928 = vpop.f32.mrf.mxu0
        %v5929 = vadd.f32 0.0, %v5928
        %v5930 = vpop.f32.mrf.mxu0
        %v5931 = vpop.f32.mrf.mxu0
        %v5932 = vadd.f32 0.0, %v5931
        %v5933 = vpop.f32.mrf.mxu0
        %5934 = vmatprep.mubr.bf16.mxu0 %v5803
        %5935 = vmatmul.mubr.bf16.gmra.mxu0 %v5627
        %v5936 = vpop.f32.mrf.mxu0
        %v5937 = vadd.f32 0.0, %v5936
        %v5938 = vpop.f32.mrf.mxu0
        %v5939 = vpop.f32.mrf.mxu0
        %v5940 = vadd.f32 0.0, %v5939
        %v5941 = vpop.f32.mrf.mxu0
        %5942 = vdwg.mxu0
        %v5943 = vadd.f32 %v5059, %v5840
        %v5944 = vadd.f32 %v5061, %v5842
        %v5945 = vadd.f32 %v5132, %v5913
        %v5946 = vadd.f32 %v5063, %v5844
        %v5947 = vadd.f32 %v5065, %v5846
        %v5948 = vadd.f32 %v5135, %v5916
        %v5949 = vadd.f32 %v5069, %v5850
        %v5950 = vadd.f32 %v5071, %v5852
        %v5951 = vadd.f32 %v5140, %v5921
        %v5952 = vadd.f32 %v5073, %v5854
        %v5953 = vadd.f32 %v5075, %v5856
        %v5954 = vadd.f32 %v5143, %v5924
        %v5955 = vadd.f32 %v5079, %v5860
        %v5956 = vadd.f32 %v5081, %v5862
        %v5957 = vadd.f32 %v5148, %v5929
        %v5958 = vadd.f32 %v5083, %v5864
        %v5959 = vadd.f32 %v5085, %v5866
        %v5960 = vadd.f32 %v5151, %v5932
        %v5961 = vadd.f32 %v5089, %v5870
        %v5962 = vadd.f32 %v5091, %v5872
        %v5963 = vadd.f32 %v5156, %v5937
        %v5964 = vadd.f32 %v5093, %v5874
        %v5965 = vadd.f32 %v5095, %v5876
        %v5966 = vadd.f32 %v5159, %v5940
        %v5967 = vld [vmem:[#allocation3] sm:$0xe]
        %v5968 = vld [vmem:[#allocation3 + $0x8] sm:$0xe]
        %v5969 = vld [vmem:[#allocation3 + $0x10] sm:$0xe]
        %v5970 = vld [vmem:[#allocation3 + $0x18] sm:$0xe]
        %v5971 = vld [vmem:[#allocation3 + $0x20] sm:$0xe]
        %v5972 = vld [vmem:[#allocation3 + $0x28] sm:$0xe]
        %v5973 = vld [vmem:[#allocation3 + $0x30] sm:$0xe]
        %v5974 = vld [vmem:[#allocation3 + $0x38] sm:$0xe]
        %v5991 = vrot.slane %v5967, 5
        %v5992 = vrot.slane %v5991, 4
        %v5993 = vrot.slane %v5163, 5
        %v5994 = vsel %vm5531, %v5992, %v5993
        %v5995 = vrot.slane %v5968, 5
        %v5996 = vrot.slane %v5995, 4
        %v5997 = vrot.slane %v5165, 5
        %v5998 = vsel %vm5531, %v5996, %v5997
        %v5999 = vrot.slane %v5969, 5
        %v6000 = vrot.slane %v5999, 4
        %v6001 = vrot.slane %v5167, 5
        %v6002 = vsel %vm5531, %v6000, %v6001
        %v6003 = vrot.slane %v5970, 5
        %v6004 = vrot.slane %v6003, 4
        %v6005 = vrot.slane %v5169, 5
        %v6006 = vsel %vm5531, %v6004, %v6005
        %v6007 = vrot.slane %v5971, 5
        %v6008 = vrot.slane %v6007, 4
        %v6009 = vrot.slane %v5171, 5
        %v6010 = vsel %vm5531, %v6008, %v6009
        %v6011 = vrot.slane %v5972, 5
        %v6012 = vrot.slane %v6011, 4
        %v6013 = vrot.slane %v5173, 5
        %v6014 = vsel %vm5531, %v6012, %v6013
        %v6015 = vrot.slane %v5973, 5
        %v6016 = vrot.slane %v6015, 4
        %v6017 = vrot.slane %v5175, 5
        %v6018 = vsel %vm5531, %v6016, %v6017
        %v6019 = vrot.slane %v5974, 5
        %v6020 = vrot.slane %v6019, 4
        %v6021 = vrot.slane %v5177, 5
        %v6022 = vsel %vm5531, %v6020, %v6021
        %s6023 = scalar_lea.vmem [#allocation12], 32
        %v6024 = vld [vmem:[%s6023] sm:$0xf]
        %v6025 = vld [vmem:[%s6023 + $0x4] sm:$0xf]
        %v6026 = vld [vmem:[%s6023 + $0x8] sm:$0xf]
        %v6027 = vld [vmem:[%s6023 + $0xc] sm:$0xf]
        %v6028 = vunpack.c.l.b16 %v5994
        %v6029 = vunpack.c.l.b16 %v5998
        %v6030 = vunpack.c.l.b16 %v6002
        %v6031 = vunpack.c.l.b16 %v6006
        %v6032 = vunpack.c.l.b16 %v6010
        %v6033 = vunpack.c.l.b16 %v6014
        %v6034 = vunpack.c.l.b16 %v6018
        %v6035 = vunpack.c.l.b16 %v6022
        %v6036 = vpack.c.b16 %v6029, %v6028
        %v6037 = vpack.c.b16 %v6031, %v6030
        %v6038 = vpack.c.b16 %v6033, %v6032
        %v6039 = vpack.c.b16 %v6035, %v6034
        %v6044 = vunpack.c.l.b16 %v6024
        %v6045 = vunpack.c.l.b16 %v6025
        %v6046 = vunpack.c.l.b16 %v6026
        %v6047 = vunpack.c.l.b16 %v6027
        %v6048 = vpack.c.b16 %v6045, %v6044
        %v6049 = vpack.c.b16 %v6047, %v6046
        %v6053 = vsel %vm4665, %v6036, 0
        %v6056 = vsel %vm4665, %v6037, 0
        %v6059 = vsel %vm4665, %v6038, 0
        %v6062 = vsel %vm4665, %v6039, 0
        %6064 = vmatprep.subr.bf16.mxu0 0
        %6065 = vmatpush1.bf16.msra.mxu0 0
        %6066 = vmatprep.subr.bf16.mxu0 0
        %6067 = vmatpush1.bf16.msra.mxu0 0
        %6068 = vmatprep.subr.bf16.mxu0 0
        %6069 = vmatpush1.bf16.msra.mxu0 0
        %6070 = vmatprep.subr.bf16.mxu0 0
        %6071 = vmatpush1.bf16.msra.mxu0 0
        %6072 = vmatprep.subr.bf16.mxu0 0
        %6073 = vmatpush1.bf16.msra.mxu0 0
        %6074 = vmatprep.subr.bf16.mxu0 0
        %6075 = vmatpush1.bf16.msra.mxu0 0
        %6076 = vmatprep.subr.bf16.mxu0 0
        %6077 = vmatpush1.bf16.msra.mxu0 %v6049
        %6078 = vmatprep.subr.bf16.mxu0 0
        %6079 = vmatpush1.bf16.msra.mxu0 %v6048
        %6080 = vmatprep.subr.bf16.mxu0 0
        %6081 = vmatpush2.bf16.msra.mxu0 0
        %6082 = vmatprep.subr.bf16.mxu0 0
        %6083 = vmatpush2.bf16.msra.mxu0 0
        %6084 = vmatprep.subr.bf16.mxu0 0
        %6085 = vmatpush2.bf16.msra.mxu0 0
        %6086 = vmatprep.subr.bf16.mxu0 0
        %6087 = vmatpush2.bf16.msra.mxu0 0
        %6088 = vmatprep.subr.bf16.mxu0 0
        %6089 = vmatpush2.bf16.msra.mxu0 0
        %6090 = vmatprep.subr.bf16.mxu0 0
        %6091 = vmatpush2.bf16.msra.mxu0 0
        %6092 = vmatprep.subr.bf16.mxu0 0
        %6093 = vmatpush2.bf16.msra.mxu0 0
        %6094 = vmatprep.subr.bf16.mxu0 0
        %6095 = vmatpush2.bf16.msra.mxu0 0
        %6096 = vmatprep.mubr.bf16.mxu0 0
        %6097 = vmatmul.mubr.bf16.gmra.mxu0 %v6053
        %v6098 = vpop.f32.mrf.mxu0
        %v6099 = vadd.f32 0.0, %v6098
        %v6100 = vpop.f32.mrf.mxu0
        %v6101 = vpop.f32.mrf.mxu0
        %v6102 = vadd.f32 0.0, %v6101
        %v6103 = vpop.f32.mrf.mxu0
        %6104 = vmatprep.mubr.bf16.mxu0 0
        %6105 = vmatmul.mubr.bf16.gmra.mxu0 %v6056
        %v6106 = vpop.f32.mrf.mxu0
        %v6107 = vadd.f32 0.0, %v6106
        %v6108 = vpop.f32.mrf.mxu0
        %v6109 = vpop.f32.mrf.mxu0
        %v6110 = vadd.f32 0.0, %v6109
        %v6111 = vpop.f32.mrf.mxu0
        %6112 = vmatprep.mubr.bf16.mxu0 0
        %6113 = vmatmul.mubr.bf16.gmra.mxu0 %v6059
        %v6114 = vpop.f32.mrf.mxu0
        %v6115 = vadd.f32 0.0, %v6114
        %v6116 = vpop.f32.mrf.mxu0
        %v6117 = vpop.f32.mrf.mxu0
        %v6118 = vadd.f32 0.0, %v6117
        %v6119 = vpop.f32.mrf.mxu0
        %6120 = vmatprep.mubr.bf16.mxu0 0
        %6121 = vmatmul.mubr.bf16.gmra.mxu0 %v6062
        %v6122 = vpop.f32.mrf.mxu0
        %v6123 = vadd.f32 0.0, %v6122
        %v6124 = vpop.f32.mrf.mxu0
        %v6125 = vpop.f32.mrf.mxu0
        %v6126 = vadd.f32 0.0, %v6125
        %v6127 = vpop.f32.mrf.mxu0
        %6128 = vdwg.mxu0
        %v6129 = vadd.f32 %v5475, %v6099
        %v6130 = vadd.f32 %v5478, %v6102
        %v6131 = vadd.f32 %v5483, %v6107
        %v6132 = vadd.f32 %v5486, %v6110
        %v6133 = vadd.f32 %v5491, %v6115
        %v6134 = vadd.f32 %v5494, %v6118
        %v6135 = vadd.f32 %v5499, %v6123
        %v6136 = vadd.f32 %v5502, %v6126
        %v6137 = vld [vmem:[%s4019] sm:$0xff]
        %v6138 = vld [vmem:[%s4019 + $0x10] sm:$0xff]
        %v6139 = vld [vmem:[%s4019 + $0x20] sm:$0xff]
        %v6140 = vld [vmem:[%s4019 + $0x30] sm:$0xff]
        %v6141 = vld [vmem:[%s4019 + $0x40] sm:$0xff]
        %v6142 = vld [vmem:[%s4019 + $0x50] sm:$0xff]
        %v6143 = vld [vmem:[%s4019 + $0x60] sm:$0xff]
        %v6144 = vld [vmem:[%s4019 + $0x70] sm:$0xff]
        %s6145 = scalar_lea.vmem [#allocation9], 720
        %v6146 = vld [vmem:[%s6145] sm:$0xff]
        %v6147 = vld [vmem:[%s6145 + $0x8] sm:$0xf]
        %v6148 = vld [vmem:[%s6145 + $0xc] sm:$0xff]
        %v6149 = vld [vmem:[%s6145 + $0x14] sm:$0xf]
        %v6150 = vld [vmem:[%s6145 + $0x18] sm:$0xff]
        %v6151 = vld [vmem:[%s6145 + $0x20] sm:$0xf]
        %v6152 = vld [vmem:[%s6145 + $0x24] sm:$0xff]
        %v6153 = vld [vmem:[%s6145 + $0x2c] sm:$0xf]
        %v6154 = vld [vmem:[%s6145 + $0x30] sm:$0xff]
        %v6155 = vld [vmem:[%s6145 + $0x38] sm:$0xf]
        %v6156 = vld [vmem:[%s6145 + $0x3c] sm:$0xff]
        %v6157 = vld [vmem:[%s6145 + $0x44] sm:$0xf]
        %v6158 = vld [vmem:[%s6145 + $0x48] sm:$0xff]
        %v6159 = vld [vmem:[%s6145 + $0x50] sm:$0xf]
        %v6160 = vld [vmem:[%s6145 + $0x54] sm:$0xff]
        %v6161 = vld [vmem:[%s6145 + $0x5c] sm:$0xf]
        %v6162 = vld [vmem:[%s6145 + $0x60] sm:$0xff]
        %v6163 = vld [vmem:[%s6145 + $0x68] sm:$0xf]
        %v6164 = vld [vmem:[%s6145 + $0x6c] sm:$0xff]
        %v6165 = vld [vmem:[%s6145 + $0x74] sm:$0xf]
        %v6166 = vld [vmem:[%s6145 + $0x78] sm:$0xff]
        %v6167 = vld [vmem:[%s6145 + $0x80] sm:$0xf]
        %v6168 = vld [vmem:[%s6145 + $0x84] sm:$0xff]
        %v6169 = vld [vmem:[%s6145 + $0x8c] sm:$0xf]
        %v6170 = vld [vmem:[%s6145 + $0x90] sm:$0xff]
        %v6171 = vld [vmem:[%s6145 + $0x98] sm:$0xf]
        %v6172 = vld [vmem:[%s6145 + $0x9c] sm:$0xff]
        %v6173 = vld [vmem:[%s6145 + $0xa4] sm:$0xf]
        %v6174 = vld [vmem:[%s6145 + $0xa8] sm:$0xff]
        %v6175 = vld [vmem:[%s6145 + $0xb0] sm:$0xf]
        %v6176 = vld [vmem:[%s6145 + $0xb4] sm:$0xff]
        %v6177 = vld [vmem:[%s6145 + $0xbc] sm:$0xf]
        %v6178 = vld [vmem:[%s6145 + $0xc0] sm:$0xff]
        %v6179 = vld [vmem:[%s6145 + $0xc8] sm:$0xf]
        %v6180 = vld [vmem:[%s6145 + $0xcc] sm:$0xff]
        %v6181 = vld [vmem:[%s6145 + $0xd4] sm:$0xf]
        %v6182 = vld [vmem:[%s6145 + $0xd8] sm:$0xff]
        %v6183 = vld [vmem:[%s6145 + $0xe0] sm:$0xf]
        %v6184 = vld [vmem:[%s6145 + $0xe4] sm:$0xff]
        %v6185 = vld [vmem:[%s6145 + $0xec] sm:$0xf]
        %v6194 = vunpack.c.l.b16 %v6137
        %v6195 = vunpack.c.h.b16 %v6137
        %v6196 = vunpack.c.l.b16 %v6138
        %v6197 = vunpack.c.h.b16 %v6138
        %v6198 = vunpack.c.l.b16 %v6139
        %v6199 = vunpack.c.h.b16 %v6139
        %v6200 = vunpack.c.l.b16 %v6140
        %v6201 = vunpack.c.h.b16 %v6140
        %v6202 = vunpack.c.l.b16 %v6141
        %v6203 = vunpack.c.h.b16 %v6141
        %v6204 = vunpack.c.l.b16 %v6142
        %v6205 = vunpack.c.h.b16 %v6142
        %v6206 = vunpack.c.l.b16 %v6143
        %v6207 = vunpack.c.h.b16 %v6143
        %v6208 = vunpack.c.l.b16 %v6144
        %v6209 = vunpack.c.h.b16 %v6144
        %v6210 = vpack.c.b16 %v6196, %v6194
        %v6211 = vpack.c.b16 %v6197, %v6195
        %v6212 = vpack.c.b16 %v6200, %v6198
        %v6213 = vpack.c.b16 %v6201, %v6199
        %v6214 = vpack.c.b16 %v6204, %v6202
        %v6215 = vpack.c.b16 %v6205, %v6203
        %v6216 = vpack.c.b16 %v6208, %v6206
        %v6217 = vpack.c.b16 %v6209, %v6207
        %v6262 = vunpack.c.l.b16 %v6146
        %v6263 = vunpack.c.h.b16 %v6146
        %v6264 = vunpack.c.l.b16 %v6147
        %v6265 = vunpack.c.l.b16 %v6148
        %v6266 = vunpack.c.h.b16 %v6148
        %v6267 = vunpack.c.l.b16 %v6149
        %v6268 = vunpack.c.l.b16 %v6150
        %v6269 = vunpack.c.h.b16 %v6150
        %v6270 = vunpack.c.l.b16 %v6151
        %v6271 = vunpack.c.l.b16 %v6152
        %v6272 = vunpack.c.h.b16 %v6152
        %v6273 = vunpack.c.l.b16 %v6153
        %v6274 = vunpack.c.l.b16 %v6154
        %v6275 = vunpack.c.h.b16 %v6154
        %v6276 = vunpack.c.l.b16 %v6155
        %v6277 = vunpack.c.l.b16 %v6156
        %v6278 = vunpack.c.h.b16 %v6156
        %v6279 = vunpack.c.l.b16 %v6157
        %v6280 = vunpack.c.l.b16 %v6158
        %v6281 = vunpack.c.h.b16 %v6158
        %v6282 = vunpack.c.l.b16 %v6159
        %v6283 = vunpack.c.l.b16 %v6160
        %v6284 = vunpack.c.h.b16 %v6160
        %v6285 = vunpack.c.l.b16 %v6161
        %v6286 = vunpack.c.l.b16 %v6162
        %v6287 = vunpack.c.h.b16 %v6162
        %v6288 = vunpack.c.l.b16 %v6163
        %v6289 = vunpack.c.l.b16 %v6164
        %v6290 = vunpack.c.h.b16 %v6164
        %v6291 = vunpack.c.l.b16 %v6165
        %v6292 = vunpack.c.l.b16 %v6166
        %v6293 = vunpack.c.h.b16 %v6166
        %v6294 = vunpack.c.l.b16 %v6167
        %v6295 = vunpack.c.l.b16 %v6168
        %v6296 = vunpack.c.h.b16 %v6168
        %v6297 = vunpack.c.l.b16 %v6169
        %v6298 = vunpack.c.l.b16 %v6170
        %v6299 = vunpack.c.h.b16 %v6170
        %v6300 = vunpack.c.l.b16 %v6171
        %v6301 = vunpack.c.l.b16 %v6172
        %v6302 = vunpack.c.h.b16 %v6172
        %v6303 = vunpack.c.l.b16 %v6173
        %v6304 = vunpack.c.l.b16 %v6174
        %v6305 = vunpack.c.h.b16 %v6174
        %v6306 = vunpack.c.l.b16 %v6175
        %v6307 = vunpack.c.l.b16 %v6176
        %v6308 = vunpack.c.h.b16 %v6176
        %v6309 = vunpack.c.l.b16 %v6177
        %v6310 = vunpack.c.l.b16 %v6178
        %v6311 = vunpack.c.h.b16 %v6178
        %v6312 = vunpack.c.l.b16 %v6179
        %v6313 = vunpack.c.l.b16 %v6180
        %v6314 = vunpack.c.h.b16 %v6180
        %v6315 = vunpack.c.l.b16 %v6181
        %v6316 = vunpack.c.l.b16 %v6182
        %v6317 = vunpack.c.h.b16 %v6182
        %v6318 = vunpack.c.l.b16 %v6183
        %v6319 = vunpack.c.l.b16 %v6184
        %v6320 = vunpack.c.h.b16 %v6184
        %v6321 = vunpack.c.l.b16 %v6185
        %v6322 = vpack.c.b16 %v6265, %v6262
        %v6323 = vpack.c.b16 %v6266, %v6263
        %v6324 = vpack.c.b16 %v6267, %v6264
        %v6325 = vpack.c.b16 %v6271, %v6268
        %v6326 = vpack.c.b16 %v6272, %v6269
        %v6327 = vpack.c.b16 %v6273, %v6270
        %v6328 = vpack.c.b16 %v6277, %v6274
        %v6329 = vpack.c.b16 %v6278, %v6275
        %v6330 = vpack.c.b16 %v6279, %v6276
        %v6331 = vpack.c.b16 %v6283, %v6280
        %v6332 = vpack.c.b16 %v6284, %v6281
        %v6333 = vpack.c.b16 %v6285, %v6282
        %v6334 = vpack.c.b16 %v6289, %v6286
        %v6335 = vpack.c.b16 %v6290, %v6287
        %v6336 = vpack.c.b16 %v6291, %v6288
        %v6337 = vpack.c.b16 %v6295, %v6292
        %v6338 = vpack.c.b16 %v6296, %v6293
        %v6339 = vpack.c.b16 %v6297, %v6294
        %v6340 = vpack.c.b16 %v6301, %v6298
        %v6341 = vpack.c.b16 %v6302, %v6299
        %v6342 = vpack.c.b16 %v6303, %v6300
        %v6343 = vpack.c.b16 %v6307, %v6304
        %v6344 = vpack.c.b16 %v6308, %v6305
        %v6345 = vpack.c.b16 %v6309, %v6306
        %v6346 = vpack.c.b16 %v6313, %v6310
        %v6347 = vpack.c.b16 %v6314, %v6311
        %v6348 = vpack.c.b16 %v6315, %v6312
        %v6349 = vpack.c.b16 %v6319, %v6316
        %v6350 = vpack.c.b16 %v6320, %v6317
        %v6351 = vpack.c.b16 %v6321, %v6318
        %v6383 = vsel %vm4665, %v6211, 0
        %v6386 = vsel %vm4665, %v6213, 0
        %v6389 = vsel %vm4665, %v6215, 0
        %v6392 = vsel %vm4665, %v6217, 0
        %6394 = vmatprep.subr.bf16.mxu0 %v6344
        %6395 = vmatpush1.bf16.msra.mxu0 %v6343
        %6396 = vmatprep.subr.bf16.mxu0 %v6341
        %6397 = vmatpush1.bf16.msra.mxu0 %v6340
        %6398 = vmatprep.subr.bf16.mxu0 %v6338
        %6399 = vmatpush1.bf16.msra.mxu0 %v6337
        %6400 = vmatprep.subr.bf16.mxu0 %v6335
        %6401 = vmatpush1.bf16.msra.mxu0 %v6334
        %6402 = vmatprep.subr.bf16.mxu0 %v6332
        %6403 = vmatpush1.bf16.msra.mxu0 %v6331
        %6404 = vmatprep.subr.bf16.mxu0 %v6329
        %6405 = vmatpush1.bf16.msra.mxu0 %v6328
        %6406 = vmatprep.subr.bf16.mxu0 %v6326
        %6407 = vmatpush1.bf16.msra.mxu0 %v6325
        %6408 = vmatprep.subr.bf16.mxu0 %v6323
        %6409 = vmatpush1.bf16.msra.mxu0 %v6322
        %6410 = vmatprep.subr.bf16.mxu0 0
        %6411 = vmatpush2.bf16.msra.mxu0 0
        %6412 = vmatprep.subr.bf16.mxu0 0
        %6413 = vmatpush2.bf16.msra.mxu0 0
        %6414 = vmatprep.subr.bf16.mxu0 0
        %6415 = vmatpush2.bf16.msra.mxu0 0
        %6416 = vmatprep.subr.bf16.mxu0 0
        %6417 = vmatpush2.bf16.msra.mxu0 0
        %6418 = vmatprep.subr.bf16.mxu0 0
        %6419 = vmatpush2.bf16.msra.mxu0 0
        %6420 = vmatprep.subr.bf16.mxu0 0
        %6421 = vmatpush2.bf16.msra.mxu0 0
        %6422 = vmatprep.subr.bf16.mxu0 %v6350
        %6423 = vmatpush2.bf16.msra.mxu0 %v6349
        %6424 = vmatprep.subr.bf16.mxu0 %v6347
        %6425 = vmatpush2.bf16.msra.mxu0 %v6346
        %6426 = vmatprep.mubr.bf16.mxu0 %v6383
        %6427 = vmatmul.mubr.bf16.gmra.mxu0 %v6210
        %v6428 = vpop.f32.mrf.mxu0
        %v6429 = vadd.f32 0.0, %v6428
        %v6430 = vpop.f32.mrf.mxu0
        %v6431 = vadd.f32 0.0, %v6430
        %v6432 = vpop.f32.mrf.mxu0
        %v6433 = vadd.f32 0.0, %v6432
        %v6434 = vpop.f32.mrf.mxu0
        %v6435 = vadd.f32 0.0, %v6434
        %6436 = vmatprep.mubr.bf16.mxu0 %v6386
        %6437 = vmatmul.mubr.bf16.gmra.mxu0 %v6212
        %v6438 = vpop.f32.mrf.mxu0
        %v6439 = vadd.f32 0.0, %v6438
        %v6440 = vpop.f32.mrf.mxu0
        %v6441 = vadd.f32 0.0, %v6440
        %v6442 = vpop.f32.mrf.mxu0
        %v6443 = vadd.f32 0.0, %v6442
        %v6444 = vpop.f32.mrf.mxu0
        %v6445 = vadd.f32 0.0, %v6444
        %6446 = vmatprep.mubr.bf16.mxu0 %v6389
        %6447 = vmatmul.mubr.bf16.gmra.mxu0 %v6214
        %v6448 = vpop.f32.mrf.mxu0
        %v6449 = vadd.f32 0.0, %v6448
        %v6450 = vpop.f32.mrf.mxu0
        %v6451 = vadd.f32 0.0, %v6450
        %v6452 = vpop.f32.mrf.mxu0
        %v6453 = vadd.f32 0.0, %v6452
        %v6454 = vpop.f32.mrf.mxu0
        %v6455 = vadd.f32 0.0, %v6454
        %6456 = vmatprep.mubr.bf16.mxu0 %v6392
        %6457 = vmatmul.mubr.bf16.gmra.mxu0 %v6216
        %v6458 = vpop.f32.mrf.mxu0
        %v6459 = vadd.f32 0.0, %v6458
        %v6460 = vpop.f32.mrf.mxu0
        %v6461 = vadd.f32 0.0, %v6460
        %v6462 = vpop.f32.mrf.mxu0
        %v6463 = vadd.f32 0.0, %v6462
        %v6464 = vpop.f32.mrf.mxu0
        %v6465 = vadd.f32 0.0, %v6464
        %6466 = vdwg.mxu0
        %6467 = vmatprep.subr.bf16.mxu0 0
        %6468 = vmatpush1.bf16.msra.mxu0 %v6345
        %6469 = vmatprep.subr.bf16.mxu0 0
        %6470 = vmatpush1.bf16.msra.mxu0 %v6342
        %6471 = vmatprep.subr.bf16.mxu0 0
        %6472 = vmatpush1.bf16.msra.mxu0 %v6339
        %6473 = vmatprep.subr.bf16.mxu0 0
        %6474 = vmatpush1.bf16.msra.mxu0 %v6336
        %6475 = vmatprep.subr.bf16.mxu0 0
        %6476 = vmatpush1.bf16.msra.mxu0 %v6333
        %6477 = vmatprep.subr.bf16.mxu0 0
        %6478 = vmatpush1.bf16.msra.mxu0 %v6330
        %6479 = vmatprep.subr.bf16.mxu0 0
        %6480 = vmatpush1.bf16.msra.mxu0 %v6327
        %6481 = vmatprep.subr.bf16.mxu0 0
        %6482 = vmatpush1.bf16.msra.mxu0 %v6324
        %6483 = vmatprep.subr.bf16.mxu0 0
        %6484 = vmatpush2.bf16.msra.mxu0 0
        %6485 = vmatprep.subr.bf16.mxu0 0
        %6486 = vmatpush2.bf16.msra.mxu0 0
        %6487 = vmatprep.subr.bf16.mxu0 0
        %6488 = vmatpush2.bf16.msra.mxu0 0
        %6489 = vmatprep.subr.bf16.mxu0 0
        %6490 = vmatpush2.bf16.msra.mxu0 0
        %6491 = vmatprep.subr.bf16.mxu0 0
        %6492 = vmatpush2.bf16.msra.mxu0 0
        %6493 = vmatprep.subr.bf16.mxu0 0
        %6494 = vmatpush2.bf16.msra.mxu0 0
        %6495 = vmatprep.subr.bf16.mxu0 0
        %6496 = vmatpush2.bf16.msra.mxu0 %v6351
        %6497 = vmatprep.subr.bf16.mxu0 0
        %6498 = vmatpush2.bf16.msra.mxu0 %v6348
        %6499 = vmatprep.mubr.bf16.mxu0 %v6383
        %6500 = vmatmul.mubr.bf16.gmra.mxu0 %v6210
        %v6501 = vpop.f32.mrf.mxu0
        %v6502 = vadd.f32 0.0, %v6501
        %v6503 = vpop.f32.mrf.mxu0
        %v6504 = vpop.f32.mrf.mxu0
        %v6505 = vadd.f32 0.0, %v6504
        %v6506 = vpop.f32.mrf.mxu0
        %6507 = vmatprep.mubr.bf16.mxu0 %v6386
        %6508 = vmatmul.mubr.bf16.gmra.mxu0 %v6212
        %v6509 = vpop.f32.mrf.mxu0
        %v6510 = vadd.f32 0.0, %v6509
        %v6511 = vpop.f32.mrf.mxu0
        %v6512 = vpop.f32.mrf.mxu0
        %v6513 = vadd.f32 0.0, %v6512
        %v6514 = vpop.f32.mrf.mxu0
        %6515 = vmatprep.mubr.bf16.mxu0 %v6389
        %6516 = vmatmul.mubr.bf16.gmra.mxu0 %v6214
        %v6517 = vpop.f32.mrf.mxu0
        %v6518 = vadd.f32 0.0, %v6517
        %v6519 = vpop.f32.mrf.mxu0
        %v6520 = vpop.f32.mrf.mxu0
        %v6521 = vadd.f32 0.0, %v6520
        %v6522 = vpop.f32.mrf.mxu0
        %6523 = vmatprep.mubr.bf16.mxu0 %v6392
        %6524 = vmatmul.mubr.bf16.gmra.mxu0 %v6216
        %v6525 = vpop.f32.mrf.mxu0
        %v6526 = vadd.f32 0.0, %v6525
        %v6527 = vpop.f32.mrf.mxu0
        %v6528 = vpop.f32.mrf.mxu0
        %v6529 = vadd.f32 0.0, %v6528
        %v6530 = vpop.f32.mrf.mxu0
        %6531 = vdwg.mxu0
        %v6532 = vadd.f32 %v5943, %v6429
        %v6533 = vadd.f32 %v5944, %v6431
        %v6534 = vadd.f32 %v5945, %v6502
        %v6535 = vadd.f32 %v5946, %v6433
        %v6536 = vadd.f32 %v5947, %v6435
        %v6537 = vadd.f32 %v5948, %v6505
        %v6538 = vadd.f32 %v5949, %v6439
        %v6539 = vadd.f32 %v5950, %v6441
        %v6540 = vadd.f32 %v5951, %v6510
        %v6541 = vadd.f32 %v5952, %v6443
        %v6542 = vadd.f32 %v5953, %v6445
        %v6543 = vadd.f32 %v5954, %v6513
        %v6544 = vadd.f32 %v5955, %v6449
        %v6545 = vadd.f32 %v5956, %v6451
        %v6546 = vadd.f32 %v5957, %v6518
        %v6547 = vadd.f32 %v5958, %v6453
        %v6548 = vadd.f32 %v5959, %v6455
        %v6549 = vadd.f32 %v5960, %v6521
        %v6550 = vadd.f32 %v5961, %v6459
        %v6551 = vadd.f32 %v5962, %v6461
        %v6552 = vadd.f32 %v5963, %v6526
        %v6553 = vadd.f32 %v5964, %v6463
        %v6554 = vadd.f32 %v5965, %v6465
        %v6555 = vadd.f32 %v5966, %v6529
        %v6556 = vld [vmem:[%s4200] sm:$0xf]
        %v6557 = vld [vmem:[%s4200 + $0x8] sm:$0xf]
        %v6558 = vld [vmem:[%s4200 + $0x10] sm:$0xf]
        %v6559 = vld [vmem:[%s4200 + $0x18] sm:$0xf]
        %v6560 = vld [vmem:[%s4200 + $0x20] sm:$0xf]
        %v6561 = vld [vmem:[%s4200 + $0x28] sm:$0xf]
        %v6562 = vld [vmem:[%s4200 + $0x30] sm:$0xf]
        %v6563 = vld [vmem:[%s4200 + $0x38] sm:$0xf]
        %s6564 = scalar_lea.vmem [#allocation12], 48
        %v6565 = vld [vmem:[%s6564] sm:$0xf]
        %v6566 = vld [vmem:[%s6564 + $0x4] sm:$0xf]
        %v6567 = vld [vmem:[%s6564 + $0x8] sm:$0xf]
        %v6568 = vld [vmem:[%s6564 + $0xc] sm:$0xf]
        %v6577 = vunpack.c.l.b16 %v6556
        %v6578 = vunpack.c.l.b16 %v6557
        %v6579 = vunpack.c.l.b16 %v6558
        %v6580 = vunpack.c.l.b16 %v6559
        %v6581 = vunpack.c.l.b16 %v6560
        %v6582 = vunpack.c.l.b16 %v6561
        %v6583 = vunpack.c.l.b16 %v6562
        %v6584 = vunpack.c.l.b16 %v6563
        %v6585 = vpack.c.b16 %v6578, %v6577
        %v6586 = vpack.c.b16 %v6580, %v6579
        %v6587 = vpack.c.b16 %v6582, %v6581
        %v6588 = vpack.c.b16 %v6584, %v6583
        %v6593 = vunpack.c.l.b16 %v6565
        %v6594 = vunpack.c.l.b16 %v6566
        %v6595 = vunpack.c.l.b16 %v6567
        %v6596 = vunpack.c.l.b16 %v6568
        %v6597 = vpack.c.b16 %v6594, %v6593
        %v6598 = vpack.c.b16 %v6596, %v6595
        %v6602 = vsel %vm4665, %v6585, 0
        %v6605 = vsel %vm4665, %v6586, 0
        %v6608 = vsel %vm4665, %v6587, 0
        %v6611 = vsel %vm4665, %v6588, 0
        %6613 = vmatprep.subr.bf16.mxu0 0
        %6614 = vmatpush1.bf16.msra.mxu0 0
        %6615 = vmatprep.subr.bf16.mxu0 0
        %6616 = vmatpush1.bf16.msra.mxu0 0
        %6617 = vmatprep.subr.bf16.mxu0 0
        %6618 = vmatpush1.bf16.msra.mxu0 0
        %6619 = vmatprep.subr.bf16.mxu0 0
        %6620 = vmatpush1.bf16.msra.mxu0 0
        %6621 = vmatprep.subr.bf16.mxu0 0
        %6622 = vmatpush1.bf16.msra.mxu0 0
        %6623 = vmatprep.subr.bf16.mxu0 0
        %6624 = vmatpush1.bf16.msra.mxu0 0
        %6625 = vmatprep.subr.bf16.mxu0 0
        %6626 = vmatpush1.bf16.msra.mxu0 %v6598
        %6627 = vmatprep.subr.bf16.mxu0 0
        %6628 = vmatpush1.bf16.msra.mxu0 %v6597
        %6629 = vmatprep.subr.bf16.mxu0 0
        %6630 = vmatpush2.bf16.msra.mxu0 0
        %6631 = vmatprep.subr.bf16.mxu0 0
        %6632 = vmatpush2.bf16.msra.mxu0 0
        %6633 = vmatprep.subr.bf16.mxu0 0
        %6634 = vmatpush2.bf16.msra.mxu0 0
        %6635 = vmatprep.subr.bf16.mxu0 0
        %6636 = vmatpush2.bf16.msra.mxu0 0
        %6637 = vmatprep.subr.bf16.mxu0 0
        %6638 = vmatpush2.bf16.msra.mxu0 0
        %6639 = vmatprep.subr.bf16.mxu0 0
        %6640 = vmatpush2.bf16.msra.mxu0 0
        %6641 = vmatprep.subr.bf16.mxu0 0
        %6642 = vmatpush2.bf16.msra.mxu0 0
        %6643 = vmatprep.subr.bf16.mxu0 0
        %6644 = vmatpush2.bf16.msra.mxu0 0
        %6645 = vmatprep.mubr.bf16.mxu0 0
        %6646 = vmatmul.mubr.bf16.gmra.mxu0 %v6602
        %v6647 = vpop.f32.mrf.mxu0
        %v6648 = vadd.f32 0.0, %v6647
        %v6649 = vpop.f32.mrf.mxu0
        %v6650 = vpop.f32.mrf.mxu0
        %v6651 = vadd.f32 0.0, %v6650
        %v6652 = vpop.f32.mrf.mxu0
        %6653 = vmatprep.mubr.bf16.mxu0 0
        %6654 = vmatmul.mubr.bf16.gmra.mxu0 %v6605
        %v6655 = vpop.f32.mrf.mxu0
        %v6656 = vadd.f32 0.0, %v6655
        %v6657 = vpop.f32.mrf.mxu0
        %v6658 = vpop.f32.mrf.mxu0
        %v6659 = vadd.f32 0.0, %v6658
        %v6660 = vpop.f32.mrf.mxu0
        %6661 = vmatprep.mubr.bf16.mxu0 0
        %6662 = vmatmul.mubr.bf16.gmra.mxu0 %v6608
        %v6663 = vpop.f32.mrf.mxu0
        %v6664 = vadd.f32 0.0, %v6663
        %v6665 = vpop.f32.mrf.mxu0
        %v6666 = vpop.f32.mrf.mxu0
        %v6667 = vadd.f32 0.0, %v6666
        %v6668 = vpop.f32.mrf.mxu0
        %6669 = vmatprep.mubr.bf16.mxu0 0
        %6670 = vmatmul.mubr.bf16.gmra.mxu0 %v6611
        %v6671 = vpop.f32.mrf.mxu0
        %v6672 = vadd.f32 0.0, %v6671
        %v6673 = vpop.f32.mrf.mxu0
        %v6674 = vpop.f32.mrf.mxu0
        %v6675 = vadd.f32 0.0, %v6674
        %v6676 = vpop.f32.mrf.mxu0
        %6677 = vdwg.mxu0
        %v6678 = vadd.f32 %v6129, %v6648
        %v6679 = vadd.f32 %v6130, %v6651
        %v6680 = vadd.f32 %v6131, %v6656
        %v6681 = vadd.f32 %v6132, %v6659
        %v6682 = vadd.f32 %v6133, %v6664
        %v6683 = vadd.f32 %v6134, %v6667
        %v6684 = vadd.f32 %v6135, %v6672
        %v6685 = vadd.f32 %v6136, %v6675
        %v6686 = vld [vmem:[%s4019] sm:$0xff]
        %v6687 = vld [vmem:[%s4019 + $0x8] sm:$0x11]
        %v6688 = vld [vmem:[%s4019 + $0x10] sm:$0xff]
        %v6689 = vld [vmem:[%s4019 + $0x18] sm:$0x11]
        %v6690 = vld [vmem:[%s4019 + $0x20] sm:$0xff]
        %v6691 = vld [vmem:[%s4019 + $0x28] sm:$0x11]
        %v6692 = vld [vmem:[%s4019 + $0x30] sm:$0xff]
        %v6693 = vld [vmem:[%s4019 + $0x38] sm:$0x11]
        %v6694 = vld [vmem:[%s4019 + $0x40] sm:$0xff]
        %v6695 = vld [vmem:[%s4019 + $0x48] sm:$0x11]
        %v6696 = vld [vmem:[%s4019 + $0x50] sm:$0xff]
        %v6697 = vld [vmem:[%s4019 + $0x58] sm:$0x11]
        %v6698 = vld [vmem:[%s4019 + $0x60] sm:$0xff]
        %v6699 = vld [vmem:[%s4019 + $0x68] sm:$0x11]
        %v6700 = vld [vmem:[%s4019 + $0x70] sm:$0xff]
        %v6701 = vld [vmem:[%s4019 + $0x78] sm:$0x11]
        %v6703 = vshrl.u32 %v6686, 16
        %v6705 = vrot.slane %v6703, 4
        %v6706 = vshll.u32 %v6686, 16
        %v6708 = vrot.slane %v6706, 5
        %v6709 = vor.u32 %v6705, %v6708
        %v6710 = vrot.slane %v6709, 4
        %v6712 = vshll.u32 %v6687, 16
        %v6714 = vrot.slane %v6712, 5
        %v6715 = vsel %vm4323, %v6710, %v6714
        %v6717 = vshrl.u32 %v6688, 16
        %v6719 = vrot.slane %v6717, 4
        %v6720 = vshll.u32 %v6688, 16
        %v6722 = vrot.slane %v6720, 5
        %v6723 = vor.u32 %v6719, %v6722
        %v6724 = vrot.slane %v6723, 4
        %v6726 = vshll.u32 %v6689, 16
        %v6728 = vrot.slane %v6726, 5
        %v6729 = vsel %vm4323, %v6724, %v6728
        %v6731 = vshrl.u32 %v6690, 16
        %v6733 = vrot.slane %v6731, 4
        %v6734 = vshll.u32 %v6690, 16
        %v6736 = vrot.slane %v6734, 5
        %v6737 = vor.u32 %v6733, %v6736
        %v6738 = vrot.slane %v6737, 4
        %v6740 = vshll.u32 %v6691, 16
        %v6742 = vrot.slane %v6740, 5
        %v6743 = vsel %vm4323, %v6738, %v6742
        %v6745 = vshrl.u32 %v6692, 16
        %v6747 = vrot.slane %v6745, 4
        %v6748 = vshll.u32 %v6692, 16
        %v6750 = vrot.slane %v6748, 5
        %v6751 = vor.u32 %v6747, %v6750
        %v6752 = vrot.slane %v6751, 4
        %v6754 = vshll.u32 %v6693, 16
        %v6756 = vrot.slane %v6754, 5
        %v6757 = vsel %vm4323, %v6752, %v6756
        %v6759 = vshrl.u32 %v6694, 16
        %v6761 = vrot.slane %v6759, 4
        %v6762 = vshll.u32 %v6694, 16
        %v6764 = vrot.slane %v6762, 5
        %v6765 = vor.u32 %v6761, %v6764
        %v6766 = vrot.slane %v6765, 4
        %v6768 = vshll.u32 %v6695, 16
        %v6770 = vrot.slane %v6768, 5
        %v6771 = vsel %vm4323, %v6766, %v6770
        %v6773 = vshrl.u32 %v6696, 16
        %v6775 = vrot.slane %v6773, 4
        %v6776 = vshll.u32 %v6696, 16
        %v6778 = vrot.slane %v6776, 5
        %v6779 = vor.u32 %v6775, %v6778
        %v6780 = vrot.slane %v6779, 4
        %v6782 = vshll.u32 %v6697, 16
        %v6784 = vrot.slane %v6782, 5
        %v6785 = vsel %vm4323, %v6780, %v6784
        %v6787 = vshrl.u32 %v6698, 16
        %v6789 = vrot.slane %v6787, 4
        %v6790 = vshll.u32 %v6698, 16
        %v6792 = vrot.slane %v6790, 5
        %v6793 = vor.u32 %v6789, %v6792
        %v6794 = vrot.slane %v6793, 4
        %v6796 = vshll.u32 %v6699, 16
        %v6798 = vrot.slane %v6796, 5
        %v6799 = vsel %vm4323, %v6794, %v6798
        %v6801 = vshrl.u32 %v6700, 16
        %v6803 = vrot.slane %v6801, 4
        %v6804 = vshll.u32 %v6700, 16
        %v6806 = vrot.slane %v6804, 5
        %v6807 = vor.u32 %v6803, %v6806
        %v6808 = vrot.slane %v6807, 4
        %v6810 = vshll.u32 %v6701, 16
        %v6812 = vrot.slane %v6810, 5
        %v6813 = vsel %vm4323, %v6808, %v6812
        %s6814 = scalar_lea.vmem [#allocation9], 960
        %v6815 = vld [vmem:[%s6814] sm:$0xff]
        %v6816 = vld [vmem:[%s6814 + $0x8] sm:$0xf]
        %v6817 = vld [vmem:[%s6814 + $0xc] sm:$0xff]
        %v6818 = vld [vmem:[%s6814 + $0x14] sm:$0xf]
        %v6819 = vld [vmem:[%s6814 + $0x18] sm:$0xff]
        %v6820 = vld [vmem:[%s6814 + $0x20] sm:$0xf]
        %v6821 = vld [vmem:[%s6814 + $0x24] sm:$0xff]
        %v6822 = vld [vmem:[%s6814 + $0x2c] sm:$0xf]
        %v6823 = vld [vmem:[%s6814 + $0x30] sm:$0xff]
        %v6824 = vld [vmem:[%s6814 + $0x38] sm:$0xf]
        %v6825 = vld [vmem:[%s6814 + $0x3c] sm:$0xff]
        %v6826 = vld [vmem:[%s6814 + $0x44] sm:$0xf]
        %v6827 = vld [vmem:[%s6814 + $0x48] sm:$0xff]
        %v6828 = vld [vmem:[%s6814 + $0x50] sm:$0xf]
        %v6829 = vld [vmem:[%s6814 + $0x54] sm:$0xff]
        %v6830 = vld [vmem:[%s6814 + $0x5c] sm:$0xf]
        %v6831 = vld [vmem:[%s6814 + $0x60] sm:$0xff]
        %v6832 = vld [vmem:[%s6814 + $0x68] sm:$0xf]
        %v6833 = vld [vmem:[%s6814 + $0x6c] sm:$0xff]
        %v6834 = vld [vmem:[%s6814 + $0x74] sm:$0xf]
        %v6835 = vld [vmem:[%s6814 + $0x78] sm:$0xff]
        %v6836 = vld [vmem:[%s6814 + $0x80] sm:$0xf]
        %v6837 = vld [vmem:[%s6814 + $0x84] sm:$0xff]
        %v6838 = vld [vmem:[%s6814 + $0x8c] sm:$0xf]
        %v6839 = vld [vmem:[%s6814 + $0x90] sm:$0xff]
        %v6840 = vld [vmem:[%s6814 + $0x98] sm:$0xf]
        %v6841 = vld [vmem:[%s6814 + $0x9c] sm:$0xff]
        %v6842 = vld [vmem:[%s6814 + $0xa4] sm:$0xf]
        %v6843 = vld [vmem:[%s6814 + $0xa8] sm:$0xff]
        %v6844 = vld [vmem:[%s6814 + $0xb0] sm:$0xf]
        %v6845 = vld [vmem:[%s6814 + $0xb4] sm:$0xff]
        %v6846 = vld [vmem:[%s6814 + $0xbc] sm:$0xf]
        %v6847 = vld [vmem:[%s6814 + $0xc0] sm:$0xff]
        %v6848 = vld [vmem:[%s6814 + $0xc8] sm:$0xf]
        %v6849 = vld [vmem:[%s6814 + $0xcc] sm:$0xff]
        %v6850 = vld [vmem:[%s6814 + $0xd4] sm:$0xf]
        %v6851 = vld [vmem:[%s6814 + $0xd8] sm:$0xff]
        %v6852 = vld [vmem:[%s6814 + $0xe0] sm:$0xf]
        %v6853 = vld [vmem:[%s6814 + $0xe4] sm:$0xff]
        %v6854 = vld [vmem:[%s6814 + $0xec] sm:$0xf]
        %v6855 = vunpack.c.l.b16 %v6715
        %v6856 = vunpack.c.h.b16 %v6715
        %v6857 = vunpack.c.l.b16 %v6729
        %v6858 = vunpack.c.h.b16 %v6729
        %v6859 = vunpack.c.l.b16 %v6743
        %v6860 = vunpack.c.h.b16 %v6743
        %v6861 = vunpack.c.l.b16 %v6757
        %v6862 = vunpack.c.h.b16 %v6757
        %v6863 = vunpack.c.l.b16 %v6771
        %v6864 = vunpack.c.h.b16 %v6771
        %v6865 = vunpack.c.l.b16 %v6785
        %v6866 = vunpack.c.h.b16 %v6785
        %v6867 = vunpack.c.l.b16 %v6799
        %v6868 = vunpack.c.h.b16 %v6799
        %v6869 = vunpack.c.l.b16 %v6813
        %v6870 = vunpack.c.h.b16 %v6813
        %v6871 = vpack.c.b16 %v6857, %v6855
        %v6872 = vpack.c.b16 %v6858, %v6856
        %v6873 = vpack.c.b16 %v6861, %v6859
        %v6874 = vpack.c.b16 %v6862, %v6860
        %v6875 = vpack.c.b16 %v6865, %v6863
        %v6876 = vpack.c.b16 %v6866, %v6864
        %v6877 = vpack.c.b16 %v6869, %v6867
        %v6878 = vpack.c.b16 %v6870, %v6868
        %v6923 = vunpack.c.l.b16 %v6815
        %v6924 = vunpack.c.h.b16 %v6815
        %v6925 = vunpack.c.l.b16 %v6816
        %v6926 = vunpack.c.l.b16 %v6817
        %v6927 = vunpack.c.h.b16 %v6817
        %v6928 = vunpack.c.l.b16 %v6818
        %v6929 = vunpack.c.l.b16 %v6819
        %v6930 = vunpack.c.h.b16 %v6819
        %v6931 = vunpack.c.l.b16 %v6820
        %v6932 = vunpack.c.l.b16 %v6821
        %v6933 = vunpack.c.h.b16 %v6821
        %v6934 = vunpack.c.l.b16 %v6822
        %v6935 = vunpack.c.l.b16 %v6823
        %v6936 = vunpack.c.h.b16 %v6823
        %v6937 = vunpack.c.l.b16 %v6824
        %v6938 = vunpack.c.l.b16 %v6825
        %v6939 = vunpack.c.h.b16 %v6825
        %v6940 = vunpack.c.l.b16 %v6826
        %v6941 = vunpack.c.l.b16 %v6827
        %v6942 = vunpack.c.h.b16 %v6827
        %v6943 = vunpack.c.l.b16 %v6828
        %v6944 = vunpack.c.l.b16 %v6829
        %v6945 = vunpack.c.h.b16 %v6829
        %v6946 = vunpack.c.l.b16 %v6830
        %v6947 = vunpack.c.l.b16 %v6831
        %v6948 = vunpack.c.h.b16 %v6831
        %v6949 = vunpack.c.l.b16 %v6832
        %v6950 = vunpack.c.l.b16 %v6833
        %v6951 = vunpack.c.h.b16 %v6833
        %v6952 = vunpack.c.l.b16 %v6834
        %v6953 = vunpack.c.l.b16 %v6835
        %v6954 = vunpack.c.h.b16 %v6835
        %v6955 = vunpack.c.l.b16 %v6836
        %v6956 = vunpack.c.l.b16 %v6837
        %v6957 = vunpack.c.h.b16 %v6837
        %v6958 = vunpack.c.l.b16 %v6838
        %v6959 = vunpack.c.l.b16 %v6839
        %v6960 = vunpack.c.h.b16 %v6839
        %v6961 = vunpack.c.l.b16 %v6840
        %v6962 = vunpack.c.l.b16 %v6841
        %v6963 = vunpack.c.h.b16 %v6841
        %v6964 = vunpack.c.l.b16 %v6842
        %v6965 = vunpack.c.l.b16 %v6843
        %v6966 = vunpack.c.h.b16 %v6843
        %v6967 = vunpack.c.l.b16 %v6844
        %v6968 = vunpack.c.l.b16 %v6845
        %v6969 = vunpack.c.h.b16 %v6845
        %v6970 = vunpack.c.l.b16 %v6846
        %v6971 = vunpack.c.l.b16 %v6847
        %v6972 = vunpack.c.h.b16 %v6847
        %v6973 = vunpack.c.l.b16 %v6848
        %v6974 = vunpack.c.l.b16 %v6849
        %v6975 = vunpack.c.h.b16 %v6849
        %v6976 = vunpack.c.l.b16 %v6850
        %v6977 = vunpack.c.l.b16 %v6851
        %v6978 = vunpack.c.h.b16 %v6851
        %v6979 = vunpack.c.l.b16 %v6852
        %v6980 = vunpack.c.l.b16 %v6853
        %v6981 = vunpack.c.h.b16 %v6853
        %v6982 = vunpack.c.l.b16 %v6854
        %v6983 = vpack.c.b16 %v6926, %v6923
        %v6984 = vpack.c.b16 %v6927, %v6924
        %v6985 = vpack.c.b16 %v6928, %v6925
        %v6986 = vpack.c.b16 %v6932, %v6929
        %v6987 = vpack.c.b16 %v6933, %v6930
        %v6988 = vpack.c.b16 %v6934, %v6931
        %v6989 = vpack.c.b16 %v6938, %v6935
        %v6990 = vpack.c.b16 %v6939, %v6936
        %v6991 = vpack.c.b16 %v6940, %v6937
        %v6992 = vpack.c.b16 %v6944, %v6941
        %v6993 = vpack.c.b16 %v6945, %v6942
        %v6994 = vpack.c.b16 %v6946, %v6943
        %v6995 = vpack.c.b16 %v6950, %v6947
        %v6996 = vpack.c.b16 %v6951, %v6948
        %v6997 = vpack.c.b16 %v6952, %v6949
        %v6998 = vpack.c.b16 %v6956, %v6953
        %v6999 = vpack.c.b16 %v6957, %v6954
        %v7000 = vpack.c.b16 %v6958, %v6955
        %v7001 = vpack.c.b16 %v6962, %v6959
        %v7002 = vpack.c.b16 %v6963, %v6960
        %v7003 = vpack.c.b16 %v6964, %v6961
        %v7004 = vpack.c.b16 %v6968, %v6965
        %v7005 = vpack.c.b16 %v6969, %v6966
        %v7006 = vpack.c.b16 %v6970, %v6967
        %v7007 = vpack.c.b16 %v6974, %v6971
        %v7008 = vpack.c.b16 %v6975, %v6972
        %v7009 = vpack.c.b16 %v6976, %v6973
        %v7010 = vpack.c.b16 %v6980, %v6977
        %v7011 = vpack.c.b16 %v6981, %v6978
        %v7012 = vpack.c.b16 %v6982, %v6979
        %v7044 = vsel %vm4665, %v6872, 0
        %v7047 = vsel %vm4665, %v6874, 0
        %v7050 = vsel %vm4665, %v6876, 0
        %v7053 = vsel %vm4665, %v6878, 0
        %7055 = vmatprep.subr.bf16.mxu0 %v7005
        %7056 = vmatpush1.bf16.msra.mxu0 %v7004
        %7057 = vmatprep.subr.bf16.mxu0 %v7002
        %7058 = vmatpush1.bf16.msra.mxu0 %v7001
        %7059 = vmatprep.subr.bf16.mxu0 %v6999
        %7060 = vmatpush1.bf16.msra.mxu0 %v6998
        %7061 = vmatprep.subr.bf16.mxu0 %v6996
        %7062 = vmatpush1.bf16.msra.mxu0 %v6995
        %7063 = vmatprep.subr.bf16.mxu0 %v6993
        %7064 = vmatpush1.bf16.msra.mxu0 %v6992
        %7065 = vmatprep.subr.bf16.mxu0 %v6990
        %7066 = vmatpush1.bf16.msra.mxu0 %v6989
        %7067 = vmatprep.subr.bf16.mxu0 %v6987
        %7068 = vmatpush1.bf16.msra.mxu0 %v6986
        %7069 = vmatprep.subr.bf16.mxu0 %v6984
        %7070 = vmatpush1.bf16.msra.mxu0 %v6983
        %7071 = vmatprep.subr.bf16.mxu0 0
        %7072 = vmatpush2.bf16.msra.mxu0 0
        %7073 = vmatprep.subr.bf16.mxu0 0
        %7074 = vmatpush2.bf16.msra.mxu0 0
        %7075 = vmatprep.subr.bf16.mxu0 0
        %7076 = vmatpush2.bf16.msra.mxu0 0
        %7077 = vmatprep.subr.bf16.mxu0 0
        %7078 = vmatpush2.bf16.msra.mxu0 0
        %7079 = vmatprep.subr.bf16.mxu0 0
        %7080 = vmatpush2.bf16.msra.mxu0 0
        %7081 = vmatprep.subr.bf16.mxu0 0
        %7082 = vmatpush2.bf16.msra.mxu0 0
        %7083 = vmatprep.subr.bf16.mxu0 %v7011
        %7084 = vmatpush2.bf16.msra.mxu0 %v7010
        %7085 = vmatprep.subr.bf16.mxu0 %v7008
        %7086 = vmatpush2.bf16.msra.mxu0 %v7007
        %7087 = vmatprep.mubr.bf16.mxu0 %v7044
        %7088 = vmatmul.mubr.bf16.gmra.mxu0 %v6871
        %v7089 = vpop.f32.mrf.mxu0
        %v7090 = vadd.f32 0.0, %v7089
        %v7091 = vpop.f32.mrf.mxu0
        %v7092 = vadd.f32 0.0, %v7091
        %v7093 = vpop.f32.mrf.mxu0
        %v7094 = vadd.f32 0.0, %v7093
        %v7095 = vpop.f32.mrf.mxu0
        %v7096 = vadd.f32 0.0, %v7095
        %7097 = vmatprep.mubr.bf16.mxu0 %v7047
        %7098 = vmatmul.mubr.bf16.gmra.mxu0 %v6873
        %v7099 = vpop.f32.mrf.mxu0
        %v7100 = vadd.f32 0.0, %v7099
        %v7101 = vpop.f32.mrf.mxu0
        %v7102 = vadd.f32 0.0, %v7101
        %v7103 = vpop.f32.mrf.mxu0
        %v7104 = vadd.f32 0.0, %v7103
        %v7105 = vpop.f32.mrf.mxu0
        %v7106 = vadd.f32 0.0, %v7105
        %7107 = vmatprep.mubr.bf16.mxu0 %v7050
        %7108 = vmatmul.mubr.bf16.gmra.mxu0 %v6875
        %v7109 = vpop.f32.mrf.mxu0
        %v7110 = vadd.f32 0.0, %v7109
        %v7111 = vpop.f32.mrf.mxu0
        %v7112 = vadd.f32 0.0, %v7111
        %v7113 = vpop.f32.mrf.mxu0
        %v7114 = vadd.f32 0.0, %v7113
        %v7115 = vpop.f32.mrf.mxu0
        %v7116 = vadd.f32 0.0, %v7115
        %7117 = vmatprep.mubr.bf16.mxu0 %v7053
        %7118 = vmatmul.mubr.bf16.gmra.mxu0 %v6877
        %v7119 = vpop.f32.mrf.mxu0
        %v7120 = vadd.f32 0.0, %v7119
        %v7121 = vpop.f32.mrf.mxu0
        %v7122 = vadd.f32 0.0, %v7121
        %v7123 = vpop.f32.mrf.mxu0
        %v7124 = vadd.f32 0.0, %v7123
        %v7125 = vpop.f32.mrf.mxu0
        %v7126 = vadd.f32 0.0, %v7125
        %7127 = vdwg.mxu0
        %7128 = vmatprep.subr.bf16.mxu0 0
        %7129 = vmatpush1.bf16.msra.mxu0 %v7006
        %7130 = vmatprep.subr.bf16.mxu0 0
        %7131 = vmatpush1.bf16.msra.mxu0 %v7003
        %7132 = vmatprep.subr.bf16.mxu0 0
        %7133 = vmatpush1.bf16.msra.mxu0 %v7000
        %7134 = vmatprep.subr.bf16.mxu0 0
        %7135 = vmatpush1.bf16.msra.mxu0 %v6997
        %7136 = vmatprep.subr.bf16.mxu0 0
        %7137 = vmatpush1.bf16.msra.mxu0 %v6994
        %7138 = vmatprep.subr.bf16.mxu0 0
        %7139 = vmatpush1.bf16.msra.mxu0 %v6991
        %7140 = vmatprep.subr.bf16.mxu0 0
        %7141 = vmatpush1.bf16.msra.mxu0 %v6988
        %7142 = vmatprep.subr.bf16.mxu0 0
        %7143 = vmatpush1.bf16.msra.mxu0 %v6985
        %7144 = vmatprep.subr.bf16.mxu0 0
        %7145 = vmatpush2.bf16.msra.mxu0 0
        %7146 = vmatprep.subr.bf16.mxu0 0
        %7147 = vmatpush2.bf16.msra.mxu0 0
        %7148 = vmatprep.subr.bf16.mxu0 0
        %7149 = vmatpush2.bf16.msra.mxu0 0
        %7150 = vmatprep.subr.bf16.mxu0 0
        %7151 = vmatpush2.bf16.msra.mxu0 0
        %7152 = vmatprep.subr.bf16.mxu0 0
        %7153 = vmatpush2.bf16.msra.mxu0 0
        %7154 = vmatprep.subr.bf16.mxu0 0
        %7155 = vmatpush2.bf16.msra.mxu0 0
        %7156 = vmatprep.subr.bf16.mxu0 0
        %7157 = vmatpush2.bf16.msra.mxu0 %v7012
        %7158 = vmatprep.subr.bf16.mxu0 0
        %7159 = vmatpush2.bf16.msra.mxu0 %v7009
        %7160 = vmatprep.mubr.bf16.mxu0 %v7044
        %7161 = vmatmul.mubr.bf16.gmra.mxu0 %v6871
        %v7162 = vpop.f32.mrf.mxu0
        %v7163 = vadd.f32 0.0, %v7162
        %v7164 = vpop.f32.mrf.mxu0
        %v7165 = vpop.f32.mrf.mxu0
        %v7166 = vadd.f32 0.0, %v7165
        %v7167 = vpop.f32.mrf.mxu0
        %7168 = vmatprep.mubr.bf16.mxu0 %v7047
        %7169 = vmatmul.mubr.bf16.gmra.mxu0 %v6873
        %v7170 = vpop.f32.mrf.mxu0
        %v7171 = vadd.f32 0.0, %v7170
        %v7172 = vpop.f32.mrf.mxu0
        %v7173 = vpop.f32.mrf.mxu0
        %v7174 = vadd.f32 0.0, %v7173
        %v7175 = vpop.f32.mrf.mxu0
        %7176 = vmatprep.mubr.bf16.mxu0 %v7050
        %7177 = vmatmul.mubr.bf16.gmra.mxu0 %v6875
        %v7178 = vpop.f32.mrf.mxu0
        %v7179 = vadd.f32 0.0, %v7178
        %v7180 = vpop.f32.mrf.mxu0
        %v7181 = vpop.f32.mrf.mxu0
        %v7182 = vadd.f32 0.0, %v7181
        %v7183 = vpop.f32.mrf.mxu0
        %7184 = vmatprep.mubr.bf16.mxu0 %v7053
        %7185 = vmatmul.mubr.bf16.gmra.mxu0 %v6877
        %v7186 = vpop.f32.mrf.mxu0
        %v7187 = vadd.f32 0.0, %v7186
        %v7188 = vpop.f32.mrf.mxu0
        %v7189 = vpop.f32.mrf.mxu0
        %v7190 = vadd.f32 0.0, %v7189
        %v7191 = vpop.f32.mrf.mxu0
        %7192 = vdwg.mxu0
        %v7193 = vadd.f32 %v6532, %v7090
        %v7194 = vadd.f32 %v6533, %v7092
        %v7195 = vadd.f32 %v6534, %v7163
        %v7196 = vadd.f32 %v6535, %v7094
        %v7197 = vadd.f32 %v6536, %v7096
        %v7198 = vadd.f32 %v6537, %v7166
        %v7199 = vadd.f32 %v6538, %v7100
        %v7200 = vadd.f32 %v6539, %v7102
        %v7201 = vadd.f32 %v6540, %v7171
        %v7202 = vadd.f32 %v6541, %v7104
        %v7203 = vadd.f32 %v6542, %v7106
        %v7204 = vadd.f32 %v6543, %v7174
        %v7205 = vadd.f32 %v6544, %v7110
        %v7206 = vadd.f32 %v6545, %v7112
        %v7207 = vadd.f32 %v6546, %v7179
        %v7208 = vadd.f32 %v6547, %v7114
        %v7209 = vadd.f32 %v6548, %v7116
        %v7210 = vadd.f32 %v6549, %v7182
        %v7211 = vadd.f32 %v6550, %v7120
        %v7212 = vadd.f32 %v6551, %v7122
        %v7213 = vadd.f32 %v6552, %v7187
        %v7214 = vadd.f32 %v6553, %v7124
        %v7215 = vadd.f32 %v6554, %v7126
        %v7216 = vadd.f32 %v6555, %v7190
        %v7217 = vld [vmem:[%s4200] sm:$0xf]
        %v7218 = vld [vmem:[%s4200 + $0x4] sm:$0x1]
        %v7219 = vld [vmem:[%s4200 + $0x8] sm:$0xf]
        %v7220 = vld [vmem:[%s4200 + $0xc] sm:$0x1]
        %v7221 = vld [vmem:[%s4200 + $0x10] sm:$0xf]
        %v7222 = vld [vmem:[%s4200 + $0x14] sm:$0x1]
        %v7223 = vld [vmem:[%s4200 + $0x18] sm:$0xf]
        %v7224 = vld [vmem:[%s4200 + $0x1c] sm:$0x1]
        %v7225 = vld [vmem:[%s4200 + $0x20] sm:$0xf]
        %v7226 = vld [vmem:[%s4200 + $0x24] sm:$0x1]
        %v7227 = vld [vmem:[%s4200 + $0x28] sm:$0xf]
        %v7228 = vld [vmem:[%s4200 + $0x2c] sm:$0x1]
        %v7229 = vld [vmem:[%s4200 + $0x30] sm:$0xf]
        %v7230 = vld [vmem:[%s4200 + $0x34] sm:$0x1]
        %v7231 = vld [vmem:[%s4200 + $0x38] sm:$0xf]
        %v7232 = vld [vmem:[%s4200 + $0x3c] sm:$0x1]
        %v7234 = vshrl.u32 %v7217, 16
        %v7236 = vrot.slane %v7234, 4
        %v7237 = vshll.u32 %v7217, 16
        %v7239 = vrot.slane %v7237, 5
        %v7240 = vor.u32 %v7236, %v7239
        %v7241 = vrot.slane %v7240, 4
        %v7243 = vshll.u32 %v7218, 16
        %v7245 = vrot.slane %v7243, 5
        %v7246 = vsel %vm4323, %v7241, %v7245
        %v7248 = vshrl.u32 %v7219, 16
        %v7250 = vrot.slane %v7248, 4
        %v7251 = vshll.u32 %v7219, 16
        %v7253 = vrot.slane %v7251, 5
        %v7254 = vor.u32 %v7250, %v7253
        %v7255 = vrot.slane %v7254, 4
        %v7257 = vshll.u32 %v7220, 16
        %v7259 = vrot.slane %v7257, 5
        %v7260 = vsel %vm4323, %v7255, %v7259
        %v7262 = vshrl.u32 %v7221, 16
        %v7264 = vrot.slane %v7262, 4
        %v7265 = vshll.u32 %v7221, 16
        %v7267 = vrot.slane %v7265, 5
        %v7268 = vor.u32 %v7264, %v7267
        %v7269 = vrot.slane %v7268, 4
        %v7271 = vshll.u32 %v7222, 16
        %v7273 = vrot.slane %v7271, 5
        %v7274 = vsel %vm4323, %v7269, %v7273
        %v7276 = vshrl.u32 %v7223, 16
        %v7278 = vrot.slane %v7276, 4
        %v7279 = vshll.u32 %v7223, 16
        %v7281 = vrot.slane %v7279, 5
        %v7282 = vor.u32 %v7278, %v7281
        %v7283 = vrot.slane %v7282, 4
        %v7285 = vshll.u32 %v7224, 16
        %v7287 = vrot.slane %v7285, 5
        %v7288 = vsel %vm4323, %v7283, %v7287
        %v7290 = vshrl.u32 %v7225, 16
        %v7292 = vrot.slane %v7290, 4
        %v7293 = vshll.u32 %v7225, 16
        %v7295 = vrot.slane %v7293, 5
        %v7296 = vor.u32 %v7292, %v7295
        %v7297 = vrot.slane %v7296, 4
        %v7299 = vshll.u32 %v7226, 16
        %v7301 = vrot.slane %v7299, 5
        %v7302 = vsel %vm4323, %v7297, %v7301
        %v7304 = vshrl.u32 %v7227, 16
        %v7306 = vrot.slane %v7304, 4
        %v7307 = vshll.u32 %v7227, 16
        %v7309 = vrot.slane %v7307, 5
        %v7310 = vor.u32 %v7306, %v7309
        %v7311 = vrot.slane %v7310, 4
        %v7313 = vshll.u32 %v7228, 16
        %v7315 = vrot.slane %v7313, 5
        %v7316 = vsel %vm4323, %v7311, %v7315
        %v7318 = vshrl.u32 %v7229, 16
        %v7320 = vrot.slane %v7318, 4
        %v7321 = vshll.u32 %v7229, 16
        %v7323 = vrot.slane %v7321, 5
        %v7324 = vor.u32 %v7320, %v7323
        %v7325 = vrot.slane %v7324, 4
        %v7327 = vshll.u32 %v7230, 16
        %v7329 = vrot.slane %v7327, 5
        %v7330 = vsel %vm4323, %v7325, %v7329
        %v7332 = vshrl.u32 %v7231, 16
        %v7334 = vrot.slane %v7332, 4
        %v7335 = vshll.u32 %v7231, 16
        %v7337 = vrot.slane %v7335, 5
        %v7338 = vor.u32 %v7334, %v7337
        %v7339 = vrot.slane %v7338, 4
        %v7341 = vshll.u32 %v7232, 16
        %v7343 = vrot.slane %v7341, 5
        %v7344 = vsel %vm4323, %v7339, %v7343
        %s7345 = scalar_lea.vmem [#allocation12], 64
        %v7346 = vld [vmem:[%s7345] sm:$0xf]
        %v7347 = vld [vmem:[%s7345 + $0x4] sm:$0xf]
        %v7348 = vld [vmem:[%s7345 + $0x8] sm:$0xf]
        %v7349 = vld [vmem:[%s7345 + $0xc] sm:$0xf]
        %v7350 = vunpack.c.l.b16 %v7246
        %v7351 = vunpack.c.l.b16 %v7260
        %v7352 = vunpack.c.l.b16 %v7274
        %v7353 = vunpack.c.l.b16 %v7288
        %v7354 = vunpack.c.l.b16 %v7302
        %v7355 = vunpack.c.l.b16 %v7316
        %v7356 = vunpack.c.l.b16 %v7330
        %v7357 = vunpack.c.l.b16 %v7344
        %v7358 = vpack.c.b16 %v7351, %v7350
        %v7359 = vpack.c.b16 %v7353, %v7352
        %v7360 = vpack.c.b16 %v7355, %v7354
        %v7361 = vpack.c.b16 %v7357, %v7356
        %v7366 = vunpack.c.l.b16 %v7346
        %v7367 = vunpack.c.l.b16 %v7347
        %v7368 = vunpack.c.l.b16 %v7348
        %v7369 = vunpack.c.l.b16 %v7349
        %v7370 = vpack.c.b16 %v7367, %v7366
        %v7371 = vpack.c.b16 %v7369, %v7368
        %v7375 = vsel %vm4665, %v7358, 0
        %v7378 = vsel %vm4665, %v7359, 0
        %v7381 = vsel %vm4665, %v7360, 0
        %v7384 = vsel %vm4665, %v7361, 0
        %7386 = vmatprep.subr.bf16.mxu0 0
        %7387 = vmatpush1.bf16.msra.mxu0 0
        %7388 = vmatprep.subr.bf16.mxu0 0
        %7389 = vmatpush1.bf16.msra.mxu0 0
        %7390 = vmatprep.subr.bf16.mxu0 0
        %7391 = vmatpush1.bf16.msra.mxu0 0
        %7392 = vmatprep.subr.bf16.mxu0 0
        %7393 = vmatpush1.bf16.msra.mxu0 0
        %7394 = vmatprep.subr.bf16.mxu0 0
        %7395 = vmatpush1.bf16.msra.mxu0 0
        %7396 = vmatprep.subr.bf16.mxu0 0
        %7397 = vmatpush1.bf16.msra.mxu0 0
        %7398 = vmatprep.subr.bf16.mxu0 0
        %7399 = vmatpush1.bf16.msra.mxu0 %v7371
        %7400 = vmatprep.subr.bf16.mxu0 0
        %7401 = vmatpush1.bf16.msra.mxu0 %v7370
        %7402 = vmatprep.subr.bf16.mxu0 0
        %7403 = vmatpush2.bf16.msra.mxu0 0
        %7404 = vmatprep.subr.bf16.mxu0 0
        %7405 = vmatpush2.bf16.msra.mxu0 0
        %7406 = vmatprep.subr.bf16.mxu0 0
        %7407 = vmatpush2.bf16.msra.mxu0 0
        %7408 = vmatprep.subr.bf16.mxu0 0
        %7409 = vmatpush2.bf16.msra.mxu0 0
        %7410 = vmatprep.subr.bf16.mxu0 0
        %7411 = vmatpush2.bf16.msra.mxu0 0
        %7412 = vmatprep.subr.bf16.mxu0 0
        %7413 = vmatpush2.bf16.msra.mxu0 0
        %7414 = vmatprep.subr.bf16.mxu0 0
        %7415 = vmatpush2.bf16.msra.mxu0 0
        %7416 = vmatprep.subr.bf16.mxu0 0
        %7417 = vmatpush2.bf16.msra.mxu0 0
        %7418 = vmatprep.mubr.bf16.mxu0 0
        %7419 = vmatmul.mubr.bf16.gmra.mxu0 %v7375
        %v7420 = vpop.f32.mrf.mxu0
        %v7421 = vadd.f32 0.0, %v7420
        %v7422 = vpop.f32.mrf.mxu0
        %v7423 = vpop.f32.mrf.mxu0
        %v7424 = vadd.f32 0.0, %v7423
        %v7425 = vpop.f32.mrf.mxu0
        %7426 = vmatprep.mubr.bf16.mxu0 0
        %7427 = vmatmul.mubr.bf16.gmra.mxu0 %v7378
        %v7428 = vpop.f32.mrf.mxu0
        %v7429 = vadd.f32 0.0, %v7428
        %v7430 = vpop.f32.mrf.mxu0
        %v7431 = vpop.f32.mrf.mxu0
        %v7432 = vadd.f32 0.0, %v7431
        %v7433 = vpop.f32.mrf.mxu0
        %7434 = vmatprep.mubr.bf16.mxu0 0
        %7435 = vmatmul.mubr.bf16.gmra.mxu0 %v7381
        %v7436 = vpop.f32.mrf.mxu0
        %v7437 = vadd.f32 0.0, %v7436
        %v7438 = vpop.f32.mrf.mxu0
        %v7439 = vpop.f32.mrf.mxu0
        %v7440 = vadd.f32 0.0, %v7439
        %v7441 = vpop.f32.mrf.mxu0
        %7442 = vmatprep.mubr.bf16.mxu0 0
        %7443 = vmatmul.mubr.bf16.gmra.mxu0 %v7384
        %v7444 = vpop.f32.mrf.mxu0
        %v7445 = vadd.f32 0.0, %v7444
        %v7446 = vpop.f32.mrf.mxu0
        %v7447 = vpop.f32.mrf.mxu0
        %v7448 = vadd.f32 0.0, %v7447
        %v7449 = vpop.f32.mrf.mxu0
        %7450 = vdwg.mxu0
        %v7451 = vadd.f32 %v6678, %v7421
        %v7452 = vadd.f32 %v6679, %v7424
        %v7453 = vadd.f32 %v6680, %v7429
        %v7454 = vadd.f32 %v6681, %v7432
        %v7455 = vadd.f32 %v6682, %v7437
        %v7456 = vadd.f32 %v6683, %v7440
        %v7457 = vadd.f32 %v6684, %v7445
        %v7458 = vadd.f32 %v6685, %v7448
        %v7459 = vld [vmem:[%s4019] sm:$0xee]
        %v7460 = vld [vmem:[%s4019 + $0x10] sm:$0xee]
        %v7461 = vld [vmem:[%s4019 + $0x20] sm:$0xee]
        %v7462 = vld [vmem:[%s4019 + $0x30] sm:$0xee]
        %v7463 = vld [vmem:[%s4019 + $0x40] sm:$0xee]
        %v7464 = vld [vmem:[%s4019 + $0x50] sm:$0xee]
        %v7465 = vld [vmem:[%s4019 + $0x60] sm:$0xee]
        %v7466 = vld [vmem:[%s4019 + $0x70] sm:$0xee]
        %v7483 = vrot.slane %v7459, 5
        %v7484 = vrot.slane %v7483, 4
        %v7485 = vrot.slane %v6687, 5
        %v7486 = vsel %vm5531, %v7484, %v7485
        %v7487 = vrot.slane %v7460, 5
        %v7488 = vrot.slane %v7487, 4
        %v7489 = vrot.slane %v6689, 5
        %v7490 = vsel %vm5531, %v7488, %v7489
        %v7491 = vrot.slane %v7461, 5
        %v7492 = vrot.slane %v7491, 4
        %v7493 = vrot.slane %v6691, 5
        %v7494 = vsel %vm5531, %v7492, %v7493
        %v7495 = vrot.slane %v7462, 5
        %v7496 = vrot.slane %v7495, 4
        %v7497 = vrot.slane %v6693, 5
        %v7498 = vsel %vm5531, %v7496, %v7497
        %v7499 = vrot.slane %v7463, 5
        %v7500 = vrot.slane %v7499, 4
        %v7501 = vrot.slane %v6695, 5
        %v7502 = vsel %vm5531, %v7500, %v7501
        %v7503 = vrot.slane %v7464, 5
        %v7504 = vrot.slane %v7503, 4
        %v7505 = vrot.slane %v6697, 5
        %v7506 = vsel %vm5531, %v7504, %v7505
        %v7507 = vrot.slane %v7465, 5
        %v7508 = vrot.slane %v7507, 4
        %v7509 = vrot.slane %v6699, 5
        %v7510 = vsel %vm5531, %v7508, %v7509
        %v7511 = vrot.slane %v7466, 5
        %v7512 = vrot.slane %v7511, 4
        %v7513 = vrot.slane %v6701, 5
        %v7514 = vsel %vm5531, %v7512, %v7513
        %s7515 = scalar_lea.vmem [#allocation9], 1200
        %v7516 = vld [vmem:[%s7515] sm:$0xff]
        %v7517 = vld [vmem:[%s7515 + $0x8] sm:$0xf]
        %v7518 = vld [vmem:[%s7515 + $0xc] sm:$0xff]
        %v7519 = vld [vmem:[%s7515 + $0x14] sm:$0xf]
        %v7520 = vld [vmem:[%s7515 + $0x18] sm:$0xff]
        %v7521 = vld [vmem:[%s7515 + $0x20] sm:$0xf]
        %v7522 = vld [vmem:[%s7515 + $0x24] sm:$0xff]
        %v7523 = vld [vmem:[%s7515 + $0x2c] sm:$0xf]
        %v7524 = vld [vmem:[%s7515 + $0x30] sm:$0xff]
        %v7525 = vld [vmem:[%s7515 + $0x38] sm:$0xf]
        %v7526 = vld [vmem:[%s7515 + $0x3c] sm:$0xff]
        %v7527 = vld [vmem:[%s7515 + $0x44] sm:$0xf]
        %v7528 = vld [vmem:[%s7515 + $0x48] sm:$0xff]
        %v7529 = vld [vmem:[%s7515 + $0x50] sm:$0xf]
        %v7530 = vld [vmem:[%s7515 + $0x54] sm:$0xff]
        %v7531 = vld [vmem:[%s7515 + $0x5c] sm:$0xf]
        %v7532 = vld [vmem:[%s7515 + $0x60] sm:$0xff]
        %v7533 = vld [vmem:[%s7515 + $0x68] sm:$0xf]
        %v7534 = vld [vmem:[%s7515 + $0x6c] sm:$0xff]
        %v7535 = vld [vmem:[%s7515 + $0x74] sm:$0xf]
        %v7536 = vld [vmem:[%s7515 + $0x78] sm:$0xff]
        %v7537 = vld [vmem:[%s7515 + $0x80] sm:$0xf]
        %v7538 = vld [vmem:[%s7515 + $0x84] sm:$0xff]
        %v7539 = vld [vmem:[%s7515 + $0x8c] sm:$0xf]
        %v7540 = vld [vmem:[%s7515 + $0x90] sm:$0xff]
        %v7541 = vld [vmem:[%s7515 + $0x98] sm:$0xf]
        %v7542 = vld [vmem:[%s7515 + $0x9c] sm:$0xff]
        %v7543 = vld [vmem:[%s7515 + $0xa4] sm:$0xf]
        %v7544 = vld [vmem:[%s7515 + $0xa8] sm:$0xff]
        %v7545 = vld [vmem:[%s7515 + $0xb0] sm:$0xf]
        %v7546 = vld [vmem:[%s7515 + $0xb4] sm:$0xff]
        %v7547 = vld [vmem:[%s7515 + $0xbc] sm:$0xf]
        %v7548 = vld [vmem:[%s7515 + $0xc0] sm:$0xff]
        %v7549 = vld [vmem:[%s7515 + $0xc8] sm:$0xf]
        %v7550 = vld [vmem:[%s7515 + $0xcc] sm:$0xff]
        %v7551 = vld [vmem:[%s7515 + $0xd4] sm:$0xf]
        %v7552 = vld [vmem:[%s7515 + $0xd8] sm:$0xff]
        %v7553 = vld [vmem:[%s7515 + $0xe0] sm:$0xf]
        %v7554 = vld [vmem:[%s7515 + $0xe4] sm:$0xff]
        %v7555 = vld [vmem:[%s7515 + $0xec] sm:$0xf]
        %v7556 = vunpack.c.l.b16 %v7486
        %v7557 = vunpack.c.h.b16 %v7486
        %v7558 = vunpack.c.l.b16 %v7490
        %v7559 = vunpack.c.h.b16 %v7490
        %v7560 = vunpack.c.l.b16 %v7494
        %v7561 = vunpack.c.h.b16 %v7494
        %v7562 = vunpack.c.l.b16 %v7498
        %v7563 = vunpack.c.h.b16 %v7498
        %v7564 = vunpack.c.l.b16 %v7502
        %v7565 = vunpack.c.h.b16 %v7502
        %v7566 = vunpack.c.l.b16 %v7506
        %v7567 = vunpack.c.h.b16 %v7506
        %v7568 = vunpack.c.l.b16 %v7510
        %v7569 = vunpack.c.h.b16 %v7510
        %v7570 = vunpack.c.l.b16 %v7514
        %v7571 = vunpack.c.h.b16 %v7514
        %v7572 = vpack.c.b16 %v7558, %v7556
        %v7573 = vpack.c.b16 %v7559, %v7557
        %v7574 = vpack.c.b16 %v7562, %v7560
        %v7575 = vpack.c.b16 %v7563, %v7561
        %v7576 = vpack.c.b16 %v7566, %v7564
        %v7577 = vpack.c.b16 %v7567, %v7565
        %v7578 = vpack.c.b16 %v7570, %v7568
        %v7579 = vpack.c.b16 %v7571, %v7569
        %v7624 = vunpack.c.l.b16 %v7516
        %v7625 = vunpack.c.h.b16 %v7516
        %v7626 = vunpack.c.l.b16 %v7517
        %v7627 = vunpack.c.l.b16 %v7518
        %v7628 = vunpack.c.h.b16 %v7518
        %v7629 = vunpack.c.l.b16 %v7519
        %v7630 = vunpack.c.l.b16 %v7520
        %v7631 = vunpack.c.h.b16 %v7520
        %v7632 = vunpack.c.l.b16 %v7521
        %v7633 = vunpack.c.l.b16 %v7522
        %v7634 = vunpack.c.h.b16 %v7522
        %v7635 = vunpack.c.l.b16 %v7523
        %v7636 = vunpack.c.l.b16 %v7524
        %v7637 = vunpack.c.h.b16 %v7524
        %v7638 = vunpack.c.l.b16 %v7525
        %v7639 = vunpack.c.l.b16 %v7526
        %v7640 = vunpack.c.h.b16 %v7526
        %v7641 = vunpack.c.l.b16 %v7527
        %v7642 = vunpack.c.l.b16 %v7528
        %v7643 = vunpack.c.h.b16 %v7528
        %v7644 = vunpack.c.l.b16 %v7529
        %v7645 = vunpack.c.l.b16 %v7530
        %v7646 = vunpack.c.h.b16 %v7530
        %v7647 = vunpack.c.l.b16 %v7531
        %v7648 = vunpack.c.l.b16 %v7532
        %v7649 = vunpack.c.h.b16 %v7532
        %v7650 = vunpack.c.l.b16 %v7533
        %v7651 = vunpack.c.l.b16 %v7534
        %v7652 = vunpack.c.h.b16 %v7534
        %v7653 = vunpack.c.l.b16 %v7535
        %v7654 = vunpack.c.l.b16 %v7536
        %v7655 = vunpack.c.h.b16 %v7536
        %v7656 = vunpack.c.l.b16 %v7537
        %v7657 = vunpack.c.l.b16 %v7538
        %v7658 = vunpack.c.h.b16 %v7538
        %v7659 = vunpack.c.l.b16 %v7539
        %v7660 = vunpack.c.l.b16 %v7540
        %v7661 = vunpack.c.h.b16 %v7540
        %v7662 = vunpack.c.l.b16 %v7541
        %v7663 = vunpack.c.l.b16 %v7542
        %v7664 = vunpack.c.h.b16 %v7542
        %v7665 = vunpack.c.l.b16 %v7543
        %v7666 = vunpack.c.l.b16 %v7544
        %v7667 = vunpack.c.h.b16 %v7544
        %v7668 = vunpack.c.l.b16 %v7545
        %v7669 = vunpack.c.l.b16 %v7546
        %v7670 = vunpack.c.h.b16 %v7546
        %v7671 = vunpack.c.l.b16 %v7547
        %v7672 = vunpack.c.l.b16 %v7548
        %v7673 = vunpack.c.h.b16 %v7548
        %v7674 = vunpack.c.l.b16 %v7549
        %v7675 = vunpack.c.l.b16 %v7550
        %v7676 = vunpack.c.h.b16 %v7550
        %v7677 = vunpack.c.l.b16 %v7551
        %v7678 = vunpack.c.l.b16 %v7552
        %v7679 = vunpack.c.h.b16 %v7552
        %v7680 = vunpack.c.l.b16 %v7553
        %v7681 = vunpack.c.l.b16 %v7554
        %v7682 = vunpack.c.h.b16 %v7554
        %v7683 = vunpack.c.l.b16 %v7555
        %v7684 = vpack.c.b16 %v7627, %v7624
        %v7685 = vpack.c.b16 %v7628, %v7625
        %v7686 = vpack.c.b16 %v7629, %v7626
        %v7687 = vpack.c.b16 %v7633, %v7630
        %v7688 = vpack.c.b16 %v7634, %v7631
        %v7689 = vpack.c.b16 %v7635, %v7632
        %v7690 = vpack.c.b16 %v7639, %v7636
        %v7691 = vpack.c.b16 %v7640, %v7637
        %v7692 = vpack.c.b16 %v7641, %v7638
        %v7693 = vpack.c.b16 %v7645, %v7642
        %v7694 = vpack.c.b16 %v7646, %v7643
        %v7695 = vpack.c.b16 %v7647, %v7644
        %v7696 = vpack.c.b16 %v7651, %v7648
        %v7697 = vpack.c.b16 %v7652, %v7649
        %v7698 = vpack.c.b16 %v7653, %v7650
        %v7699 = vpack.c.b16 %v7657, %v7654
        %v7700 = vpack.c.b16 %v7658, %v7655
        %v7701 = vpack.c.b16 %v7659, %v7656
        %v7702 = vpack.c.b16 %v7663, %v7660
        %v7703 = vpack.c.b16 %v7664, %v7661
        %v7704 = vpack.c.b16 %v7665, %v7662
        %v7705 = vpack.c.b16 %v7669, %v7666
        %v7706 = vpack.c.b16 %v7670, %v7667
        %v7707 = vpack.c.b16 %v7671, %v7668
        %v7708 = vpack.c.b16 %v7675, %v7672
        %v7709 = vpack.c.b16 %v7676, %v7673
        %v7710 = vpack.c.b16 %v7677, %v7674
        %v7711 = vpack.c.b16 %v7681, %v7678
        %v7712 = vpack.c.b16 %v7682, %v7679
        %v7713 = vpack.c.b16 %v7683, %v7680
        %v7745 = vsel %vm4665, %v7573, 0
        %v7748 = vsel %vm4665, %v7575, 0
        %v7751 = vsel %vm4665, %v7577, 0
        %v7754 = vsel %vm4665, %v7579, 0
        %7756 = vmatprep.subr.bf16.mxu0 %v7706
        %7757 = vmatpush1.bf16.msra.mxu0 %v7705
        %7758 = vmatprep.subr.bf16.mxu0 %v7703
        %7759 = vmatpush1.bf16.msra.mxu0 %v7702
        %7760 = vmatprep.subr.bf16.mxu0 %v7700
        %7761 = vmatpush1.bf16.msra.mxu0 %v7699
        %7762 = vmatprep.subr.bf16.mxu0 %v7697
        %7763 = vmatpush1.bf16.msra.mxu0 %v7696
        %7764 = vmatprep.subr.bf16.mxu0 %v7694
        %7765 = vmatpush1.bf16.msra.mxu0 %v7693
        %7766 = vmatprep.subr.bf16.mxu0 %v7691
        %7767 = vmatpush1.bf16.msra.mxu0 %v7690
        %7768 = vmatprep.subr.bf16.mxu0 %v7688
        %7769 = vmatpush1.bf16.msra.mxu0 %v7687
        %7770 = vmatprep.subr.bf16.mxu0 %v7685
        %7771 = vmatpush1.bf16.msra.mxu0 %v7684
        %7772 = vmatprep.subr.bf16.mxu0 0
        %7773 = vmatpush2.bf16.msra.mxu0 0
        %7774 = vmatprep.subr.bf16.mxu0 0
        %7775 = vmatpush2.bf16.msra.mxu0 0
        %7776 = vmatprep.subr.bf16.mxu0 0
        %7777 = vmatpush2.bf16.msra.mxu0 0
        %7778 = vmatprep.subr.bf16.mxu0 0
        %7779 = vmatpush2.bf16.msra.mxu0 0
        %7780 = vmatprep.subr.bf16.mxu0 0
        %7781 = vmatpush2.bf16.msra.mxu0 0
        %7782 = vmatprep.subr.bf16.mxu0 0
        %7783 = vmatpush2.bf16.msra.mxu0 0
        %7784 = vmatprep.subr.bf16.mxu0 %v7712
        %7785 = vmatpush2.bf16.msra.mxu0 %v7711
        %7786 = vmatprep.subr.bf16.mxu0 %v7709
        %7787 = vmatpush2.bf16.msra.mxu0 %v7708
        %7788 = vmatprep.mubr.bf16.mxu0 %v7745
        %7789 = vmatmul.mubr.bf16.gmra.mxu0 %v7572
        %v7790 = vpop.f32.mrf.mxu0
        %v7791 = vadd.f32 0.0, %v7790
        %v7792 = vpop.f32.mrf.mxu0
        %v7793 = vadd.f32 0.0, %v7792
        %v7794 = vpop.f32.mrf.mxu0
        %v7795 = vadd.f32 0.0, %v7794
        %v7796 = vpop.f32.mrf.mxu0
        %v7797 = vadd.f32 0.0, %v7796
        %7798 = vmatprep.mubr.bf16.mxu0 %v7748
        %7799 = vmatmul.mubr.bf16.gmra.mxu0 %v7574
        %v7800 = vpop.f32.mrf.mxu0
        %v7801 = vadd.f32 0.0, %v7800
        %v7802 = vpop.f32.mrf.mxu0
        %v7803 = vadd.f32 0.0, %v7802
        %v7804 = vpop.f32.mrf.mxu0
        %v7805 = vadd.f32 0.0, %v7804
        %v7806 = vpop.f32.mrf.mxu0
        %v7807 = vadd.f32 0.0, %v7806
        %7808 = vmatprep.mubr.bf16.mxu0 %v7751
        %7809 = vmatmul.mubr.bf16.gmra.mxu0 %v7576
        %v7810 = vpop.f32.mrf.mxu0
        %v7811 = vadd.f32 0.0, %v7810
        %v7812 = vpop.f32.mrf.mxu0
        %v7813 = vadd.f32 0.0, %v7812
        %v7814 = vpop.f32.mrf.mxu0
        %v7815 = vadd.f32 0.0, %v7814
        %v7816 = vpop.f32.mrf.mxu0
        %v7817 = vadd.f32 0.0, %v7816
        %7818 = vmatprep.mubr.bf16.mxu0 %v7754
        %7819 = vmatmul.mubr.bf16.gmra.mxu0 %v7578
        %v7820 = vpop.f32.mrf.mxu0
        %v7821 = vadd.f32 0.0, %v7820
        %v7822 = vpop.f32.mrf.mxu0
        %v7823 = vadd.f32 0.0, %v7822
        %v7824 = vpop.f32.mrf.mxu0
        %v7825 = vadd.f32 0.0, %v7824
        %v7826 = vpop.f32.mrf.mxu0
        %v7827 = vadd.f32 0.0, %v7826
        %7828 = vdwg.mxu0
        %7829 = vmatprep.subr.bf16.mxu0 0
        %7830 = vmatpush1.bf16.msra.mxu0 %v7707
        %7831 = vmatprep.subr.bf16.mxu0 0
        %7832 = vmatpush1.bf16.msra.mxu0 %v7704
        %7833 = vmatprep.subr.bf16.mxu0 0
        %7834 = vmatpush1.bf16.msra.mxu0 %v7701
        %7835 = vmatprep.subr.bf16.mxu0 0
        %7836 = vmatpush1.bf16.msra.mxu0 %v7698
        %7837 = vmatprep.subr.bf16.mxu0 0
        %7838 = vmatpush1.bf16.msra.mxu0 %v7695
        %7839 = vmatprep.subr.bf16.mxu0 0
        %7840 = vmatpush1.bf16.msra.mxu0 %v7692
        %7841 = vmatprep.subr.bf16.mxu0 0
        %7842 = vmatpush1.bf16.msra.mxu0 %v7689
        %7843 = vmatprep.subr.bf16.mxu0 0
        %7844 = vmatpush1.bf16.msra.mxu0 %v7686
        %7845 = vmatprep.subr.bf16.mxu0 0
        %7846 = vmatpush2.bf16.msra.mxu0 0
        %7847 = vmatprep.subr.bf16.mxu0 0
        %7848 = vmatpush2.bf16.msra.mxu0 0
        %7849 = vmatprep.subr.bf16.mxu0 0
        %7850 = vmatpush2.bf16.msra.mxu0 0
        %7851 = vmatprep.subr.bf16.mxu0 0
        %7852 = vmatpush2.bf16.msra.mxu0 0
        %7853 = vmatprep.subr.bf16.mxu0 0
        %7854 = vmatpush2.bf16.msra.mxu0 0
        %7855 = vmatprep.subr.bf16.mxu0 0
        %7856 = vmatpush2.bf16.msra.mxu0 0
        %7857 = vmatprep.subr.bf16.mxu0 0
        %7858 = vmatpush2.bf16.msra.mxu0 %v7713
        %7859 = vmatprep.subr.bf16.mxu0 0
        %7860 = vmatpush2.bf16.msra.mxu0 %v7710
        %7861 = vmatprep.mubr.bf16.mxu0 %v7745
        %7862 = vmatmul.mubr.bf16.gmra.mxu0 %v7572
        %v7863 = vpop.f32.mrf.mxu0
        %v7864 = vadd.f32 0.0, %v7863
        %v7865 = vpop.f32.mrf.mxu0
        %v7866 = vpop.f32.mrf.mxu0
        %v7867 = vadd.f32 0.0, %v7866
        %v7868 = vpop.f32.mrf.mxu0
        %7869 = vmatprep.mubr.bf16.mxu0 %v7748
        %7870 = vmatmul.mubr.bf16.gmra.mxu0 %v7574
        %v7871 = vpop.f32.mrf.mxu0
        %v7872 = vadd.f32 0.0, %v7871
        %v7873 = vpop.f32.mrf.mxu0
        %v7874 = vpop.f32.mrf.mxu0
        %v7875 = vadd.f32 0.0, %v7874
        %v7876 = vpop.f32.mrf.mxu0
        %7877 = vmatprep.mubr.bf16.mxu0 %v7751
        %7878 = vmatmul.mubr.bf16.gmra.mxu0 %v7576
        %v7879 = vpop.f32.mrf.mxu0
        %v7880 = vadd.f32 0.0, %v7879
        %v7881 = vpop.f32.mrf.mxu0
        %v7882 = vpop.f32.mrf.mxu0
        %v7883 = vadd.f32 0.0, %v7882
        %v7884 = vpop.f32.mrf.mxu0
        %7885 = vmatprep.mubr.bf16.mxu0 %v7754
        %7886 = vmatmul.mubr.bf16.gmra.mxu0 %v7578
        %v7887 = vpop.f32.mrf.mxu0
        %v7888 = vadd.f32 0.0, %v7887
        %v7889 = vpop.f32.mrf.mxu0
        %v7890 = vpop.f32.mrf.mxu0
        %v7891 = vadd.f32 0.0, %v7890
        %v7892 = vpop.f32.mrf.mxu0
        %7893 = vdwg.mxu0
        %v7894 = vadd.f32 %v7193, %v7791
        %v7895 = vadd.f32 %v7194, %v7793
        %v7896 = vadd.f32 %v7195, %v7864
        %v7897 = vadd.f32 %v7196, %v7795
        %v7898 = vadd.f32 %v7197, %v7797
        %v7899 = vadd.f32 %v7198, %v7867
        %v7900 = vadd.f32 %v7199, %v7801
        %v7901 = vadd.f32 %v7200, %v7803
        %v7902 = vadd.f32 %v7201, %v7872
        %v7903 = vadd.f32 %v7202, %v7805
        %v7904 = vadd.f32 %v7203, %v7807
        %v7905 = vadd.f32 %v7204, %v7875
        %v7906 = vadd.f32 %v7205, %v7811
        %v7907 = vadd.f32 %v7206, %v7813
        %v7908 = vadd.f32 %v7207, %v7880
        %v7909 = vadd.f32 %v7208, %v7815
        %v7910 = vadd.f32 %v7209, %v7817
        %v7911 = vadd.f32 %v7210, %v7883
        %v7912 = vadd.f32 %v7211, %v7821
        %v7913 = vadd.f32 %v7212, %v7823
        %v7914 = vadd.f32 %v7213, %v7888
        %v7915 = vadd.f32 %v7214, %v7825
        %v7916 = vadd.f32 %v7215, %v7827
        %v7917 = vadd.f32 %v7216, %v7891
        %v7918 = vld [vmem:[%s4200] sm:$0xe]
        %v7919 = vld [vmem:[%s4200 + $0x8] sm:$0xe]
        %v7920 = vld [vmem:[%s4200 + $0x10] sm:$0xe]
        %v7921 = vld [vmem:[%s4200 + $0x18] sm:$0xe]
        %v7922 = vld [vmem:[%s4200 + $0x20] sm:$0xe]
        %v7923 = vld [vmem:[%s4200 + $0x28] sm:$0xe]
        %v7924 = vld [vmem:[%s4200 + $0x30] sm:$0xe]
        %v7925 = vld [vmem:[%s4200 + $0x38] sm:$0xe]
        %v7942 = vrot.slane %v7918, 5
        %v7943 = vrot.slane %v7942, 4
        %v7944 = vrot.slane %v7218, 5
        %v7945 = vsel %vm5531, %v7943, %v7944
        %v7946 = vrot.slane %v7919, 5
        %v7947 = vrot.slane %v7946, 4
        %v7948 = vrot.slane %v7220, 5
        %v7949 = vsel %vm5531, %v7947, %v7948
        %v7950 = vrot.slane %v7920, 5
        %v7951 = vrot.slane %v7950, 4
        %v7952 = vrot.slane %v7222, 5
        %v7953 = vsel %vm5531, %v7951, %v7952
        %v7954 = vrot.slane %v7921, 5
        %v7955 = vrot.slane %v7954, 4
        %v7956 = vrot.slane %v7224, 5
        %v7957 = vsel %vm5531, %v7955, %v7956
        %v7958 = vrot.slane %v7922, 5
        %v7959 = vrot.slane %v7958, 4
        %v7960 = vrot.slane %v7226, 5
        %v7961 = vsel %vm5531, %v7959, %v7960
        %v7962 = vrot.slane %v7923, 5
        %v7963 = vrot.slane %v7962, 4
        %v7964 = vrot.slane %v7228, 5
        %v7965 = vsel %vm5531, %v7963, %v7964
        %v7966 = vrot.slane %v7924, 5
        %v7967 = vrot.slane %v7966, 4
        %v7968 = vrot.slane %v7230, 5
        %v7969 = vsel %vm5531, %v7967, %v7968
        %v7970 = vrot.slane %v7925, 5
        %v7971 = vrot.slane %v7970, 4
        %v7972 = vrot.slane %v7232, 5
        %v7973 = vsel %vm5531, %v7971, %v7972
        %s7974 = scalar_lea.vmem [#allocation12], 80
        %v7975 = vld [vmem:[%s7974] sm:$0xf]
        %v7976 = vld [vmem:[%s7974 + $0x4] sm:$0xf]
        %v7977 = vld [vmem:[%s7974 + $0x8] sm:$0xf]
        %v7978 = vld [vmem:[%s7974 + $0xc] sm:$0xf]
        %v7979 = vunpack.c.l.b16 %v7945
        %v7980 = vunpack.c.l.b16 %v7949
        %v7981 = vunpack.c.l.b16 %v7953
        %v7982 = vunpack.c.l.b16 %v7957
        %v7983 = vunpack.c.l.b16 %v7961
        %v7984 = vunpack.c.l.b16 %v7965
        %v7985 = vunpack.c.l.b16 %v7969
        %v7986 = vunpack.c.l.b16 %v7973
        %v7987 = vpack.c.b16 %v7980, %v7979
        %v7988 = vpack.c.b16 %v7982, %v7981
        %v7989 = vpack.c.b16 %v7984, %v7983
        %v7990 = vpack.c.b16 %v7986, %v7985
        %v7995 = vunpack.c.l.b16 %v7975
        %v7996 = vunpack.c.l.b16 %v7976
        %v7997 = vunpack.c.l.b16 %v7977
        %v7998 = vunpack.c.l.b16 %v7978
        %v7999 = vpack.c.b16 %v7996, %v7995
        %v8000 = vpack.c.b16 %v7998, %v7997
        %v8004 = vsel %vm4665, %v7987, 0
        %v8007 = vsel %vm4665, %v7988, 0
        %v8010 = vsel %vm4665, %v7989, 0
        %v8013 = vsel %vm4665, %v7990, 0
        %8015 = vmatprep.subr.bf16.mxu0 0
        %8016 = vmatpush1.bf16.msra.mxu0 0
        %8017 = vmatprep.subr.bf16.mxu0 0
        %8018 = vmatpush1.bf16.msra.mxu0 0
        %8019 = vmatprep.subr.bf16.mxu0 0
        %8020 = vmatpush1.bf16.msra.mxu0 0
        %8021 = vmatprep.subr.bf16.mxu0 0
        %8022 = vmatpush1.bf16.msra.mxu0 0
        %8023 = vmatprep.subr.bf16.mxu0 0
        %8024 = vmatpush1.bf16.msra.mxu0 0
        %8025 = vmatprep.subr.bf16.mxu0 0
        %8026 = vmatpush1.bf16.msra.mxu0 0
        %8027 = vmatprep.subr.bf16.mxu0 0
        %8028 = vmatpush1.bf16.msra.mxu0 %v8000
        %8029 = vmatprep.subr.bf16.mxu0 0
        %8030 = vmatpush1.bf16.msra.mxu0 %v7999
        %8031 = vmatprep.subr.bf16.mxu0 0
        %8032 = vmatpush2.bf16.msra.mxu0 0
        %8033 = vmatprep.subr.bf16.mxu0 0
        %8034 = vmatpush2.bf16.msra.mxu0 0
        %8035 = vmatprep.subr.bf16.mxu0 0
        %8036 = vmatpush2.bf16.msra.mxu0 0
        %8037 = vmatprep.subr.bf16.mxu0 0
        %8038 = vmatpush2.bf16.msra.mxu0 0
        %8039 = vmatprep.subr.bf16.mxu0 0
        %8040 = vmatpush2.bf16.msra.mxu0 0
        %8041 = vmatprep.subr.bf16.mxu0 0
        %8042 = vmatpush2.bf16.msra.mxu0 0
        %8043 = vmatprep.subr.bf16.mxu0 0
        %8044 = vmatpush2.bf16.msra.mxu0 0
        %8045 = vmatprep.subr.bf16.mxu0 0
        %8046 = vmatpush2.bf16.msra.mxu0 0
        %8047 = vmatprep.mubr.bf16.mxu0 0
        %8048 = vmatmul.mubr.bf16.gmra.mxu0 %v8004
        %v8049 = vpop.f32.mrf.mxu0
        %v8050 = vadd.f32 0.0, %v8049
        %v8051 = vpop.f32.mrf.mxu0
        %v8052 = vpop.f32.mrf.mxu0
        %v8053 = vadd.f32 0.0, %v8052
        %v8054 = vpop.f32.mrf.mxu0
        %8055 = vmatprep.mubr.bf16.mxu0 0
        %8056 = vmatmul.mubr.bf16.gmra.mxu0 %v8007
        %v8057 = vpop.f32.mrf.mxu0
        %v8058 = vadd.f32 0.0, %v8057
        %v8059 = vpop.f32.mrf.mxu0
        %v8060 = vpop.f32.mrf.mxu0
        %v8061 = vadd.f32 0.0, %v8060
        %v8062 = vpop.f32.mrf.mxu0
        %8063 = vmatprep.mubr.bf16.mxu0 0
        %8064 = vmatmul.mubr.bf16.gmra.mxu0 %v8010
        %v8065 = vpop.f32.mrf.mxu0
        %v8066 = vadd.f32 0.0, %v8065
        %v8067 = vpop.f32.mrf.mxu0
        %v8068 = vpop.f32.mrf.mxu0
        %v8069 = vadd.f32 0.0, %v8068
        %v8070 = vpop.f32.mrf.mxu0
        %8071 = vmatprep.mubr.bf16.mxu0 0
        %8072 = vmatmul.mubr.bf16.gmra.mxu0 %v8013
        %v8073 = vpop.f32.mrf.mxu0
        %v8074 = vadd.f32 0.0, %v8073
        %v8075 = vpop.f32.mrf.mxu0
        %v8076 = vpop.f32.mrf.mxu0
        %v8077 = vadd.f32 0.0, %v8076
        %v8078 = vpop.f32.mrf.mxu0
        %8079 = vdwg.mxu0
        %v8080 = vadd.f32 %v7451, %v8050
        %v8081 = vadd.f32 %v7452, %v8053
        %v8082 = vadd.f32 %v7453, %v8058
        %v8083 = vadd.f32 %v7454, %v8061
        %v8084 = vadd.f32 %v7455, %v8066
        %v8085 = vadd.f32 %v7456, %v8069
        %v8086 = vadd.f32 %v7457, %v8074
        %v8087 = vadd.f32 %v7458, %v8077
        %s8088 = scalar_lea.vmem [#allocation2], 32
        %v8089 = vld [vmem:[%s8088] sm:$0xff]
        %v8090 = vld [vmem:[%s8088 + $0x10] sm:$0xff]
        %v8091 = vld [vmem:[%s8088 + $0x20] sm:$0xff]
        %v8092 = vld [vmem:[%s8088 + $0x30] sm:$0xff]
        %v8093 = vld [vmem:[%s8088 + $0x40] sm:$0xff]
        %v8094 = vld [vmem:[%s8088 + $0x50] sm:$0xff]
        %v8095 = vld [vmem:[%s8088 + $0x60] sm:$0xff]
        %v8096 = vld [vmem:[%s8088 + $0x70] sm:$0xff]
        %s8097 = scalar_lea.vmem [#allocation9], 1440
        %v8098 = vld [vmem:[%s8097] sm:$0xff]
        %v8099 = vld [vmem:[%s8097 + $0x8] sm:$0xf]
        %v8100 = vld [vmem:[%s8097 + $0xc] sm:$0xff]
        %v8101 = vld [vmem:[%s8097 + $0x14] sm:$0xf]
        %v8102 = vld [vmem:[%s8097 + $0x18] sm:$0xff]
        %v8103 = vld [vmem:[%s8097 + $0x20] sm:$0xf]
        %v8104 = vld [vmem:[%s8097 + $0x24] sm:$0xff]
        %v8105 = vld [vmem:[%s8097 + $0x2c] sm:$0xf]
        %v8106 = vld [vmem:[%s8097 + $0x30] sm:$0xff]
        %v8107 = vld [vmem:[%s8097 + $0x38] sm:$0xf]
        %v8108 = vld [vmem:[%s8097 + $0x3c] sm:$0xff]
        %v8109 = vld [vmem:[%s8097 + $0x44] sm:$0xf]
        %v8110 = vld [vmem:[%s8097 + $0x48] sm:$0xff]
        %v8111 = vld [vmem:[%s8097 + $0x50] sm:$0xf]
        %v8112 = vld [vmem:[%s8097 + $0x54] sm:$0xff]
        %v8113 = vld [vmem:[%s8097 + $0x5c] sm:$0xf]
        %v8114 = vld [vmem:[%s8097 + $0x60] sm:$0xff]
        %v8115 = vld [vmem:[%s8097 + $0x68] sm:$0xf]
        %v8116 = vld [vmem:[%s8097 + $0x6c] sm:$0xff]
        %v8117 = vld [vmem:[%s8097 + $0x74] sm:$0xf]
        %v8118 = vld [vmem:[%s8097 + $0x78] sm:$0xff]
        %v8119 = vld [vmem:[%s8097 + $0x80] sm:$0xf]
        %v8120 = vld [vmem:[%s8097 + $0x84] sm:$0xff]
        %v8121 = vld [vmem:[%s8097 + $0x8c] sm:$0xf]
        %v8122 = vld [vmem:[%s8097 + $0x90] sm:$0xff]
        %v8123 = vld [vmem:[%s8097 + $0x98] sm:$0xf]
        %v8124 = vld [vmem:[%s8097 + $0x9c] sm:$0xff]
        %v8125 = vld [vmem:[%s8097 + $0xa4] sm:$0xf]
        %v8126 = vld [vmem:[%s8097 + $0xa8] sm:$0xff]
        %v8127 = vld [vmem:[%s8097 + $0xb0] sm:$0xf]
        %v8128 = vld [vmem:[%s8097 + $0xb4] sm:$0xff]
        %v8129 = vld [vmem:[%s8097 + $0xbc] sm:$0xf]
        %v8130 = vld [vmem:[%s8097 + $0xc0] sm:$0xff]
        %v8131 = vld [vmem:[%s8097 + $0xc8] sm:$0xf]
        %v8132 = vld [vmem:[%s8097 + $0xcc] sm:$0xff]
        %v8133 = vld [vmem:[%s8097 + $0xd4] sm:$0xf]
        %v8134 = vld [vmem:[%s8097 + $0xd8] sm:$0xff]
        %v8135 = vld [vmem:[%s8097 + $0xe0] sm:$0xf]
        %v8136 = vld [vmem:[%s8097 + $0xe4] sm:$0xff]
        %v8137 = vld [vmem:[%s8097 + $0xec] sm:$0xf]
        %v8146 = vunpack.c.l.b16 %v8089
        %v8147 = vunpack.c.h.b16 %v8089
        %v8148 = vunpack.c.l.b16 %v8090
        %v8149 = vunpack.c.h.b16 %v8090
        %v8150 = vunpack.c.l.b16 %v8091
        %v8151 = vunpack.c.h.b16 %v8091
        %v8152 = vunpack.c.l.b16 %v8092
        %v8153 = vunpack.c.h.b16 %v8092
        %v8154 = vunpack.c.l.b16 %v8093
        %v8155 = vunpack.c.h.b16 %v8093
        %v8156 = vunpack.c.l.b16 %v8094
        %v8157 = vunpack.c.h.b16 %v8094
        %v8158 = vunpack.c.l.b16 %v8095
        %v8159 = vunpack.c.h.b16 %v8095
        %v8160 = vunpack.c.l.b16 %v8096
        %v8161 = vunpack.c.h.b16 %v8096
        %v8162 = vpack.c.b16 %v8148, %v8146
        %v8163 = vpack.c.b16 %v8149, %v8147
        %v8164 = vpack.c.b16 %v8152, %v8150
        %v8165 = vpack.c.b16 %v8153, %v8151
        %v8166 = vpack.c.b16 %v8156, %v8154
        %v8167 = vpack.c.b16 %v8157, %v8155
        %v8168 = vpack.c.b16 %v8160, %v8158
        %v8169 = vpack.c.b16 %v8161, %v8159
        %v8214 = vunpack.c.l.b16 %v8098
        %v8215 = vunpack.c.h.b16 %v8098
        %v8216 = vunpack.c.l.b16 %v8099
        %v8217 = vunpack.c.l.b16 %v8100
        %v8218 = vunpack.c.h.b16 %v8100
        %v8219 = vunpack.c.l.b16 %v8101
        %v8220 = vunpack.c.l.b16 %v8102
        %v8221 = vunpack.c.h.b16 %v8102
        %v8222 = vunpack.c.l.b16 %v8103
        %v8223 = vunpack.c.l.b16 %v8104
        %v8224 = vunpack.c.h.b16 %v8104
        %v8225 = vunpack.c.l.b16 %v8105
        %v8226 = vunpack.c.l.b16 %v8106
        %v8227 = vunpack.c.h.b16 %v8106
        %v8228 = vunpack.c.l.b16 %v8107
        %v8229 = vunpack.c.l.b16 %v8108
        %v8230 = vunpack.c.h.b16 %v8108
        %v8231 = vunpack.c.l.b16 %v8109
        %v8232 = vunpack.c.l.b16 %v8110
        %v8233 = vunpack.c.h.b16 %v8110
        %v8234 = vunpack.c.l.b16 %v8111
        %v8235 = vunpack.c.l.b16 %v8112
        %v8236 = vunpack.c.h.b16 %v8112
        %v8237 = vunpack.c.l.b16 %v8113
        %v8238 = vunpack.c.l.b16 %v8114
        %v8239 = vunpack.c.h.b16 %v8114
        %v8240 = vunpack.c.l.b16 %v8115
        %v8241 = vunpack.c.l.b16 %v8116
        %v8242 = vunpack.c.h.b16 %v8116
        %v8243 = vunpack.c.l.b16 %v8117
        %v8244 = vunpack.c.l.b16 %v8118
        %v8245 = vunpack.c.h.b16 %v8118
        %v8246 = vunpack.c.l.b16 %v8119
        %v8247 = vunpack.c.l.b16 %v8120
        %v8248 = vunpack.c.h.b16 %v8120
        %v8249 = vunpack.c.l.b16 %v8121
        %v8250 = vunpack.c.l.b16 %v8122
        %v8251 = vunpack.c.h.b16 %v8122
        %v8252 = vunpack.c.l.b16 %v8123
        %v8253 = vunpack.c.l.b16 %v8124
        %v8254 = vunpack.c.h.b16 %v8124
        %v8255 = vunpack.c.l.b16 %v8125
        %v8256 = vunpack.c.l.b16 %v8126
        %v8257 = vunpack.c.h.b16 %v8126
        %v8258 = vunpack.c.l.b16 %v8127
        %v8259 = vunpack.c.l.b16 %v8128
        %v8260 = vunpack.c.h.b16 %v8128
        %v8261 = vunpack.c.l.b16 %v8129
        %v8262 = vunpack.c.l.b16 %v8130
        %v8263 = vunpack.c.h.b16 %v8130
        %v8264 = vunpack.c.l.b16 %v8131
        %v8265 = vunpack.c.l.b16 %v8132
        %v8266 = vunpack.c.h.b16 %v8132
        %v8267 = vunpack.c.l.b16 %v8133
        %v8268 = vunpack.c.l.b16 %v8134
        %v8269 = vunpack.c.h.b16 %v8134
        %v8270 = vunpack.c.l.b16 %v8135
        %v8271 = vunpack.c.l.b16 %v8136
        %v8272 = vunpack.c.h.b16 %v8136
        %v8273 = vunpack.c.l.b16 %v8137
        %v8274 = vpack.c.b16 %v8217, %v8214
        %v8275 = vpack.c.b16 %v8218, %v8215
        %v8276 = vpack.c.b16 %v8219, %v8216
        %v8277 = vpack.c.b16 %v8223, %v8220
        %v8278 = vpack.c.b16 %v8224, %v8221
        %v8279 = vpack.c.b16 %v8225, %v8222
        %v8280 = vpack.c.b16 %v8229, %v8226
        %v8281 = vpack.c.b16 %v8230, %v8227
        %v8282 = vpack.c.b16 %v8231, %v8228
        %v8283 = vpack.c.b16 %v8235, %v8232
        %v8284 = vpack.c.b16 %v8236, %v8233
        %v8285 = vpack.c.b16 %v8237, %v8234
        %v8286 = vpack.c.b16 %v8241, %v8238
        %v8287 = vpack.c.b16 %v8242, %v8239
        %v8288 = vpack.c.b16 %v8243, %v8240
        %v8289 = vpack.c.b16 %v8247, %v8244
        %v8290 = vpack.c.b16 %v8248, %v8245
        %v8291 = vpack.c.b16 %v8249, %v8246
        %v8292 = vpack.c.b16 %v8253, %v8250
        %v8293 = vpack.c.b16 %v8254, %v8251
        %v8294 = vpack.c.b16 %v8255, %v8252
        %v8295 = vpack.c.b16 %v8259, %v8256
        %v8296 = vpack.c.b16 %v8260, %v8257
        %v8297 = vpack.c.b16 %v8261, %v8258
        %v8298 = vpack.c.b16 %v8265, %v8262
        %v8299 = vpack.c.b16 %v8266, %v8263
        %v8300 = vpack.c.b16 %v8267, %v8264
        %v8301 = vpack.c.b16 %v8271, %v8268
        %v8302 = vpack.c.b16 %v8272, %v8269
        %v8303 = vpack.c.b16 %v8273, %v8270
        %v8335 = vsel %vm4665, %v8163, 0
        %v8338 = vsel %vm4665, %v8165, 0
        %v8341 = vsel %vm4665, %v8167, 0
        %v8344 = vsel %vm4665, %v8169, 0
        %8346 = vmatprep.subr.bf16.mxu0 %v8296
        %8347 = vmatpush1.bf16.msra.mxu0 %v8295
        %8348 = vmatprep.subr.bf16.mxu0 %v8293
        %8349 = vmatpush1.bf16.msra.mxu0 %v8292
        %8350 = vmatprep.subr.bf16.mxu0 %v8290
        %8351 = vmatpush1.bf16.msra.mxu0 %v8289
        %8352 = vmatprep.subr.bf16.mxu0 %v8287
        %8353 = vmatpush1.bf16.msra.mxu0 %v8286
        %8354 = vmatprep.subr.bf16.mxu0 %v8284
        %8355 = vmatpush1.bf16.msra.mxu0 %v8283
        %8356 = vmatprep.subr.bf16.mxu0 %v8281
        %8357 = vmatpush1.bf16.msra.mxu0 %v8280
        %8358 = vmatprep.subr.bf16.mxu0 %v8278
        %8359 = vmatpush1.bf16.msra.mxu0 %v8277
        %8360 = vmatprep.subr.bf16.mxu0 %v8275
        %8361 = vmatpush1.bf16.msra.mxu0 %v8274
        %8362 = vmatprep.subr.bf16.mxu0 0
        %8363 = vmatpush2.bf16.msra.mxu0 0
        %8364 = vmatprep.subr.bf16.mxu0 0
        %8365 = vmatpush2.bf16.msra.mxu0 0
        %8366 = vmatprep.subr.bf16.mxu0 0
        %8367 = vmatpush2.bf16.msra.mxu0 0
        %8368 = vmatprep.subr.bf16.mxu0 0
        %8369 = vmatpush2.bf16.msra.mxu0 0
        %8370 = vmatprep.subr.bf16.mxu0 0
        %8371 = vmatpush2.bf16.msra.mxu0 0
        %8372 = vmatprep.subr.bf16.mxu0 0
        %8373 = vmatpush2.bf16.msra.mxu0 0
        %8374 = vmatprep.subr.bf16.mxu0 %v8302
        %8375 = vmatpush2.bf16.msra.mxu0 %v8301
        %8376 = vmatprep.subr.bf16.mxu0 %v8299
        %8377 = vmatpush2.bf16.msra.mxu0 %v8298
        %8378 = vmatprep.mubr.bf16.mxu0 %v8335
        %8379 = vmatmul.mubr.bf16.gmra.mxu0 %v8162
        %v8380 = vpop.f32.mrf.mxu0
        %v8381 = vadd.f32 0.0, %v8380
        %v8382 = vpop.f32.mrf.mxu0
        %v8383 = vadd.f32 0.0, %v8382
        %v8384 = vpop.f32.mrf.mxu0
        %v8385 = vadd.f32 0.0, %v8384
        %v8386 = vpop.f32.mrf.mxu0
        %v8387 = vadd.f32 0.0, %v8386
        %8388 = vmatprep.mubr.bf16.mxu0 %v8338
        %8389 = vmatmul.mubr.bf16.gmra.mxu0 %v8164
        %v8390 = vpop.f32.mrf.mxu0
        %v8391 = vadd.f32 0.0, %v8390
        %v8392 = vpop.f32.mrf.mxu0
        %v8393 = vadd.f32 0.0, %v8392
        %v8394 = vpop.f32.mrf.mxu0
        %v8395 = vadd.f32 0.0, %v8394
        %v8396 = vpop.f32.mrf.mxu0
        %v8397 = vadd.f32 0.0, %v8396
        %8398 = vmatprep.mubr.bf16.mxu0 %v8341
        %8399 = vmatmul.mubr.bf16.gmra.mxu0 %v8166
        %v8400 = vpop.f32.mrf.mxu0
        %v8401 = vadd.f32 0.0, %v8400
        %v8402 = vpop.f32.mrf.mxu0
        %v8403 = vadd.f32 0.0, %v8402
        %v8404 = vpop.f32.mrf.mxu0
        %v8405 = vadd.f32 0.0, %v8404
        %v8406 = vpop.f32.mrf.mxu0
        %v8407 = vadd.f32 0.0, %v8406
        %8408 = vmatprep.mubr.bf16.mxu0 %v8344
        %8409 = vmatmul.mubr.bf16.gmra.mxu0 %v8168
        %v8410 = vpop.f32.mrf.mxu0
        %v8411 = vadd.f32 0.0, %v8410
        %v8412 = vpop.f32.mrf.mxu0
        %v8413 = vadd.f32 0.0, %v8412
        %v8414 = vpop.f32.mrf.mxu0
        %v8415 = vadd.f32 0.0, %v8414
        %v8416 = vpop.f32.mrf.mxu0
        %v8417 = vadd.f32 0.0, %v8416
        %8418 = vdwg.mxu0
        %8419 = vmatprep.subr.bf16.mxu0 0
        %8420 = vmatpush1.bf16.msra.mxu0 %v8297
        %8421 = vmatprep.subr.bf16.mxu0 0
        %8422 = vmatpush1.bf16.msra.mxu0 %v8294
        %8423 = vmatprep.subr.bf16.mxu0 0
        %8424 = vmatpush1.bf16.msra.mxu0 %v8291
        %8425 = vmatprep.subr.bf16.mxu0 0
        %8426 = vmatpush1.bf16.msra.mxu0 %v8288
        %8427 = vmatprep.subr.bf16.mxu0 0
        %8428 = vmatpush1.bf16.msra.mxu0 %v8285
        %8429 = vmatprep.subr.bf16.mxu0 0
        %8430 = vmatpush1.bf16.msra.mxu0 %v8282
        %8431 = vmatprep.subr.bf16.mxu0 0
        %8432 = vmatpush1.bf16.msra.mxu0 %v8279
        %8433 = vmatprep.subr.bf16.mxu0 0
        %8434 = vmatpush1.bf16.msra.mxu0 %v8276
        %8435 = vmatprep.subr.bf16.mxu0 0
        %8436 = vmatpush2.bf16.msra.mxu0 0
        %8437 = vmatprep.subr.bf16.mxu0 0
        %8438 = vmatpush2.bf16.msra.mxu0 0
        %8439 = vmatprep.subr.bf16.mxu0 0
        %8440 = vmatpush2.bf16.msra.mxu0 0
        %8441 = vmatprep.subr.bf16.mxu0 0
        %8442 = vmatpush2.bf16.msra.mxu0 0
        %8443 = vmatprep.subr.bf16.mxu0 0
        %8444 = vmatpush2.bf16.msra.mxu0 0
        %8445 = vmatprep.subr.bf16.mxu0 0
        %8446 = vmatpush2.bf16.msra.mxu0 0
        %8447 = vmatprep.subr.bf16.mxu0 0
        %8448 = vmatpush2.bf16.msra.mxu0 %v8303
        %8449 = vmatprep.subr.bf16.mxu0 0
        %8450 = vmatpush2.bf16.msra.mxu0 %v8300
        %8451 = vmatprep.mubr.bf16.mxu0 %v8335
        %8452 = vmatmul.mubr.bf16.gmra.mxu0 %v8162
        %v8453 = vpop.f32.mrf.mxu0
        %v8454 = vadd.f32 0.0, %v8453
        %v8455 = vpop.f32.mrf.mxu0
        %v8456 = vpop.f32.mrf.mxu0
        %v8457 = vadd.f32 0.0, %v8456
        %v8458 = vpop.f32.mrf.mxu0
        %8459 = vmatprep.mubr.bf16.mxu0 %v8338
        %8460 = vmatmul.mubr.bf16.gmra.mxu0 %v8164
        %v8461 = vpop.f32.mrf.mxu0
        %v8462 = vadd.f32 0.0, %v8461
        %v8463 = vpop.f32.mrf.mxu0
        %v8464 = vpop.f32.mrf.mxu0
        %v8465 = vadd.f32 0.0, %v8464
        %v8466 = vpop.f32.mrf.mxu0
        %8467 = vmatprep.mubr.bf16.mxu0 %v8341
        %8468 = vmatmul.mubr.bf16.gmra.mxu0 %v8166
        %v8469 = vpop.f32.mrf.mxu0
        %v8470 = vadd.f32 0.0, %v8469
        %v8471 = vpop.f32.mrf.mxu0
        %v8472 = vpop.f32.mrf.mxu0
        %v8473 = vadd.f32 0.0, %v8472
        %v8474 = vpop.f32.mrf.mxu0
        %8475 = vmatprep.mubr.bf16.mxu0 %v8344
        %8476 = vmatmul.mubr.bf16.gmra.mxu0 %v8168
        %v8477 = vpop.f32.mrf.mxu0
        %v8478 = vadd.f32 0.0, %v8477
        %v8479 = vpop.f32.mrf.mxu0
        %v8480 = vpop.f32.mrf.mxu0
        %v8481 = vadd.f32 0.0, %v8480
        %v8482 = vpop.f32.mrf.mxu0
        %8483 = vdwg.mxu0
        %v8484 = vadd.f32 %v7894, %v8381
        %v8485 = vadd.f32 %v7895, %v8383
        %v8486 = vadd.f32 %v7896, %v8454
        %v8487 = vadd.f32 %v7897, %v8385
        %v8488 = vadd.f32 %v7898, %v8387
        %v8489 = vadd.f32 %v7899, %v8457
        %v8490 = vadd.f32 %v7900, %v8391
        %v8491 = vadd.f32 %v7901, %v8393
        %v8492 = vadd.f32 %v7902, %v8462
        %v8493 = vadd.f32 %v7903, %v8395
        %v8494 = vadd.f32 %v7904, %v8397
        %v8495 = vadd.f32 %v7905, %v8465
        %v8496 = vadd.f32 %v7906, %v8401
        %v8497 = vadd.f32 %v7907, %v8403
        %v8498 = vadd.f32 %v7908, %v8470
        %v8499 = vadd.f32 %v7909, %v8405
        %v8500 = vadd.f32 %v7910, %v8407
        %v8501 = vadd.f32 %v7911, %v8473
        %v8502 = vadd.f32 %v7912, %v8411
        %v8503 = vadd.f32 %v7913, %v8413
        %v8504 = vadd.f32 %v7914, %v8478
        %v8505 = vadd.f32 %v7915, %v8415
        %v8506 = vadd.f32 %v7916, %v8417
        %v8507 = vadd.f32 %v7917, %v8481
        %s8508 = scalar_lea.vmem [#allocation3], 16
        %v8509 = vld [vmem:[%s8508] sm:$0xf]
        %v8510 = vld [vmem:[%s8508 + $0x8] sm:$0xf]
        %v8511 = vld [vmem:[%s8508 + $0x10] sm:$0xf]
        %v8512 = vld [vmem:[%s8508 + $0x18] sm:$0xf]
        %v8513 = vld [vmem:[%s8508 + $0x20] sm:$0xf]
        %v8514 = vld [vmem:[%s8508 + $0x28] sm:$0xf]
        %v8515 = vld [vmem:[%s8508 + $0x30] sm:$0xf]
        %v8516 = vld [vmem:[%s8508 + $0x38] sm:$0xf]
        %s8517 = scalar_lea.vmem [#allocation12], 96
        %v8518 = vld [vmem:[%s8517] sm:$0xf]
        %v8519 = vld [vmem:[%s8517 + $0x4] sm:$0xf]
        %v8520 = vld [vmem:[%s8517 + $0x8] sm:$0xf]
        %v8521 = vld [vmem:[%s8517 + $0xc] sm:$0xf]
        %v8530 = vunpack.c.l.b16 %v8509
        %v8531 = vunpack.c.l.b16 %v8510
        %v8532 = vunpack.c.l.b16 %v8511
        %v8533 = vunpack.c.l.b16 %v8512
        %v8534 = vunpack.c.l.b16 %v8513
        %v8535 = vunpack.c.l.b16 %v8514
        %v8536 = vunpack.c.l.b16 %v8515
        %v8537 = vunpack.c.l.b16 %v8516
        %v8538 = vpack.c.b16 %v8531, %v8530
        %v8539 = vpack.c.b16 %v8533, %v8532
        %v8540 = vpack.c.b16 %v8535, %v8534
        %v8541 = vpack.c.b16 %v8537, %v8536
        %v8546 = vunpack.c.l.b16 %v8518
        %v8547 = vunpack.c.l.b16 %v8519
        %v8548 = vunpack.c.l.b16 %v8520
        %v8549 = vunpack.c.l.b16 %v8521
        %v8550 = vpack.c.b16 %v8547, %v8546
        %v8551 = vpack.c.b16 %v8549, %v8548
        %v8555 = vsel %vm4665, %v8538, 0
        %v8558 = vsel %vm4665, %v8539, 0
        %v8561 = vsel %vm4665, %v8540, 0
        %v8564 = vsel %vm4665, %v8541, 0
        %8566 = vmatprep.subr.bf16.mxu0 0
        %8567 = vmatpush1.bf16.msra.mxu0 0
        %8568 = vmatprep.subr.bf16.mxu0 0
        %8569 = vmatpush1.bf16.msra.mxu0 0
        %8570 = vmatprep.subr.bf16.mxu0 0
        %8571 = vmatpush1.bf16.msra.mxu0 0
        %8572 = vmatprep.subr.bf16.mxu0 0
        %8573 = vmatpush1.bf16.msra.mxu0 0
        %8574 = vmatprep.subr.bf16.mxu0 0
        %8575 = vmatpush1.bf16.msra.mxu0 0
        %8576 = vmatprep.subr.bf16.mxu0 0
        %8577 = vmatpush1.bf16.msra.mxu0 0
        %8578 = vmatprep.subr.bf16.mxu0 0
        %8579 = vmatpush1.bf16.msra.mxu0 %v8551
        %8580 = vmatprep.subr.bf16.mxu0 0
        %8581 = vmatpush1.bf16.msra.mxu0 %v8550
        %8582 = vmatprep.subr.bf16.mxu0 0
        %8583 = vmatpush2.bf16.msra.mxu0 0
        %8584 = vmatprep.subr.bf16.mxu0 0
        %8585 = vmatpush2.bf16.msra.mxu0 0
        %8586 = vmatprep.subr.bf16.mxu0 0
        %8587 = vmatpush2.bf16.msra.mxu0 0
        %8588 = vmatprep.subr.bf16.mxu0 0
        %8589 = vmatpush2.bf16.msra.mxu0 0
        %8590 = vmatprep.subr.bf16.mxu0 0
        %8591 = vmatpush2.bf16.msra.mxu0 0
        %8592 = vmatprep.subr.bf16.mxu0 0
        %8593 = vmatpush2.bf16.msra.mxu0 0
        %8594 = vmatprep.subr.bf16.mxu0 0
        %8595 = vmatpush2.bf16.msra.mxu0 0
        %8596 = vmatprep.subr.bf16.mxu0 0
        %8597 = vmatpush2.bf16.msra.mxu0 0
        %8598 = vmatprep.mubr.bf16.mxu0 0
        %8599 = vmatmul.mubr.bf16.gmra.mxu0 %v8555
        %v8600 = vpop.f32.mrf.mxu0
        %v8601 = vadd.f32 0.0, %v8600
        %v8602 = vpop.f32.mrf.mxu0
        %v8603 = vpop.f32.mrf.mxu0
        %v8604 = vadd.f32 0.0, %v8603
        %v8605 = vpop.f32.mrf.mxu0
        %8606 = vmatprep.mubr.bf16.mxu0 0
        %8607 = vmatmul.mubr.bf16.gmra.mxu0 %v8558
        %v8608 = vpop.f32.mrf.mxu0
        %v8609 = vadd.f32 0.0, %v8608
        %v8610 = vpop.f32.mrf.mxu0
        %v8611 = vpop.f32.mrf.mxu0
        %v8612 = vadd.f32 0.0, %v8611
        %v8613 = vpop.f32.mrf.mxu0
        %8614 = vmatprep.mubr.bf16.mxu0 0
        %8615 = vmatmul.mubr.bf16.gmra.mxu0 %v8561
        %v8616 = vpop.f32.mrf.mxu0
        %v8617 = vadd.f32 0.0, %v8616
        %v8618 = vpop.f32.mrf.mxu0
        %v8619 = vpop.f32.mrf.mxu0
        %v8620 = vadd.f32 0.0, %v8619
        %v8621 = vpop.f32.mrf.mxu0
        %8622 = vmatprep.mubr.bf16.mxu0 0
        %8623 = vmatmul.mubr.bf16.gmra.mxu0 %v8564
        %v8624 = vpop.f32.mrf.mxu0
        %v8625 = vadd.f32 0.0, %v8624
        %v8626 = vpop.f32.mrf.mxu0
        %v8627 = vpop.f32.mrf.mxu0
        %v8628 = vadd.f32 0.0, %v8627
        %v8629 = vpop.f32.mrf.mxu0
        %8630 = vdwg.mxu0
        %v8631 = vadd.f32 %v8080, %v8601
        %v8632 = vadd.f32 %v8081, %v8604
        %v8633 = vadd.f32 %v8082, %v8609
        %v8634 = vadd.f32 %v8083, %v8612
        %v8635 = vadd.f32 %v8084, %v8617
        %v8636 = vadd.f32 %v8085, %v8620
        %v8637 = vadd.f32 %v8086, %v8625
        %v8638 = vadd.f32 %v8087, %v8628
        %v8639 = vld [vmem:[%s8088] sm:$0xff]
        %v8640 = vld [vmem:[%s8088 + $0x8] sm:$0x11]
        %v8641 = vld [vmem:[%s8088 + $0x10] sm:$0xff]
        %v8642 = vld [vmem:[%s8088 + $0x18] sm:$0x11]
        %v8643 = vld [vmem:[%s8088 + $0x20] sm:$0xff]
        %v8644 = vld [vmem:[%s8088 + $0x28] sm:$0x11]
        %v8645 = vld [vmem:[%s8088 + $0x30] sm:$0xff]
        %v8646 = vld [vmem:[%s8088 + $0x38] sm:$0x11]
        %v8647 = vld [vmem:[%s8088 + $0x40] sm:$0xff]
        %v8648 = vld [vmem:[%s8088 + $0x48] sm:$0x11]
        %v8649 = vld [vmem:[%s8088 + $0x50] sm:$0xff]
        %v8650 = vld [vmem:[%s8088 + $0x58] sm:$0x11]
        %v8651 = vld [vmem:[%s8088 + $0x60] sm:$0xff]
        %v8652 = vld [vmem:[%s8088 + $0x68] sm:$0x11]
        %v8653 = vld [vmem:[%s8088 + $0x70] sm:$0xff]
        %v8654 = vld [vmem:[%s8088 + $0x78] sm:$0x11]
        %v8656 = vshrl.u32 %v8639, 16
        %v8658 = vrot.slane %v8656, 4
        %v8659 = vshll.u32 %v8639, 16
        %v8661 = vrot.slane %v8659, 5
        %v8662 = vor.u32 %v8658, %v8661
        %v8663 = vrot.slane %v8662, 4
        %v8665 = vshll.u32 %v8640, 16
        %v8667 = vrot.slane %v8665, 5
        %v8668 = vsel %vm4323, %v8663, %v8667
        %v8670 = vshrl.u32 %v8641, 16
        %v8672 = vrot.slane %v8670, 4
        %v8673 = vshll.u32 %v8641, 16
        %v8675 = vrot.slane %v8673, 5
        %v8676 = vor.u32 %v8672, %v8675
        %v8677 = vrot.slane %v8676, 4
        %v8679 = vshll.u32 %v8642, 16
        %v8681 = vrot.slane %v8679, 5
        %v8682 = vsel %vm4323, %v8677, %v8681
        %v8684 = vshrl.u32 %v8643, 16
        %v8686 = vrot.slane %v8684, 4
        %v8687 = vshll.u32 %v8643, 16
        %v8689 = vrot.slane %v8687, 5
        %v8690 = vor.u32 %v8686, %v8689
        %v8691 = vrot.slane %v8690, 4
        %v8693 = vshll.u32 %v8644, 16
        %v8695 = vrot.slane %v8693, 5
        %v8696 = vsel %vm4323, %v8691, %v8695
        %v8698 = vshrl.u32 %v8645, 16
        %v8700 = vrot.slane %v8698, 4
        %v8701 = vshll.u32 %v8645, 16
        %v8703 = vrot.slane %v8701, 5
        %v8704 = vor.u32 %v8700, %v8703
        %v8705 = vrot.slane %v8704, 4
        %v8707 = vshll.u32 %v8646, 16
        %v8709 = vrot.slane %v8707, 5
        %v8710 = vsel %vm4323, %v8705, %v8709
        %v8712 = vshrl.u32 %v8647, 16
        %v8714 = vrot.slane %v8712, 4
        %v8715 = vshll.u32 %v8647, 16
        %v8717 = vrot.slane %v8715, 5
        %v8718 = vor.u32 %v8714, %v8717
        %v8719 = vrot.slane %v8718, 4
        %v8721 = vshll.u32 %v8648, 16
        %v8723 = vrot.slane %v8721, 5
        %v8724 = vsel %vm4323, %v8719, %v8723
        %v8726 = vshrl.u32 %v8649, 16
        %v8728 = vrot.slane %v8726, 4
        %v8729 = vshll.u32 %v8649, 16
        %v8731 = vrot.slane %v8729, 5
        %v8732 = vor.u32 %v8728, %v8731
        %v8733 = vrot.slane %v8732, 4
        %v8735 = vshll.u32 %v8650, 16
        %v8737 = vrot.slane %v8735, 5
        %v8738 = vsel %vm4323, %v8733, %v8737
        %v8740 = vshrl.u32 %v8651, 16
        %v8742 = vrot.slane %v8740, 4
        %v8743 = vshll.u32 %v8651, 16
        %v8745 = vrot.slane %v8743, 5
        %v8746 = vor.u32 %v8742, %v8745
        %v8747 = vrot.slane %v8746, 4
        %v8749 = vshll.u32 %v8652, 16
        %v8751 = vrot.slane %v8749, 5
        %v8752 = vsel %vm4323, %v8747, %v8751
        %v8754 = vshrl.u32 %v8653, 16
        %v8756 = vrot.slane %v8754, 4
        %v8757 = vshll.u32 %v8653, 16
        %v8759 = vrot.slane %v8757, 5
        %v8760 = vor.u32 %v8756, %v8759
        %v8761 = vrot.slane %v8760, 4
        %v8763 = vshll.u32 %v8654, 16
        %v8765 = vrot.slane %v8763, 5
        %v8766 = vsel %vm4323, %v8761, %v8765
        %s8767 = scalar_lea.vmem [#allocation9], 1680
        %v8768 = vld [vmem:[%s8767] sm:$0xff]
        %v8769 = vld [vmem:[%s8767 + $0x8] sm:$0xf]
        %v8770 = vld [vmem:[%s8767 + $0xc] sm:$0xff]
        %v8771 = vld [vmem:[%s8767 + $0x14] sm:$0xf]
        %v8772 = vld [vmem:[%s8767 + $0x18] sm:$0xff]
        %v8773 = vld [vmem:[%s8767 + $0x20] sm:$0xf]
        %v8774 = vld [vmem:[%s8767 + $0x24] sm:$0xff]
        %v8775 = vld [vmem:[%s8767 + $0x2c] sm:$0xf]
        %v8776 = vld [vmem:[%s8767 + $0x30] sm:$0xff]
        %v8777 = vld [vmem:[%s8767 + $0x38] sm:$0xf]
        %v8778 = vld [vmem:[%s8767 + $0x3c] sm:$0xff]
        %v8779 = vld [vmem:[%s8767 + $0x44] sm:$0xf]
        %v8780 = vld [vmem:[%s8767 + $0x48] sm:$0xff]
        %v8781 = vld [vmem:[%s8767 + $0x50] sm:$0xf]
        %v8782 = vld [vmem:[%s8767 + $0x54] sm:$0xff]
        %v8783 = vld [vmem:[%s8767 + $0x5c] sm:$0xf]
        %v8784 = vld [vmem:[%s8767 + $0x60] sm:$0xff]
        %v8785 = vld [vmem:[%s8767 + $0x68] sm:$0xf]
        %v8786 = vld [vmem:[%s8767 + $0x6c] sm:$0xff]
        %v8787 = vld [vmem:[%s8767 + $0x74] sm:$0xf]
        %v8788 = vld [vmem:[%s8767 + $0x78] sm:$0xff]
        %v8789 = vld [vmem:[%s8767 + $0x80] sm:$0xf]
        %v8790 = vld [vmem:[%s8767 + $0x84] sm:$0xff]
        %v8791 = vld [vmem:[%s8767 + $0x8c] sm:$0xf]
        %v8792 = vld [vmem:[%s8767 + $0x90] sm:$0xff]
        %v8793 = vld [vmem:[%s8767 + $0x98] sm:$0xf]
        %v8794 = vld [vmem:[%s8767 + $0x9c] sm:$0xff]
        %v8795 = vld [vmem:[%s8767 + $0xa4] sm:$0xf]
        %v8796 = vld [vmem:[%s8767 + $0xa8] sm:$0xff]
        %v8797 = vld [vmem:[%s8767 + $0xb0] sm:$0xf]
        %v8798 = vld [vmem:[%s8767 + $0xb4] sm:$0xff]
        %v8799 = vld [vmem:[%s8767 + $0xbc] sm:$0xf]
        %v8800 = vld [vmem:[%s8767 + $0xc0] sm:$0xff]
        %v8801 = vld [vmem:[%s8767 + $0xc8] sm:$0xf]
        %v8802 = vld [vmem:[%s8767 + $0xcc] sm:$0xff]
        %v8803 = vld [vmem:[%s8767 + $0xd4] sm:$0xf]
        %v8804 = vld [vmem:[%s8767 + $0xd8] sm:$0xff]
        %v8805 = vld [vmem:[%s8767 + $0xe0] sm:$0xf]
        %v8806 = vld [vmem:[%s8767 + $0xe4] sm:$0xff]
        %v8807 = vld [vmem:[%s8767 + $0xec] sm:$0xf]
        %v8808 = vunpack.c.l.b16 %v8668
        %v8809 = vunpack.c.h.b16 %v8668
        %v8810 = vunpack.c.l.b16 %v8682
        %v8811 = vunpack.c.h.b16 %v8682
        %v8812 = vunpack.c.l.b16 %v8696
        %v8813 = vunpack.c.h.b16 %v8696
        %v8814 = vunpack.c.l.b16 %v8710
        %v8815 = vunpack.c.h.b16 %v8710
        %v8816 = vunpack.c.l.b16 %v8724
        %v8817 = vunpack.c.h.b16 %v8724
        %v8818 = vunpack.c.l.b16 %v8738
        %v8819 = vunpack.c.h.b16 %v8738
        %v8820 = vunpack.c.l.b16 %v8752
        %v8821 = vunpack.c.h.b16 %v8752
        %v8822 = vunpack.c.l.b16 %v8766
        %v8823 = vunpack.c.h.b16 %v8766
        %v8824 = vpack.c.b16 %v8810, %v8808
        %v8825 = vpack.c.b16 %v8811, %v8809
        %v8826 = vpack.c.b16 %v8814, %v8812
        %v8827 = vpack.c.b16 %v8815, %v8813
        %v8828 = vpack.c.b16 %v8818, %v8816
        %v8829 = vpack.c.b16 %v8819, %v8817
        %v8830 = vpack.c.b16 %v8822, %v8820
        %v8831 = vpack.c.b16 %v8823, %v8821
        %v8876 = vunpack.c.l.b16 %v8768
        %v8877 = vunpack.c.h.b16 %v8768
        %v8878 = vunpack.c.l.b16 %v8769
        %v8879 = vunpack.c.l.b16 %v8770
        %v8880 = vunpack.c.h.b16 %v8770
        %v8881 = vunpack.c.l.b16 %v8771
        %v8882 = vunpack.c.l.b16 %v8772
        %v8883 = vunpack.c.h.b16 %v8772
        %v8884 = vunpack.c.l.b16 %v8773
        %v8885 = vunpack.c.l.b16 %v8774
        %v8886 = vunpack.c.h.b16 %v8774
        %v8887 = vunpack.c.l.b16 %v8775
        %v8888 = vunpack.c.l.b16 %v8776
        %v8889 = vunpack.c.h.b16 %v8776
        %v8890 = vunpack.c.l.b16 %v8777
        %v8891 = vunpack.c.l.b16 %v8778
        %v8892 = vunpack.c.h.b16 %v8778
        %v8893 = vunpack.c.l.b16 %v8779
        %v8894 = vunpack.c.l.b16 %v8780
        %v8895 = vunpack.c.h.b16 %v8780
        %v8896 = vunpack.c.l.b16 %v8781
        %v8897 = vunpack.c.l.b16 %v8782
        %v8898 = vunpack.c.h.b16 %v8782
        %v8899 = vunpack.c.l.b16 %v8783
        %v8900 = vunpack.c.l.b16 %v8784
        %v8901 = vunpack.c.h.b16 %v8784
        %v8902 = vunpack.c.l.b16 %v8785
        %v8903 = vunpack.c.l.b16 %v8786
        %v8904 = vunpack.c.h.b16 %v8786
        %v8905 = vunpack.c.l.b16 %v8787
        %v8906 = vunpack.c.l.b16 %v8788
        %v8907 = vunpack.c.h.b16 %v8788
        %v8908 = vunpack.c.l.b16 %v8789
        %v8909 = vunpack.c.l.b16 %v8790
        %v8910 = vunpack.c.h.b16 %v8790
        %v8911 = vunpack.c.l.b16 %v8791
        %v8912 = vunpack.c.l.b16 %v8792
        %v8913 = vunpack.c.h.b16 %v8792
        %v8914 = vunpack.c.l.b16 %v8793
        %v8915 = vunpack.c.l.b16 %v8794
        %v8916 = vunpack.c.h.b16 %v8794
        %v8917 = vunpack.c.l.b16 %v8795
        %v8918 = vunpack.c.l.b16 %v8796
        %v8919 = vunpack.c.h.b16 %v8796
        %v8920 = vunpack.c.l.b16 %v8797
        %v8921 = vunpack.c.l.b16 %v8798
        %v8922 = vunpack.c.h.b16 %v8798
        %v8923 = vunpack.c.l.b16 %v8799
        %v8924 = vunpack.c.l.b16 %v8800
        %v8925 = vunpack.c.h.b16 %v8800
        %v8926 = vunpack.c.l.b16 %v8801
        %v8927 = vunpack.c.l.b16 %v8802
        %v8928 = vunpack.c.h.b16 %v8802
        %v8929 = vunpack.c.l.b16 %v8803
        %v8930 = vunpack.c.l.b16 %v8804
        %v8931 = vunpack.c.h.b16 %v8804
        %v8932 = vunpack.c.l.b16 %v8805
        %v8933 = vunpack.c.l.b16 %v8806
        %v8934 = vunpack.c.h.b16 %v8806
        %v8935 = vunpack.c.l.b16 %v8807
        %v8936 = vpack.c.b16 %v8879, %v8876
        %v8937 = vpack.c.b16 %v8880, %v8877
        %v8938 = vpack.c.b16 %v8881, %v8878
        %v8939 = vpack.c.b16 %v8885, %v8882
        %v8940 = vpack.c.b16 %v8886, %v8883
        %v8941 = vpack.c.b16 %v8887, %v8884
        %v8942 = vpack.c.b16 %v8891, %v8888
        %v8943 = vpack.c.b16 %v8892, %v8889
        %v8944 = vpack.c.b16 %v8893, %v8890
        %v8945 = vpack.c.b16 %v8897, %v8894
        %v8946 = vpack.c.b16 %v8898, %v8895
        %v8947 = vpack.c.b16 %v8899, %v8896
        %v8948 = vpack.c.b16 %v8903, %v8900
        %v8949 = vpack.c.b16 %v8904, %v8901
        %v8950 = vpack.c.b16 %v8905, %v8902
        %v8951 = vpack.c.b16 %v8909, %v8906
        %v8952 = vpack.c.b16 %v8910, %v8907
        %v8953 = vpack.c.b16 %v8911, %v8908
        %v8954 = vpack.c.b16 %v8915, %v8912
        %v8955 = vpack.c.b16 %v8916, %v8913
        %v8956 = vpack.c.b16 %v8917, %v8914
        %v8957 = vpack.c.b16 %v8921, %v8918
        %v8958 = vpack.c.b16 %v8922, %v8919
        %v8959 = vpack.c.b16 %v8923, %v8920
        %v8960 = vpack.c.b16 %v8927, %v8924
        %v8961 = vpack.c.b16 %v8928, %v8925
        %v8962 = vpack.c.b16 %v8929, %v8926
        %v8963 = vpack.c.b16 %v8933, %v8930
        %v8964 = vpack.c.b16 %v8934, %v8931
        %v8965 = vpack.c.b16 %v8935, %v8932
        %v8997 = vsel %vm4665, %v8825, 0
        %v9000 = vsel %vm4665, %v8827, 0
        %v9003 = vsel %vm4665, %v8829, 0
        %v9006 = vsel %vm4665, %v8831, 0
        %9008 = vmatprep.subr.bf16.mxu0 %v8958
        %9009 = vmatpush1.bf16.msra.mxu0 %v8957
        %9010 = vmatprep.subr.bf16.mxu0 %v8955
        %9011 = vmatpush1.bf16.msra.mxu0 %v8954
        %9012 = vmatprep.subr.bf16.mxu0 %v8952
        %9013 = vmatpush1.bf16.msra.mxu0 %v8951
        %9014 = vmatprep.subr.bf16.mxu0 %v8949
        %9015 = vmatpush1.bf16.msra.mxu0 %v8948
        %9016 = vmatprep.subr.bf16.mxu0 %v8946
        %9017 = vmatpush1.bf16.msra.mxu0 %v8945
        %9018 = vmatprep.subr.bf16.mxu0 %v8943
        %9019 = vmatpush1.bf16.msra.mxu0 %v8942
        %9020 = vmatprep.subr.bf16.mxu0 %v8940
        %9021 = vmatpush1.bf16.msra.mxu0 %v8939
        %9022 = vmatprep.subr.bf16.mxu0 %v8937
        %9023 = vmatpush1.bf16.msra.mxu0 %v8936
        %9024 = vmatprep.subr.bf16.mxu0 0
        %9025 = vmatpush2.bf16.msra.mxu0 0
        %9026 = vmatprep.subr.bf16.mxu0 0
        %9027 = vmatpush2.bf16.msra.mxu0 0
        %9028 = vmatprep.subr.bf16.mxu0 0
        %9029 = vmatpush2.bf16.msra.mxu0 0
        %9030 = vmatprep.subr.bf16.mxu0 0
        %9031 = vmatpush2.bf16.msra.mxu0 0
        %9032 = vmatprep.subr.bf16.mxu0 0
        %9033 = vmatpush2.bf16.msra.mxu0 0
        %9034 = vmatprep.subr.bf16.mxu0 0
        %9035 = vmatpush2.bf16.msra.mxu0 0
        %9036 = vmatprep.subr.bf16.mxu0 %v8964
        %9037 = vmatpush2.bf16.msra.mxu0 %v8963
        %9038 = vmatprep.subr.bf16.mxu0 %v8961
        %9039 = vmatpush2.bf16.msra.mxu0 %v8960
        %9040 = vmatprep.mubr.bf16.mxu0 %v8997
        %9041 = vmatmul.mubr.bf16.gmra.mxu0 %v8824
        %v9042 = vpop.f32.mrf.mxu0
        %v9043 = vadd.f32 0.0, %v9042
        %v9044 = vpop.f32.mrf.mxu0
        %v9045 = vadd.f32 0.0, %v9044
        %v9046 = vpop.f32.mrf.mxu0
        %v9047 = vadd.f32 0.0, %v9046
        %v9048 = vpop.f32.mrf.mxu0
        %v9049 = vadd.f32 0.0, %v9048
        %9050 = vmatprep.mubr.bf16.mxu0 %v9000
        %9051 = vmatmul.mubr.bf16.gmra.mxu0 %v8826
        %v9052 = vpop.f32.mrf.mxu0
        %v9053 = vadd.f32 0.0, %v9052
        %v9054 = vpop.f32.mrf.mxu0
        %v9055 = vadd.f32 0.0, %v9054
        %v9056 = vpop.f32.mrf.mxu0
        %v9057 = vadd.f32 0.0, %v9056
        %v9058 = vpop.f32.mrf.mxu0
        %v9059 = vadd.f32 0.0, %v9058
        %9060 = vmatprep.mubr.bf16.mxu0 %v9003
        %9061 = vmatmul.mubr.bf16.gmra.mxu0 %v8828
        %v9062 = vpop.f32.mrf.mxu0
        %v9063 = vadd.f32 0.0, %v9062
        %v9064 = vpop.f32.mrf.mxu0
        %v9065 = vadd.f32 0.0, %v9064
        %v9066 = vpop.f32.mrf.mxu0
        %v9067 = vadd.f32 0.0, %v9066
        %v9068 = vpop.f32.mrf.mxu0
        %v9069 = vadd.f32 0.0, %v9068
        %9070 = vmatprep.mubr.bf16.mxu0 %v9006
        %9071 = vmatmul.mubr.bf16.gmra.mxu0 %v8830
        %v9072 = vpop.f32.mrf.mxu0
        %v9073 = vadd.f32 0.0, %v9072
        %v9074 = vpop.f32.mrf.mxu0
        %v9075 = vadd.f32 0.0, %v9074
        %v9076 = vpop.f32.mrf.mxu0
        %v9077 = vadd.f32 0.0, %v9076
        %v9078 = vpop.f32.mrf.mxu0
        %v9079 = vadd.f32 0.0, %v9078
        %9080 = vdwg.mxu0
        %9081 = vmatprep.subr.bf16.mxu0 0
        %9082 = vmatpush1.bf16.msra.mxu0 %v8959
        %9083 = vmatprep.subr.bf16.mxu0 0
        %9084 = vmatpush1.bf16.msra.mxu0 %v8956
        %9085 = vmatprep.subr.bf16.mxu0 0
        %9086 = vmatpush1.bf16.msra.mxu0 %v8953
        %9087 = vmatprep.subr.bf16.mxu0 0
        %9088 = vmatpush1.bf16.msra.mxu0 %v8950
        %9089 = vmatprep.subr.bf16.mxu0 0
        %9090 = vmatpush1.bf16.msra.mxu0 %v8947
        %9091 = vmatprep.subr.bf16.mxu0 0
        %9092 = vmatpush1.bf16.msra.mxu0 %v8944
        %9093 = vmatprep.subr.bf16.mxu0 0
        %9094 = vmatpush1.bf16.msra.mxu0 %v8941
        %9095 = vmatprep.subr.bf16.mxu0 0
        %9096 = vmatpush1.bf16.msra.mxu0 %v8938
        %9097 = vmatprep.subr.bf16.mxu0 0
        %9098 = vmatpush2.bf16.msra.mxu0 0
        %9099 = vmatprep.subr.bf16.mxu0 0
        %9100 = vmatpush2.bf16.msra.mxu0 0
        %9101 = vmatprep.subr.bf16.mxu0 0
        %9102 = vmatpush2.bf16.msra.mxu0 0
        %9103 = vmatprep.subr.bf16.mxu0 0
        %9104 = vmatpush2.bf16.msra.mxu0 0
        %9105 = vmatprep.subr.bf16.mxu0 0
        %9106 = vmatpush2.bf16.msra.mxu0 0
        %9107 = vmatprep.subr.bf16.mxu0 0
        %9108 = vmatpush2.bf16.msra.mxu0 0
        %9109 = vmatprep.subr.bf16.mxu0 0
        %9110 = vmatpush2.bf16.msra.mxu0 %v8965
        %9111 = vmatprep.subr.bf16.mxu0 0
        %9112 = vmatpush2.bf16.msra.mxu0 %v8962
        %9113 = vmatprep.mubr.bf16.mxu0 %v8997
        %9114 = vmatmul.mubr.bf16.gmra.mxu0 %v8824
        %v9115 = vpop.f32.mrf.mxu0
        %v9116 = vadd.f32 0.0, %v9115
        %v9117 = vpop.f32.mrf.mxu0
        %v9118 = vpop.f32.mrf.mxu0
        %v9119 = vadd.f32 0.0, %v9118
        %v9120 = vpop.f32.mrf.mxu0
        %9121 = vmatprep.mubr.bf16.mxu0 %v9000
        %9122 = vmatmul.mubr.bf16.gmra.mxu0 %v8826
        %v9123 = vpop.f32.mrf.mxu0
        %v9124 = vadd.f32 0.0, %v9123
        %v9125 = vpop.f32.mrf.mxu0
        %v9126 = vpop.f32.mrf.mxu0
        %v9127 = vadd.f32 0.0, %v9126
        %v9128 = vpop.f32.mrf.mxu0
        %9129 = vmatprep.mubr.bf16.mxu0 %v9003
        %9130 = vmatmul.mubr.bf16.gmra.mxu0 %v8828
        %v9131 = vpop.f32.mrf.mxu0
        %v9132 = vadd.f32 0.0, %v9131
        %v9133 = vpop.f32.mrf.mxu0
        %v9134 = vpop.f32.mrf.mxu0
        %v9135 = vadd.f32 0.0, %v9134
        %v9136 = vpop.f32.mrf.mxu0
        %9137 = vmatprep.mubr.bf16.mxu0 %v9006
        %9138 = vmatmul.mubr.bf16.gmra.mxu0 %v8830
        %v9139 = vpop.f32.mrf.mxu0
        %v9140 = vadd.f32 0.0, %v9139
        %v9141 = vpop.f32.mrf.mxu0
        %v9142 = vpop.f32.mrf.mxu0
        %v9143 = vadd.f32 0.0, %v9142
        %v9144 = vpop.f32.mrf.mxu0
        %9145 = vdwg.mxu0
        %v9146 = vadd.f32 %v8484, %v9043
        %v9147 = vadd.f32 %v8485, %v9045
        %v9148 = vadd.f32 %v8486, %v9116
        %v9149 = vadd.f32 %v8487, %v9047
        %v9150 = vadd.f32 %v8488, %v9049
        %v9151 = vadd.f32 %v8489, %v9119
        %v9152 = vadd.f32 %v8490, %v9053
        %v9153 = vadd.f32 %v8491, %v9055
        %v9154 = vadd.f32 %v8492, %v9124
        %v9155 = vadd.f32 %v8493, %v9057
        %v9156 = vadd.f32 %v8494, %v9059
        %v9157 = vadd.f32 %v8495, %v9127
        %v9158 = vadd.f32 %v8496, %v9063
        %v9159 = vadd.f32 %v8497, %v9065
        %v9160 = vadd.f32 %v8498, %v9132
        %v9161 = vadd.f32 %v8499, %v9067
        %v9162 = vadd.f32 %v8500, %v9069
        %v9163 = vadd.f32 %v8501, %v9135
        %v9164 = vadd.f32 %v8502, %v9073
        %v9165 = vadd.f32 %v8503, %v9075
        %v9166 = vadd.f32 %v8504, %v9140
        %v9167 = vadd.f32 %v8505, %v9077
        %v9168 = vadd.f32 %v8506, %v9079
        %v9169 = vadd.f32 %v8507, %v9143
        %v9170 = vld [vmem:[%s8508] sm:$0xf]
        %v9171 = vld [vmem:[%s8508 + $0x4] sm:$0x1]
        %v9172 = vld [vmem:[%s8508 + $0x8] sm:$0xf]
        %v9173 = vld [vmem:[%s8508 + $0xc] sm:$0x1]
        %v9174 = vld [vmem:[%s8508 + $0x10] sm:$0xf]
        %v9175 = vld [vmem:[%s8508 + $0x14] sm:$0x1]
        %v9176 = vld [vmem:[%s8508 + $0x18] sm:$0xf]
        %v9177 = vld [vmem:[%s8508 + $0x1c] sm:$0x1]
        %v9178 = vld [vmem:[%s8508 + $0x20] sm:$0xf]
        %v9179 = vld [vmem:[%s8508 + $0x24] sm:$0x1]
        %v9180 = vld [vmem:[%s8508 + $0x28] sm:$0xf]
        %v9181 = vld [vmem:[%s8508 + $0x2c] sm:$0x1]
        %v9182 = vld [vmem:[%s8508 + $0x30] sm:$0xf]
        %v9183 = vld [vmem:[%s8508 + $0x34] sm:$0x1]
        %v9184 = vld [vmem:[%s8508 + $0x38] sm:$0xf]
        %v9185 = vld [vmem:[%s8508 + $0x3c] sm:$0x1]
        %v9187 = vshrl.u32 %v9170, 16
        %v9189 = vrot.slane %v9187, 4
        %v9190 = vshll.u32 %v9170, 16
        %v9192 = vrot.slane %v9190, 5
        %v9193 = vor.u32 %v9189, %v9192
        %v9194 = vrot.slane %v9193, 4
        %v9196 = vshll.u32 %v9171, 16
        %v9198 = vrot.slane %v9196, 5
        %v9199 = vsel %vm4323, %v9194, %v9198
        %v9201 = vshrl.u32 %v9172, 16
        %v9203 = vrot.slane %v9201, 4
        %v9204 = vshll.u32 %v9172, 16
        %v9206 = vrot.slane %v9204, 5
        %v9207 = vor.u32 %v9203, %v9206
        %v9208 = vrot.slane %v9207, 4
        %v9210 = vshll.u32 %v9173, 16
        %v9212 = vrot.slane %v9210, 5
        %v9213 = vsel %vm4323, %v9208, %v9212
        %v9215 = vshrl.u32 %v9174, 16
        %v9217 = vrot.slane %v9215, 4
        %v9218 = vshll.u32 %v9174, 16
        %v9220 = vrot.slane %v9218, 5
        %v9221 = vor.u32 %v9217, %v9220
        %v9222 = vrot.slane %v9221, 4
        %v9224 = vshll.u32 %v9175, 16
        %v9226 = vrot.slane %v9224, 5
        %v9227 = vsel %vm4323, %v9222, %v9226
        %v9229 = vshrl.u32 %v9176, 16
        %v9231 = vrot.slane %v9229, 4
        %v9232 = vshll.u32 %v9176, 16
        %v9234 = vrot.slane %v9232, 5
        %v9235 = vor.u32 %v9231, %v9234
        %v9236 = vrot.slane %v9235, 4
        %v9238 = vshll.u32 %v9177, 16
        %v9240 = vrot.slane %v9238, 5
        %v9241 = vsel %vm4323, %v9236, %v9240
        %v9243 = vshrl.u32 %v9178, 16
        %v9245 = vrot.slane %v9243, 4
        %v9246 = vshll.u32 %v9178, 16
        %v9248 = vrot.slane %v9246, 5
        %v9249 = vor.u32 %v9245, %v9248
        %v9250 = vrot.slane %v9249, 4
        %v9252 = vshll.u32 %v9179, 16
        %v9254 = vrot.slane %v9252, 5
        %v9255 = vsel %vm4323, %v9250, %v9254
        %v9257 = vshrl.u32 %v9180, 16
        %v9259 = vrot.slane %v9257, 4
        %v9260 = vshll.u32 %v9180, 16
        %v9262 = vrot.slane %v9260, 5
        %v9263 = vor.u32 %v9259, %v9262
        %v9264 = vrot.slane %v9263, 4
        %v9266 = vshll.u32 %v9181, 16
        %v9268 = vrot.slane %v9266, 5
        %v9269 = vsel %vm4323, %v9264, %v9268
        %v9271 = vshrl.u32 %v9182, 16
        %v9273 = vrot.slane %v9271, 4
        %v9274 = vshll.u32 %v9182, 16
        %v9276 = vrot.slane %v9274, 5
        %v9277 = vor.u32 %v9273, %v9276
        %v9278 = vrot.slane %v9277, 4
        %v9280 = vshll.u32 %v9183, 16
        %v9282 = vrot.slane %v9280, 5
        %v9283 = vsel %vm4323, %v9278, %v9282
        %v9285 = vshrl.u32 %v9184, 16
        %v9287 = vrot.slane %v9285, 4
        %v9288 = vshll.u32 %v9184, 16
        %v9290 = vrot.slane %v9288, 5
        %v9291 = vor.u32 %v9287, %v9290
        %v9292 = vrot.slane %v9291, 4
        %v9294 = vshll.u32 %v9185, 16
        %v9296 = vrot.slane %v9294, 5
        %v9297 = vsel %vm4323, %v9292, %v9296
        %s9298 = scalar_lea.vmem [#allocation12], 112
        %v9299 = vld [vmem:[%s9298] sm:$0xf]
        %v9300 = vld [vmem:[%s9298 + $0x4] sm:$0xf]
        %v9301 = vld [vmem:[%s9298 + $0x8] sm:$0xf]
        %v9302 = vld [vmem:[%s9298 + $0xc] sm:$0xf]
        %v9303 = vunpack.c.l.b16 %v9199
        %v9304 = vunpack.c.l.b16 %v9213
        %v9305 = vunpack.c.l.b16 %v9227
        %v9306 = vunpack.c.l.b16 %v9241
        %v9307 = vunpack.c.l.b16 %v9255
        %v9308 = vunpack.c.l.b16 %v9269
        %v9309 = vunpack.c.l.b16 %v9283
        %v9310 = vunpack.c.l.b16 %v9297
        %v9311 = vpack.c.b16 %v9304, %v9303
        %v9312 = vpack.c.b16 %v9306, %v9305
        %v9313 = vpack.c.b16 %v9308, %v9307
        %v9314 = vpack.c.b16 %v9310, %v9309
        %v9319 = vunpack.c.l.b16 %v9299
        %v9320 = vunpack.c.l.b16 %v9300
        %v9321 = vunpack.c.l.b16 %v9301
        %v9322 = vunpack.c.l.b16 %v9302
        %v9323 = vpack.c.b16 %v9320, %v9319
        %v9324 = vpack.c.b16 %v9322, %v9321
        %v9328 = vsel %vm4665, %v9311, 0
        %v9331 = vsel %vm4665, %v9312, 0
        %v9334 = vsel %vm4665, %v9313, 0
        %v9337 = vsel %vm4665, %v9314, 0
        %9339 = vmatprep.subr.bf16.mxu0 0
        %9340 = vmatpush1.bf16.msra.mxu0 0
        %9341 = vmatprep.subr.bf16.mxu0 0
        %9342 = vmatpush1.bf16.msra.mxu0 0
        %9343 = vmatprep.subr.bf16.mxu0 0
        %9344 = vmatpush1.bf16.msra.mxu0 0
        %9345 = vmatprep.subr.bf16.mxu0 0
        %9346 = vmatpush1.bf16.msra.mxu0 0
        %9347 = vmatprep.subr.bf16.mxu0 0
        %9348 = vmatpush1.bf16.msra.mxu0 0
        %9349 = vmatprep.subr.bf16.mxu0 0
        %9350 = vmatpush1.bf16.msra.mxu0 0
        %9351 = vmatprep.subr.bf16.mxu0 0
        %9352 = vmatpush1.bf16.msra.mxu0 %v9324
        %9353 = vmatprep.subr.bf16.mxu0 0
        %9354 = vmatpush1.bf16.msra.mxu0 %v9323
        %9355 = vmatprep.subr.bf16.mxu0 0
        %9356 = vmatpush2.bf16.msra.mxu0 0
        %9357 = vmatprep.subr.bf16.mxu0 0
        %9358 = vmatpush2.bf16.msra.mxu0 0
        %9359 = vmatprep.subr.bf16.mxu0 0
        %9360 = vmatpush2.bf16.msra.mxu0 0
        %9361 = vmatprep.subr.bf16.mxu0 0
        %9362 = vmatpush2.bf16.msra.mxu0 0
        %9363 = vmatprep.subr.bf16.mxu0 0
        %9364 = vmatpush2.bf16.msra.mxu0 0
        %9365 = vmatprep.subr.bf16.mxu0 0
        %9366 = vmatpush2.bf16.msra.mxu0 0
        %9367 = vmatprep.subr.bf16.mxu0 0
        %9368 = vmatpush2.bf16.msra.mxu0 0
        %9369 = vmatprep.subr.bf16.mxu0 0
        %9370 = vmatpush2.bf16.msra.mxu0 0
        %9371 = vmatprep.mubr.bf16.mxu0 0
        %9372 = vmatmul.mubr.bf16.gmra.mxu0 %v9328
        %v9373 = vpop.f32.mrf.mxu0
        %v9374 = vadd.f32 0.0, %v9373
        %v9375 = vpop.f32.mrf.mxu0
        %v9376 = vpop.f32.mrf.mxu0
        %v9377 = vadd.f32 0.0, %v9376
        %v9378 = vpop.f32.mrf.mxu0
        %9379 = vmatprep.mubr.bf16.mxu0 0
        %9380 = vmatmul.mubr.bf16.gmra.mxu0 %v9331
        %v9381 = vpop.f32.mrf.mxu0
        %v9382 = vadd.f32 0.0, %v9381
        %v9383 = vpop.f32.mrf.mxu0
        %v9384 = vpop.f32.mrf.mxu0
        %v9385 = vadd.f32 0.0, %v9384
        %v9386 = vpop.f32.mrf.mxu0
        %9387 = vmatprep.mubr.bf16.mxu0 0
        %9388 = vmatmul.mubr.bf16.gmra.mxu0 %v9334
        %v9389 = vpop.f32.mrf.mxu0
        %v9390 = vadd.f32 0.0, %v9389
        %v9391 = vpop.f32.mrf.mxu0
        %v9392 = vpop.f32.mrf.mxu0
        %v9393 = vadd.f32 0.0, %v9392
        %v9394 = vpop.f32.mrf.mxu0
        %9395 = vmatprep.mubr.bf16.mxu0 0
        %9396 = vmatmul.mubr.bf16.gmra.mxu0 %v9337
        %v9397 = vpop.f32.mrf.mxu0
        %v9398 = vadd.f32 0.0, %v9397
        %v9399 = vpop.f32.mrf.mxu0
        %v9400 = vpop.f32.mrf.mxu0
        %v9401 = vadd.f32 0.0, %v9400
        %v9402 = vpop.f32.mrf.mxu0
        %9403 = vdwg.mxu0
        %v9404 = vadd.f32 %v8631, %v9374
        %v9405 = vadd.f32 %v8632, %v9377
        %v9406 = vadd.f32 %v8633, %v9382
        %v9407 = vadd.f32 %v8634, %v9385
        %v9408 = vadd.f32 %v8635, %v9390
        %v9409 = vadd.f32 %v8636, %v9393
        %v9410 = vadd.f32 %v8637, %v9398
        %v9411 = vadd.f32 %v8638, %v9401
        %v9412 = vld [vmem:[%s8088] sm:$0xee]
        %v9413 = vld [vmem:[%s8088 + $0x10] sm:$0xee]
        %v9414 = vld [vmem:[%s8088 + $0x20] sm:$0xee]
        %v9415 = vld [vmem:[%s8088 + $0x30] sm:$0xee]
        %v9416 = vld [vmem:[%s8088 + $0x40] sm:$0xee]
        %v9417 = vld [vmem:[%s8088 + $0x50] sm:$0xee]
        %v9418 = vld [vmem:[%s8088 + $0x60] sm:$0xee]
        %v9419 = vld [vmem:[%s8088 + $0x70] sm:$0xee]
        %v9436 = vrot.slane %v9412, 5
        %v9437 = vrot.slane %v9436, 4
        %v9438 = vrot.slane %v8640, 5
        %v9439 = vsel %vm5531, %v9437, %v9438
        %v9440 = vrot.slane %v9413, 5
        %v9441 = vrot.slane %v9440, 4
        %v9442 = vrot.slane %v8642, 5
        %v9443 = vsel %vm5531, %v9441, %v9442
        %v9444 = vrot.slane %v9414, 5
        %v9445 = vrot.slane %v9444, 4
        %v9446 = vrot.slane %v8644, 5
        %v9447 = vsel %vm5531, %v9445, %v9446
        %v9448 = vrot.slane %v9415, 5
        %v9449 = vrot.slane %v9448, 4
        %v9450 = vrot.slane %v8646, 5
        %v9451 = vsel %vm5531, %v9449, %v9450
        %v9452 = vrot.slane %v9416, 5
        %v9453 = vrot.slane %v9452, 4
        %v9454 = vrot.slane %v8648, 5
        %v9455 = vsel %vm5531, %v9453, %v9454
        %v9456 = vrot.slane %v9417, 5
        %v9457 = vrot.slane %v9456, 4
        %v9458 = vrot.slane %v8650, 5
        %v9459 = vsel %vm5531, %v9457, %v9458
        %v9460 = vrot.slane %v9418, 5
        %v9461 = vrot.slane %v9460, 4
        %v9462 = vrot.slane %v8652, 5
        %v9463 = vsel %vm5531, %v9461, %v9462
        %v9464 = vrot.slane %v9419, 5
        %v9465 = vrot.slane %v9464, 4
        %v9466 = vrot.slane %v8654, 5
        %v9467 = vsel %vm5531, %v9465, %v9466
        %s9468 = scalar_lea.vmem [#allocation9], 1920
        %v9469 = vld [vmem:[%s9468] sm:$0xff]
        %v9470 = vld [vmem:[%s9468 + $0x8] sm:$0xf]
        %v9471 = vld [vmem:[%s9468 + $0xc] sm:$0xff]
        %v9472 = vld [vmem:[%s9468 + $0x14] sm:$0xf]
        %v9473 = vld [vmem:[%s9468 + $0x18] sm:$0xff]
        %v9474 = vld [vmem:[%s9468 + $0x20] sm:$0xf]
        %v9475 = vld [vmem:[%s9468 + $0x24] sm:$0xff]
        %v9476 = vld [vmem:[%s9468 + $0x2c] sm:$0xf]
        %v9477 = vld [vmem:[%s9468 + $0x30] sm:$0xff]
        %v9478 = vld [vmem:[%s9468 + $0x38] sm:$0xf]
        %v9479 = vld [vmem:[%s9468 + $0x3c] sm:$0xff]
        %v9480 = vld [vmem:[%s9468 + $0x44] sm:$0xf]
        %v9481 = vld [vmem:[%s9468 + $0x48] sm:$0xff]
        %v9482 = vld [vmem:[%s9468 + $0x50] sm:$0xf]
        %v9483 = vld [vmem:[%s9468 + $0x54] sm:$0xff]
        %v9484 = vld [vmem:[%s9468 + $0x5c] sm:$0xf]
        %v9485 = vld [vmem:[%s9468 + $0x60] sm:$0xff]
        %v9486 = vld [vmem:[%s9468 + $0x68] sm:$0xf]
        %v9487 = vld [vmem:[%s9468 + $0x6c] sm:$0xff]
        %v9488 = vld [vmem:[%s9468 + $0x74] sm:$0xf]
        %v9489 = vld [vmem:[%s9468 + $0x78] sm:$0xff]
        %v9490 = vld [vmem:[%s9468 + $0x80] sm:$0xf]
        %v9491 = vld [vmem:[%s9468 + $0x84] sm:$0xff]
        %v9492 = vld [vmem:[%s9468 + $0x8c] sm:$0xf]
        %v9493 = vld [vmem:[%s9468 + $0x90] sm:$0xff]
        %v9494 = vld [vmem:[%s9468 + $0x98] sm:$0xf]
        %v9495 = vld [vmem:[%s9468 + $0x9c] sm:$0xff]
        %v9496 = vld [vmem:[%s9468 + $0xa4] sm:$0xf]
        %v9497 = vld [vmem:[%s9468 + $0xa8] sm:$0xff]
        %v9498 = vld [vmem:[%s9468 + $0xb0] sm:$0xf]
        %v9499 = vld [vmem:[%s9468 + $0xb4] sm:$0xff]
        %v9500 = vld [vmem:[%s9468 + $0xbc] sm:$0xf]
        %v9501 = vld [vmem:[%s9468 + $0xc0] sm:$0xff]
        %v9502 = vld [vmem:[%s9468 + $0xc8] sm:$0xf]
        %v9503 = vld [vmem:[%s9468 + $0xcc] sm:$0xff]
        %v9504 = vld [vmem:[%s9468 + $0xd4] sm:$0xf]
        %v9505 = vld [vmem:[%s9468 + $0xd8] sm:$0xff]
        %v9506 = vld [vmem:[%s9468 + $0xe0] sm:$0xf]
        %v9507 = vld [vmem:[%s9468 + $0xe4] sm:$0xff]
        %v9508 = vld [vmem:[%s9468 + $0xec] sm:$0xf]
        %v9509 = vunpack.c.l.b16 %v9439
        %v9510 = vunpack.c.h.b16 %v9439
        %v9511 = vunpack.c.l.b16 %v9443
        %v9512 = vunpack.c.h.b16 %v9443
        %v9513 = vunpack.c.l.b16 %v9447
        %v9514 = vunpack.c.h.b16 %v9447
        %v9515 = vunpack.c.l.b16 %v9451
        %v9516 = vunpack.c.h.b16 %v9451
        %v9517 = vunpack.c.l.b16 %v9455
        %v9518 = vunpack.c.h.b16 %v9455
        %v9519 = vunpack.c.l.b16 %v9459
        %v9520 = vunpack.c.h.b16 %v9459
        %v9521 = vunpack.c.l.b16 %v9463
        %v9522 = vunpack.c.h.b16 %v9463
        %v9523 = vunpack.c.l.b16 %v9467
        %v9524 = vunpack.c.h.b16 %v9467
        %v9525 = vpack.c.b16 %v9511, %v9509
        %v9526 = vpack.c.b16 %v9512, %v9510
        %v9527 = vpack.c.b16 %v9515, %v9513
        %v9528 = vpack.c.b16 %v9516, %v9514
        %v9529 = vpack.c.b16 %v9519, %v9517
        %v9530 = vpack.c.b16 %v9520, %v9518
        %v9531 = vpack.c.b16 %v9523, %v9521
        %v9532 = vpack.c.b16 %v9524, %v9522
        %v9577 = vunpack.c.l.b16 %v9469
        %v9578 = vunpack.c.h.b16 %v9469
        %v9579 = vunpack.c.l.b16 %v9470
        %v9580 = vunpack.c.l.b16 %v9471
        %v9581 = vunpack.c.h.b16 %v9471
        %v9582 = vunpack.c.l.b16 %v9472
        %v9583 = vunpack.c.l.b16 %v9473
        %v9584 = vunpack.c.h.b16 %v9473
        %v9585 = vunpack.c.l.b16 %v9474
        %v9586 = vunpack.c.l.b16 %v9475
        %v9587 = vunpack.c.h.b16 %v9475
        %v9588 = vunpack.c.l.b16 %v9476
        %v9589 = vunpack.c.l.b16 %v9477
        %v9590 = vunpack.c.h.b16 %v9477
        %v9591 = vunpack.c.l.b16 %v9478
        %v9592 = vunpack.c.l.b16 %v9479
        %v9593 = vunpack.c.h.b16 %v9479
        %v9594 = vunpack.c.l.b16 %v9480
        %v9595 = vunpack.c.l.b16 %v9481
        %v9596 = vunpack.c.h.b16 %v9481
        %v9597 = vunpack.c.l.b16 %v9482
        %v9598 = vunpack.c.l.b16 %v9483
        %v9599 = vunpack.c.h.b16 %v9483
        %v9600 = vunpack.c.l.b16 %v9484
        %v9601 = vunpack.c.l.b16 %v9485
        %v9602 = vunpack.c.h.b16 %v9485
        %v9603 = vunpack.c.l.b16 %v9486
        %v9604 = vunpack.c.l.b16 %v9487
        %v9605 = vunpack.c.h.b16 %v9487
        %v9606 = vunpack.c.l.b16 %v9488
        %v9607 = vunpack.c.l.b16 %v9489
        %v9608 = vunpack.c.h.b16 %v9489
        %v9609 = vunpack.c.l.b16 %v9490
        %v9610 = vunpack.c.l.b16 %v9491
        %v9611 = vunpack.c.h.b16 %v9491
        %v9612 = vunpack.c.l.b16 %v9492
        %v9613 = vunpack.c.l.b16 %v9493
        %v9614 = vunpack.c.h.b16 %v9493
        %v9615 = vunpack.c.l.b16 %v9494
        %v9616 = vunpack.c.l.b16 %v9495
        %v9617 = vunpack.c.h.b16 %v9495
        %v9618 = vunpack.c.l.b16 %v9496
        %v9619 = vunpack.c.l.b16 %v9497
        %v9620 = vunpack.c.h.b16 %v9497
        %v9621 = vunpack.c.l.b16 %v9498
        %v9622 = vunpack.c.l.b16 %v9499
        %v9623 = vunpack.c.h.b16 %v9499
        %v9624 = vunpack.c.l.b16 %v9500
        %v9625 = vunpack.c.l.b16 %v9501
        %v9626 = vunpack.c.h.b16 %v9501
        %v9627 = vunpack.c.l.b16 %v9502
        %v9628 = vunpack.c.l.b16 %v9503
        %v9629 = vunpack.c.h.b16 %v9503
        %v9630 = vunpack.c.l.b16 %v9504
        %v9631 = vunpack.c.l.b16 %v9505
        %v9632 = vunpack.c.h.b16 %v9505
        %v9633 = vunpack.c.l.b16 %v9506
        %v9634 = vunpack.c.l.b16 %v9507
        %v9635 = vunpack.c.h.b16 %v9507
        %v9636 = vunpack.c.l.b16 %v9508
        %v9637 = vpack.c.b16 %v9580, %v9577
        %v9638 = vpack.c.b16 %v9581, %v9578
        %v9639 = vpack.c.b16 %v9582, %v9579
        %v9640 = vpack.c.b16 %v9586, %v9583
        %v9641 = vpack.c.b16 %v9587, %v9584
        %v9642 = vpack.c.b16 %v9588, %v9585
        %v9643 = vpack.c.b16 %v9592, %v9589
        %v9644 = vpack.c.b16 %v9593, %v9590
        %v9645 = vpack.c.b16 %v9594, %v9591
        %v9646 = vpack.c.b16 %v9598, %v9595
        %v9647 = vpack.c.b16 %v9599, %v9596
        %v9648 = vpack.c.b16 %v9600, %v9597
        %v9649 = vpack.c.b16 %v9604, %v9601
        %v9650 = vpack.c.b16 %v9605, %v9602
        %v9651 = vpack.c.b16 %v9606, %v9603
        %v9652 = vpack.c.b16 %v9610, %v9607
        %v9653 = vpack.c.b16 %v9611, %v9608
        %v9654 = vpack.c.b16 %v9612, %v9609
        %v9655 = vpack.c.b16 %v9616, %v9613
        %v9656 = vpack.c.b16 %v9617, %v9614
        %v9657 = vpack.c.b16 %v9618, %v9615
        %v9658 = vpack.c.b16 %v9622, %v9619
        %v9659 = vpack.c.b16 %v9623, %v9620
        %v9660 = vpack.c.b16 %v9624, %v9621
        %v9661 = vpack.c.b16 %v9628, %v9625
        %v9662 = vpack.c.b16 %v9629, %v9626
        %v9663 = vpack.c.b16 %v9630, %v9627
        %v9664 = vpack.c.b16 %v9634, %v9631
        %v9665 = vpack.c.b16 %v9635, %v9632
        %v9666 = vpack.c.b16 %v9636, %v9633
        %v9698 = vsel %vm4665, %v9526, 0
        %v9701 = vsel %vm4665, %v9528, 0
        %v9704 = vsel %vm4665, %v9530, 0
        %v9707 = vsel %vm4665, %v9532, 0
        %9709 = vmatprep.subr.bf16.mxu0 %v9659
        %9710 = vmatpush1.bf16.msra.mxu0 %v9658
        %9711 = vmatprep.subr.bf16.mxu0 %v9656
        %9712 = vmatpush1.bf16.msra.mxu0 %v9655
        %9713 = vmatprep.subr.bf16.mxu0 %v9653
        %9714 = vmatpush1.bf16.msra.mxu0 %v9652
        %9715 = vmatprep.subr.bf16.mxu0 %v9650
        %9716 = vmatpush1.bf16.msra.mxu0 %v9649
        %9717 = vmatprep.subr.bf16.mxu0 %v9647
        %9718 = vmatpush1.bf16.msra.mxu0 %v9646
        %9719 = vmatprep.subr.bf16.mxu0 %v9644
        %9720 = vmatpush1.bf16.msra.mxu0 %v9643
        %9721 = vmatprep.subr.bf16.mxu0 %v9641
        %9722 = vmatpush1.bf16.msra.mxu0 %v9640
        %9723 = vmatprep.subr.bf16.mxu0 %v9638
        %9724 = vmatpush1.bf16.msra.mxu0 %v9637
        %9725 = vmatprep.subr.bf16.mxu0 0
        %9726 = vmatpush2.bf16.msra.mxu0 0
        %9727 = vmatprep.subr.bf16.mxu0 0
        %9728 = vmatpush2.bf16.msra.mxu0 0
        %9729 = vmatprep.subr.bf16.mxu0 0
        %9730 = vmatpush2.bf16.msra.mxu0 0
        %9731 = vmatprep.subr.bf16.mxu0 0
        %9732 = vmatpush2.bf16.msra.mxu0 0
        %9733 = vmatprep.subr.bf16.mxu0 0
        %9734 = vmatpush2.bf16.msra.mxu0 0
        %9735 = vmatprep.subr.bf16.mxu0 0
        %9736 = vmatpush2.bf16.msra.mxu0 0
        %9737 = vmatprep.subr.bf16.mxu0 %v9665
        %9738 = vmatpush2.bf16.msra.mxu0 %v9664
        %9739 = vmatprep.subr.bf16.mxu0 %v9662
        %9740 = vmatpush2.bf16.msra.mxu0 %v9661
        %9741 = vmatprep.mubr.bf16.mxu0 %v9698
        %9742 = vmatmul.mubr.bf16.gmra.mxu0 %v9525
        %v9743 = vpop.f32.mrf.mxu0
        %v9744 = vadd.f32 0.0, %v9743
        %v9745 = vpop.f32.mrf.mxu0
        %v9746 = vadd.f32 0.0, %v9745
        %v9747 = vpop.f32.mrf.mxu0
        %v9748 = vadd.f32 0.0, %v9747
        %v9749 = vpop.f32.mrf.mxu0
        %v9750 = vadd.f32 0.0, %v9749
        %9751 = vmatprep.mubr.bf16.mxu0 %v9701
        %9752 = vmatmul.mubr.bf16.gmra.mxu0 %v9527
        %v9753 = vpop.f32.mrf.mxu0
        %v9754 = vadd.f32 0.0, %v9753
        %v9755 = vpop.f32.mrf.mxu0
        %v9756 = vadd.f32 0.0, %v9755
        %v9757 = vpop.f32.mrf.mxu0
        %v9758 = vadd.f32 0.0, %v9757
        %v9759 = vpop.f32.mrf.mxu0
        %v9760 = vadd.f32 0.0, %v9759
        %9761 = vmatprep.mubr.bf16.mxu0 %v9704
        %9762 = vmatmul.mubr.bf16.gmra.mxu0 %v9529
        %v9763 = vpop.f32.mrf.mxu0
        %v9764 = vadd.f32 0.0, %v9763
        %v9765 = vpop.f32.mrf.mxu0
        %v9766 = vadd.f32 0.0, %v9765
        %v9767 = vpop.f32.mrf.mxu0
        %v9768 = vadd.f32 0.0, %v9767
        %v9769 = vpop.f32.mrf.mxu0
        %v9770 = vadd.f32 0.0, %v9769
        %9771 = vmatprep.mubr.bf16.mxu0 %v9707
        %9772 = vmatmul.mubr.bf16.gmra.mxu0 %v9531
        %v9773 = vpop.f32.mrf.mxu0
        %v9774 = vadd.f32 0.0, %v9773
        %v9775 = vpop.f32.mrf.mxu0
        %v9776 = vadd.f32 0.0, %v9775
        %v9777 = vpop.f32.mrf.mxu0
        %v9778 = vadd.f32 0.0, %v9777
        %v9779 = vpop.f32.mrf.mxu0
        %v9780 = vadd.f32 0.0, %v9779
        %9781 = vdwg.mxu0
        %9782 = vmatprep.subr.bf16.mxu0 0
        %9783 = vmatpush1.bf16.msra.mxu0 %v9660
        %9784 = vmatprep.subr.bf16.mxu0 0
        %9785 = vmatpush1.bf16.msra.mxu0 %v9657
        %9786 = vmatprep.subr.bf16.mxu0 0
        %9787 = vmatpush1.bf16.msra.mxu0 %v9654
        %9788 = vmatprep.subr.bf16.mxu0 0
        %9789 = vmatpush1.bf16.msra.mxu0 %v9651
        %9790 = vmatprep.subr.bf16.mxu0 0
        %9791 = vmatpush1.bf16.msra.mxu0 %v9648
        %9792 = vmatprep.subr.bf16.mxu0 0
        %9793 = vmatpush1.bf16.msra.mxu0 %v9645
        %9794 = vmatprep.subr.bf16.mxu0 0
        %9795 = vmatpush1.bf16.msra.mxu0 %v9642
        %9796 = vmatprep.subr.bf16.mxu0 0
        %9797 = vmatpush1.bf16.msra.mxu0 %v9639
        %9798 = vmatprep.subr.bf16.mxu0 0
        %9799 = vmatpush2.bf16.msra.mxu0 0
        %9800 = vmatprep.subr.bf16.mxu0 0
        %9801 = vmatpush2.bf16.msra.mxu0 0
        %9802 = vmatprep.subr.bf16.mxu0 0
        %9803 = vmatpush2.bf16.msra.mxu0 0
        %9804 = vmatprep.subr.bf16.mxu0 0
        %9805 = vmatpush2.bf16.msra.mxu0 0
        %9806 = vmatprep.subr.bf16.mxu0 0
        %9807 = vmatpush2.bf16.msra.mxu0 0
        %9808 = vmatprep.subr.bf16.mxu0 0
        %9809 = vmatpush2.bf16.msra.mxu0 0
        %9810 = vmatprep.subr.bf16.mxu0 0
        %9811 = vmatpush2.bf16.msra.mxu0 %v9666
        %9812 = vmatprep.subr.bf16.mxu0 0
        %9813 = vmatpush2.bf16.msra.mxu0 %v9663
        %9814 = vmatprep.mubr.bf16.mxu0 %v9698
        %9815 = vmatmul.mubr.bf16.gmra.mxu0 %v9525
        %v9816 = vpop.f32.mrf.mxu0
        %v9817 = vadd.f32 0.0, %v9816
        %v9818 = vpop.f32.mrf.mxu0
        %v9819 = vpop.f32.mrf.mxu0
        %v9820 = vadd.f32 0.0, %v9819
        %v9821 = vpop.f32.mrf.mxu0
        %9822 = vmatprep.mubr.bf16.mxu0 %v9701
        %9823 = vmatmul.mubr.bf16.gmra.mxu0 %v9527
        %v9824 = vpop.f32.mrf.mxu0
        %v9825 = vadd.f32 0.0, %v9824
        %v9826 = vpop.f32.mrf.mxu0
        %v9827 = vpop.f32.mrf.mxu0
        %v9828 = vadd.f32 0.0, %v9827
        %v9829 = vpop.f32.mrf.mxu0
        %9830 = vmatprep.mubr.bf16.mxu0 %v9704
        %9831 = vmatmul.mubr.bf16.gmra.mxu0 %v9529
        %v9832 = vpop.f32.mrf.mxu0
        %v9833 = vadd.f32 0.0, %v9832
        %v9834 = vpop.f32.mrf.mxu0
        %v9835 = vpop.f32.mrf.mxu0
        %v9836 = vadd.f32 0.0, %v9835
        %v9837 = vpop.f32.mrf.mxu0
        %9838 = vmatprep.mubr.bf16.mxu0 %v9707
        %9839 = vmatmul.mubr.bf16.gmra.mxu0 %v9531
        %v9840 = vpop.f32.mrf.mxu0
        %v9841 = vadd.f32 0.0, %v9840
        %v9842 = vpop.f32.mrf.mxu0
        %v9843 = vpop.f32.mrf.mxu0
        %v9844 = vadd.f32 0.0, %v9843
        %v9845 = vpop.f32.mrf.mxu0
        %9846 = vdwg.mxu0
        %v9847 = vadd.f32 %v9146, %v9744
        %v9848 = vadd.f32 %v9147, %v9746
        %v9849 = vadd.f32 %v9148, %v9817
        %v9850 = vadd.f32 %v9149, %v9748
        %v9851 = vadd.f32 %v9150, %v9750
        %v9852 = vadd.f32 %v9151, %v9820
        %v9853 = vadd.f32 %v9152, %v9754
        %v9854 = vadd.f32 %v9153, %v9756
        %v9855 = vadd.f32 %v9154, %v9825
        %v9856 = vadd.f32 %v9155, %v9758
        %v9857 = vadd.f32 %v9156, %v9760
        %v9858 = vadd.f32 %v9157, %v9828
        %v9859 = vadd.f32 %v9158, %v9764
        %v9860 = vadd.f32 %v9159, %v9766
        %v9861 = vadd.f32 %v9160, %v9833
        %v9862 = vadd.f32 %v9161, %v9768
        %v9863 = vadd.f32 %v9162, %v9770
        %v9864 = vadd.f32 %v9163, %v9836
        %v9865 = vadd.f32 %v9164, %v9774
        %v9866 = vadd.f32 %v9165, %v9776
        %v9867 = vadd.f32 %v9166, %v9841
        %v9868 = vadd.f32 %v9167, %v9778
        %v9869 = vadd.f32 %v9168, %v9780
        %v9870 = vadd.f32 %v9169, %v9844
        %v9871 = vld [vmem:[%s8508] sm:$0xe]
        %v9872 = vld [vmem:[%s8508 + $0x8] sm:$0xe]
        %v9873 = vld [vmem:[%s8508 + $0x10] sm:$0xe]
        %v9874 = vld [vmem:[%s8508 + $0x18] sm:$0xe]
        %v9875 = vld [vmem:[%s8508 + $0x20] sm:$0xe]
        %v9876 = vld [vmem:[%s8508 + $0x28] sm:$0xe]
        %v9877 = vld [vmem:[%s8508 + $0x30] sm:$0xe]
        %v9878 = vld [vmem:[%s8508 + $0x38] sm:$0xe]
        %v9895 = vrot.slane %v9871, 5
        %v9896 = vrot.slane %v9895, 4
        %v9897 = vrot.slane %v9171, 5
        %v9898 = vsel %vm5531, %v9896, %v9897
        %v9899 = vrot.slane %v9872, 5
        %v9900 = vrot.slane %v9899, 4
        %v9901 = vrot.slane %v9173, 5
        %v9902 = vsel %vm5531, %v9900, %v9901
        %v9903 = vrot.slane %v9873, 5
        %v9904 = vrot.slane %v9903, 4
        %v9905 = vrot.slane %v9175, 5
        %v9906 = vsel %vm5531, %v9904, %v9905
        %v9907 = vrot.slane %v9874, 5
        %v9908 = vrot.slane %v9907, 4
        %v9909 = vrot.slane %v9177, 5
        %v9910 = vsel %vm5531, %v9908, %v9909
        %v9911 = vrot.slane %v9875, 5
        %v9912 = vrot.slane %v9911, 4
        %v9913 = vrot.slane %v9179, 5
        %v9914 = vsel %vm5531, %v9912, %v9913
        %v9915 = vrot.slane %v9876, 5
        %v9916 = vrot.slane %v9915, 4
        %v9917 = vrot.slane %v9181, 5
        %v9918 = vsel %vm5531, %v9916, %v9917
        %v9919 = vrot.slane %v9877, 5
        %v9920 = vrot.slane %v9919, 4
        %v9921 = vrot.slane %v9183, 5
        %v9922 = vsel %vm5531, %v9920, %v9921
        %v9923 = vrot.slane %v9878, 5
        %v9924 = vrot.slane %v9923, 4
        %v9925 = vrot.slane %v9185, 5
        %v9926 = vsel %vm5531, %v9924, %v9925
        %s9927 = scalar_lea.vmem [#allocation12], 128
        %v9928 = vld [vmem:[%s9927] sm:$0xf]
        %v9929 = vld [vmem:[%s9927 + $0x4] sm:$0xf]
        %v9930 = vld [vmem:[%s9927 + $0x8] sm:$0xf]
        %v9931 = vld [vmem:[%s9927 + $0xc] sm:$0xf]
        %v9932 = vunpack.c.l.b16 %v9898
        %v9933 = vunpack.c.l.b16 %v9902
        %v9934 = vunpack.c.l.b16 %v9906
        %v9935 = vunpack.c.l.b16 %v9910
        %v9936 = vunpack.c.l.b16 %v9914
        %v9937 = vunpack.c.l.b16 %v9918
        %v9938 = vunpack.c.l.b16 %v9922
        %v9939 = vunpack.c.l.b16 %v9926
        %v9940 = vpack.c.b16 %v9933, %v9932
        %v9941 = vpack.c.b16 %v9935, %v9934
        %v9942 = vpack.c.b16 %v9937, %v9936
        %v9943 = vpack.c.b16 %v9939, %v9938
        %v9948 = vunpack.c.l.b16 %v9928
        %v9949 = vunpack.c.l.b16 %v9929
        %v9950 = vunpack.c.l.b16 %v9930
        %v9951 = vunpack.c.l.b16 %v9931
        %v9952 = vpack.c.b16 %v9949, %v9948
        %v9953 = vpack.c.b16 %v9951, %v9950
        %v9957 = vsel %vm4665, %v9940, 0
        %v9960 = vsel %vm4665, %v9941, 0
        %v9963 = vsel %vm4665, %v9942, 0
        %v9966 = vsel %vm4665, %v9943, 0
        %9968 = vmatprep.subr.bf16.mxu0 0
        %9969 = vmatpush1.bf16.msra.mxu0 0
        %9970 = vmatprep.subr.bf16.mxu0 0
        %9971 = vmatpush1.bf16.msra.mxu0 0
        %9972 = vmatprep.subr.bf16.mxu0 0
        %9973 = vmatpush1.bf16.msra.mxu0 0
        %9974 = vmatprep.subr.bf16.mxu0 0
        %9975 = vmatpush1.bf16.msra.mxu0 0
        %9976 = vmatprep.subr.bf16.mxu0 0
        %9977 = vmatpush1.bf16.msra.mxu0 0
        %9978 = vmatprep.subr.bf16.mxu0 0
        %9979 = vmatpush1.bf16.msra.mxu0 0
        %9980 = vmatprep.subr.bf16.mxu0 0
        %9981 = vmatpush1.bf16.msra.mxu0 %v9953
        %9982 = vmatprep.subr.bf16.mxu0 0
        %9983 = vmatpush1.bf16.msra.mxu0 %v9952
        %9984 = vmatprep.subr.bf16.mxu0 0
        %9985 = vmatpush2.bf16.msra.mxu0 0
        %9986 = vmatprep.subr.bf16.mxu0 0
        %9987 = vmatpush2.bf16.msra.mxu0 0
        %9988 = vmatprep.subr.bf16.mxu0 0
        %9989 = vmatpush2.bf16.msra.mxu0 0
        %9990 = vmatprep.subr.bf16.mxu0 0
        %9991 = vmatpush2.bf16.msra.mxu0 0
        %9992 = vmatprep.subr.bf16.mxu0 0
        %9993 = vmatpush2.bf16.msra.mxu0 0
        %9994 = vmatprep.subr.bf16.mxu0 0
        %9995 = vmatpush2.bf16.msra.mxu0 0
        %9996 = vmatprep.subr.bf16.mxu0 0
        %9997 = vmatpush2.bf16.msra.mxu0 0
        %9998 = vmatprep.subr.bf16.mxu0 0
        %9999 = vmatpush2.bf16.msra.mxu0 0
        %10000 = vmatprep.mubr.bf16.mxu0 0
        %10001 = vmatmul.mubr.bf16.gmra.mxu0 %v9957
        %v10002 = vpop.f32.mrf.mxu0
        %v10003 = vadd.f32 0.0, %v10002
        %v10004 = vpop.f32.mrf.mxu0
        %v10005 = vpop.f32.mrf.mxu0
        %v10006 = vadd.f32 0.0, %v10005
        %v10007 = vpop.f32.mrf.mxu0
        %10008 = vmatprep.mubr.bf16.mxu0 0
        %10009 = vmatmul.mubr.bf16.gmra.mxu0 %v9960
        %v10010 = vpop.f32.mrf.mxu0
        %v10011 = vadd.f32 0.0, %v10010
        %v10012 = vpop.f32.mrf.mxu0
        %v10013 = vpop.f32.mrf.mxu0
        %v10014 = vadd.f32 0.0, %v10013
        %v10015 = vpop.f32.mrf.mxu0
        %10016 = vmatprep.mubr.bf16.mxu0 0
        %10017 = vmatmul.mubr.bf16.gmra.mxu0 %v9963
        %v10018 = vpop.f32.mrf.mxu0
        %v10019 = vadd.f32 0.0, %v10018
        %v10020 = vpop.f32.mrf.mxu0
        %v10021 = vpop.f32.mrf.mxu0
        %v10022 = vadd.f32 0.0, %v10021
        %v10023 = vpop.f32.mrf.mxu0
        %10024 = vmatprep.mubr.bf16.mxu0 0
        %10025 = vmatmul.mubr.bf16.gmra.mxu0 %v9966
        %v10026 = vpop.f32.mrf.mxu0
        %v10027 = vadd.f32 0.0, %v10026
        %v10028 = vpop.f32.mrf.mxu0
        %v10029 = vpop.f32.mrf.mxu0
        %v10030 = vadd.f32 0.0, %v10029
        %v10031 = vpop.f32.mrf.mxu0
        %10032 = vdwg.mxu0
        %v10033 = vadd.f32 %v9404, %v10003
        %v10034 = vadd.f32 %v9405, %v10006
        %v10035 = vadd.f32 %v9406, %v10011
        %v10036 = vadd.f32 %v9407, %v10014
        %v10037 = vadd.f32 %v9408, %v10019
        %v10038 = vadd.f32 %v9409, %v10022
        %v10039 = vadd.f32 %v9410, %v10027
        %v10040 = vadd.f32 %v9411, %v10030
        %v10041 = vld [vmem:[#allocation10] sm:$0x7]
        %v10043 = vlaneseq
        %v10044 = vshrl.u32 %v10043, 7
        %v10045 = vsub.s32 0, %v10044
        %v10046 = vrot.slane %v10041, %v10045
        %v10047 = vlaneseq
        %v10048 = vshrl.u32 %v10047, 7
        %v10049 = vsub.s32 1, %v10048
        %v10050 = vrot.slane %v10041, %v10049
        %v10051 = vlaneseq
        %v10052 = vshrl.u32 %v10051, 7
        %v10053 = vsub.s32 2, %v10052
        %v10054 = vrot.slane %v10041, %v10053
        %v10058 = vadd.f32 %v9847, %v10046
        %v10059 = vadd.f32 %v9848, %v10050
        %v10060 = vadd.f32 %v9849, %v10054
        %v10061 = vadd.f32 %v9850, %v10046
        %v10062 = vadd.f32 %v9851, %v10050
        %v10063 = vadd.f32 %v9852, %v10054
        %v10064 = vadd.f32 %v9853, %v10046
        %v10065 = vadd.f32 %v9854, %v10050
        %v10066 = vadd.f32 %v9855, %v10054
        %v10067 = vadd.f32 %v9856, %v10046
        %v10068 = vadd.f32 %v9857, %v10050
        %v10069 = vadd.f32 %v9858, %v10054
        %v10070 = vadd.f32 %v9859, %v10046
        %v10071 = vadd.f32 %v9860, %v10050
        %v10072 = vadd.f32 %v9861, %v10054
        %v10073 = vadd.f32 %v9862, %v10046
        %v10074 = vadd.f32 %v9863, %v10050
        %v10075 = vadd.f32 %v9864, %v10054
        %v10076 = vadd.f32 %v9865, %v10046
        %v10077 = vadd.f32 %v9866, %v10050
        %v10078 = vadd.f32 %v9867, %v10054
        %v10079 = vadd.f32 %v9868, %v10046
        %v10080 = vadd.f32 %v9869, %v10050
        %v10081 = vadd.f32 %v9870, %v10054
        %v10082 = vmax.f32 %v10058, 0.0
        %v10083 = vmax.f32 %v10059, 0.0
        %v10084 = vmax.f32 %v10060, 0.0
        %v10085 = vmax.f32 %v10061, 0.0
        %v10086 = vmax.f32 %v10062, 0.0
        %v10087 = vmax.f32 %v10063, 0.0
        %v10088 = vmax.f32 %v10064, 0.0
        %v10089 = vmax.f32 %v10065, 0.0
        %v10090 = vmax.f32 %v10066, 0.0
        %v10091 = vmax.f32 %v10067, 0.0
        %v10092 = vmax.f32 %v10068, 0.0
        %v10093 = vmax.f32 %v10069, 0.0
        %v10094 = vmax.f32 %v10070, 0.0
        %v10095 = vmax.f32 %v10071, 0.0
        %v10096 = vmax.f32 %v10072, 0.0
        %v10097 = vmax.f32 %v10073, 0.0
        %v10098 = vmax.f32 %v10074, 0.0
        %v10099 = vmax.f32 %v10075, 0.0
        %v10100 = vmax.f32 %v10076, 0.0
        %v10101 = vmax.f32 %v10077, 0.0
        %v10102 = vmax.f32 %v10078, 0.0
        %v10103 = vmax.f32 %v10079, 0.0
        %v10104 = vmax.f32 %v10080, 0.0
        %v10105 = vmax.f32 %v10081, 0.0
        %10106 = vst [vmem:[%s476 + $0x10] sm:$0xff] %v10082
        %10107 = vst [vmem:[%s476 + $0x18] sm:$0xff] %v10083
        %10108 = vst.msk [vmem:[%s476 + $0x20] sm:$0xff] %vm2960, %v10084
        %10109 = vst [vmem:[%s476 + $0x38] sm:$0xff] %v10085
        %10110 = vst [vmem:[%s476 + $0x40] sm:$0xff] %v10086
        %10111 = vst.msk [vmem:[%s476 + $0x48] sm:$0xff] %vm2960, %v10087
        %10112 = vst [vmem:[%s476 + $0x60] sm:$0xff] %v10088
        %10113 = vst [vmem:[%s476 + $0x68] sm:$0xff] %v10089
        %10114 = vst.msk [vmem:[%s476 + $0x70] sm:$0xff] %vm2960, %v10090
        %10115 = vst [vmem:[%s476 + $0x88] sm:$0xff] %v10091
        %10116 = vst [vmem:[%s476 + $0x90] sm:$0xff] %v10092
        %10117 = vst.msk [vmem:[%s476 + $0x98] sm:$0xff] %vm2960, %v10093
        %10118 = vst [vmem:[%s476 + $0xb0] sm:$0xff] %v10094
        %10119 = vst [vmem:[%s476 + $0xb8] sm:$0xff] %v10095
        %10120 = vst.msk [vmem:[%s476 + $0xc0] sm:$0xff] %vm2960, %v10096
        %10121 = vst [vmem:[%s476 + $0xd8] sm:$0xff] %v10097
        %10122 = vst [vmem:[%s476 + $0xe0] sm:$0xff] %v10098
        %10123 = vst.msk [vmem:[%s476 + $0xe8] sm:$0xff] %vm2960, %v10099
        %10124 = vst [vmem:[%s476 + $0x100] sm:$0xff] %v10100
        %10125 = vst [vmem:[%s476 + $0x108] sm:$0xff] %v10101
        %10126 = vst.msk [vmem:[%s476 + $0x110] sm:$0xff] %vm2960, %v10102
        %10127 = vst [vmem:[%s476 + $0x128] sm:$0xff] %v10103
        %10128 = vst [vmem:[%s476 + $0x130] sm:$0xff] %v10104
        %10129 = vst.msk [vmem:[%s476 + $0x138] sm:$0xff] %vm2960, %v10105
        %v10130 = vld [vmem:[#allocation13] sm:$0x1]
        %v10132 = vlaneseq
        %v10133 = vshrl.u32 %v10132, 7
        %v10134 = vsub.s32 0, %v10133
        %v10135 = vrot.slane %v10130, %v10134
        %v10137 = vadd.f32 %v10033, %v10135
        %v10138 = vadd.f32 %v10034, %v10135
        %v10139 = vadd.f32 %v10035, %v10135
        %v10140 = vadd.f32 %v10036, %v10135
        %v10141 = vadd.f32 %v10037, %v10135
        %v10142 = vadd.f32 %v10038, %v10135
        %v10143 = vadd.f32 %v10039, %v10135
        %v10144 = vadd.f32 %v10040, %v10135
        %v10145 = vmax.f32 %v10137, 0.0
        %v10146 = vmax.f32 %v10138, 0.0
        %v10147 = vmax.f32 %v10139, 0.0
        %v10148 = vmax.f32 %v10140, 0.0
        %v10149 = vmax.f32 %v10141, 0.0
        %v10150 = vmax.f32 %v10142, 0.0
        %v10151 = vmax.f32 %v10143, 0.0
        %v10152 = vmax.f32 %v10144, 0.0
        %10153 = vst [vmem:[%s481] sm:$0xff] %v10145
        %10154 = vst [vmem:[%s481 + $0x10] sm:$0xff] %v10146
        %10155 = vst [vmem:[%s481 + $0x20] sm:$0xff] %v10147
        %10156 = vst [vmem:[%s481 + $0x30] sm:$0xff] %v10148
        %10157 = vst [vmem:[%s481 + $0x40] sm:$0xff] %v10149
        %10158 = vst [vmem:[%s481 + $0x50] sm:$0xff] %v10150
        %10159 = vst [vmem:[%s481 + $0x60] sm:$0xff] %v10151
        %10160 = vst [vmem:[%s481 + $0x70] sm:$0xff] %v10152
        %v10161 = vld [vmem:[#allocation4] sm:$0xff]
        %v10162 = vld [vmem:[#allocation4 + $0x8] sm:$0xff]
        %v10163 = vld [vmem:[#allocation4 + $0x10] sm:$0xff]
        %v10164 = vld [vmem:[#allocation4 + $0x18] sm:$0xf]
        %v10165 = vld [vmem:[#allocation4 + $0x38] sm:$0xff]
        %v10166 = vld [vmem:[#allocation4 + $0x40] sm:$0xff]
        %v10167 = vld [vmem:[#allocation4 + $0x48] sm:$0xff]
        %v10168 = vld [vmem:[#allocation4 + $0x50] sm:$0xf]
        %v10169 = vld [vmem:[#allocation4 + $0x70] sm:$0xff]
        %v10170 = vld [vmem:[#allocation4 + $0x78] sm:$0xff]
        %v10171 = vld [vmem:[#allocation4 + $0x80] sm:$0xff]
        %v10172 = vld [vmem:[#allocation4 + $0x88] sm:$0xf]
        %v10173 = vld [vmem:[#allocation4 + $0xa8] sm:$0xff]
        %v10174 = vld [vmem:[#allocation4 + $0xb0] sm:$0xff]
        %v10175 = vld [vmem:[#allocation4 + $0xb8] sm:$0xff]
        %v10176 = vld [vmem:[#allocation4 + $0xc0] sm:$0xf]
        %v10177 = vld [vmem:[#allocation4 + $0xe0] sm:$0xff]
        %v10178 = vld [vmem:[#allocation4 + $0xe8] sm:$0xff]
        %v10179 = vld [vmem:[#allocation4 + $0xf0] sm:$0xff]
        %v10180 = vld [vmem:[#allocation4 + $0xf8] sm:$0xf]
        %v10181 = vld [vmem:[#allocation4 + $0x118] sm:$0xff]
        %v10182 = vld [vmem:[#allocation4 + $0x120] sm:$0xff]
        %v10183 = vld [vmem:[#allocation4 + $0x128] sm:$0xff]
        %v10184 = vld [vmem:[#allocation4 + $0x130] sm:$0xf]
        %v10185 = vld [vmem:[#allocation4 + $0x150] sm:$0xff]
        %v10186 = vld [vmem:[#allocation4 + $0x158] sm:$0xff]
        %v10187 = vld [vmem:[#allocation4 + $0x160] sm:$0xff]
        %v10188 = vld [vmem:[#allocation4 + $0x168] sm:$0xf]
        %v10189 = vld [vmem:[#allocation4 + $0x188] sm:$0xff]
        %v10190 = vld [vmem:[#allocation4 + $0x190] sm:$0xff]
        %v10191 = vld [vmem:[#allocation4 + $0x198] sm:$0xff]
        %v10192 = vld [vmem:[#allocation4 + $0x1a0] sm:$0xf]
        %v10193 = vld [vmem:[#allocation4 + $0x1c0] sm:$0xff]
        %v10194 = vld [vmem:[#allocation4 + $0x1c8] sm:$0xff]
        %v10195 = vld [vmem:[#allocation4 + $0x1d0] sm:$0xff]
        %v10196 = vld [vmem:[#allocation4 + $0x1d8] sm:$0xf]
        %v10197 = vld [vmem:[#allocation4 + $0x1f8] sm:$0xff]
        %v10198 = vld [vmem:[#allocation4 + $0x200] sm:$0xff]
        %v10199 = vld [vmem:[#allocation4 + $0x208] sm:$0xff]
        %v10200 = vld [vmem:[#allocation4 + $0x210] sm:$0xf]
        %v10201 = vld [vmem:[#allocation4 + $0x1c] sm:$0x11]
        %v10202 = vld [vmem:[#allocation4 + $0x24] sm:$0x11]
        %v10203 = vld [vmem:[#allocation4 + $0x2c] sm:$0x11]
        %v10204 = vld [vmem:[#allocation4 + $0x34] sm:$0x1]
        %v10205 = vld [vmem:[#allocation4 + $0x54] sm:$0x11]
        %v10206 = vld [vmem:[#allocation4 + $0x5c] sm:$0x11]
        %v10207 = vld [vmem:[#allocation4 + $0x64] sm:$0x11]
        %v10208 = vld [vmem:[#allocation4 + $0x6c] sm:$0x1]
        %v10209 = vld [vmem:[#allocation4 + $0x8c] sm:$0x11]
        %v10210 = vld [vmem:[#allocation4 + $0x94] sm:$0x11]
        %v10211 = vld [vmem:[#allocation4 + $0x9c] sm:$0x11]
        %v10212 = vld [vmem:[#allocation4 + $0xa4] sm:$0x1]
        %v10213 = vld [vmem:[#allocation4 + $0xc4] sm:$0x11]
        %v10214 = vld [vmem:[#allocation4 + $0xcc] sm:$0x11]
        %v10215 = vld [vmem:[#allocation4 + $0xd4] sm:$0x11]
        %v10216 = vld [vmem:[#allocation4 + $0xdc] sm:$0x1]
        %v10217 = vld [vmem:[#allocation4 + $0xfc] sm:$0x11]
        %v10218 = vld [vmem:[#allocation4 + $0x104] sm:$0x11]
        %v10219 = vld [vmem:[#allocation4 + $0x10c] sm:$0x11]
        %v10220 = vld [vmem:[#allocation4 + $0x114] sm:$0x1]
        %v10221 = vld [vmem:[#allocation4 + $0x134] sm:$0x11]
        %v10222 = vld [vmem:[#allocation4 + $0x13c] sm:$0x11]
        %v10223 = vld [vmem:[#allocation4 + $0x144] sm:$0x11]
        %v10224 = vld [vmem:[#allocation4 + $0x14c] sm:$0x1]
        %v10225 = vld [vmem:[#allocation4 + $0x16c] sm:$0x11]
        %v10226 = vld [vmem:[#allocation4 + $0x174] sm:$0x11]
        %v10227 = vld [vmem:[#allocation4 + $0x17c] sm:$0x11]
        %v10228 = vld [vmem:[#allocation4 + $0x184] sm:$0x1]
        %v10229 = vld [vmem:[#allocation4 + $0x1a4] sm:$0x11]
        %v10230 = vld [vmem:[#allocation4 + $0x1ac] sm:$0x11]
        %v10231 = vld [vmem:[#allocation4 + $0x1b4] sm:$0x11]
        %v10232 = vld [vmem:[#allocation4 + $0x1bc] sm:$0x1]
        %v10233 = vld [vmem:[#allocation4 + $0x1dc] sm:$0x11]
        %v10234 = vld [vmem:[#allocation4 + $0x1e4] sm:$0x11]
        %v10235 = vld [vmem:[#allocation4 + $0x1ec] sm:$0x11]
        %v10236 = vld [vmem:[#allocation4 + $0x1f4] sm:$0x1]
        %v10237 = vld [vmem:[#allocation4 + $0x214] sm:$0x11]
        %v10238 = vld [vmem:[#allocation4 + $0x21c] sm:$0x11]
        %v10239 = vld [vmem:[#allocation4 + $0x224] sm:$0x11]
        %v10240 = vld [vmem:[#allocation4 + $0x22c] sm:$0x1]
        %v10242 = vshrl.u32 %v10161, 16
        %v10244 = vrot.slane %v10242, 4
        %v10245 = vshll.u32 %v10161, 16
        %v10247 = vrot.slane %v10245, 5
        %v10248 = vor.u32 %v10244, %v10247
        %v10249 = vrot.slane %v10248, 4
        %v10251 = vshll.u32 %v10201, 16
        %v10253 = vrot.slane %v10251, 5
        %v10254 = vsel %vm4323, %v10249, %v10253
        %v10256 = vshrl.u32 %v10162, 16
        %v10258 = vrot.slane %v10256, 4
        %v10259 = vshll.u32 %v10162, 16
        %v10261 = vrot.slane %v10259, 5
        %v10262 = vor.u32 %v10258, %v10261
        %v10263 = vrot.slane %v10262, 4
        %v10265 = vshll.u32 %v10202, 16
        %v10267 = vrot.slane %v10265, 5
        %v10268 = vsel %vm4323, %v10263, %v10267
        %v10270 = vshrl.u32 %v10163, 16
        %v10272 = vrot.slane %v10270, 4
        %v10273 = vshll.u32 %v10163, 16
        %v10275 = vrot.slane %v10273, 5
        %v10276 = vor.u32 %v10272, %v10275
        %v10277 = vrot.slane %v10276, 4
        %v10279 = vshll.u32 %v10203, 16
        %v10281 = vrot.slane %v10279, 5
        %v10282 = vsel %vm4323, %v10277, %v10281
        %v10284 = vshrl.u32 %v10164, 16
        %v10286 = vrot.slane %v10284, 4
        %v10287 = vshll.u32 %v10164, 16
        %v10289 = vrot.slane %v10287, 5
        %v10290 = vor.u32 %v10286, %v10289
        %v10291 = vrot.slane %v10290, 4
        %v10293 = vshll.u32 %v10204, 16
        %v10295 = vrot.slane %v10293, 5
        %v10296 = vsel %vm4323, %v10291, %v10295
        %v10298 = vshrl.u32 %v10165, 16
        %v10300 = vrot.slane %v10298, 4
        %v10301 = vshll.u32 %v10165, 16
        %v10303 = vrot.slane %v10301, 5
        %v10304 = vor.u32 %v10300, %v10303
        %v10305 = vrot.slane %v10304, 4
        %v10307 = vshll.u32 %v10205, 16
        %v10309 = vrot.slane %v10307, 5
        %v10310 = vsel %vm4323, %v10305, %v10309
        %v10312 = vshrl.u32 %v10166, 16
        %v10314 = vrot.slane %v10312, 4
        %v10315 = vshll.u32 %v10166, 16
        %v10317 = vrot.slane %v10315, 5
        %v10318 = vor.u32 %v10314, %v10317
        %v10319 = vrot.slane %v10318, 4
        %v10321 = vshll.u32 %v10206, 16
        %v10323 = vrot.slane %v10321, 5
        %v10324 = vsel %vm4323, %v10319, %v10323
        %v10326 = vshrl.u32 %v10167, 16
        %v10328 = vrot.slane %v10326, 4
        %v10329 = vshll.u32 %v10167, 16
        %v10331 = vrot.slane %v10329, 5
        %v10332 = vor.u32 %v10328, %v10331
        %v10333 = vrot.slane %v10332, 4
        %v10335 = vshll.u32 %v10207, 16
        %v10337 = vrot.slane %v10335, 5
        %v10338 = vsel %vm4323, %v10333, %v10337
        %v10340 = vshrl.u32 %v10168, 16
        %v10342 = vrot.slane %v10340, 4
        %v10343 = vshll.u32 %v10168, 16
        %v10345 = vrot.slane %v10343, 5
        %v10346 = vor.u32 %v10342, %v10345
        %v10347 = vrot.slane %v10346, 4
        %v10349 = vshll.u32 %v10208, 16
        %v10351 = vrot.slane %v10349, 5
        %v10352 = vsel %vm4323, %v10347, %v10351
        %v10354 = vshrl.u32 %v10169, 16
        %v10356 = vrot.slane %v10354, 4
        %v10357 = vshll.u32 %v10169, 16
        %v10359 = vrot.slane %v10357, 5
        %v10360 = vor.u32 %v10356, %v10359
        %v10361 = vrot.slane %v10360, 4
        %v10363 = vshll.u32 %v10209, 16
        %v10365 = vrot.slane %v10363, 5
        %v10366 = vsel %vm4323, %v10361, %v10365
        %v10368 = vshrl.u32 %v10170, 16
        %v10370 = vrot.slane %v10368, 4
        %v10371 = vshll.u32 %v10170, 16
        %v10373 = vrot.slane %v10371, 5
        %v10374 = vor.u32 %v10370, %v10373
        %v10375 = vrot.slane %v10374, 4
        %v10377 = vshll.u32 %v10210, 16
        %v10379 = vrot.slane %v10377, 5
        %v10380 = vsel %vm4323, %v10375, %v10379
        %v10382 = vshrl.u32 %v10171, 16
        %v10384 = vrot.slane %v10382, 4
        %v10385 = vshll.u32 %v10171, 16
        %v10387 = vrot.slane %v10385, 5
        %v10388 = vor.u32 %v10384, %v10387
        %v10389 = vrot.slane %v10388, 4
        %v10391 = vshll.u32 %v10211, 16
        %v10393 = vrot.slane %v10391, 5
        %v10394 = vsel %vm4323, %v10389, %v10393
        %v10396 = vshrl.u32 %v10172, 16
        %v10398 = vrot.slane %v10396, 4
        %v10399 = vshll.u32 %v10172, 16
        %v10401 = vrot.slane %v10399, 5
        %v10402 = vor.u32 %v10398, %v10401
        %v10403 = vrot.slane %v10402, 4
        %v10405 = vshll.u32 %v10212, 16
        %v10407 = vrot.slane %v10405, 5
        %v10408 = vsel %vm4323, %v10403, %v10407
        %v10410 = vshrl.u32 %v10173, 16
        %v10412 = vrot.slane %v10410, 4
        %v10413 = vshll.u32 %v10173, 16
        %v10415 = vrot.slane %v10413, 5
        %v10416 = vor.u32 %v10412, %v10415
        %v10417 = vrot.slane %v10416, 4
        %v10419 = vshll.u32 %v10213, 16
        %v10421 = vrot.slane %v10419, 5
        %v10422 = vsel %vm4323, %v10417, %v10421
        %v10424 = vshrl.u32 %v10174, 16
        %v10426 = vrot.slane %v10424, 4
        %v10427 = vshll.u32 %v10174, 16
        %v10429 = vrot.slane %v10427, 5
        %v10430 = vor.u32 %v10426, %v10429
        %v10431 = vrot.slane %v10430, 4
        %v10433 = vshll.u32 %v10214, 16
        %v10435 = vrot.slane %v10433, 5
        %v10436 = vsel %vm4323, %v10431, %v10435
        %v10438 = vshrl.u32 %v10175, 16
        %v10440 = vrot.slane %v10438, 4
        %v10441 = vshll.u32 %v10175, 16
        %v10443 = vrot.slane %v10441, 5
        %v10444 = vor.u32 %v10440, %v10443
        %v10445 = vrot.slane %v10444, 4
        %v10447 = vshll.u32 %v10215, 16
        %v10449 = vrot.slane %v10447, 5
        %v10450 = vsel %vm4323, %v10445, %v10449
        %v10452 = vshrl.u32 %v10176, 16
        %v10454 = vrot.slane %v10452, 4
        %v10455 = vshll.u32 %v10176, 16
        %v10457 = vrot.slane %v10455, 5
        %v10458 = vor.u32 %v10454, %v10457
        %v10459 = vrot.slane %v10458, 4
        %v10461 = vshll.u32 %v10216, 16
        %v10463 = vrot.slane %v10461, 5
        %v10464 = vsel %vm4323, %v10459, %v10463
        %v10466 = vshrl.u32 %v10177, 16
        %v10468 = vrot.slane %v10466, 4
        %v10469 = vshll.u32 %v10177, 16
        %v10471 = vrot.slane %v10469, 5
        %v10472 = vor.u32 %v10468, %v10471
        %v10473 = vrot.slane %v10472, 4
        %v10475 = vshll.u32 %v10217, 16
        %v10477 = vrot.slane %v10475, 5
        %v10478 = vsel %vm4323, %v10473, %v10477
        %v10480 = vshrl.u32 %v10178, 16
        %v10482 = vrot.slane %v10480, 4
        %v10483 = vshll.u32 %v10178, 16
        %v10485 = vrot.slane %v10483, 5
        %v10486 = vor.u32 %v10482, %v10485
        %v10487 = vrot.slane %v10486, 4
        %v10489 = vshll.u32 %v10218, 16
        %v10491 = vrot.slane %v10489, 5
        %v10492 = vsel %vm4323, %v10487, %v10491
        %v10494 = vshrl.u32 %v10179, 16
        %v10496 = vrot.slane %v10494, 4
        %v10497 = vshll.u32 %v10179, 16
        %v10499 = vrot.slane %v10497, 5
        %v10500 = vor.u32 %v10496, %v10499
        %v10501 = vrot.slane %v10500, 4
        %v10503 = vshll.u32 %v10219, 16
        %v10505 = vrot.slane %v10503, 5
        %v10506 = vsel %vm4323, %v10501, %v10505
        %v10508 = vshrl.u32 %v10180, 16
        %v10510 = vrot.slane %v10508, 4
        %v10511 = vshll.u32 %v10180, 16
        %v10513 = vrot.slane %v10511, 5
        %v10514 = vor.u32 %v10510, %v10513
        %v10515 = vrot.slane %v10514, 4
        %v10517 = vshll.u32 %v10220, 16
        %v10519 = vrot.slane %v10517, 5
        %v10520 = vsel %vm4323, %v10515, %v10519
        %v10522 = vshrl.u32 %v10181, 16
        %v10524 = vrot.slane %v10522, 4
        %v10525 = vshll.u32 %v10181, 16
        %v10527 = vrot.slane %v10525, 5
        %v10528 = vor.u32 %v10524, %v10527
        %v10529 = vrot.slane %v10528, 4
        %v10531 = vshll.u32 %v10221, 16
        %v10533 = vrot.slane %v10531, 5
        %v10534 = vsel %vm4323, %v10529, %v10533
        %v10536 = vshrl.u32 %v10182, 16
        %v10538 = vrot.slane %v10536, 4
        %v10539 = vshll.u32 %v10182, 16
        %v10541 = vrot.slane %v10539, 5
        %v10542 = vor.u32 %v10538, %v10541
        %v10543 = vrot.slane %v10542, 4
        %v10545 = vshll.u32 %v10222, 16
        %v10547 = vrot.slane %v10545, 5
        %v10548 = vsel %vm4323, %v10543, %v10547
        %v10550 = vshrl.u32 %v10183, 16
        %v10552 = vrot.slane %v10550, 4
        %v10553 = vshll.u32 %v10183, 16
        %v10555 = vrot.slane %v10553, 5
        %v10556 = vor.u32 %v10552, %v10555
        %v10557 = vrot.slane %v10556, 4
        %v10559 = vshll.u32 %v10223, 16
        %v10561 = vrot.slane %v10559, 5
        %v10562 = vsel %vm4323, %v10557, %v10561
        %v10564 = vshrl.u32 %v10184, 16
        %v10566 = vrot.slane %v10564, 4
        %v10567 = vshll.u32 %v10184, 16
        %v10569 = vrot.slane %v10567, 5
        %v10570 = vor.u32 %v10566, %v10569
        %v10571 = vrot.slane %v10570, 4
        %v10573 = vshll.u32 %v10224, 16
        %v10575 = vrot.slane %v10573, 5
        %v10576 = vsel %vm4323, %v10571, %v10575
        %v10578 = vshrl.u32 %v10185, 16
        %v10580 = vrot.slane %v10578, 4
        %v10581 = vshll.u32 %v10185, 16
        %v10583 = vrot.slane %v10581, 5
        %v10584 = vor.u32 %v10580, %v10583
        %v10585 = vrot.slane %v10584, 4
        %v10587 = vshll.u32 %v10225, 16
        %v10589 = vrot.slane %v10587, 5
        %v10590 = vsel %vm4323, %v10585, %v10589
        %v10592 = vshrl.u32 %v10186, 16
        %v10594 = vrot.slane %v10592, 4
        %v10595 = vshll.u32 %v10186, 16
        %v10597 = vrot.slane %v10595, 5
        %v10598 = vor.u32 %v10594, %v10597
        %v10599 = vrot.slane %v10598, 4
        %v10601 = vshll.u32 %v10226, 16
        %v10603 = vrot.slane %v10601, 5
        %v10604 = vsel %vm4323, %v10599, %v10603
        %v10606 = vshrl.u32 %v10187, 16
        %v10608 = vrot.slane %v10606, 4
        %v10609 = vshll.u32 %v10187, 16
        %v10611 = vrot.slane %v10609, 5
        %v10612 = vor.u32 %v10608, %v10611
        %v10613 = vrot.slane %v10612, 4
        %v10615 = vshll.u32 %v10227, 16
        %v10617 = vrot.slane %v10615, 5
        %v10618 = vsel %vm4323, %v10613, %v10617
        %v10620 = vshrl.u32 %v10188, 16
        %v10622 = vrot.slane %v10620, 4
        %v10623 = vshll.u32 %v10188, 16
        %v10625 = vrot.slane %v10623, 5
        %v10626 = vor.u32 %v10622, %v10625
        %v10627 = vrot.slane %v10626, 4
        %v10629 = vshll.u32 %v10228, 16
        %v10631 = vrot.slane %v10629, 5
        %v10632 = vsel %vm4323, %v10627, %v10631
        %v10634 = vshrl.u32 %v10189, 16
        %v10636 = vrot.slane %v10634, 4
        %v10637 = vshll.u32 %v10189, 16
        %v10639 = vrot.slane %v10637, 5
        %v10640 = vor.u32 %v10636, %v10639
        %v10641 = vrot.slane %v10640, 4
        %v10643 = vshll.u32 %v10229, 16
        %v10645 = vrot.slane %v10643, 5
        %v10646 = vsel %vm4323, %v10641, %v10645
        %v10648 = vshrl.u32 %v10190, 16
        %v10650 = vrot.slane %v10648, 4
        %v10651 = vshll.u32 %v10190, 16
        %v10653 = vrot.slane %v10651, 5
        %v10654 = vor.u32 %v10650, %v10653
        %v10655 = vrot.slane %v10654, 4
        %v10657 = vshll.u32 %v10230, 16
        %v10659 = vrot.slane %v10657, 5
        %v10660 = vsel %vm4323, %v10655, %v10659
        %v10662 = vshrl.u32 %v10191, 16
        %v10664 = vrot.slane %v10662, 4
        %v10665 = vshll.u32 %v10191, 16
        %v10667 = vrot.slane %v10665, 5
        %v10668 = vor.u32 %v10664, %v10667
        %v10669 = vrot.slane %v10668, 4
        %v10671 = vshll.u32 %v10231, 16
        %v10673 = vrot.slane %v10671, 5
        %v10674 = vsel %vm4323, %v10669, %v10673
        %v10676 = vshrl.u32 %v10192, 16
        %v10678 = vrot.slane %v10676, 4
        %v10679 = vshll.u32 %v10192, 16
        %v10681 = vrot.slane %v10679, 5
        %v10682 = vor.u32 %v10678, %v10681
        %v10683 = vrot.slane %v10682, 4
        %v10685 = vshll.u32 %v10232, 16
        %v10687 = vrot.slane %v10685, 5
        %v10688 = vsel %vm4323, %v10683, %v10687
        %v10690 = vshrl.u32 %v10193, 16
        %v10692 = vrot.slane %v10690, 4
        %v10693 = vshll.u32 %v10193, 16
        %v10695 = vrot.slane %v10693, 5
        %v10696 = vor.u32 %v10692, %v10695
        %v10697 = vrot.slane %v10696, 4
        %v10699 = vshll.u32 %v10233, 16
        %v10701 = vrot.slane %v10699, 5
        %v10702 = vsel %vm4323, %v10697, %v10701
        %v10704 = vshrl.u32 %v10194, 16
        %v10706 = vrot.slane %v10704, 4
        %v10707 = vshll.u32 %v10194, 16
        %v10709 = vrot.slane %v10707, 5
        %v10710 = vor.u32 %v10706, %v10709
        %v10711 = vrot.slane %v10710, 4
        %v10713 = vshll.u32 %v10234, 16
        %v10715 = vrot.slane %v10713, 5
        %v10716 = vsel %vm4323, %v10711, %v10715
        %v10718 = vshrl.u32 %v10195, 16
        %v10720 = vrot.slane %v10718, 4
        %v10721 = vshll.u32 %v10195, 16
        %v10723 = vrot.slane %v10721, 5
        %v10724 = vor.u32 %v10720, %v10723
        %v10725 = vrot.slane %v10724, 4
        %v10727 = vshll.u32 %v10235, 16
        %v10729 = vrot.slane %v10727, 5
        %v10730 = vsel %vm4323, %v10725, %v10729
        %v10732 = vshrl.u32 %v10196, 16
        %v10734 = vrot.slane %v10732, 4
        %v10735 = vshll.u32 %v10196, 16
        %v10737 = vrot.slane %v10735, 5
        %v10738 = vor.u32 %v10734, %v10737
        %v10739 = vrot.slane %v10738, 4
        %v10741 = vshll.u32 %v10236, 16
        %v10743 = vrot.slane %v10741, 5
        %v10744 = vsel %vm4323, %v10739, %v10743
        %v10746 = vshrl.u32 %v10197, 16
        %v10748 = vrot.slane %v10746, 4
        %v10749 = vshll.u32 %v10197, 16
        %v10751 = vrot.slane %v10749, 5
        %v10752 = vor.u32 %v10748, %v10751
        %v10753 = vrot.slane %v10752, 4
        %v10755 = vshll.u32 %v10237, 16
        %v10757 = vrot.slane %v10755, 5
        %v10758 = vsel %vm4323, %v10753, %v10757
        %v10760 = vshrl.u32 %v10198, 16
        %v10762 = vrot.slane %v10760, 4
        %v10763 = vshll.u32 %v10198, 16
        %v10765 = vrot.slane %v10763, 5
        %v10766 = vor.u32 %v10762, %v10765
        %v10767 = vrot.slane %v10766, 4
        %v10769 = vshll.u32 %v10238, 16
        %v10771 = vrot.slane %v10769, 5
        %v10772 = vsel %vm4323, %v10767, %v10771
        %v10774 = vshrl.u32 %v10199, 16
        %v10776 = vrot.slane %v10774, 4
        %v10777 = vshll.u32 %v10199, 16
        %v10779 = vrot.slane %v10777, 5
        %v10780 = vor.u32 %v10776, %v10779
        %v10781 = vrot.slane %v10780, 4
        %v10783 = vshll.u32 %v10239, 16
        %v10785 = vrot.slane %v10783, 5
        %v10786 = vsel %vm4323, %v10781, %v10785
        %v10788 = vshrl.u32 %v10200, 16
        %v10790 = vrot.slane %v10788, 4
        %v10791 = vshll.u32 %v10200, 16
        %v10793 = vrot.slane %v10791, 5
        %v10794 = vor.u32 %v10790, %v10793
        %v10795 = vrot.slane %v10794, 4
        %v10797 = vshll.u32 %v10240, 16
        %v10799 = vrot.slane %v10797, 5
        %v10800 = vsel %vm4323, %v10795, %v10799
        %v10841 = vmax.bf16 %v10161, %v10254
        %v10842 = vmax.bf16 %v10162, %v10268
        %v10843 = vmax.bf16 %v10163, %v10282
        %v10844 = vmax.bf16 %v10164, %v10296
        %v10845 = vmax.bf16 %v10165, %v10310
        %v10846 = vmax.bf16 %v10166, %v10324
        %v10847 = vmax.bf16 %v10167, %v10338
        %v10848 = vmax.bf16 %v10168, %v10352
        %v10849 = vmax.bf16 %v10169, %v10366
        %v10850 = vmax.bf16 %v10170, %v10380
        %v10851 = vmax.bf16 %v10171, %v10394
        %v10852 = vmax.bf16 %v10172, %v10408
        %v10853 = vmax.bf16 %v10173, %v10422
        %v10854 = vmax.bf16 %v10174, %v10436
        %v10855 = vmax.bf16 %v10175, %v10450
        %v10856 = vmax.bf16 %v10176, %v10464
        %v10857 = vmax.bf16 %v10177, %v10478
        %v10858 = vmax.bf16 %v10178, %v10492
        %v10859 = vmax.bf16 %v10179, %v10506
        %v10860 = vmax.bf16 %v10180, %v10520
        %v10861 = vmax.bf16 %v10181, %v10534
        %v10862 = vmax.bf16 %v10182, %v10548
        %v10863 = vmax.bf16 %v10183, %v10562
        %v10864 = vmax.bf16 %v10184, %v10576
        %v10865 = vmax.bf16 %v10185, %v10590
        %v10866 = vmax.bf16 %v10186, %v10604
        %v10867 = vmax.bf16 %v10187, %v10618
        %v10868 = vmax.bf16 %v10188, %v10632
        %v10869 = vmax.bf16 %v10189, %v10646
        %v10870 = vmax.bf16 %v10190, %v10660
        %v10871 = vmax.bf16 %v10191, %v10674
        %v10872 = vmax.bf16 %v10192, %v10688
        %v10873 = vmax.bf16 %v10193, %v10702
        %v10874 = vmax.bf16 %v10194, %v10716
        %v10875 = vmax.bf16 %v10195, %v10730
        %v10876 = vmax.bf16 %v10196, %v10744
        %v10877 = vmax.bf16 %v10197, %v10758
        %v10878 = vmax.bf16 %v10198, %v10772
        %v10879 = vmax.bf16 %v10199, %v10786
        %v10880 = vmax.bf16 %v10200, %v10800
        %v10881 = vld [vmem:[#allocation4] sm:$0xee]
        %v10882 = vld [vmem:[#allocation4 + $0x8] sm:$0xee]
        %v10883 = vld [vmem:[#allocation4 + $0x10] sm:$0xee]
        %v10884 = vld [vmem:[#allocation4 + $0x18] sm:$0xe]
        %v10885 = vld [vmem:[#allocation4 + $0x38] sm:$0xee]
        %v10886 = vld [vmem:[#allocation4 + $0x40] sm:$0xee]
        %v10887 = vld [vmem:[#allocation4 + $0x48] sm:$0xee]
        %v10888 = vld [vmem:[#allocation4 + $0x50] sm:$0xe]
        %v10889 = vld [vmem:[#allocation4 + $0x70] sm:$0xee]
        %v10890 = vld [vmem:[#allocation4 + $0x78] sm:$0xee]
        %v10891 = vld [vmem:[#allocation4 + $0x80] sm:$0xee]
        %v10892 = vld [vmem:[#allocation4 + $0x88] sm:$0xe]
        %v10893 = vld [vmem:[#allocation4 + $0xa8] sm:$0xee]
        %v10894 = vld [vmem:[#allocation4 + $0xb0] sm:$0xee]
        %v10895 = vld [vmem:[#allocation4 + $0xb8] sm:$0xee]
        %v10896 = vld [vmem:[#allocation4 + $0xc0] sm:$0xe]
        %v10897 = vld [vmem:[#allocation4 + $0xe0] sm:$0xee]
        %v10898 = vld [vmem:[#allocation4 + $0xe8] sm:$0xee]
        %v10899 = vld [vmem:[#allocation4 + $0xf0] sm:$0xee]
        %v10900 = vld [vmem:[#allocation4 + $0xf8] sm:$0xe]
        %v10901 = vld [vmem:[#allocation4 + $0x118] sm:$0xee]
        %v10902 = vld [vmem:[#allocation4 + $0x120] sm:$0xee]
        %v10903 = vld [vmem:[#allocation4 + $0x128] sm:$0xee]
        %v10904 = vld [vmem:[#allocation4 + $0x130] sm:$0xe]
        %v10905 = vld [vmem:[#allocation4 + $0x150] sm:$0xee]
        %v10906 = vld [vmem:[#allocation4 + $0x158] sm:$0xee]
        %v10907 = vld [vmem:[#allocation4 + $0x160] sm:$0xee]
        %v10908 = vld [vmem:[#allocation4 + $0x168] sm:$0xe]
        %v10909 = vld [vmem:[#allocation4 + $0x188] sm:$0xee]
        %v10910 = vld [vmem:[#allocation4 + $0x190] sm:$0xee]
        %v10911 = vld [vmem:[#allocation4 + $0x198] sm:$0xee]
        %v10912 = vld [vmem:[#allocation4 + $0x1a0] sm:$0xe]
        %v10913 = vld [vmem:[#allocation4 + $0x1c0] sm:$0xee]
        %v10914 = vld [vmem:[#allocation4 + $0x1c8] sm:$0xee]
        %v10915 = vld [vmem:[#allocation4 + $0x1d0] sm:$0xee]
        %v10916 = vld [vmem:[#allocation4 + $0x1d8] sm:$0xe]
        %v10917 = vld [vmem:[#allocation4 + $0x1f8] sm:$0xee]
        %v10918 = vld [vmem:[#allocation4 + $0x200] sm:$0xee]
        %v10919 = vld [vmem:[#allocation4 + $0x208] sm:$0xee]
        %v10920 = vld [vmem:[#allocation4 + $0x210] sm:$0xe]
        %v11001 = vrot.slane %v10881, 5
        %v11002 = vrot.slane %v11001, 4
        %v11003 = vrot.slane %v10201, 5
        %v11004 = vsel %vm5531, %v11002, %v11003
        %v11005 = vrot.slane %v10882, 5
        %v11006 = vrot.slane %v11005, 4
        %v11007 = vrot.slane %v10202, 5
        %v11008 = vsel %vm5531, %v11006, %v11007
        %v11009 = vrot.slane %v10883, 5
        %v11010 = vrot.slane %v11009, 4
        %v11011 = vrot.slane %v10203, 5
        %v11012 = vsel %vm5531, %v11010, %v11011
        %v11013 = vrot.slane %v10884, 5
        %v11014 = vrot.slane %v11013, 4
        %v11015 = vrot.slane %v10204, 5
        %v11016 = vsel %vm5531, %v11014, %v11015
        %v11017 = vrot.slane %v10885, 5
        %v11018 = vrot.slane %v11017, 4
        %v11019 = vrot.slane %v10205, 5
        %v11020 = vsel %vm5531, %v11018, %v11019
        %v11021 = vrot.slane %v10886, 5
        %v11022 = vrot.slane %v11021, 4
        %v11023 = vrot.slane %v10206, 5
        %v11024 = vsel %vm5531, %v11022, %v11023
        %v11025 = vrot.slane %v10887, 5
        %v11026 = vrot.slane %v11025, 4
        %v11027 = vrot.slane %v10207, 5
        %v11028 = vsel %vm5531, %v11026, %v11027
        %v11029 = vrot.slane %v10888, 5
        %v11030 = vrot.slane %v11029, 4
        %v11031 = vrot.slane %v10208, 5
        %v11032 = vsel %vm5531, %v11030, %v11031
        %v11033 = vrot.slane %v10889, 5
        %v11034 = vrot.slane %v11033, 4
        %v11035 = vrot.slane %v10209, 5
        %v11036 = vsel %vm5531, %v11034, %v11035
        %v11037 = vrot.slane %v10890, 5
        %v11038 = vrot.slane %v11037, 4
        %v11039 = vrot.slane %v10210, 5
        %v11040 = vsel %vm5531, %v11038, %v11039
        %v11041 = vrot.slane %v10891, 5
        %v11042 = vrot.slane %v11041, 4
        %v11043 = vrot.slane %v10211, 5
        %v11044 = vsel %vm5531, %v11042, %v11043
        %v11045 = vrot.slane %v10892, 5
        %v11046 = vrot.slane %v11045, 4
        %v11047 = vrot.slane %v10212, 5
        %v11048 = vsel %vm5531, %v11046, %v11047
        %v11049 = vrot.slane %v10893, 5
        %v11050 = vrot.slane %v11049, 4
        %v11051 = vrot.slane %v10213, 5
        %v11052 = vsel %vm5531, %v11050, %v11051
        %v11053 = vrot.slane %v10894, 5
        %v11054 = vrot.slane %v11053, 4
        %v11055 = vrot.slane %v10214, 5
        %v11056 = vsel %vm5531, %v11054, %v11055
        %v11057 = vrot.slane %v10895, 5
        %v11058 = vrot.slane %v11057, 4
        %v11059 = vrot.slane %v10215, 5
        %v11060 = vsel %vm5531, %v11058, %v11059
        %v11061 = vrot.slane %v10896, 5
        %v11062 = vrot.slane %v11061, 4
        %v11063 = vrot.slane %v10216, 5
        %v11064 = vsel %vm5531, %v11062, %v11063
        %v11065 = vrot.slane %v10897, 5
        %v11066 = vrot.slane %v11065, 4
        %v11067 = vrot.slane %v10217, 5
        %v11068 = vsel %vm5531, %v11066, %v11067
        %v11069 = vrot.slane %v10898, 5
        %v11070 = vrot.slane %v11069, 4
        %v11071 = vrot.slane %v10218, 5
        %v11072 = vsel %vm5531, %v11070, %v11071
        %v11073 = vrot.slane %v10899, 5
        %v11074 = vrot.slane %v11073, 4
        %v11075 = vrot.slane %v10219, 5
        %v11076 = vsel %vm5531, %v11074, %v11075
        %v11077 = vrot.slane %v10900, 5
        %v11078 = vrot.slane %v11077, 4
        %v11079 = vrot.slane %v10220, 5
        %v11080 = vsel %vm5531, %v11078, %v11079
        %v11081 = vrot.slane %v10901, 5
        %v11082 = vrot.slane %v11081, 4
        %v11083 = vrot.slane %v10221, 5
        %v11084 = vsel %vm5531, %v11082, %v11083
        %v11085 = vrot.slane %v10902, 5
        %v11086 = vrot.slane %v11085, 4
        %v11087 = vrot.slane %v10222, 5
        %v11088 = vsel %vm5531, %v11086, %v11087
        %v11089 = vrot.slane %v10903, 5
        %v11090 = vrot.slane %v11089, 4
        %v11091 = vrot.slane %v10223, 5
        %v11092 = vsel %vm5531, %v11090, %v11091
        %v11093 = vrot.slane %v10904, 5
        %v11094 = vrot.slane %v11093, 4
        %v11095 = vrot.slane %v10224, 5
        %v11096 = vsel %vm5531, %v11094, %v11095
        %v11097 = vrot.slane %v10905, 5
        %v11098 = vrot.slane %v11097, 4
        %v11099 = vrot.slane %v10225, 5
        %v11100 = vsel %vm5531, %v11098, %v11099
        %v11101 = vrot.slane %v10906, 5
        %v11102 = vrot.slane %v11101, 4
        %v11103 = vrot.slane %v10226, 5
        %v11104 = vsel %vm5531, %v11102, %v11103
        %v11105 = vrot.slane %v10907, 5
        %v11106 = vrot.slane %v11105, 4
        %v11107 = vrot.slane %v10227, 5
        %v11108 = vsel %vm5531, %v11106, %v11107
        %v11109 = vrot.slane %v10908, 5
        %v11110 = vrot.slane %v11109, 4
        %v11111 = vrot.slane %v10228, 5
        %v11112 = vsel %vm5531, %v11110, %v11111
        %v11113 = vrot.slane %v10909, 5
        %v11114 = vrot.slane %v11113, 4
        %v11115 = vrot.slane %v10229, 5
        %v11116 = vsel %vm5531, %v11114, %v11115
        %v11117 = vrot.slane %v10910, 5
        %v11118 = vrot.slane %v11117, 4
        %v11119 = vrot.slane %v10230, 5
        %v11120 = vsel %vm5531, %v11118, %v11119
        %v11121 = vrot.slane %v10911, 5
        %v11122 = vrot.slane %v11121, 4
        %v11123 = vrot.slane %v10231, 5
        %v11124 = vsel %vm5531, %v11122, %v11123
        %v11125 = vrot.slane %v10912, 5
        %v11126 = vrot.slane %v11125, 4
        %v11127 = vrot.slane %v10232, 5
        %v11128 = vsel %vm5531, %v11126, %v11127
        %v11129 = vrot.slane %v10913, 5
        %v11130 = vrot.slane %v11129, 4
        %v11131 = vrot.slane %v10233, 5
        %v11132 = vsel %vm5531, %v11130, %v11131
        %v11133 = vrot.slane %v10914, 5
        %v11134 = vrot.slane %v11133, 4
        %v11135 = vrot.slane %v10234, 5
        %v11136 = vsel %vm5531, %v11134, %v11135
        %v11137 = vrot.slane %v10915, 5
        %v11138 = vrot.slane %v11137, 4
        %v11139 = vrot.slane %v10235, 5
        %v11140 = vsel %vm5531, %v11138, %v11139
        %v11141 = vrot.slane %v10916, 5
        %v11142 = vrot.slane %v11141, 4
        %v11143 = vrot.slane %v10236, 5
        %v11144 = vsel %vm5531, %v11142, %v11143
        %v11145 = vrot.slane %v10917, 5
        %v11146 = vrot.slane %v11145, 4
        %v11147 = vrot.slane %v10237, 5
        %v11148 = vsel %vm5531, %v11146, %v11147
        %v11149 = vrot.slane %v10918, 5
        %v11150 = vrot.slane %v11149, 4
        %v11151 = vrot.slane %v10238, 5
        %v11152 = vsel %vm5531, %v11150, %v11151
        %v11153 = vrot.slane %v10919, 5
        %v11154 = vrot.slane %v11153, 4
        %v11155 = vrot.slane %v10239, 5
        %v11156 = vsel %vm5531, %v11154, %v11155
        %v11157 = vrot.slane %v10920, 5
        %v11158 = vrot.slane %v11157, 4
        %v11159 = vrot.slane %v10240, 5
        %v11160 = vsel %vm5531, %v11158, %v11159
        %v11201 = vmax.bf16 %v10841, %v11004
        %v11202 = vmax.bf16 %v10842, %v11008
        %v11203 = vmax.bf16 %v10843, %v11012
        %v11204 = vmax.bf16 %v10844, %v11016
        %v11205 = vmax.bf16 %v10845, %v11020
        %v11206 = vmax.bf16 %v10846, %v11024
        %v11207 = vmax.bf16 %v10847, %v11028
        %v11208 = vmax.bf16 %v10848, %v11032
        %v11209 = vmax.bf16 %v10849, %v11036
        %v11210 = vmax.bf16 %v10850, %v11040
        %v11211 = vmax.bf16 %v10851, %v11044
        %v11212 = vmax.bf16 %v10852, %v11048
        %v11213 = vmax.bf16 %v10853, %v11052
        %v11214 = vmax.bf16 %v10854, %v11056
        %v11215 = vmax.bf16 %v10855, %v11060
        %v11216 = vmax.bf16 %v10856, %v11064
        %v11217 = vmax.bf16 %v10857, %v11068
        %v11218 = vmax.bf16 %v10858, %v11072
        %v11219 = vmax.bf16 %v10859, %v11076
        %v11220 = vmax.bf16 %v10860, %v11080
        %v11221 = vmax.bf16 %v10861, %v11084
        %v11222 = vmax.bf16 %v10862, %v11088
        %v11223 = vmax.bf16 %v10863, %v11092
        %v11224 = vmax.bf16 %v10864, %v11096
        %v11225 = vmax.bf16 %v10865, %v11100
        %v11226 = vmax.bf16 %v10866, %v11104
        %v11227 = vmax.bf16 %v10867, %v11108
        %v11228 = vmax.bf16 %v10868, %v11112
        %v11229 = vmax.bf16 %v10869, %v11116
        %v11230 = vmax.bf16 %v10870, %v11120
        %v11231 = vmax.bf16 %v10871, %v11124
        %v11232 = vmax.bf16 %v10872, %v11128
        %v11233 = vmax.bf16 %v10873, %v11132
        %v11234 = vmax.bf16 %v10874, %v11136
        %v11235 = vmax.bf16 %v10875, %v11140
        %v11236 = vmax.bf16 %v10876, %v11144
        %v11237 = vmax.bf16 %v10877, %v11148
        %v11238 = vmax.bf16 %v10878, %v11152
        %v11239 = vmax.bf16 %v10879, %v11156
        %v11240 = vmax.bf16 %v10880, %v11160
        %v11241 = vmax.bf16 %v11201, %v11205
        %v11242 = vmax.bf16 %v11202, %v11206
        %v11243 = vmax.bf16 %v11203, %v11207
        %v11244 = vmax.bf16 %v11204, %v11208
        %v11245 = vmax.bf16 %v11205, %v11209
        %v11246 = vmax.bf16 %v11206, %v11210
        %v11247 = vmax.bf16 %v11207, %v11211
        %v11248 = vmax.bf16 %v11208, %v11212
        %v11249 = vmax.bf16 %v11209, %v11213
        %v11250 = vmax.bf16 %v11210, %v11214
        %v11251 = vmax.bf16 %v11211, %v11215
        %v11252 = vmax.bf16 %v11212, %v11216
        %v11253 = vmax.bf16 %v11213, %v11217
        %v11254 = vmax.bf16 %v11214, %v11218
        %v11255 = vmax.bf16 %v11215, %v11219
        %v11256 = vmax.bf16 %v11216, %v11220
        %v11257 = vmax.bf16 %v11217, %v11221
        %v11258 = vmax.bf16 %v11218, %v11222
        %v11259 = vmax.bf16 %v11219, %v11223
        %v11260 = vmax.bf16 %v11220, %v11224
        %v11261 = vmax.bf16 %v11221, %v11225
        %v11262 = vmax.bf16 %v11222, %v11226
        %v11263 = vmax.bf16 %v11223, %v11227
        %v11264 = vmax.bf16 %v11224, %v11228
        %v11265 = vmax.bf16 %v11225, %v11229
        %v11266 = vmax.bf16 %v11226, %v11230
        %v11267 = vmax.bf16 %v11227, %v11231
        %v11268 = vmax.bf16 %v11228, %v11232
        %v11269 = vmax.bf16 %v11229, %v11233
        %v11270 = vmax.bf16 %v11230, %v11234
        %v11271 = vmax.bf16 %v11231, %v11235
        %v11272 = vmax.bf16 %v11232, %v11236
        %v11273 = vmax.bf16 %v11241, %v11209
        %v11274 = vmax.bf16 %v11242, %v11210
        %v11275 = vmax.bf16 %v11243, %v11211
        %v11276 = vmax.bf16 %v11244, %v11212
        %v11277 = vmax.bf16 %v11245, %v11213
        %v11278 = vmax.bf16 %v11246, %v11214
        %v11279 = vmax.bf16 %v11247, %v11215
        %v11280 = vmax.bf16 %v11248, %v11216
        %v11281 = vmax.bf16 %v11249, %v11217
        %v11282 = vmax.bf16 %v11250, %v11218
        %v11283 = vmax.bf16 %v11251, %v11219
        %v11284 = vmax.bf16 %v11252, %v11220
        %v11285 = vmax.bf16 %v11253, %v11221
        %v11286 = vmax.bf16 %v11254, %v11222
        %v11287 = vmax.bf16 %v11255, %v11223
        %v11288 = vmax.bf16 %v11256, %v11224
        %v11289 = vmax.bf16 %v11257, %v11225
        %v11290 = vmax.bf16 %v11258, %v11226
        %v11291 = vmax.bf16 %v11259, %v11227
        %v11292 = vmax.bf16 %v11260, %v11228
        %v11293 = vmax.bf16 %v11261, %v11229
        %v11294 = vmax.bf16 %v11262, %v11230
        %v11295 = vmax.bf16 %v11263, %v11231
        %v11296 = vmax.bf16 %v11264, %v11232
        %v11297 = vmax.bf16 %v11265, %v11233
        %v11298 = vmax.bf16 %v11266, %v11234
        %v11299 = vmax.bf16 %v11267, %v11235
        %v11300 = vmax.bf16 %v11268, %v11236
        %v11301 = vmax.bf16 %v11269, %v11237
        %v11302 = vmax.bf16 %v11270, %v11238
        %v11303 = vmax.bf16 %v11271, %v11239
        %v11304 = vmax.bf16 %v11272, %v11240
        %v11305 = vld [vmem:[#allocation15] sm:$0xf]
        %v11306 = vld [vmem:[#allocation15 + $0x4] sm:$0xf]
        %v11307 = vld [vmem:[#allocation15 + $0x8] sm:$0xf]
        %v11308 = vld [vmem:[#allocation15 + $0xc] sm:$0xf]
        %v11309 = vld [vmem:[#allocation15 + $0x10] sm:$0xf]
        %v11310 = vld [vmem:[#allocation15 + $0x14] sm:$0xf]
        %v11311 = vld [vmem:[#allocation15 + $0x18] sm:$0xf]
        %v11312 = vld [vmem:[#allocation15 + $0x1c] sm:$0xf]
        %v11313 = vld [vmem:[#allocation15 + $0x20] sm:$0xf]
        %v11314 = vld [vmem:[#allocation15 + $0x24] sm:$0xf]
        %v11315 = vld [vmem:[#allocation15 + $0x28] sm:$0xf]
        %v11316 = vld [vmem:[#allocation15 + $0x2c] sm:$0xf]
        %v11317 = vld [vmem:[#allocation15 + $0x30] sm:$0xf]
        %v11318 = vld [vmem:[#allocation15 + $0x34] sm:$0xf]
        %v11319 = vld [vmem:[#allocation15 + $0x38] sm:$0xf]
        %v11320 = vld [vmem:[#allocation15 + $0x3c] sm:$0xf]
        %v11321 = vld [vmem:[#allocation15 + $0x40] sm:$0xf]
        %v11322 = vld [vmem:[#allocation15 + $0x44] sm:$0xf]
        %v11323 = vld [vmem:[#allocation15 + $0x48] sm:$0xf]
        %v11324 = vld [vmem:[#allocation15 + $0x4c] sm:$0xf]
        %v11325 = vld [vmem:[#allocation15 + $0x50] sm:$0xf]
        %v11326 = vld [vmem:[#allocation15 + $0x54] sm:$0xf]
        %v11327 = vld [vmem:[#allocation15 + $0x58] sm:$0xf]
        %v11328 = vld [vmem:[#allocation15 + $0x5c] sm:$0xf]
        %v11329 = vld [vmem:[#allocation15 + $0x60] sm:$0xf]
        %v11330 = vld [vmem:[#allocation15 + $0x64] sm:$0xf]
        %v11331 = vld [vmem:[#allocation15 + $0x68] sm:$0xf]
        %v11332 = vld [vmem:[#allocation15 + $0x6c] sm:$0xf]
        %v11333 = vld [vmem:[#allocation15 + $0x70] sm:$0xf]
        %v11334 = vld [vmem:[#allocation15 + $0x74] sm:$0xf]
        %v11335 = vld [vmem:[#allocation15 + $0x78] sm:$0xf]
        %v11336 = vld [vmem:[#allocation15 + $0x7c] sm:$0xf]
        %v11337 = vld [vmem:[#allocation15 + $0x80] sm:$0xf]
        %v11338 = vld [vmem:[#allocation15 + $0x84] sm:$0xf]
        %v11339 = vld [vmem:[#allocation15 + $0x88] sm:$0xf]
        %v11340 = vld [vmem:[#allocation15 + $0x8c] sm:$0xf]
        %v11341 = vld [vmem:[#allocation15 + $0x90] sm:$0xf]
        %v11342 = vld [vmem:[#allocation15 + $0x94] sm:$0xf]
        %v11343 = vld [vmem:[#allocation15 + $0x98] sm:$0xf]
        %v11344 = vld [vmem:[#allocation15 + $0x9c] sm:$0xf]
        %v11345 = vld [vmem:[#allocation15 + $0xa0] sm:$0xf]
        %v11346 = vld [vmem:[#allocation15 + $0xa4] sm:$0xf]
        %v11347 = vld [vmem:[#allocation15 + $0xa8] sm:$0xf]
        %v11348 = vld [vmem:[#allocation15 + $0xac] sm:$0xf]
        %v11349 = vld [vmem:[#allocation15 + $0xb0] sm:$0xf]
        %v11350 = vld [vmem:[#allocation15 + $0xb4] sm:$0xf]
        %v11351 = vld [vmem:[#allocation15 + $0xb8] sm:$0xf]
        %v11352 = vld [vmem:[#allocation15 + $0xbc] sm:$0xf]
        %v11353 = vld [vmem:[#allocation15 + $0xc0] sm:$0xf]
        %v11354 = vld [vmem:[#allocation15 + $0xc4] sm:$0xf]
        %v11355 = vld [vmem:[#allocation15 + $0xc8] sm:$0xf]
        %v11356 = vld [vmem:[#allocation15 + $0xcc] sm:$0xf]
        %v11357 = vld [vmem:[#allocation15 + $0xd0] sm:$0xf]
        %v11358 = vld [vmem:[#allocation15 + $0xd4] sm:$0xf]
        %v11359 = vld [vmem:[#allocation15 + $0xd8] sm:$0xf]
        %v11360 = vld [vmem:[#allocation15 + $0xdc] sm:$0xf]
        %v11361 = vld [vmem:[#allocation15 + $0xe0] sm:$0xf]
        %v11362 = vld [vmem:[#allocation15 + $0xe4] sm:$0xf]
        %v11363 = vld [vmem:[#allocation15 + $0xe8] sm:$0xf]
        %v11364 = vld [vmem:[#allocation15 + $0xec] sm:$0xf]
        %v11365 = vld [vmem:[#allocation15 + $0xf0] sm:$0xf]
        %v11366 = vld [vmem:[#allocation15 + $0xf4] sm:$0xf]
        %v11367 = vld [vmem:[#allocation15 + $0xf8] sm:$0xf]
        %v11368 = vld [vmem:[#allocation15 + $0xfc] sm:$0xf]
        %v11369 = vld [vmem:[#allocation15 + $0x100] sm:$0xf]
        %v11370 = vld [vmem:[#allocation15 + $0x104] sm:$0xf]
        %v11371 = vld [vmem:[#allocation15 + $0x108] sm:$0xf]
        %v11372 = vld [vmem:[#allocation15 + $0x10c] sm:$0xf]
        %v11373 = vld [vmem:[#allocation15 + $0x110] sm:$0xf]
        %v11374 = vld [vmem:[#allocation15 + $0x114] sm:$0xf]
        %v11375 = vld [vmem:[#allocation15 + $0x118] sm:$0xf]
        %v11376 = vld [vmem:[#allocation15 + $0x11c] sm:$0xf]
        %v11377 = vld [vmem:[#allocation15 + $0x120] sm:$0xf]
        %v11378 = vld [vmem:[#allocation15 + $0x124] sm:$0xf]
        %v11379 = vld [vmem:[#allocation15 + $0x128] sm:$0xf]
        %v11380 = vld [vmem:[#allocation15 + $0x12c] sm:$0xf]
        %v11381 = vld [vmem:[#allocation15 + $0x130] sm:$0xf]
        %v11382 = vld [vmem:[#allocation15 + $0x134] sm:$0xf]
        %v11383 = vld [vmem:[#allocation15 + $0x138] sm:$0xf]
        %v11384 = vld [vmem:[#allocation15 + $0x13c] sm:$0xf]
        %v11385 = vld [vmem:[#allocation15 + $0x140] sm:$0xf]
        %v11386 = vld [vmem:[#allocation15 + $0x144] sm:$0xf]
        %v11387 = vld [vmem:[#allocation15 + $0x148] sm:$0xf]
        %v11388 = vld [vmem:[#allocation15 + $0x14c] sm:$0xf]
        %v11389 = vld [vmem:[#allocation15 + $0x150] sm:$0xf]
        %v11390 = vld [vmem:[#allocation15 + $0x154] sm:$0xf]
        %v11391 = vld [vmem:[#allocation15 + $0x158] sm:$0xf]
        %v11392 = vld [vmem:[#allocation15 + $0x15c] sm:$0xf]
        %v11393 = vld [vmem:[#allocation15 + $0x160] sm:$0xf]
        %v11394 = vld [vmem:[#allocation15 + $0x164] sm:$0xf]
        %v11395 = vld [vmem:[#allocation15 + $0x168] sm:$0xf]
        %v11396 = vld [vmem:[#allocation15 + $0x16c] sm:$0xf]
        %v11397 = vld [vmem:[#allocation15 + $0x170] sm:$0xf]
        %v11398 = vld [vmem:[#allocation15 + $0x174] sm:$0xf]
        %v11399 = vld [vmem:[#allocation15 + $0x178] sm:$0xf]
        %v11400 = vld [vmem:[#allocation15 + $0x17c] sm:$0xf]
        %v11401 = vld [vmem:[#allocation15 + $0x180] sm:$0xf]
        %v11402 = vld [vmem:[#allocation15 + $0x184] sm:$0xf]
        %v11403 = vld [vmem:[#allocation15 + $0x188] sm:$0xf]
        %v11404 = vld [vmem:[#allocation15 + $0x18c] sm:$0xf]
        %v11405 = vld [vmem:[#allocation15 + $0x190] sm:$0xf]
        %v11406 = vld [vmem:[#allocation15 + $0x194] sm:$0xf]
        %v11407 = vld [vmem:[#allocation15 + $0x198] sm:$0xf]
        %v11408 = vld [vmem:[#allocation15 + $0x19c] sm:$0xf]
        %v11409 = vld [vmem:[#allocation16] sm:$0x1]
        %v11411 = vlaneseq
        %v11412 = vshrl.u32 %v11411, 7
        %v11413 = vsub.s32 0, %v11412
        %v11414 = vrot.slane %v11409, %v11413
        %v11448 = vunpack.c.l.b16 %v11273
        %v11449 = vunpack.c.h.b16 %v11273
        %v11450 = vunpack.c.l.b16 %v11274
        %v11451 = vunpack.c.h.b16 %v11274
        %v11452 = vunpack.c.l.b16 %v11275
        %v11453 = vunpack.c.h.b16 %v11275
        %v11454 = vunpack.c.l.b16 %v11276
        %v11455 = vunpack.c.l.b16 %v11277
        %v11456 = vunpack.c.h.b16 %v11277
        %v11457 = vunpack.c.l.b16 %v11278
        %v11458 = vunpack.c.h.b16 %v11278
        %v11459 = vunpack.c.l.b16 %v11279
        %v11460 = vunpack.c.h.b16 %v11279
        %v11461 = vunpack.c.l.b16 %v11280
        %v11462 = vunpack.c.l.b16 %v11281
        %v11463 = vunpack.c.h.b16 %v11281
        %v11464 = vunpack.c.l.b16 %v11282
        %v11465 = vunpack.c.h.b16 %v11282
        %v11466 = vunpack.c.l.b16 %v11283
        %v11467 = vunpack.c.h.b16 %v11283
        %v11468 = vunpack.c.l.b16 %v11284
        %v11469 = vunpack.c.l.b16 %v11285
        %v11470 = vunpack.c.h.b16 %v11285
        %v11471 = vunpack.c.l.b16 %v11286
        %v11472 = vunpack.c.h.b16 %v11286
        %v11473 = vunpack.c.l.b16 %v11287
        %v11474 = vunpack.c.h.b16 %v11287
        %v11475 = vunpack.c.l.b16 %v11288
        %v11476 = vunpack.c.l.b16 %v11289
        %v11477 = vunpack.c.h.b16 %v11289
        %v11478 = vunpack.c.l.b16 %v11290
        %v11479 = vunpack.c.h.b16 %v11290
        %v11480 = vunpack.c.l.b16 %v11291
        %v11481 = vunpack.c.h.b16 %v11291
        %v11482 = vunpack.c.l.b16 %v11292
        %v11483 = vunpack.c.l.b16 %v11293
        %v11484 = vunpack.c.h.b16 %v11293
        %v11485 = vunpack.c.l.b16 %v11294
        %v11486 = vunpack.c.h.b16 %v11294
        %v11487 = vunpack.c.l.b16 %v11295
        %v11488 = vunpack.c.h.b16 %v11295
        %v11489 = vunpack.c.l.b16 %v11296
        %v11490 = vunpack.c.l.b16 %v11297
        %v11491 = vunpack.c.h.b16 %v11297
        %v11492 = vunpack.c.l.b16 %v11298
        %v11493 = vunpack.c.h.b16 %v11298
        %v11494 = vunpack.c.l.b16 %v11299
        %v11495 = vunpack.c.h.b16 %v11299
        %v11496 = vunpack.c.l.b16 %v11300
        %v11497 = vunpack.c.l.b16 %v11301
        %v11498 = vunpack.c.h.b16 %v11301
        %v11499 = vunpack.c.l.b16 %v11302
        %v11500 = vunpack.c.h.b16 %v11302
        %v11501 = vunpack.c.l.b16 %v11303
        %v11502 = vunpack.c.h.b16 %v11303
        %v11503 = vunpack.c.l.b16 %v11304
        %v11504 = vpack.c.b16 %v11455, %v11448
        %v11505 = vpack.c.b16 %v11456, %v11449
        %v11506 = vpack.c.b16 %v11457, %v11450
        %v11507 = vpack.c.b16 %v11458, %v11451
        %v11508 = vpack.c.b16 %v11459, %v11452
        %v11509 = vpack.c.b16 %v11460, %v11453
        %v11510 = vpack.c.b16 %v11461, %v11454
        %v11511 = vpack.c.b16 %v11469, %v11462
        %v11512 = vpack.c.b16 %v11470, %v11463
        %v11513 = vpack.c.b16 %v11471, %v11464
        %v11514 = vpack.c.b16 %v11472, %v11465
        %v11515 = vpack.c.b16 %v11473, %v11466
        %v11516 = vpack.c.b16 %v11474, %v11467
        %v11517 = vpack.c.b16 %v11475, %v11468
        %v11518 = vpack.c.b16 %v11483, %v11476
        %v11519 = vpack.c.b16 %v11484, %v11477
        %v11520 = vpack.c.b16 %v11485, %v11478
        %v11521 = vpack.c.b16 %v11486, %v11479
        %v11522 = vpack.c.b16 %v11487, %v11480
        %v11523 = vpack.c.b16 %v11488, %v11481
        %v11524 = vpack.c.b16 %v11489, %v11482
        %v11525 = vpack.c.b16 %v11497, %v11490
        %v11526 = vpack.c.b16 %v11498, %v11491
        %v11527 = vpack.c.b16 %v11499, %v11492
        %v11528 = vpack.c.b16 %v11500, %v11493
        %v11529 = vpack.c.b16 %v11501, %v11494
        %v11530 = vpack.c.b16 %v11502, %v11495
        %v11531 = vpack.c.b16 %v11503, %v11496
        %v11660 = vunpack.c.l.b16 %v11305
        %v11661 = vunpack.c.l.b16 %v11306
        %v11662 = vunpack.c.l.b16 %v11307
        %v11663 = vunpack.c.l.b16 %v11308
        %v11664 = vunpack.c.l.b16 %v11309
        %v11665 = vunpack.c.l.b16 %v11310
        %v11666 = vunpack.c.l.b16 %v11311
        %v11667 = vunpack.c.l.b16 %v11312
        %v11668 = vunpack.c.l.b16 %v11313
        %v11669 = vunpack.c.l.b16 %v11314
        %v11670 = vunpack.c.l.b16 %v11315
        %v11671 = vunpack.c.l.b16 %v11316
        %v11672 = vunpack.c.l.b16 %v11317
        %v11673 = vunpack.c.l.b16 %v11318
        %v11674 = vunpack.c.l.b16 %v11319
        %v11675 = vunpack.c.l.b16 %v11320
        %v11676 = vunpack.c.l.b16 %v11321
        %v11677 = vunpack.c.l.b16 %v11322
        %v11678 = vunpack.c.l.b16 %v11323
        %v11679 = vunpack.c.l.b16 %v11324
        %v11680 = vunpack.c.l.b16 %v11325
        %v11681 = vunpack.c.l.b16 %v11326
        %v11682 = vunpack.c.l.b16 %v11327
        %v11683 = vunpack.c.l.b16 %v11328
        %v11684 = vunpack.c.l.b16 %v11329
        %v11685 = vunpack.c.l.b16 %v11330
        %v11686 = vunpack.c.l.b16 %v11331
        %v11687 = vunpack.c.l.b16 %v11332
        %v11688 = vunpack.c.l.b16 %v11333
        %v11689 = vunpack.c.l.b16 %v11334
        %v11690 = vunpack.c.l.b16 %v11335
        %v11691 = vunpack.c.l.b16 %v11336
        %v11692 = vunpack.c.l.b16 %v11337
        %v11693 = vunpack.c.l.b16 %v11338
        %v11694 = vunpack.c.l.b16 %v11339
        %v11695 = vunpack.c.l.b16 %v11340
        %v11696 = vunpack.c.l.b16 %v11341
        %v11697 = vunpack.c.l.b16 %v11342
        %v11698 = vunpack.c.l.b16 %v11343
        %v11699 = vunpack.c.l.b16 %v11344
        %v11700 = vunpack.c.l.b16 %v11345
        %v11701 = vunpack.c.l.b16 %v11346
        %v11702 = vunpack.c.l.b16 %v11347
        %v11703 = vunpack.c.l.b16 %v11348
        %v11704 = vunpack.c.l.b16 %v11349
        %v11705 = vunpack.c.l.b16 %v11350
        %v11706 = vunpack.c.l.b16 %v11351
        %v11707 = vunpack.c.l.b16 %v11352
        %v11708 = vunpack.c.l.b16 %v11353
        %v11709 = vunpack.c.l.b16 %v11354
        %v11710 = vunpack.c.l.b16 %v11355
        %v11711 = vunpack.c.l.b16 %v11356
        %v11712 = vunpack.c.l.b16 %v11357
        %v11713 = vunpack.c.l.b16 %v11358
        %v11714 = vunpack.c.l.b16 %v11359
        %v11715 = vunpack.c.l.b16 %v11360
        %v11716 = vunpack.c.l.b16 %v11361
        %v11717 = vunpack.c.l.b16 %v11362
        %v11718 = vunpack.c.l.b16 %v11363
        %v11719 = vunpack.c.l.b16 %v11364
        %v11720 = vunpack.c.l.b16 %v11365
        %v11721 = vunpack.c.l.b16 %v11366
        %v11722 = vunpack.c.l.b16 %v11367
        %v11723 = vunpack.c.l.b16 %v11368
        %v11724 = vunpack.c.l.b16 %v11369
        %v11725 = vunpack.c.l.b16 %v11370
        %v11726 = vunpack.c.l.b16 %v11371
        %v11727 = vunpack.c.l.b16 %v11372
        %v11728 = vunpack.c.l.b16 %v11373
        %v11729 = vunpack.c.l.b16 %v11374
        %v11730 = vunpack.c.l.b16 %v11375
        %v11731 = vunpack.c.l.b16 %v11376
        %v11732 = vunpack.c.l.b16 %v11377
        %v11733 = vunpack.c.l.b16 %v11378
        %v11734 = vunpack.c.l.b16 %v11379
        %v11735 = vunpack.c.l.b16 %v11380
        %v11736 = vunpack.c.l.b16 %v11381
        %v11737 = vunpack.c.l.b16 %v11382
        %v11738 = vunpack.c.l.b16 %v11383
        %v11739 = vunpack.c.l.b16 %v11384
        %v11740 = vunpack.c.l.b16 %v11385
        %v11741 = vunpack.c.l.b16 %v11386
        %v11742 = vunpack.c.l.b16 %v11387
        %v11743 = vunpack.c.l.b16 %v11388
        %v11744 = vunpack.c.l.b16 %v11389
        %v11745 = vunpack.c.l.b16 %v11390
        %v11746 = vunpack.c.l.b16 %v11391
        %v11747 = vunpack.c.l.b16 %v11392
        %v11748 = vunpack.c.l.b16 %v11393
        %v11749 = vunpack.c.l.b16 %v11394
        %v11750 = vunpack.c.l.b16 %v11395
        %v11751 = vunpack.c.l.b16 %v11396
        %v11752 = vunpack.c.l.b16 %v11397
        %v11753 = vunpack.c.l.b16 %v11398
        %v11754 = vunpack.c.l.b16 %v11399
        %v11755 = vunpack.c.l.b16 %v11400
        %v11756 = vunpack.c.l.b16 %v11401
        %v11757 = vunpack.c.l.b16 %v11402
        %v11758 = vunpack.c.l.b16 %v11403
        %v11759 = vunpack.c.l.b16 %v11404
        %v11760 = vunpack.c.l.b16 %v11405
        %v11761 = vunpack.c.l.b16 %v11406
        %v11762 = vunpack.c.l.b16 %v11407
        %v11763 = vunpack.c.l.b16 %v11408
        %v11764 = vpack.c.b16 %v11661, %v11660
        %v11765 = vpack.c.b16 %v11663, %v11662
        %v11766 = vpack.c.b16 %v11665, %v11664
        %v11767 = vpack.c.b16 %v11667, %v11666
        %v11768 = vpack.c.b16 %v11669, %v11668
        %v11769 = vpack.c.b16 %v11671, %v11670
        %v11770 = vpack.c.b16 %v11673, %v11672
        %v11771 = vpack.c.b16 %v11675, %v11674
        %v11772 = vpack.c.b16 %v11677, %v11676
        %v11773 = vpack.c.b16 %v11679, %v11678
        %v11774 = vpack.c.b16 %v11681, %v11680
        %v11775 = vpack.c.b16 %v11683, %v11682
        %v11776 = vpack.c.b16 %v11685, %v11684
        %v11777 = vpack.c.b16 %v11687, %v11686
        %v11778 = vpack.c.b16 %v11689, %v11688
        %v11779 = vpack.c.b16 %v11691, %v11690
        %v11780 = vpack.c.b16 %v11693, %v11692
        %v11781 = vpack.c.b16 %v11695, %v11694
        %v11782 = vpack.c.b16 %v11697, %v11696
        %v11783 = vpack.c.b16 %v11699, %v11698
        %v11784 = vpack.c.b16 %v11701, %v11700
        %v11785 = vpack.c.b16 %v11703, %v11702
        %v11786 = vpack.c.b16 %v11705, %v11704
        %v11787 = vpack.c.b16 %v11707, %v11706
        %v11788 = vpack.c.b16 %v11709, %v11708
        %v11789 = vpack.c.b16 %v11711, %v11710
        %v11790 = vpack.c.b16 %v11713, %v11712
        %v11791 = vpack.c.b16 %v11715, %v11714
        %v11792 = vpack.c.b16 %v11717, %v11716
        %v11793 = vpack.c.b16 %v11719, %v11718
        %v11794 = vpack.c.b16 %v11721, %v11720
        %v11795 = vpack.c.b16 %v11723, %v11722
        %v11796 = vpack.c.b16 %v11725, %v11724
        %v11797 = vpack.c.b16 %v11727, %v11726
        %v11798 = vpack.c.b16 %v11729, %v11728
        %v11799 = vpack.c.b16 %v11731, %v11730
        %v11800 = vpack.c.b16 %v11733, %v11732
        %v11801 = vpack.c.b16 %v11735, %v11734
        %v11802 = vpack.c.b16 %v11737, %v11736
        %v11803 = vpack.c.b16 %v11739, %v11738
        %v11804 = vpack.c.b16 %v11741, %v11740
        %v11805 = vpack.c.b16 %v11743, %v11742
        %v11806 = vpack.c.b16 %v11745, %v11744
        %v11807 = vpack.c.b16 %v11747, %v11746
        %v11808 = vpack.c.b16 %v11749, %v11748
        %v11809 = vpack.c.b16 %v11751, %v11750
        %v11810 = vpack.c.b16 %v11753, %v11752
        %v11811 = vpack.c.b16 %v11755, %v11754
        %v11812 = vpack.c.b16 %v11757, %v11756
        %v11813 = vpack.c.b16 %v11759, %v11758
        %v11814 = vpack.c.b16 %v11761, %v11760
        %v11815 = vpack.c.b16 %v11763, %v11762
        %v11869 = vsel %vm2960, %v11510, 0
        %v11872 = vsel %vm2960, %v11517, 0
        %v11875 = vsel %vm2960, %v11524, 0
        %v11878 = vsel %vm2960, %v11531, 0
        %11880 = vmatprep.subr.bf16.mxu0 0
        %11881 = vmatpush1.bf16.msra.mxu0 %v11771
        %11882 = vmatprep.subr.bf16.mxu0 0
        %11883 = vmatpush1.bf16.msra.mxu0 %v11770
        %11884 = vmatprep.subr.bf16.mxu0 0
        %11885 = vmatpush1.bf16.msra.mxu0 %v11769
        %11886 = vmatprep.subr.bf16.mxu0 0
        %11887 = vmatpush1.bf16.msra.mxu0 %v11768
        %11888 = vmatprep.subr.bf16.mxu0 0
        %11889 = vmatpush1.bf16.msra.mxu0 %v11767
        %11890 = vmatprep.subr.bf16.mxu0 0
        %11891 = vmatpush1.bf16.msra.mxu0 %v11766
        %11892 = vmatprep.subr.bf16.mxu0 0
        %11893 = vmatpush1.bf16.msra.mxu0 %v11765
        %11894 = vmatprep.subr.bf16.mxu0 0
        %11895 = vmatpush1.bf16.msra.mxu0 %v11764
        %11896 = vmatprep.subr.bf16.mxu0 0
        %11897 = vmatpush2.bf16.msra.mxu0 %v11779
        %11898 = vmatprep.subr.bf16.mxu0 0
        %11899 = vmatpush2.bf16.msra.mxu0 %v11778
        %11900 = vmatprep.subr.bf16.mxu0 0
        %11901 = vmatpush2.bf16.msra.mxu0 %v11777
        %11902 = vmatprep.subr.bf16.mxu0 0
        %11903 = vmatpush2.bf16.msra.mxu0 %v11776
        %11904 = vmatprep.subr.bf16.mxu0 0
        %11905 = vmatpush2.bf16.msra.mxu0 %v11775
        %11906 = vmatprep.subr.bf16.mxu0 0
        %11907 = vmatpush2.bf16.msra.mxu0 %v11774
        %11908 = vmatprep.subr.bf16.mxu0 0
        %11909 = vmatpush2.bf16.msra.mxu0 %v11773
        %11910 = vmatprep.subr.bf16.mxu0 0
        %11911 = vmatpush2.bf16.msra.mxu0 %v11772
        %11912 = vmatprep.mubr.bf16.mxu0 %v11505
        %11913 = vmatmul.mubr.bf16.gmra.mxu0 %v11504
        %v11914 = vpop.f32.mrf.mxu0
        %v11915 = vadd.f32 %v11414, %v11914
        %v11916 = vpop.f32.mrf.mxu0
        %v11917 = vpop.f32.mrf.mxu0
        %v11918 = vadd.f32 %v11414, %v11917
        %v11919 = vpop.f32.mrf.mxu0
        %11920 = vmatprep.mubr.bf16.mxu0 %v11512
        %11921 = vmatmul.mubr.bf16.gmra.mxu0 %v11511
        %v11922 = vpop.f32.mrf.mxu0
        %v11923 = vadd.f32 %v11414, %v11922
        %v11924 = vpop.f32.mrf.mxu0
        %v11925 = vpop.f32.mrf.mxu0
        %v11926 = vadd.f32 %v11414, %v11925
        %v11927 = vpop.f32.mrf.mxu0
        %11928 = vmatprep.mubr.bf16.mxu0 %v11519
        %11929 = vmatmul.mubr.bf16.gmra.mxu0 %v11518
        %v11930 = vpop.f32.mrf.mxu0
        %v11931 = vadd.f32 %v11414, %v11930
        %v11932 = vpop.f32.mrf.mxu0
        %v11933 = vpop.f32.mrf.mxu0
        %v11934 = vadd.f32 %v11414, %v11933
        %v11935 = vpop.f32.mrf.mxu0
        %11936 = vmatprep.mubr.bf16.mxu0 %v11526
        %11937 = vmatmul.mubr.bf16.gmra.mxu0 %v11525
        %v11938 = vpop.f32.mrf.mxu0
        %v11939 = vadd.f32 %v11414, %v11938
        %v11940 = vpop.f32.mrf.mxu0
        %v11941 = vpop.f32.mrf.mxu0
        %v11942 = vadd.f32 %v11414, %v11941
        %v11943 = vpop.f32.mrf.mxu0
        %11944 = vdwg.mxu0
        %11945 = vmatprep.subr.bf16.mxu0 0
        %11946 = vmatpush1.bf16.msra.mxu0 %v11787
        %11947 = vmatprep.subr.bf16.mxu0 0
        %11948 = vmatpush1.bf16.msra.mxu0 %v11786
        %11949 = vmatprep.subr.bf16.mxu0 0
        %11950 = vmatpush1.bf16.msra.mxu0 %v11785
        %11951 = vmatprep.subr.bf16.mxu0 0
        %11952 = vmatpush1.bf16.msra.mxu0 %v11784
        %11953 = vmatprep.subr.bf16.mxu0 0
        %11954 = vmatpush1.bf16.msra.mxu0 %v11783
        %11955 = vmatprep.subr.bf16.mxu0 0
        %11956 = vmatpush1.bf16.msra.mxu0 %v11782
        %11957 = vmatprep.subr.bf16.mxu0 0
        %11958 = vmatpush1.bf16.msra.mxu0 %v11781
        %11959 = vmatprep.subr.bf16.mxu0 0
        %11960 = vmatpush1.bf16.msra.mxu0 %v11780
        %11961 = vmatprep.subr.bf16.mxu0 0
        %11962 = vmatpush2.bf16.msra.mxu0 %v11795
        %11963 = vmatprep.subr.bf16.mxu0 0
        %11964 = vmatpush2.bf16.msra.mxu0 %v11794
        %11965 = vmatprep.subr.bf16.mxu0 0
        %11966 = vmatpush2.bf16.msra.mxu0 %v11793
        %11967 = vmatprep.subr.bf16.mxu0 0
        %11968 = vmatpush2.bf16.msra.mxu0 %v11792
        %11969 = vmatprep.subr.bf16.mxu0 0
        %11970 = vmatpush2.bf16.msra.mxu0 %v11791
        %11971 = vmatprep.subr.bf16.mxu0 0
        %11972 = vmatpush2.bf16.msra.mxu0 %v11790
        %11973 = vmatprep.subr.bf16.mxu0 0
        %11974 = vmatpush2.bf16.msra.mxu0 %v11789
        %11975 = vmatprep.subr.bf16.mxu0 0
        %11976 = vmatpush2.bf16.msra.mxu0 %v11788
        %11977 = vmatprep.mubr.bf16.mxu0 %v11507
        %11978 = vmatmul.mubr.bf16.gmra.mxu0 %v11506
        %v11979 = vpop.f32.mrf.mxu0
        %v11980 = vadd.f32 %v11915, %v11979
        %v11981 = vpop.f32.mrf.mxu0
        %v11982 = vpop.f32.mrf.mxu0
        %v11983 = vadd.f32 %v11918, %v11982
        %v11984 = vpop.f32.mrf.mxu0
        %11985 = vmatprep.mubr.bf16.mxu0 %v11514
        %11986 = vmatmul.mubr.bf16.gmra.mxu0 %v11513
        %v11987 = vpop.f32.mrf.mxu0
        %v11988 = vadd.f32 %v11923, %v11987
        %v11989 = vpop.f32.mrf.mxu0
        %v11990 = vpop.f32.mrf.mxu0
        %v11991 = vadd.f32 %v11926, %v11990
        %v11992 = vpop.f32.mrf.mxu0
        %11993 = vmatprep.mubr.bf16.mxu0 %v11521
        %11994 = vmatmul.mubr.bf16.gmra.mxu0 %v11520
        %v11995 = vpop.f32.mrf.mxu0
        %v11996 = vadd.f32 %v11931, %v11995
        %v11997 = vpop.f32.mrf.mxu0
        %v11998 = vpop.f32.mrf.mxu0
        %v11999 = vadd.f32 %v11934, %v11998
        %v12000 = vpop.f32.mrf.mxu0
        %12001 = vmatprep.mubr.bf16.mxu0 %v11528
        %12002 = vmatmul.mubr.bf16.gmra.mxu0 %v11527
        %v12003 = vpop.f32.mrf.mxu0
        %v12004 = vadd.f32 %v11939, %v12003
        %v12005 = vpop.f32.mrf.mxu0
        %v12006 = vpop.f32.mrf.mxu0
        %v12007 = vadd.f32 %v11942, %v12006
        %v12008 = vpop.f32.mrf.mxu0
        %12009 = vdwg.mxu0
        %12010 = vmatprep.subr.bf16.mxu0 0
        %12011 = vmatpush1.bf16.msra.mxu0 %v11803
        %12012 = vmatprep.subr.bf16.mxu0 0
        %12013 = vmatpush1.bf16.msra.mxu0 %v11802
        %12014 = vmatprep.subr.bf16.mxu0 0
        %12015 = vmatpush1.bf16.msra.mxu0 %v11801
        %12016 = vmatprep.subr.bf16.mxu0 0
        %12017 = vmatpush1.bf16.msra.mxu0 %v11800
        %12018 = vmatprep.subr.bf16.mxu0 0
        %12019 = vmatpush1.bf16.msra.mxu0 %v11799
        %12020 = vmatprep.subr.bf16.mxu0 0
        %12021 = vmatpush1.bf16.msra.mxu0 %v11798
        %12022 = vmatprep.subr.bf16.mxu0 0
        %12023 = vmatpush1.bf16.msra.mxu0 %v11797
        %12024 = vmatprep.subr.bf16.mxu0 0
        %12025 = vmatpush1.bf16.msra.mxu0 %v11796
        %12026 = vmatprep.subr.bf16.mxu0 0
        %12027 = vmatpush2.bf16.msra.mxu0 %v11811
        %12028 = vmatprep.subr.bf16.mxu0 0
        %12029 = vmatpush2.bf16.msra.mxu0 %v11810
        %12030 = vmatprep.subr.bf16.mxu0 0
        %12031 = vmatpush2.bf16.msra.mxu0 %v11809
        %12032 = vmatprep.subr.bf16.mxu0 0
        %12033 = vmatpush2.bf16.msra.mxu0 %v11808
        %12034 = vmatprep.subr.bf16.mxu0 0
        %12035 = vmatpush2.bf16.msra.mxu0 %v11807
        %12036 = vmatprep.subr.bf16.mxu0 0
        %12037 = vmatpush2.bf16.msra.mxu0 %v11806
        %12038 = vmatprep.subr.bf16.mxu0 0
        %12039 = vmatpush2.bf16.msra.mxu0 %v11805
        %12040 = vmatprep.subr.bf16.mxu0 0
        %12041 = vmatpush2.bf16.msra.mxu0 %v11804
        %12042 = vmatprep.mubr.bf16.mxu0 %v11509
        %12043 = vmatmul.mubr.bf16.gmra.mxu0 %v11508
        %v12044 = vpop.f32.mrf.mxu0
        %v12045 = vadd.f32 %v11980, %v12044
        %v12046 = vpop.f32.mrf.mxu0
        %v12047 = vpop.f32.mrf.mxu0
        %v12048 = vadd.f32 %v11983, %v12047
        %v12049 = vpop.f32.mrf.mxu0
        %12050 = vmatprep.mubr.bf16.mxu0 %v11516
        %12051 = vmatmul.mubr.bf16.gmra.mxu0 %v11515
        %v12052 = vpop.f32.mrf.mxu0
        %v12053 = vadd.f32 %v11988, %v12052
        %v12054 = vpop.f32.mrf.mxu0
        %v12055 = vpop.f32.mrf.mxu0
        %v12056 = vadd.f32 %v11991, %v12055
        %v12057 = vpop.f32.mrf.mxu0
        %12058 = vmatprep.mubr.bf16.mxu0 %v11523
        %12059 = vmatmul.mubr.bf16.gmra.mxu0 %v11522
        %v12060 = vpop.f32.mrf.mxu0
        %v12061 = vadd.f32 %v11996, %v12060
        %v12062 = vpop.f32.mrf.mxu0
        %v12063 = vpop.f32.mrf.mxu0
        %v12064 = vadd.f32 %v11999, %v12063
        %v12065 = vpop.f32.mrf.mxu0
        %12066 = vmatprep.mubr.bf16.mxu0 %v11530
        %12067 = vmatmul.mubr.bf16.gmra.mxu0 %v11529
        %v12068 = vpop.f32.mrf.mxu0
        %v12069 = vadd.f32 %v12004, %v12068
        %v12070 = vpop.f32.mrf.mxu0
        %v12071 = vpop.f32.mrf.mxu0
        %v12072 = vadd.f32 %v12007, %v12071
        %v12073 = vpop.f32.mrf.mxu0
        %12074 = vdwg.mxu0
        %12075 = vmatprep.subr.bf16.mxu0 0
        %12076 = vmatpush1.bf16.msra.mxu0 0
        %12077 = vmatprep.subr.bf16.mxu0 0
        %12078 = vmatpush1.bf16.msra.mxu0 0
        %12079 = vmatprep.subr.bf16.mxu0 0
        %12080 = vmatpush1.bf16.msra.mxu0 0
        %12081 = vmatprep.subr.bf16.mxu0 0
        %12082 = vmatpush1.bf16.msra.mxu0 0
        %12083 = vmatprep.subr.bf16.mxu0 0
        %12084 = vmatpush1.bf16.msra.mxu0 %v11815
        %12085 = vmatprep.subr.bf16.mxu0 0
        %12086 = vmatpush1.bf16.msra.mxu0 %v11814
        %12087 = vmatprep.subr.bf16.mxu0 0
        %12088 = vmatpush1.bf16.msra.mxu0 %v11813
        %12089 = vmatprep.subr.bf16.mxu0 0
        %12090 = vmatpush1.bf16.msra.mxu0 %v11812
        %12091 = vmatprep.subr.bf16.mxu0 0
        %12092 = vmatpush2.bf16.msra.mxu0 0
        %12093 = vmatprep.subr.bf16.mxu0 0
        %12094 = vmatpush2.bf16.msra.mxu0 0
        %12095 = vmatprep.subr.bf16.mxu0 0
        %12096 = vmatpush2.bf16.msra.mxu0 0
        %12097 = vmatprep.subr.bf16.mxu0 0
        %12098 = vmatpush2.bf16.msra.mxu0 0
        %12099 = vmatprep.subr.bf16.mxu0 0
        %12100 = vmatpush2.bf16.msra.mxu0 0
        %12101 = vmatprep.subr.bf16.mxu0 0
        %12102 = vmatpush2.bf16.msra.mxu0 0
        %12103 = vmatprep.subr.bf16.mxu0 0
        %12104 = vmatpush2.bf16.msra.mxu0 0
        %12105 = vmatprep.subr.bf16.mxu0 0
        %12106 = vmatpush2.bf16.msra.mxu0 0
        %12107 = vmatprep.mubr.bf16.mxu0 0
        %12108 = vmatmul.mubr.bf16.gmra.mxu0 %v11869
        %v12109 = vpop.f32.mrf.mxu0
        %v12110 = vadd.f32 %v12045, %v12109
        %v12111 = vpop.f32.mrf.mxu0
        %v12112 = vpop.f32.mrf.mxu0
        %v12113 = vadd.f32 %v12048, %v12112
        %v12114 = vpop.f32.mrf.mxu0
        %12115 = vmatprep.mubr.bf16.mxu0 0
        %12116 = vmatmul.mubr.bf16.gmra.mxu0 %v11872
        %v12117 = vpop.f32.mrf.mxu0
        %v12118 = vadd.f32 %v12053, %v12117
        %v12119 = vpop.f32.mrf.mxu0
        %v12120 = vpop.f32.mrf.mxu0
        %v12121 = vadd.f32 %v12056, %v12120
        %v12122 = vpop.f32.mrf.mxu0
        %12123 = vmatprep.mubr.bf16.mxu0 0
        %12124 = vmatmul.mubr.bf16.gmra.mxu0 %v11875
        %v12125 = vpop.f32.mrf.mxu0
        %v12126 = vadd.f32 %v12061, %v12125
        %v12127 = vpop.f32.mrf.mxu0
        %v12128 = vpop.f32.mrf.mxu0
        %v12129 = vadd.f32 %v12064, %v12128
        %v12130 = vpop.f32.mrf.mxu0
        %12131 = vmatprep.mubr.bf16.mxu0 0
        %12132 = vmatmul.mubr.bf16.gmra.mxu0 %v11878
        %v12133 = vpop.f32.mrf.mxu0
        %v12134 = vadd.f32 %v12069, %v12133
        %v12135 = vpop.f32.mrf.mxu0
        %v12136 = vpop.f32.mrf.mxu0
        %v12137 = vadd.f32 %v12072, %v12136
        %v12138 = vpop.f32.mrf.mxu0
        %12139 = vdwg.mxu0
        %v12140 = vmax.f32 %v12110, 0.0
        %v12141 = vmax.f32 %v12113, 0.0
        %v12142 = vmax.f32 %v12118, 0.0
        %v12143 = vmax.f32 %v12121, 0.0
        %v12144 = vmax.f32 %v12126, 0.0
        %v12145 = vmax.f32 %v12129, 0.0
        %v12146 = vmax.f32 %v12134, 0.0
        %v12147 = vmax.f32 %v12137, 0.0
        %12148 = vst [vmem:[%s481 + $0x8] sm:$0xff] %v12140
        %12149 = vst [vmem:[%s481 + $0x18] sm:$0xff] %v12141
        %12150 = vst [vmem:[%s481 + $0x28] sm:$0xff] %v12142
        %12151 = vst [vmem:[%s481 + $0x38] sm:$0xff] %v12143
        %12152 = vst [vmem:[%s481 + $0x48] sm:$0xff] %v12144
        %12153 = vst [vmem:[%s481 + $0x58] sm:$0xff] %v12145
        %12154 = vst [vmem:[%s481 + $0x68] sm:$0xff] %v12146
        %12155 = vst [vmem:[%s481 + $0x78] sm:$0xff] %v12147
        %p12156 = scmp.lt.s32.totalorder %s27, 1
        %s12157 = scalar_select %p12156, %s27, 1
        %s12158 = smul.addr %s12157, 40
        %s12159 = smul.addr %s12158, 8
        %s12160 = scalar_lea.vmem %s9, %s12159
        %p12161 = scmp.lt.s32.totalorder %s27, 1
        %s12162 = scalar_select %p12161, %s27, 1
        %s12163 = smul.addr %s12162, 16
        %s12164 = smul.addr %s12163, 8
        %s12165 = scalar_lea.vmem %s10, %s12164
        // Predicated region
        $region89: #{inception5a_forward.1} parent=55 // pred_check
          %p12166 = pneg %p239
        $region90: #{inception5a_forward.1} parent=55 // pred_check_branch
          %12168 = sbr.rel (%p12166) target = $region92
        $region91: #{inception5a_forward.1} parent=55 // pred_region
          _
        $region92: #{inception5a_forward.1} parent=55 // pred_fallthru
          _
        // Predicated region
        $region93: #{inception5a_forward.1} parent=55 // pred_check
          %p12169 = pneg %p265
        $region94: #{inception5a_forward.1} parent=55 // pred_check_branch
          %12171 = sbr.rel (%p12169) target = $region96
        $region95: #{inception5a_forward.1} parent=55 // pred_region
          _
        $region96: #{inception5a_forward.1} parent=55 // pred_fallthru
          _
      $region56: #{inception5a_forward.1} parent=5 // pred_fallthru
        _
      %p12172 = scmp.le.s32.totalorder 2, %s22
      // Predicated region
      $region97: #{inception5a_forward.1} parent=5 // pred_check
        %p12173 = pneg %p12172
      $region98: #{inception5a_forward.1} parent=5 // pred_check_branch
        %12175 = sbr.rel (%p12173) target = $region100
      $region99: #{inception5a_forward.1} parent=5 // pred_region
        %s12176 = ssub.s32 %s22, 2
        // Predicated region
        $region101: #{inception5a_forward.1} parent=99 // pred_check
          %p12177 = pneg %p245
        $region102: #{inception5a_forward.1} parent=99 // pred_check_branch
          %12179 = sbr.rel (%p12177) target = $region104
        $region103: #{inception5a_forward.1} parent=99 // pred_region
          %p12180 = scmp.lt.s32.totalorder %s28, 1
          %s12181 = scalar_select %p12180, %s28, 1
          %s12182 = smul.addr %s12181, 40
          %s12183 = smul.addr %s12182, 8
          %s12184 = scalar_lea.vmem %s9, %s12183
        $region104: #{inception5a_forward.1} parent=99 // pred_fallthru
          _
        // Predicated region
        $region105: #{inception5a_forward.1} parent=99 // pred_check
          %p12185 = pneg %p271
        $region106: #{inception5a_forward.1} parent=99 // pred_check_branch
          %12187 = sbr.rel (%p12185) target = $region108
        $region107: #{inception5a_forward.1} parent=99 // pred_region
          %p12188 = scmp.lt.s32.totalorder %s28, 1
          %s12189 = scalar_select %p12188, %s28, 1
          %s12190 = smul.addr %s12189, 16
          %s12191 = smul.addr %s12190, 8
          %s12192 = scalar_lea.vmem %s10, %s12191
        $region108: #{inception5a_forward.1} parent=99 // pred_fallthru
          _
      $region100: #{inception5a_forward.1} parent=5 // pred_fallthru
        _
    $region6: #{inception5a_forward.1} parent=1 // loop_footer
      %s26 = sadd.s32 1, %s22
    $region7: #{inception5a_forward.1} parent=1 // loop_footer_branch
      %21 = sbr.rel target = $region3
    $region8: #{inception5a_forward.1} parent=1 // loop_exit
      _
    %12193 = vsyncpa [#allocation6], 1
    %s12194 = scalar_lea.sflag [#allocation6], 1
    %12195 = vsyncpa %s12194, 1
    %12196 = vsyncpa [#allocation8], 1
    %12197 = vsyncpa [#allocation11], 1
    %12198 = vsyncpa [#allocation14], 1
    %12199 = vsyncpa [#allocation17], 1

</llo_original>
